<compile_context>
chip_gen: v7x
topology: tpu7x:2x2x1
jax: 0.10.0
libtpu: 0.0.40
codegen_flags: <defaults>
</compile_context>

<pallas_src>
import functools

import jax
import jax.numpy as jnp
import numpy as np
from jax.experimental import pallas as pl
from jax.experimental.pallas import tpu as pltpu

# ---- DSSMEmbed default hyper-parameters -------------------------------------
DICT_SIZE = 14
H = 5
W = 5
EMBED_SIZE = 64
STATE_EMBED_SIZE = 3
N_Z = 5
EPS = 1e-4
C1 = 16   # phi*_conv1 output channels
C2 = 32   # phi*_conv2 output channels


# ---- trace-time tables --------------------------------------------------------
def _build_tap_masks(height, width, batch):
    """(N, 16) f32 validity mask, one column per 3x3 tap (k = (dy+1)*3+(dx+1)).

    Also statically asserts wrap-safety of the roll-based conv: every row whose
    rolled source row wraps around the array boundary must be masked out.
    """
    P = height * width
    N = P * batch
    r = np.arange(N)
    p = r // batch
    oh = p // width
    ow = p % width
    masks = np.zeros((N, 16), np.float32)
    taps = [(dy, dx) for dy in (-1, 0, 1) for dx in (-1, 0, 1)]
    for k, (dy, dx) in enumerate(taps):
        valid = ((oh + dy >= 0) & (oh + dy < height) &
                 (ow + dx >= 0) & (ow + dx < width))
        masks[:, k] = valid.astype(np.float32)
        src = r + (dy * width + dx) * batch
        wrapped = (src < 0) | (src >= N)
        assert not np.any(wrapped & valid), (
            "3x3 tap rotation would read a wrapped row that is not masked out; "
            "the roll-based conv is invalid for this (H, W, batch) geometry")
    return masks


# ---- Pallas kernel -----------------------------------------------------------
def _dssm_kernel(x_ref, mask_ref, w1_ref, w2_ref, lw_ref, aux_ref, out_ref,
                 *, height, width, batch, eps, c1, c2, embed_size, n_z):
    f32 = jnp.float32
    P = height * width
    N = P * batch

    x = x_ref[...]         # (N, 6)   fused [s_embed | s'_embed - s_embed]
    masks = mask_ref[...]  # (N, 16)  per-tap validity masks (precomputed)
    aux = aux_ref[...]     # (8, 128) biases / z_norm / scale, packed

    b_c1 = aux[0:1, 0:2 * c1]                 # (1, 32)  fused conv1 bias
    b_c2 = aux[1:2, 0:2 * c2]                 # (1, 64)  fused conv2 bias
    b_lin = aux[2:3, 0:2 * embed_size]        # (1, 128) fused linear bias
    z_norm = aux[3:3 + n_z, 0:embed_size]     # (n_z, E) pre-normalized z
    scale = aux[0:1, 127:128]                 # (1, 1)   raw scale

    taps = [(dy, dx) for dy in (-1, 0, 1) for dx in (-1, 0, 1)]

    def conv3x3_relu(x2d, w_ref, bias):
        # 3x3 "same" conv, both towers at once (block-diagonal weight).
        # Tap (dy, dx) of output row r = (oh*W+ow)*batch + b reads input row
        # r + (dy*W+dx)*batch: a sublane-aligned rotation (shift multiple of
        # batch) done on the XLU via pltpu.roll; out-of-image taps are zeroed
        # by the precomputed per-row mask (center tap needs neither).
        acc = None
        for k, (dy, dx) in enumerate(taps):
            shift = (-(dy * width + dx) * batch) % N
            piece = x2d if shift == 0 else pltpu.roll(x2d, shift, axis=0)
            if (dy, dx) != (0, 0):
                piece = piece * masks[:, k:k + 1]
            d = jnp.dot(piece, w_ref[k], preferred_element_type=f32)
            acc = d if acc is None else acc + d
        return jnp.maximum(acc + bias, 0.0)

    # fused towers: lanes [0:Cout1] = phi1, [Cout1:2*Cout1] = phi2
    h = conv3x3_relu(x, w1_ref, b_c1)          # (N, 32)
    h = conv3x3_relu(h, w2_ref, b_c2)          # (N, 64)

    # fused linear: batched over P pixels (contract channels), reduce over P.
    h3 = h.reshape(P, batch, 2 * c2)                                  # (P, B, 64)
    part = jax.lax.dot_general(h3, lw_ref[...],
                               dimension_numbers=(((2,), (1,)), ((0,), (0,))),
                               preferred_element_type=f32)            # (P, B, 128)
    pre = jnp.sum(part, axis=0) + b_lin                               # (B, 128)

    def l2norm(v):
        ss = jnp.sum(v * v, axis=1, keepdims=True)
        return v * pl.reciprocal(jnp.sqrt(ss) + eps, approx=True)

    embed1 = l2norm(pre[:, :embed_size])       # phi1(s)
    embed2 = l2norm(pre[:, embed_size:])       # phi2(s' - s)

    # quantization: nearest (by inner product) normalized z-vector
    scores = jax.lax.dot_general(embed2, z_norm, (((1,), (1,)), ((), ())),
                                 preferred_element_type=f32)          # (B, n_z)
    maxv = jnp.max(scores, axis=1, keepdims=True)
    colz = jax.lax.broadcasted_iota(jnp.int32, scores.shape, 1)
    idx = jnp.min(jnp.where(scores == maxv, colz, n_z), axis=1, keepdims=True)
    onehot = (colz == idx).astype(f32)                                # (B, n_z)
    z_matrix = jnp.dot(onehot, z_norm, preferred_element_type=f32)    # (B, E)

    # inner product matrix (downscale_factor == 1) scaled by exp(scale)
    inner = jax.lax.dot_general(embed1, z_matrix, (((1,), (1,)), ((), ())),
                                preferred_element_type=f32)           # (B, B)
    out_ref[...] = jnp.exp(scale) * inner


# ---- glue: parameter setup + layout transforms + pallas_call -----------------
def init_params(key):
    ks = jax.random.split(key, 16)
    f32 = jnp.float32
    p = {}
    emb = jax.random.normal(ks[0], (DICT_SIZE, STATE_EMBED_SIZE), f32)
    # nn.Embedding(max_norm=1): rows renormed to L2 norm <= 1 on lookup.
    nrm = jnp.sqrt(jnp.sum(emb ** 2, axis=1, keepdims=True))
    p['emb_table'] = emb * jnp.minimum(1.0, 1.0 / nrm)

    def cw(k, cout, cin):
        return 0.1 * jax.random.normal(k, (cout, cin, 3, 3), f32)

    p['phi1_conv1_w'] = cw(ks[1], C1, STATE_EMBED_SIZE)
    p['phi1_conv1_b'] = 0.1 * jax.random.normal(ks[2], (C1,), f32)
    p['phi1_conv2_w'] = cw(ks[3], C2, C1)
    p['phi1_conv2_b'] = 0.1 * jax.random.normal(ks[4], (C2,), f32)
    p['phi1_linear_w'] = 0.05 * jax.random.normal(ks[5], (EMBED_SIZE, C2 * H * W), f32)
    p['phi1_linear_b'] = 0.05 * jax.random.normal(ks[6], (EMBED_SIZE,), f32)
    p['phi2_conv1_w'] = cw(ks[7], C1, STATE_EMBED_SIZE)
    p['phi2_conv1_b'] = 0.1 * jax.random.normal(ks[8], (C1,), f32)
    p['phi2_conv2_w'] = cw(ks[9], C2, C1)
    p['phi2_conv2_b'] = 0.1 * jax.random.normal(ks[10], (C2,), f32)
    p['phi2_linear_w'] = 0.05 * jax.random.normal(ks[11], (EMBED_SIZE, C2 * H * W), f32)
    p['phi2_linear_b'] = 0.05 * jax.random.normal(ks[12], (EMBED_SIZE,), f32)
    p['z_vectors'] = jax.random.normal(ks[13], (N_Z, EMBED_SIZE), f32)   # torch.randn
    p['scale'] = jnp.ones((1,), f32)                                     # torch.ones
    return p


def dssm_forward_pallas(s, s_prime, params, downscale_factor=1):
    # TODO(synk): downscale_factor > 1 (block-diagonal bmm) path and the
    # optional conv_embed (embed_conv_size is not None) branch are not
    # implemented; defaults of the module are covered.
    assert downscale_factor == 1
    batch = s.shape[0]
    P = H * W
    N = P * batch
    f32 = jnp.float32

    emb = params['emb_table']

    def to_rows(e):   # (B,H,W,C) -> (P*B, C), row = (h*W + w)*B + b
        return (e.reshape(batch, P, STATE_EMBED_SIZE)
                 .transpose(1, 0, 2)
                 .reshape(N, STATE_EMBED_SIZE))

    s_rows = to_rows(emb[s])
    d_rows = to_rows(emb[s_prime]) - s_rows
    x_fused = jnp.concatenate([s_rows, d_rows], axis=1)                 # (N, 6)

    masks = jnp.asarray(_build_tap_masks(H, W, batch))                  # (N, 16)

    def conv_w_fused(wa, wb):
        # (Cout,Cin,3,3) pair -> block-diagonal (9, Cin_a+Cin_b, Cout_a+Cout_b)
        coa, cia = wa.shape[0], wa.shape[1]
        cob, cib = wb.shape[0], wb.shape[1]
        wak = jnp.transpose(wa, (2, 3, 1, 0)).reshape(9, cia, coa)
        wbk = jnp.transpose(wb, (2, 3, 1, 0)).reshape(9, cib, cob)
        top = jnp.concatenate([wak, jnp.zeros((9, cia, cob), f32)], axis=2)
        bot = jnp.concatenate([jnp.zeros((9, cib, coa), f32), wbk], axis=2)
        return jnp.concatenate([top, bot], axis=1)

    def lin_w_fused(wa, wb):
        # torch (E, C2*H*W) CHW-flatten pair -> block-diagonal (P, 2*C2, 2*E)
        e = wa.shape[0]
        wap = jnp.transpose(wa.reshape(e, C2, P), (2, 1, 0))            # (P, C2, E)
        wbp = jnp.transpose(wb.reshape(e, C2, P), (2, 1, 0))
        z = jnp.zeros((P, C2, e), f32)
        top = jnp.concatenate([wap, z], axis=2)
        bot = jnp.concatenate([z, wbp], axis=2)
        return jnp.concatenate([top, bot], axis=1)

    w1 = conv_w_fused(params['phi1_conv1_w'], params['phi2_conv1_w'])   # (9, 6, 32)
    w2 = conv_w_fused(params['phi1_conv2_w'], params['phi2_conv2_w'])   # (9, 32, 64)
    lw = lin_w_fused(params['phi1_linear_w'], params['phi2_linear_w'])  # (25, 64, 128)

    zv = params['z_vectors']
    z_norm = zv / jnp.sqrt(jnp.sum(zv * zv, axis=1, keepdims=True))     # eps=0 (module)

    # Single lane-dense (8,128) tile: biases (rows 0-2), z_norm (rows 3-7,
    # lanes 0:64), raw scale (row 0, lane 127).
    aux = jnp.zeros((8, 128), f32)
    aux = aux.at[0, 0:2 * C1].set(jnp.concatenate([params['phi1_conv1_b'],
                                                   params['phi2_conv1_b']]))
    aux = aux.at[1, 0:2 * C2].set(jnp.concatenate([params['phi1_conv2_b'],
                                                   params['phi2_conv2_b']]))
    aux = aux.at[2, 0:2 * EMBED_SIZE].set(jnp.concatenate([params['phi1_linear_b'],
                                                           params['phi2_linear_b']]))
    aux = aux.at[3:3 + N_Z, 0:EMBED_SIZE].set(z_norm)
    aux = aux.at[0, 127].set(params['scale'][0])

    kernel = functools.partial(_dssm_kernel, height=H, width=W, batch=batch,
                               eps=EPS, c1=C1, c2=C2, embed_size=EMBED_SIZE,
                               n_z=N_Z)
    vmem = lambda: pl.BlockSpec(memory_space=pltpu.MemorySpace.VMEM)
    # TODO(synk): if this is ever invoked over many (s, s') problems at once,
    # add a leading "parallel" grid axis so v7x's second TensorCore is used.
    return pl.pallas_call(
        kernel,
        out_shape=jax.ShapeDtypeStruct((batch, batch), jnp.float32),
        in_specs=[vmem() for _ in range(6)],
        out_specs=vmem(),
    )(x_fused, masks, w1, w2, lw, aux)


# ---- pure-JAX reference (mirrors the PyTorch forward) -------------------------
def dssm_forward_ref(s, s_prime, params):
    emb = params['emb_table']

    def embed(x):
        return jnp.transpose(emb[x], (0, 3, 1, 2))                    # NCHW

    def conv(x, w, b):
        y = jax.lax.conv_general_dilated(
            x, w, (1, 1), [(1, 1), (1, 1)],
            dimension_numbers=('NCHW', 'OIHW', 'NCHW'))
        return y + b[None, :, None, None]

    def phi(x, w1, b1, w2, b2, lw, lb):
        x = jax.nn.relu(conv(x, w1, b1))
        x = jax.nn.relu(conv(x, w2, b2))
        x = x.reshape(x.shape[0], -1)                                  # CHW flatten
        x = x @ lw.T + lb
        return x / (jnp.sqrt(jnp.sum(x ** 2, axis=1, keepdims=True)) + EPS)

    se = embed(s)
    spe = embed(s_prime)
    e1 = phi(se, params['phi1_conv1_w'], params['phi1_conv1_b'],
             params['phi1_conv2_w'], params['phi1_conv2_b'],
             params['phi1_linear_w'], params['phi1_linear_b'])
    e2 = phi(spe - se, params['phi2_conv1_w'], params['phi2_conv1_b'],
             params['phi2_conv2_w'], params['phi2_conv2_b'],
             params['phi2_linear_w'], params['phi2_linear_b'])
    z = params['z_vectors']
    zn = z / jnp.sqrt(jnp.sum(z ** 2, axis=1, keepdims=True))
    inds = jnp.argmax(e2 @ zn.T, axis=1)
    zm = zn[inds]
    return jnp.exp(params['scale'][0]) * (e1 @ zm.T)


# ---- main ---------------------------------------------------------------------
if __name__ == "__main__":
    key = jax.random.PRNGKey(0)
    kp, ks, ksp = jax.random.split(key, 3)
    params = init_params(kp)

    batch = 8
    s = jax.random.randint(ks, (batch, H, W), 0, DICT_SIZE, dtype=jnp.int32)
    s_prime = jax.random.randint(ksp, (batch, H, W), 0, DICT_SIZE, dtype=jnp.int32)

    out = dssm_forward_pallas(s, s_prime, params)
    out = jax.block_until_ready(out)

    ref = jax.block_until_ready(dssm_forward_ref(s, s_prime, params))
    np.testing.assert_allclose(np.asarray(out), np.asarray(ref),
                               rtol=5e-2, atol=5e-2)
    print("KERNEL_OK")
</pallas_src>

<mosaic_0001>
module attributes {stable_mosaic.version = 11 : i64} {
  func.func @_dssm_kernel(%arg0: memref<200x6xf32, #tpu.memory_space<vmem>>, %arg1: memref<200x16xf32, #tpu.memory_space<vmem>>, %arg2: memref<9x6x32xf32, #tpu.memory_space<vmem>>, %arg3: memref<9x32x64xf32, #tpu.memory_space<vmem>>, %arg4: memref<25x64x128xf32, #tpu.memory_space<vmem>>, %arg5: memref<8x128xf32, #tpu.memory_space<vmem>>, %arg6: memref<8x8xf32, #tpu.memory_space<vmem>>) attributes {dimension_semantics = [], scalar_prefetch = 0 : i64, scratch_operands = 0 : i64, tpu.core_type = #tpu.core_type<tc>} {
    %c0 = arith.constant 0 : index
    %c0_0 = arith.constant 0 : index
    %0 = vector.load %arg0[%c0, %c0_0] : memref<200x6xf32, #tpu.memory_space<vmem>>, vector<200x6xf32>
    %c0_1 = arith.constant 0 : index
    %c0_2 = arith.constant 0 : index
    %1 = vector.load %arg1[%c0_1, %c0_2] : memref<200x16xf32, #tpu.memory_space<vmem>>, vector<200x16xf32>
    %c0_3 = arith.constant 0 : index
    %c0_4 = arith.constant 0 : index
    %2 = vector.load %arg5[%c0_3, %c0_4] : memref<8x128xf32, #tpu.memory_space<vmem>>, vector<8x128xf32>
    %3 = vector.extract_strided_slice %2 {offsets = [0, 0], sizes = [1, 32], strides = [1, 1]} : vector<8x128xf32> to vector<1x32xf32>
    %4 = vector.extract_strided_slice %2 {offsets = [1, 0], sizes = [1, 64], strides = [1, 1]} : vector<8x128xf32> to vector<1x64xf32>
    %5 = vector.extract_strided_slice %2 {offsets = [2, 0], sizes = [1, 128], strides = [1, 1]} : vector<8x128xf32> to vector<1x128xf32>
    %6 = vector.extract_strided_slice %2 {offsets = [3, 0], sizes = [5, 64], strides = [1, 1]} : vector<8x128xf32> to vector<5x64xf32>
    %7 = vector.extract_strided_slice %2 {offsets = [0, 127], sizes = [1, 1], strides = [1, 1]} : vector<8x128xf32> to vector<1x1xf32>
    %c48_i32 = arith.constant 48 : i32
    %8 = tpu.dynamic_rotate %0 by %c48_i32 dim 0 : vector<200x6xf32>, i32 -> vector<200x6xf32>
    %9 = vector.extract_strided_slice %1 {offsets = [0, 0], sizes = [200, 1], strides = [1, 1]} : vector<200x16xf32> to vector<200x1xf32>
    %10 = vector.broadcast %9 : vector<200x1xf32> to vector<200x6xf32>
    %11 = arith.mulf %8, %10 : vector<200x6xf32>
    %c0_5 = arith.constant 0 : index
    %c0_6 = arith.constant 0 : index
    %c0_7 = arith.constant 0 : index
    %12 = vector.load %arg2[%c0_5, %c0_6, %c0_7] : memref<9x6x32xf32, #tpu.memory_space<vmem>>, vector<1x6x32xf32>
    %13 = vector.shape_cast %12 : vector<1x6x32xf32> to vector<6x32xf32>
    %cst = arith.constant dense<0.000000e+00> : vector<200x32xf32>
    %14 = tpu.matmul %11, %13, %cst {dimension_numbers = #tpu.dot_dimension_numbers<[1], [0], [0], [1], [0, 0, 1, 1], [], []>} : vector<200x6xf32>, vector<6x32xf32>, vector<200x32xf32> -> vector<200x32xf32>
    %c40_i32 = arith.constant 40 : i32
    %15 = tpu.dynamic_rotate %0 by %c40_i32 dim 0 : vector<200x6xf32>, i32 -> vector<200x6xf32>
    %16 = vector.extract_strided_slice %1 {offsets = [0, 1], sizes = [200, 1], strides = [1, 1]} : vector<200x16xf32> to vector<200x1xf32>
    %17 = vector.broadcast %16 : vector<200x1xf32> to vector<200x6xf32>
    %18 = arith.mulf %15, %17 : vector<200x6xf32>
    %c1 = arith.constant 1 : index
    %c0_8 = arith.constant 0 : index
    %c0_9 = arith.constant 0 : index
    %19 = vector.load %arg2[%c1, %c0_8, %c0_9] : memref<9x6x32xf32, #tpu.memory_space<vmem>>, vector<1x6x32xf32>
    %20 = vector.shape_cast %19 : vector<1x6x32xf32> to vector<6x32xf32>
    %cst_10 = arith.constant dense<0.000000e+00> : vector<200x32xf32>
    %21 = tpu.matmul %18, %20, %cst_10 {dimension_numbers = #tpu.dot_dimension_numbers<[1], [0], [0], [1], [0, 0, 1, 1], [], []>} : vector<200x6xf32>, vector<6x32xf32>, vector<200x32xf32> -> vector<200x32xf32>
    %22 = arith.addf %14, %21 : vector<200x32xf32>
    %c32_i32 = arith.constant 32 : i32
    %23 = tpu.dynamic_rotate %0 by %c32_i32 dim 0 : vector<200x6xf32>, i32 -> vector<200x6xf32>
    %24 = vector.extract_strided_slice %1 {offsets = [0, 2], sizes = [200, 1], strides = [1, 1]} : vector<200x16xf32> to vector<200x1xf32>
    %25 = vector.broadcast %24 : vector<200x1xf32> to vector<200x6xf32>
    %26 = arith.mulf %23, %25 : vector<200x6xf32>
    %c2 = arith.constant 2 : index
    %c0_11 = arith.constant 0 : index
    %c0_12 = arith.constant 0 : index
    %27 = vector.load %arg2[%c2, %c0_11, %c0_12] : memref<9x6x32xf32, #tpu.memory_space<vmem>>, vector<1x6x32xf32>
    %28 = vector.shape_cast %27 : vector<1x6x32xf32> to vector<6x32xf32>
    %cst_13 = arith.constant dense<0.000000e+00> : vector<200x32xf32>
    %29 = tpu.matmul %26, %28, %cst_13 {dimension_numbers = #tpu.dot_dimension_numbers<[1], [0], [0], [1], [0, 0, 1, 1], [], []>} : vector<200x6xf32>, vector<6x32xf32>, vector<200x32xf32> -> vector<200x32xf32>
    %30 = arith.addf %22, %29 : vector<200x32xf32>
    %c8_i32 = arith.constant 8 : i32
    %31 = tpu.dynamic_rotate %0 by %c8_i32 dim 0 : vector<200x6xf32>, i32 -> vector<200x6xf32>
    %32 = vector.extract_strided_slice %1 {offsets = [0, 3], sizes = [200, 1], strides = [1, 1]} : vector<200x16xf32> to vector<200x1xf32>
    %33 = vector.broadcast %32 : vector<200x1xf32> to vector<200x6xf32>
    %34 = arith.mulf %31, %33 : vector<200x6xf32>
    %c3 = arith.constant 3 : index
    %c0_14 = arith.constant 0 : index
    %c0_15 = arith.constant 0 : index
    %35 = vector.load %arg2[%c3, %c0_14, %c0_15] : memref<9x6x32xf32, #tpu.memory_space<vmem>>, vector<1x6x32xf32>
    %36 = vector.shape_cast %35 : vector<1x6x32xf32> to vector<6x32xf32>
    %cst_16 = arith.constant dense<0.000000e+00> : vector<200x32xf32>
    %37 = tpu.matmul %34, %36, %cst_16 {dimension_numbers = #tpu.dot_dimension_numbers<[1], [0], [0], [1], [0, 0, 1, 1], [], []>} : vector<200x6xf32>, vector<6x32xf32>, vector<200x32xf32> -> vector<200x32xf32>
    %38 = arith.addf %30, %37 : vector<200x32xf32>
    %c4 = arith.constant 4 : index
    %c0_17 = arith.constant 0 : index
    %c0_18 = arith.constant 0 : index
    %39 = vector.load %arg2[%c4, %c0_17, %c0_18] : memref<9x6x32xf32, #tpu.memory_space<vmem>>, vector<1x6x32xf32>
    %40 = vector.shape_cast %39 : vector<1x6x32xf32> to vector<6x32xf32>
    %cst_19 = arith.constant dense<0.000000e+00> : vector<200x32xf32>
    %41 = tpu.matmul %0, %40, %cst_19 {dimension_numbers = #tpu.dot_dimension_numbers<[1], [0], [0], [1], [0, 0, 1, 1], [], []>} : vector<200x6xf32>, vector<6x32xf32>, vector<200x32xf32> -> vector<200x32xf32>
    %42 = arith.addf %38, %41 : vector<200x32xf32>
    %c192_i32 = arith.constant 192 : i32
    %43 = tpu.dynamic_rotate %0 by %c192_i32 dim 0 : vector<200x6xf32>, i32 -> vector<200x6xf32>
    %44 = vector.extract_strided_slice %1 {offsets = [0, 5], sizes = [200, 1], strides = [1, 1]} : vector<200x16xf32> to vector<200x1xf32>
    %45 = vector.broadcast %44 : vector<200x1xf32> to vector<200x6xf32>
    %46 = arith.mulf %43, %45 : vector<200x6xf32>
    %c5 = arith.constant 5 : index
    %c0_20 = arith.constant 0 : index
    %c0_21 = arith.constant 0 : index
    %47 = vector.load %arg2[%c5, %c0_20, %c0_21] : memref<9x6x32xf32, #tpu.memory_space<vmem>>, vector<1x6x32xf32>
    %48 = vector.shape_cast %47 : vector<1x6x32xf32> to vector<6x32xf32>
    %cst_22 = arith.constant dense<0.000000e+00> : vector<200x32xf32>
    %49 = tpu.matmul %46, %48, %cst_22 {dimension_numbers = #tpu.dot_dimension_numbers<[1], [0], [0], [1], [0, 0, 1, 1], [], []>} : vector<200x6xf32>, vector<6x32xf32>, vector<200x32xf32> -> vector<200x32xf32>
    %50 = arith.addf %42, %49 : vector<200x32xf32>
    %c168_i32 = arith.constant 168 : i32
    %51 = tpu.dynamic_rotate %0 by %c168_i32 dim 0 : vector<200x6xf32>, i32 -> vector<200x6xf32>
    %52 = vector.extract_strided_slice %1 {offsets = [0, 6], sizes = [200, 1], strides = [1, 1]} : vector<200x16xf32> to vector<200x1xf32>
    %53 = vector.broadcast %52 : vector<200x1xf32> to vector<200x6xf32>
    %54 = arith.mulf %51, %53 : vector<200x6xf32>
    %c6 = arith.constant 6 : index
    %c0_23 = arith.constant 0 : index
    %c0_24 = arith.constant 0 : index
    %55 = vector.load %arg2[%c6, %c0_23, %c0_24] : memref<9x6x32xf32, #tpu.memory_space<vmem>>, vector<1x6x32xf32>
    %56 = vector.shape_cast %55 : vector<1x6x32xf32> to vector<6x32xf32>
    %cst_25 = arith.constant dense<0.000000e+00> : vector<200x32xf32>
    %57 = tpu.matmul %54, %56, %cst_25 {dimension_numbers = #tpu.dot_dimension_numbers<[1], [0], [0], [1], [0, 0, 1, 1], [], []>} : vector<200x6xf32>, vector<6x32xf32>, vector<200x32xf32> -> vector<200x32xf32>
    %58 = arith.addf %50, %57 : vector<200x32xf32>
    %c160_i32 = arith.constant 160 : i32
    %59 = tpu.dynamic_rotate %0 by %c160_i32 dim 0 : vector<200x6xf32>, i32 -> vector<200x6xf32>
    %60 = vector.extract_strided_slice %1 {offsets = [0, 7], sizes = [200, 1], strides = [1, 1]} : vector<200x16xf32> to vector<200x1xf32>
    %61 = vector.broadcast %60 : vector<200x1xf32> to vector<200x6xf32>
    %62 = arith.mulf %59, %61 : vector<200x6xf32>
    %c7 = arith.constant 7 : index
    %c0_26 = arith.constant 0 : index
    %c0_27 = arith.constant 0 : index
    %63 = vector.load %arg2[%c7, %c0_26, %c0_27] : memref<9x6x32xf32, #tpu.memory_space<vmem>>, vector<1x6x32xf32>
    %64 = vector.shape_cast %63 : vector<1x6x32xf32> to vector<6x32xf32>
    %cst_28 = arith.constant dense<0.000000e+00> : vector<200x32xf32>
    %65 = tpu.matmul %62, %64, %cst_28 {dimension_numbers = #tpu.dot_dimension_numbers<[1], [0], [0], [1], [0, 0, 1, 1], [], []>} : vector<200x6xf32>, vector<6x32xf32>, vector<200x32xf32> -> vector<200x32xf32>
    %66 = arith.addf %58, %65 : vector<200x32xf32>
    %c152_i32 = arith.constant 152 : i32
    %67 = tpu.dynamic_rotate %0 by %c152_i32 dim 0 : vector<200x6xf32>, i32 -> vector<200x6xf32>
    %68 = vector.extract_strided_slice %1 {offsets = [0, 8], sizes = [200, 1], strides = [1, 1]} : vector<200x16xf32> to vector<200x1xf32>
    %69 = vector.broadcast %68 : vector<200x1xf32> to vector<200x6xf32>
    %70 = arith.mulf %67, %69 : vector<200x6xf32>
    %c8 = arith.constant 8 : index
    %c0_29 = arith.constant 0 : index
    %c0_30 = arith.constant 0 : index
    %71 = vector.load %arg2[%c8, %c0_29, %c0_30] : memref<9x6x32xf32, #tpu.memory_space<vmem>>, vector<1x6x32xf32>
    %72 = vector.shape_cast %71 : vector<1x6x32xf32> to vector<6x32xf32>
    %cst_31 = arith.constant dense<0.000000e+00> : vector<200x32xf32>
    %73 = tpu.matmul %70, %72, %cst_31 {dimension_numbers = #tpu.dot_dimension_numbers<[1], [0], [0], [1], [0, 0, 1, 1], [], []>} : vector<200x6xf32>, vector<6x32xf32>, vector<200x32xf32> -> vector<200x32xf32>
    %74 = arith.addf %66, %73 : vector<200x32xf32>
    %75 = vector.broadcast %3 : vector<1x32xf32> to vector<200x32xf32>
    %76 = arith.addf %74, %75 : vector<200x32xf32>
    %cst_32 = arith.constant 0.000000e+00 : f32
    %77 = vector.broadcast %cst_32 : f32 to vector<200x32xf32>
    %78 = arith.maximumf %76, %77 : vector<200x32xf32>
    %c48_i32_33 = arith.constant 48 : i32
    %79 = tpu.dynamic_rotate %78 by %c48_i32_33 dim 0 : vector<200x32xf32>, i32 -> vector<200x32xf32>
    %80 = vector.extract_strided_slice %1 {offsets = [0, 0], sizes = [200, 1], strides = [1, 1]} : vector<200x16xf32> to vector<200x1xf32>
    %81 = vector.broadcast %80 : vector<200x1xf32> to vector<200x32xf32>
    %82 = arith.mulf %79, %81 : vector<200x32xf32>
    %c0_34 = arith.constant 0 : index
    %c0_35 = arith.constant 0 : index
    %c0_36 = arith.constant 0 : index
    %83 = vector.load %arg3[%c0_34, %c0_35, %c0_36] : memref<9x32x64xf32, #tpu.memory_space<vmem>>, vector<1x32x64xf32>
    %84 = vector.shape_cast %83 : vector<1x32x64xf32> to vector<32x64xf32>
    %cst_37 = arith.constant dense<0.000000e+00> : vector<200x64xf32>
    %85 = tpu.matmul %82, %84, %cst_37 {dimension_numbers = #tpu.dot_dimension_numbers<[1], [0], [0], [1], [0, 0, 1, 1], [], []>} : vector<200x32xf32>, vector<32x64xf32>, vector<200x64xf32> -> vector<200x64xf32>
    %c40_i32_38 = arith.constant 40 : i32
    %86 = tpu.dynamic_rotate %78 by %c40_i32_38 dim 0 : vector<200x32xf32>, i32 -> vector<200x32xf32>
    %87 = vector.extract_strided_slice %1 {offsets = [0, 1], sizes = [200, 1], strides = [1, 1]} : vector<200x16xf32> to vector<200x1xf32>
    %88 = vector.broadcast %87 : vector<200x1xf32> to vector<200x32xf32>
    %89 = arith.mulf %86, %88 : vector<200x32xf32>
    %c1_39 = arith.constant 1 : index
    %c0_40 = arith.constant 0 : index
    %c0_41 = arith.constant 0 : index
    %90 = vector.load %arg3[%c1_39, %c0_40, %c0_41] : memref<9x32x64xf32, #tpu.memory_space<vmem>>, vector<1x32x64xf32>
    %91 = vector.shape_cast %90 : vector<1x32x64xf32> to vector<32x64xf32>
    %cst_42 = arith.constant dense<0.000000e+00> : vector<200x64xf32>
    %92 = tpu.matmul %89, %91, %cst_42 {dimension_numbers = #tpu.dot_dimension_numbers<[1], [0], [0], [1], [0, 0, 1, 1], [], []>} : vector<200x32xf32>, vector<32x64xf32>, vector<200x64xf32> -> vector<200x64xf32>
    %93 = arith.addf %85, %92 : vector<200x64xf32>
    %c32_i32_43 = arith.constant 32 : i32
    %94 = tpu.dynamic_rotate %78 by %c32_i32_43 dim 0 : vector<200x32xf32>, i32 -> vector<200x32xf32>
    %95 = vector.extract_strided_slice %1 {offsets = [0, 2], sizes = [200, 1], strides = [1, 1]} : vector<200x16xf32> to vector<200x1xf32>
    %96 = vector.broadcast %95 : vector<200x1xf32> to vector<200x32xf32>
    %97 = arith.mulf %94, %96 : vector<200x32xf32>
    %c2_44 = arith.constant 2 : index
    %c0_45 = arith.constant 0 : index
    %c0_46 = arith.constant 0 : index
    %98 = vector.load %arg3[%c2_44, %c0_45, %c0_46] : memref<9x32x64xf32, #tpu.memory_space<vmem>>, vector<1x32x64xf32>
    %99 = vector.shape_cast %98 : vector<1x32x64xf32> to vector<32x64xf32>
    %cst_47 = arith.constant dense<0.000000e+00> : vector<200x64xf32>
    %100 = tpu.matmul %97, %99, %cst_47 {dimension_numbers = #tpu.dot_dimension_numbers<[1], [0], [0], [1], [0, 0, 1, 1], [], []>} : vector<200x32xf32>, vector<32x64xf32>, vector<200x64xf32> -> vector<200x64xf32>
    %101 = arith.addf %93, %100 : vector<200x64xf32>
    %c8_i32_48 = arith.constant 8 : i32
    %102 = tpu.dynamic_rotate %78 by %c8_i32_48 dim 0 : vector<200x32xf32>, i32 -> vector<200x32xf32>
    %103 = vector.extract_strided_slice %1 {offsets = [0, 3], sizes = [200, 1], strides = [1, 1]} : vector<200x16xf32> to vector<200x1xf32>
    %104 = vector.broadcast %103 : vector<200x1xf32> to vector<200x32xf32>
    %105 = arith.mulf %102, %104 : vector<200x32xf32>
    %c3_49 = arith.constant 3 : index
    %c0_50 = arith.constant 0 : index
    %c0_51 = arith.constant 0 : index
    %106 = vector.load %arg3[%c3_49, %c0_50, %c0_51] : memref<9x32x64xf32, #tpu.memory_space<vmem>>, vector<1x32x64xf32>
    %107 = vector.shape_cast %106 : vector<1x32x64xf32> to vector<32x64xf32>
    %cst_52 = arith.constant dense<0.000000e+00> : vector<200x64xf32>
    %108 = tpu.matmul %105, %107, %cst_52 {dimension_numbers = #tpu.dot_dimension_numbers<[1], [0], [0], [1], [0, 0, 1, 1], [], []>} : vector<200x32xf32>, vector<32x64xf32>, vector<200x64xf32> -> vector<200x64xf32>
    %109 = arith.addf %101, %108 : vector<200x64xf32>
    %c4_53 = arith.constant 4 : index
    %c0_54 = arith.constant 0 : index
    %c0_55 = arith.constant 0 : index
    %110 = vector.load %arg3[%c4_53, %c0_54, %c0_55] : memref<9x32x64xf32, #tpu.memory_space<vmem>>, vector<1x32x64xf32>
    %111 = vector.shape_cast %110 : vector<1x32x64xf32> to vector<32x64xf32>
    %cst_56 = arith.constant dense<0.000000e+00> : vector<200x64xf32>
    %112 = tpu.matmul %78, %111, %cst_56 {dimension_numbers = #tpu.dot_dimension_numbers<[1], [0], [0], [1], [0, 0, 1, 1], [], []>} : vector<200x32xf32>, vector<32x64xf32>, vector<200x64xf32> -> vector<200x64xf32>
    %113 = arith.addf %109, %112 : vector<200x64xf32>
    %c192_i32_57 = arith.constant 192 : i32
    %114 = tpu.dynamic_rotate %78 by %c192_i32_57 dim 0 : vector<200x32xf32>, i32 -> vector<200x32xf32>
    %115 = vector.extract_strided_slice %1 {offsets = [0, 5], sizes = [200, 1], strides = [1, 1]} : vector<200x16xf32> to vector<200x1xf32>
    %116 = vector.broadcast %115 : vector<200x1xf32> to vector<200x32xf32>
    %117 = arith.mulf %114, %116 : vector<200x32xf32>
    %c5_58 = arith.constant 5 : index
    %c0_59 = arith.constant 0 : index
    %c0_60 = arith.constant 0 : index
    %118 = vector.load %arg3[%c5_58, %c0_59, %c0_60] : memref<9x32x64xf32, #tpu.memory_space<vmem>>, vector<1x32x64xf32>
    %119 = vector.shape_cast %118 : vector<1x32x64xf32> to vector<32x64xf32>
    %cst_61 = arith.constant dense<0.000000e+00> : vector<200x64xf32>
    %120 = tpu.matmul %117, %119, %cst_61 {dimension_numbers = #tpu.dot_dimension_numbers<[1], [0], [0], [1], [0, 0, 1, 1], [], []>} : vector<200x32xf32>, vector<32x64xf32>, vector<200x64xf32> -> vector<200x64xf32>
    %121 = arith.addf %113, %120 : vector<200x64xf32>
    %c168_i32_62 = arith.constant 168 : i32
    %122 = tpu.dynamic_rotate %78 by %c168_i32_62 dim 0 : vector<200x32xf32>, i32 -> vector<200x32xf32>
    %123 = vector.extract_strided_slice %1 {offsets = [0, 6], sizes = [200, 1], strides = [1, 1]} : vector<200x16xf32> to vector<200x1xf32>
    %124 = vector.broadcast %123 : vector<200x1xf32> to vector<200x32xf32>
    %125 = arith.mulf %122, %124 : vector<200x32xf32>
    %c6_63 = arith.constant 6 : index
    %c0_64 = arith.constant 0 : index
    %c0_65 = arith.constant 0 : index
    %126 = vector.load %arg3[%c6_63, %c0_64, %c0_65] : memref<9x32x64xf32, #tpu.memory_space<vmem>>, vector<1x32x64xf32>
    %127 = vector.shape_cast %126 : vector<1x32x64xf32> to vector<32x64xf32>
    %cst_66 = arith.constant dense<0.000000e+00> : vector<200x64xf32>
    %128 = tpu.matmul %125, %127, %cst_66 {dimension_numbers = #tpu.dot_dimension_numbers<[1], [0], [0], [1], [0, 0, 1, 1], [], []>} : vector<200x32xf32>, vector<32x64xf32>, vector<200x64xf32> -> vector<200x64xf32>
    %129 = arith.addf %121, %128 : vector<200x64xf32>
    %c160_i32_67 = arith.constant 160 : i32
    %130 = tpu.dynamic_rotate %78 by %c160_i32_67 dim 0 : vector<200x32xf32>, i32 -> vector<200x32xf32>
    %131 = vector.extract_strided_slice %1 {offsets = [0, 7], sizes = [200, 1], strides = [1, 1]} : vector<200x16xf32> to vector<200x1xf32>
    %132 = vector.broadcast %131 : vector<200x1xf32> to vector<200x32xf32>
    %133 = arith.mulf %130, %132 : vector<200x32xf32>
    %c7_68 = arith.constant 7 : index
    %c0_69 = arith.constant 0 : index
    %c0_70 = arith.constant 0 : index
    %134 = vector.load %arg3[%c7_68, %c0_69, %c0_70] : memref<9x32x64xf32, #tpu.memory_space<vmem>>, vector<1x32x64xf32>
    %135 = vector.shape_cast %134 : vector<1x32x64xf32> to vector<32x64xf32>
    %cst_71 = arith.constant dense<0.000000e+00> : vector<200x64xf32>
    %136 = tpu.matmul %133, %135, %cst_71 {dimension_numbers = #tpu.dot_dimension_numbers<[1], [0], [0], [1], [0, 0, 1, 1], [], []>} : vector<200x32xf32>, vector<32x64xf32>, vector<200x64xf32> -> vector<200x64xf32>
    %137 = arith.addf %129, %136 : vector<200x64xf32>
    %c152_i32_72 = arith.constant 152 : i32
    %138 = tpu.dynamic_rotate %78 by %c152_i32_72 dim 0 : vector<200x32xf32>, i32 -> vector<200x32xf32>
    %139 = vector.extract_strided_slice %1 {offsets = [0, 8], sizes = [200, 1], strides = [1, 1]} : vector<200x16xf32> to vector<200x1xf32>
    %140 = vector.broadcast %139 : vector<200x1xf32> to vector<200x32xf32>
    %141 = arith.mulf %138, %140 : vector<200x32xf32>
    %c8_73 = arith.constant 8 : index
    %c0_74 = arith.constant 0 : index
    %c0_75 = arith.constant 0 : index
    %142 = vector.load %arg3[%c8_73, %c0_74, %c0_75] : memref<9x32x64xf32, #tpu.memory_space<vmem>>, vector<1x32x64xf32>
    %143 = vector.shape_cast %142 : vector<1x32x64xf32> to vector<32x64xf32>
    %cst_76 = arith.constant dense<0.000000e+00> : vector<200x64xf32>
    %144 = tpu.matmul %141, %143, %cst_76 {dimension_numbers = #tpu.dot_dimension_numbers<[1], [0], [0], [1], [0, 0, 1, 1], [], []>} : vector<200x32xf32>, vector<32x64xf32>, vector<200x64xf32> -> vector<200x64xf32>
    %145 = arith.addf %137, %144 : vector<200x64xf32>
    %146 = vector.broadcast %4 : vector<1x64xf32> to vector<200x64xf32>
    %147 = arith.addf %145, %146 : vector<200x64xf32>
    %cst_77 = arith.constant 0.000000e+00 : f32
    %148 = vector.broadcast %cst_77 : f32 to vector<200x64xf32>
    %149 = arith.maximumf %147, %148 : vector<200x64xf32>
    %150 = vector.shape_cast %149 : vector<200x64xf32> to vector<25x8x64xf32>
    %c0_78 = arith.constant 0 : index
    %c0_79 = arith.constant 0 : index
    %c0_80 = arith.constant 0 : index
    %151 = vector.load %arg4[%c0_78, %c0_79, %c0_80] : memref<25x64x128xf32, #tpu.memory_space<vmem>>, vector<25x64x128xf32>
    %cst_81 = arith.constant dense<0.000000e+00> : vector<25x8x128xf32>
    %152 = tpu.matmul %150, %151, %cst_81 {dimension_numbers = #tpu.dot_dimension_numbers<[2], [1], [1], [2], [0, 0, 0, 1, 1, 2], [0], [0]>} : vector<25x8x64xf32>, vector<25x64x128xf32>, vector<25x8x128xf32> -> vector<25x8x128xf32>
    %cst_82 = arith.constant dense<0.000000e+00> : vector<8x128xf32>
    %153 = vector.multi_reduction <add>, %152, %cst_82 [0] : vector<25x8x128xf32> to vector<8x128xf32>
    %154 = vector.broadcast %5 : vector<1x128xf32> to vector<8x128xf32>
    %155 = arith.addf %153, %154 : vector<8x128xf32>
    %156 = vector.extract_strided_slice %155 {offsets = [0, 0], sizes = [8, 64], strides = [1, 1]} : vector<8x128xf32> to vector<8x64xf32>
    %157 = arith.mulf %156, %156 : vector<8x64xf32>
    %cst_83 = arith.constant dense<0.000000e+00> : vector<8xf32>
    %158 = vector.multi_reduction <add>, %157, %cst_83 [1] : vector<8x64xf32> to vector<8xf32>
    %159 = vector.shape_cast %158 : vector<8xf32> to vector<8x1xf32>
    %160 = math.sqrt %159 : vector<8x1xf32>
    %cst_84 = arith.constant 9.99999974E-5 : f32
    %161 = vector.broadcast %cst_84 : f32 to vector<8x1xf32>
    %162 = arith.addf %160, %161 : vector<8x1xf32>
    %163 = tpu.reciprocal %162 {approx = true} : vector<8x1xf32> -> vector<8x1xf32>
    %164 = vector.broadcast %163 : vector<8x1xf32> to vector<8x64xf32>
    %165 = arith.mulf %156, %164 : vector<8x64xf32>
    %166 = vector.extract_strided_slice %155 {offsets = [0, 64], sizes = [8, 64], strides = [1, 1]} : vector<8x128xf32> to vector<8x64xf32>
    %167 = arith.mulf %166, %166 : vector<8x64xf32>
    %cst_85 = arith.constant dense<0.000000e+00> : vector<8xf32>
    %168 = vector.multi_reduction <add>, %167, %cst_85 [1] : vector<8x64xf32> to vector<8xf32>
    %169 = vector.shape_cast %168 : vector<8xf32> to vector<8x1xf32>
    %170 = math.sqrt %169 : vector<8x1xf32>
    %cst_86 = arith.constant 9.99999974E-5 : f32
    %171 = vector.broadcast %cst_86 : f32 to vector<8x1xf32>
    %172 = arith.addf %170, %171 : vector<8x1xf32>
    %173 = tpu.reciprocal %172 {approx = true} : vector<8x1xf32> -> vector<8x1xf32>
    %174 = vector.broadcast %173 : vector<8x1xf32> to vector<8x64xf32>
    %175 = arith.mulf %166, %174 : vector<8x64xf32>
    %cst_87 = arith.constant dense<0.000000e+00> : vector<8x5xf32>
    %176 = tpu.matmul %175, %6, %cst_87 {dimension_numbers = #tpu.dot_dimension_numbers<[1], [1], [0], [0], [0, 0, 1, 0], [], []>} : vector<8x64xf32>, vector<5x64xf32>, vector<8x5xf32> -> vector<8x5xf32>
    %cst_88 = arith.constant dense<0xFF800000> : vector<8xf32>
    %177 = vector.multi_reduction <maximumf>, %176, %cst_88 [1] : vector<8x5xf32> to vector<8xf32>
    %178 = vector.shape_cast %177 : vector<8xf32> to vector<8x1xf32>
    %179 = tpu.iota {dimensions = array<i32: 1>} : vector<8x5xi32>
    %180 = vector.broadcast %178 : vector<8x1xf32> to vector<8x5xf32>
    %181 = arith.cmpf oeq, %176, %180 : vector<8x5xf32>
    %c5_i32 = arith.constant 5 : i32
    %182 = vector.broadcast %c5_i32 : i32 to vector<8x5xi32>
    %183 = arith.select %181, %179, %182 : vector<8x5xi1>, vector<8x5xi32>
    %cst_89 = arith.constant dense<2147483647> : vector<8xi32>
    %184 = vector.multi_reduction <minsi>, %183, %cst_89 [1] : vector<8x5xi32> to vector<8xi32>
    %185 = vector.shape_cast %184 : vector<8xi32> to vector<8x1xi32>
    %186 = vector.broadcast %185 : vector<8x1xi32> to vector<8x5xi32>
    %187 = arith.cmpi eq, %179, %186 : vector<8x5xi32>
    %188 = arith.extui %187 : vector<8x5xi1> to vector<8x5xi32>
    %189 = arith.sitofp %188 : vector<8x5xi32> to vector<8x5xf32>
    %cst_90 = arith.constant dense<0.000000e+00> : vector<8x64xf32>
    %190 = tpu.matmul %189, %6, %cst_90 {dimension_numbers = #tpu.dot_dimension_numbers<[1], [0], [0], [1], [0, 0, 1, 1], [], []>} : vector<8x5xf32>, vector<5x64xf32>, vector<8x64xf32> -> vector<8x64xf32>
    %cst_91 = arith.constant dense<0.000000e+00> : vector<8x8xf32>
    %191 = tpu.matmul %165, %190, %cst_91 {dimension_numbers = #tpu.dot_dimension_numbers<[1], [1], [0], [0], [0, 0, 1, 0], [], []>} : vector<8x64xf32>, vector<8x64xf32>, vector<8x8xf32> -> vector<8x8xf32>
    %192 = math.exp %7 : vector<1x1xf32>
    %193 = vector.broadcast %192 : vector<1x1xf32> to vector<8x8xf32>
    %194 = arith.mulf %193, %191 : vector<8x8xf32>
    %c0_92 = arith.constant 0 : index
    %c0_93 = arith.constant 0 : index
    %195 = vector.load %arg6[%c0_92, %c0_93] : memref<8x8xf32, #tpu.memory_space<vmem>>, vector<8x8xf32>
    tpu.vector_store %arg6[%c0_92, %c0_93], %194 {strides = array<i32>} : memref<8x8xf32, #tpu.memory_space<vmem>>, vector<8x8xf32>,
    return
  }
}

</mosaic_0001>

<llo_original>
// kernel: tpu_custom_call.1
$region0: #{tpu_custom_call.1}
  #allocation0 [shape = 'u32[]', space=smem, size = 0x4, offset = 0x4, fixed_abs, tag = 'smem constant byte address 0x4 - core index']
  #allocation1 [shape = 'u32[144,128]{1,0:T(1,128)}', space=vmem, size = 0x12000, scoped, tag = 'internal scratch']
  %s0 = inlined_call_operand.vmem [shape: f32[200,6], index: 0, kind: input, shape index: {}]
  %s1 = inlined_call_operand.vmem [shape: f32[200,16], index: 1, kind: input, shape index: {}]
  %s2 = inlined_call_operand.vmem [shape: f32[9,6,32], index: 2, kind: input, shape index: {}]
  %s3 = inlined_call_operand.vmem [shape: f32[9,32,64], index: 3, kind: input, shape index: {}]
  %s4 = inlined_call_operand.hbm [shape: f32[25,64,128], index: 4, kind: input, shape index: {}]
  %s5 = inlined_call_operand.vmem [shape: f32[8,128], index: 5, kind: input, shape index: {}]
  %s6 = inlined_call_operand.hbm [shape: f32[8,8], index: 6, kind: output, shape index: {}]
  %s7 = sld [smem:[#allocation0]]
  $region38: #{tpu_custom_call.1} parent=0
    _
  %s9 = ssub.s32 1, %s7
  %s10 = scalar_select 0, %s9, %s7
  $region1: #{tpu_custom_call.1} parent=0
    #allocation2 [shape = 'u8[819200]{0}', space=vmem, size = 0xc8000, scoped, tag = 'input window, operand 4, single buffered']
    #allocation3 [shape = 's32[1]{0}', space=sflag, size = 0x4, scoped, tag = 'scoped memory for tpu_custom_call.1']
    #allocation4 [shape = 's32[1]{0}', space=sflag, size = 0x4, scoped, tag = 'scoped memory for tpu_custom_call.1']
    #allocation5 [shape = 'u8[4096]{0}', space=vmem, size = 0x1000, scoped, tag = 'output window, operand 0, single buffered']
    %11 = vsyncpa [#allocation3], 0
    %12 = vsyncpa [#allocation4], 0
    // Predicated region
    $region2: #{tpu_custom_call.1} parent=1 // pred_check
      _
    $region3: #{tpu_custom_call.1} parent=1 // pred_check_branch
      %14 = sbr.rel (0) target = $region5
    $region4: #{tpu_custom_call.1} parent=1 // pred_region
      _
    $region5: #{tpu_custom_call.1} parent=1 // pred_fallthru
      _
    // Predicated region
    $region6: #{tpu_custom_call.1} parent=1 // pred_check
      _
    $region7: #{tpu_custom_call.1} parent=1 // pred_check_branch
      %16 = sbr.rel (0) target = $region9
    $region8: #{tpu_custom_call.1} parent=1 // pred_region
      _
    $region9: #{tpu_custom_call.1} parent=1 // pred_fallthru
      _
    // Predicated region
    $region10: #{tpu_custom_call.1} parent=1 // pred_check
      _
    $region11: #{tpu_custom_call.1} parent=1 // pred_check_branch
      %18 = sbr.rel (0) target = $region13
    $region12: #{tpu_custom_call.1} parent=1 // pred_region
      _
    $region13: #{tpu_custom_call.1} parent=1 // pred_fallthru
      _
    // Predicated region
    $region14: #{tpu_custom_call.1} parent=1 // pred_check
      _
    $region15: #{tpu_custom_call.1} parent=1 // pred_check_branch
      %20 = sbr.rel (0) target = $region17
    $region16: #{tpu_custom_call.1} parent=1 // pred_region
      _
    $region17: #{tpu_custom_call.1} parent=1 // pred_fallthru
      _
    // Predicated region
    $region18: #{tpu_custom_call.1} parent=1 // pred_check
      _
    $region19: #{tpu_custom_call.1} parent=1 // pred_check_branch
      %22 = sbr.rel (0) target = $region21
    $region20: #{tpu_custom_call.1} parent=1 // pred_region
      %s24 = ssub.s32 25600, 25600
      %25 = vsyncadd [#allocation3], %s24
      %s26 = sshll.u32 [#allocation2], 4
      %s27 = int_to_ptr.vmem [resolvable:$true] %s26
      %32 = dma.hbm_to_vmem [thread:$0]  %s4, 25600, %s27, [#allocation3], 128, 128, 8
    $region21: #{tpu_custom_call.1} parent=1 // pred_fallthru
      _
    // Predicated region
    $region22: #{tpu_custom_call.1} parent=1 // pred_check
      _
    $region23: #{tpu_custom_call.1} parent=1 // pred_check_branch
      %34 = sbr.rel (0) target = $region25
    $region24: #{tpu_custom_call.1} parent=1 // pred_region
      _
    $region25: #{tpu_custom_call.1} parent=1 // pred_fallthru
      _
    // Predicated region
    $region26: #{tpu_custom_call.1} parent=1 // pred_check
      _
    $region27: #{tpu_custom_call.1} parent=1 // pred_check_branch
      %36 = sbr.rel (0) target = $region29
    $region28: #{tpu_custom_call.1} parent=1 // pred_region
      %37 = dma.done [#allocation3], 25600
    $region29: #{tpu_custom_call.1} parent=1 // pred_fallthru
      _
    %v38 = vld [vmem:[%s0] sm:$0xff]
    %v39 = vld [vmem:[%s0 + $0x8] sm:$0xff]
    %v40 = vld [vmem:[%s0 + $0x10] sm:$0xff]
    %v41 = vld [vmem:[%s0 + $0x18] sm:$0xff]
    %v42 = vld [vmem:[%s0 + $0x20] sm:$0xff]
    %v43 = vld [vmem:[%s0 + $0x28] sm:$0xff]
    %v44 = vld [vmem:[%s0 + $0x30] sm:$0xff]
    %v45 = vld [vmem:[%s0 + $0x38] sm:$0xff]
    %v46 = vld [vmem:[%s0 + $0x40] sm:$0xff]
    %v47 = vld [vmem:[%s0 + $0x48] sm:$0xff]
    %v48 = vld [vmem:[%s0 + $0x50] sm:$0xff]
    %v49 = vld [vmem:[%s0 + $0x58] sm:$0xff]
    %v50 = vld [vmem:[%s0 + $0x60] sm:$0xff]
    %v51 = vld [vmem:[%s0 + $0x68] sm:$0xff]
    %v52 = vld [vmem:[%s0 + $0x70] sm:$0xff]
    %v53 = vld [vmem:[%s0 + $0x78] sm:$0xff]
    %v54 = vld [vmem:[%s0 + $0x80] sm:$0xff]
    %v55 = vld [vmem:[%s0 + $0x88] sm:$0xff]
    %v56 = vld [vmem:[%s0 + $0x90] sm:$0xff]
    %v57 = vld [vmem:[%s0 + $0x98] sm:$0xff]
    %v58 = vld [vmem:[%s0 + $0xa0] sm:$0xff]
    %v59 = vld [vmem:[%s0 + $0xa8] sm:$0xff]
    %v60 = vld [vmem:[%s0 + $0xb0] sm:$0xff]
    %v61 = vld [vmem:[%s0 + $0xb8] sm:$0xff]
    %v62 = vld [vmem:[%s0 + $0xc0] sm:$0xff]
    %v63 = vld [vmem:[%s1] sm:$0xff]
    %v64 = vld [vmem:[%s1 + $0x8] sm:$0xff]
    %v65 = vld [vmem:[%s1 + $0x10] sm:$0xff]
    %v66 = vld [vmem:[%s1 + $0x18] sm:$0xff]
    %v67 = vld [vmem:[%s1 + $0x20] sm:$0xff]
    %v68 = vld [vmem:[%s1 + $0x28] sm:$0xff]
    %v69 = vld [vmem:[%s1 + $0x30] sm:$0xff]
    %v70 = vld [vmem:[%s1 + $0x38] sm:$0xff]
    %v71 = vld [vmem:[%s1 + $0x40] sm:$0xff]
    %v72 = vld [vmem:[%s1 + $0x48] sm:$0xff]
    %v73 = vld [vmem:[%s1 + $0x50] sm:$0xff]
    %v74 = vld [vmem:[%s1 + $0x58] sm:$0xff]
    %v75 = vld [vmem:[%s1 + $0x60] sm:$0xff]
    %v76 = vld [vmem:[%s1 + $0x68] sm:$0xff]
    %v77 = vld [vmem:[%s1 + $0x70] sm:$0xff]
    %v78 = vld [vmem:[%s1 + $0x78] sm:$0xff]
    %v79 = vld [vmem:[%s1 + $0x80] sm:$0xff]
    %v80 = vld [vmem:[%s1 + $0x88] sm:$0xff]
    %v81 = vld [vmem:[%s1 + $0x90] sm:$0xff]
    %v82 = vld [vmem:[%s1 + $0x98] sm:$0xff]
    %v83 = vld [vmem:[%s1 + $0xa0] sm:$0xff]
    %v84 = vld [vmem:[%s1 + $0xa8] sm:$0xff]
    %v85 = vld [vmem:[%s1 + $0xb0] sm:$0xff]
    %v86 = vld [vmem:[%s1 + $0xb8] sm:$0xff]
    %v87 = vld [vmem:[%s1 + $0xc0] sm:$0xff]
    %v88 = vld [vmem:[%s5] sm:$0xff]
    %90 = vset.pattern.permute.xlu0 0
    %91 = vperm.xlu0 %90, %v63
    %v92 = vpop.permute.xlu0 %91
    %95 = vset.pattern.permute.xlu0 0
    %96 = vperm.xlu0 %95, %v64
    %v97 = vpop.permute.xlu0 %96
    %100 = vset.pattern.permute.xlu0 0
    %101 = vperm.xlu0 %100, %v65
    %v102 = vpop.permute.xlu0 %101
    %105 = vset.pattern.permute.xlu0 0
    %106 = vperm.xlu0 %105, %v66
    %v107 = vpop.permute.xlu0 %106
    %110 = vset.pattern.permute.xlu0 0
    %111 = vperm.xlu0 %110, %v67
    %v112 = vpop.permute.xlu0 %111
    %115 = vset.pattern.permute.xlu0 0
    %116 = vperm.xlu0 %115, %v68
    %v117 = vpop.permute.xlu0 %116
    %120 = vset.pattern.permute.xlu0 0
    %121 = vperm.xlu0 %120, %v69
    %v122 = vpop.permute.xlu0 %121
    %125 = vset.pattern.permute.xlu0 0
    %126 = vperm.xlu0 %125, %v70
    %v127 = vpop.permute.xlu0 %126
    %130 = vset.pattern.permute.xlu0 0
    %131 = vperm.xlu0 %130, %v71
    %v132 = vpop.permute.xlu0 %131
    %135 = vset.pattern.permute.xlu0 0
    %136 = vperm.xlu0 %135, %v72
    %v137 = vpop.permute.xlu0 %136
    %140 = vset.pattern.permute.xlu0 0
    %141 = vperm.xlu0 %140, %v73
    %v142 = vpop.permute.xlu0 %141
    %145 = vset.pattern.permute.xlu0 0
    %146 = vperm.xlu0 %145, %v74
    %v147 = vpop.permute.xlu0 %146
    %150 = vset.pattern.permute.xlu0 0
    %151 = vperm.xlu0 %150, %v75
    %v152 = vpop.permute.xlu0 %151
    %155 = vset.pattern.permute.xlu0 0
    %156 = vperm.xlu0 %155, %v76
    %v157 = vpop.permute.xlu0 %156
    %160 = vset.pattern.permute.xlu0 0
    %161 = vperm.xlu0 %160, %v77
    %v162 = vpop.permute.xlu0 %161
    %165 = vset.pattern.permute.xlu0 0
    %166 = vperm.xlu0 %165, %v78
    %v167 = vpop.permute.xlu0 %166
    %170 = vset.pattern.permute.xlu0 0
    %171 = vperm.xlu0 %170, %v79
    %v172 = vpop.permute.xlu0 %171
    %175 = vset.pattern.permute.xlu0 0
    %176 = vperm.xlu0 %175, %v80
    %v177 = vpop.permute.xlu0 %176
    %180 = vset.pattern.permute.xlu0 0
    %181 = vperm.xlu0 %180, %v81
    %v182 = vpop.permute.xlu0 %181
    %185 = vset.pattern.permute.xlu0 0
    %186 = vperm.xlu0 %185, %v82
    %v187 = vpop.permute.xlu0 %186
    %190 = vset.pattern.permute.xlu0 0
    %191 = vperm.xlu0 %190, %v83
    %v192 = vpop.permute.xlu0 %191
    %195 = vset.pattern.permute.xlu0 0
    %196 = vperm.xlu0 %195, %v84
    %v197 = vpop.permute.xlu0 %196
    %200 = vset.pattern.permute.xlu0 0
    %201 = vperm.xlu0 %200, %v85
    %v202 = vpop.permute.xlu0 %201
    %205 = vset.pattern.permute.xlu0 0
    %206 = vperm.xlu0 %205, %v86
    %v207 = vpop.permute.xlu0 %206
    %210 = vset.pattern.permute.xlu0 0
    %211 = vperm.xlu0 %210, %v87
    %v212 = vpop.permute.xlu0 %211
    %v214 = vmul.f32 %v57, %v92
    %v215 = vmul.f32 %v58, %v97
    %v216 = vmul.f32 %v59, %v102
    %v217 = vmul.f32 %v60, %v107
    %v218 = vmul.f32 %v61, %v112
    %v219 = vmul.f32 %v62, %v117
    %v220 = vmul.f32 %v38, %v122
    %v221 = vmul.f32 %v39, %v127
    %v222 = vmul.f32 %v40, %v132
    %v223 = vmul.f32 %v41, %v137
    %v224 = vmul.f32 %v42, %v142
    %v225 = vmul.f32 %v43, %v147
    %v226 = vmul.f32 %v44, %v152
    %v227 = vmul.f32 %v45, %v157
    %v228 = vmul.f32 %v46, %v162
    %v229 = vmul.f32 %v47, %v167
    %v230 = vmul.f32 %v48, %v172
    %v231 = vmul.f32 %v49, %v177
    %v232 = vmul.f32 %v50, %v182
    %v233 = vmul.f32 %v51, %v187
    %v234 = vmul.f32 %v52, %v192
    %v235 = vmul.f32 %v53, %v197
    %v236 = vmul.f32 %v54, %v202
    %v237 = vmul.f32 %v55, %v207
    %v238 = vmul.f32 %v56, %v212
    %v239 = vld [vmem:[%s2] sm:$0x3f]
    %240 = vset.pattern.permute.xlu0 1
    %241 = vperm.xlu0 %240, %v63
    %v242 = vpop.permute.xlu0 %241
    %244 = vset.pattern.permute.xlu0 1
    %245 = vperm.xlu0 %244, %v64
    %v246 = vpop.permute.xlu0 %245
    %248 = vset.pattern.permute.xlu0 1
    %249 = vperm.xlu0 %248, %v65
    %v250 = vpop.permute.xlu0 %249
    %252 = vset.pattern.permute.xlu0 1
    %253 = vperm.xlu0 %252, %v66
    %v254 = vpop.permute.xlu0 %253
    %256 = vset.pattern.permute.xlu0 1
    %257 = vperm.xlu0 %256, %v67
    %v258 = vpop.permute.xlu0 %257
    %260 = vset.pattern.permute.xlu0 1
    %261 = vperm.xlu0 %260, %v68
    %v262 = vpop.permute.xlu0 %261
    %264 = vset.pattern.permute.xlu0 1
    %265 = vperm.xlu0 %264, %v69
    %v266 = vpop.permute.xlu0 %265
    %268 = vset.pattern.permute.xlu0 1
    %269 = vperm.xlu0 %268, %v70
    %v270 = vpop.permute.xlu0 %269
    %272 = vset.pattern.permute.xlu0 1
    %273 = vperm.xlu0 %272, %v71
    %v274 = vpop.permute.xlu0 %273
    %276 = vset.pattern.permute.xlu0 1
    %277 = vperm.xlu0 %276, %v72
    %v278 = vpop.permute.xlu0 %277
    %280 = vset.pattern.permute.xlu0 1
    %281 = vperm.xlu0 %280, %v73
    %v282 = vpop.permute.xlu0 %281
    %284 = vset.pattern.permute.xlu0 1
    %285 = vperm.xlu0 %284, %v74
    %v286 = vpop.permute.xlu0 %285
    %288 = vset.pattern.permute.xlu0 1
    %289 = vperm.xlu0 %288, %v75
    %v290 = vpop.permute.xlu0 %289
    %292 = vset.pattern.permute.xlu0 1
    %293 = vperm.xlu0 %292, %v76
    %v294 = vpop.permute.xlu0 %293
    %296 = vset.pattern.permute.xlu0 1
    %297 = vperm.xlu0 %296, %v77
    %v298 = vpop.permute.xlu0 %297
    %300 = vset.pattern.permute.xlu0 1
    %301 = vperm.xlu0 %300, %v78
    %v302 = vpop.permute.xlu0 %301
    %304 = vset.pattern.permute.xlu0 1
    %305 = vperm.xlu0 %304, %v79
    %v306 = vpop.permute.xlu0 %305
    %308 = vset.pattern.permute.xlu0 1
    %309 = vperm.xlu0 %308, %v80
    %v310 = vpop.permute.xlu0 %309
    %312 = vset.pattern.permute.xlu0 1
    %313 = vperm.xlu0 %312, %v81
    %v314 = vpop.permute.xlu0 %313
    %316 = vset.pattern.permute.xlu0 1
    %317 = vperm.xlu0 %316, %v82
    %v318 = vpop.permute.xlu0 %317
    %320 = vset.pattern.permute.xlu0 1
    %321 = vperm.xlu0 %320, %v83
    %v322 = vpop.permute.xlu0 %321
    %324 = vset.pattern.permute.xlu0 1
    %325 = vperm.xlu0 %324, %v84
    %v326 = vpop.permute.xlu0 %325
    %328 = vset.pattern.permute.xlu0 1
    %329 = vperm.xlu0 %328, %v85
    %v330 = vpop.permute.xlu0 %329
    %332 = vset.pattern.permute.xlu0 1
    %333 = vperm.xlu0 %332, %v86
    %v334 = vpop.permute.xlu0 %333
    %336 = vset.pattern.permute.xlu0 1
    %337 = vperm.xlu0 %336, %v87
    %v338 = vpop.permute.xlu0 %337
    %v340 = vmul.f32 %v58, %v242
    %v341 = vmul.f32 %v59, %v246
    %v342 = vmul.f32 %v60, %v250
    %v343 = vmul.f32 %v61, %v254
    %v344 = vmul.f32 %v62, %v258
    %v345 = vmul.f32 %v38, %v262
    %v346 = vmul.f32 %v39, %v266
    %v347 = vmul.f32 %v40, %v270
    %v348 = vmul.f32 %v41, %v274
    %v349 = vmul.f32 %v42, %v278
    %v350 = vmul.f32 %v43, %v282
    %v351 = vmul.f32 %v44, %v286
    %v352 = vmul.f32 %v45, %v290
    %v353 = vmul.f32 %v46, %v294
    %v354 = vmul.f32 %v47, %v298
    %v355 = vmul.f32 %v48, %v302
    %v356 = vmul.f32 %v49, %v306
    %v357 = vmul.f32 %v50, %v310
    %v358 = vmul.f32 %v51, %v314
    %v359 = vmul.f32 %v52, %v318
    %v360 = vmul.f32 %v53, %v322
    %v361 = vmul.f32 %v54, %v326
    %v362 = vmul.f32 %v55, %v330
    %v363 = vmul.f32 %v56, %v334
    %v364 = vmul.f32 %v57, %v338
    %s365 = scalar_lea.vmem %s2, 8
    %v366 = vld [vmem:[%s365] sm:$0x3f]
    %vm367 = vcmask 48128
    %v369 = vsel %vm367, %v340, 0
    %v372 = vsel %vm367, %v341, 0
    %v375 = vsel %vm367, %v342, 0
    %v378 = vsel %vm367, %v343, 0
    %v381 = vsel %vm367, %v344, 0
    %v384 = vsel %vm367, %v345, 0
    %v387 = vsel %vm367, %v346, 0
    %v390 = vsel %vm367, %v347, 0
    %v393 = vsel %vm367, %v348, 0
    %v396 = vsel %vm367, %v349, 0
    %v399 = vsel %vm367, %v350, 0
    %v402 = vsel %vm367, %v351, 0
    %v405 = vsel %vm367, %v352, 0
    %v408 = vsel %vm367, %v353, 0
    %v411 = vsel %vm367, %v354, 0
    %v414 = vsel %vm367, %v355, 0
    %v417 = vsel %vm367, %v356, 0
    %v420 = vsel %vm367, %v357, 0
    %v423 = vsel %vm367, %v358, 0
    %v426 = vsel %vm367, %v359, 0
    %v429 = vsel %vm367, %v360, 0
    %v432 = vsel %vm367, %v361, 0
    %v435 = vsel %vm367, %v362, 0
    %v438 = vsel %vm367, %v363, 0
    %v441 = vsel %vm367, %v364, 0
    %vm443 = vcmask 1045504
    %v445 = vsel %vm443, %v366, 0
    %447 = vmatprep.subr.mxu0 0.0
    %448 = vmatpush1.msra.mxu0 %v445
    %449 = vmatprep.subr.mxu0 0.0
    %450 = vmatpush1.msra.mxu0 0.0
    %451 = vmatprep.subr.mxu0 0.0
    %452 = vmatpush1.msra.mxu0 0.0
    %453 = vmatprep.subr.mxu0 0.0
    %454 = vmatpush1.msra.mxu0 0.0
    %455 = vmatprep.subr.mxu0 0.0
    %456 = vmatpush1.msra.mxu0 0.0
    %457 = vmatprep.subr.mxu0 0.0
    %458 = vmatpush1.msra.mxu0 0.0
    %459 = vmatprep.subr.mxu0 0.0
    %460 = vmatpush1.msra.mxu0 0.0
    %461 = vmatprep.subr.mxu0 0.0
    %462 = vmatpush1.msra.mxu0 0.0
    %463 = vmatprep.subr.mxu0 0.0
    %464 = vmatpush1.msra.mxu0 0.0
    %465 = vmatprep.subr.mxu0 0.0
    %466 = vmatpush1.msra.mxu0 0.0
    %467 = vmatprep.subr.mxu0 0.0
    %468 = vmatpush1.msra.mxu0 0.0
    %469 = vmatprep.subr.mxu0 0.0
    %470 = vmatpush1.msra.mxu0 0.0
    %471 = vmatprep.subr.mxu0 0.0
    %472 = vmatpush1.msra.mxu0 0.0
    %473 = vmatprep.subr.mxu0 0.0
    %474 = vmatpush1.msra.mxu0 0.0
    %475 = vmatprep.subr.mxu0 0.0
    %476 = vmatpush1.msra.mxu0 0.0
    %477 = vmatprep.subr.mxu0 0.0
    %478 = vmatpush1.msra.mxu0 0.0
    %479 = vmatprep.subr.mxu0 0.0
    %480 = vmatpush1.msra.mxu0 0.0
    %481 = vmatprep.subr.mxu0 0.0
    %482 = vmatpush1.msra.mxu0 0.0
    %483 = vmatprep.subr.mxu0 0.0
    %484 = vmatpush1.msra.mxu0 0.0
    %485 = vmatprep.subr.mxu0 0.0
    %486 = vmatpush1.msra.mxu0 0.0
    %487 = vmatprep.subr.mxu0 0.0
    %488 = vmatpush1.msra.mxu0 0.0
    %489 = vmatprep.subr.mxu0 0.0
    %490 = vmatpush1.msra.mxu0 0.0
    %491 = vmatprep.subr.mxu0 0.0
    %492 = vmatpush1.msra.mxu0 0.0
    %493 = vmatprep.subr.mxu0 0.0
    %494 = vmatpush1.msra.mxu0 0.0
    %495 = vmatprep.subr.mxu0 0.0
    %496 = vmatpush1.msra.mxu0 0.0
    %497 = vmatprep.subr.mxu0 0.0
    %498 = vmatpush1.msra.mxu0 0.0
    %499 = vmatprep.subr.mxu0 0.0
    %500 = vmatpush1.msra.mxu0 0.0
    %501 = vmatprep.subr.mxu0 0.0
    %502 = vmatpush1.msra.mxu0 0.0
    %503 = vmatprep.subr.mxu0 0.0
    %504 = vmatpush1.msra.mxu0 0.0
    %505 = vmatprep.subr.mxu0 0.0
    %506 = vmatpush1.msra.mxu0 0.0
    %507 = vmatprep.subr.mxu0 0.0
    %508 = vmatpush1.msra.mxu0 0.0
    %509 = vmatprep.subr.mxu0 0.0
    %510 = vmatpush1.msra.mxu0 0.0
    %511 = vmatprep.mubr.f32.mxu0 0.0
    %512 = vmatmul.mubr.f32.gmra.mrb[0].mxu0 %v369
    %v513 = vpop.f32.mrb[0].mxu0
    %v514 = vadd.f32 0.0, %v513
    %v515 = vpop.f32.mrb[0].mxu0
    %516 = vmatprep.mubr.f32.mxu0 0.0
    %517 = vmatmul.mubr.f32.gmra.mrb[0].mxu0 %v372
    %v518 = vpop.f32.mrb[0].mxu0
    %v519 = vadd.f32 0.0, %v518
    %v520 = vpop.f32.mrb[0].mxu0
    %521 = vmatprep.mubr.f32.mxu0 0.0
    %522 = vmatmul.mubr.f32.gmra.mrb[0].mxu0 %v375
    %v523 = vpop.f32.mrb[0].mxu0
    %v524 = vadd.f32 0.0, %v523
    %v525 = vpop.f32.mrb[0].mxu0
    %526 = vmatprep.mubr.f32.mxu0 0.0
    %527 = vmatmul.mubr.f32.gmra.mrb[0].mxu0 %v378
    %v528 = vpop.f32.mrb[0].mxu0
    %v529 = vadd.f32 0.0, %v528
    %v530 = vpop.f32.mrb[0].mxu0
    %531 = vmatprep.mubr.f32.mxu0 0.0
    %532 = vmatmul.mubr.f32.gmra.mrb[0].mxu0 %v381
    %v533 = vpop.f32.mrb[0].mxu0
    %v534 = vadd.f32 0.0, %v533
    %v535 = vpop.f32.mrb[0].mxu0
    %536 = vmatprep.mubr.f32.mxu0 0.0
    %537 = vmatmul.mubr.f32.gmra.mrb[0].mxu0 %v384
    %v538 = vpop.f32.mrb[0].mxu0
    %v539 = vadd.f32 0.0, %v538
    %v540 = vpop.f32.mrb[0].mxu0
    %541 = vmatprep.mubr.f32.mxu0 0.0
    %542 = vmatmul.mubr.f32.gmra.mrb[0].mxu0 %v387
    %v543 = vpop.f32.mrb[0].mxu0
    %v544 = vadd.f32 0.0, %v543
    %v545 = vpop.f32.mrb[0].mxu0
    %546 = vmatprep.mubr.f32.mxu0 0.0
    %547 = vmatmul.mubr.f32.gmra.mrb[0].mxu0 %v390
    %v548 = vpop.f32.mrb[0].mxu0
    %v549 = vadd.f32 0.0, %v548
    %v550 = vpop.f32.mrb[0].mxu0
    %551 = vmatprep.mubr.f32.mxu0 0.0
    %552 = vmatmul.mubr.f32.gmra.mrb[0].mxu0 %v393
    %v553 = vpop.f32.mrb[0].mxu0
    %v554 = vadd.f32 0.0, %v553
    %v555 = vpop.f32.mrb[0].mxu0
    %556 = vmatprep.mubr.f32.mxu0 0.0
    %557 = vmatmul.mubr.f32.gmra.mrb[0].mxu0 %v396
    %v558 = vpop.f32.mrb[0].mxu0
    %v559 = vadd.f32 0.0, %v558
    %v560 = vpop.f32.mrb[0].mxu0
    %561 = vmatprep.mubr.f32.mxu0 0.0
    %562 = vmatmul.mubr.f32.gmra.mrb[0].mxu0 %v399
    %v563 = vpop.f32.mrb[0].mxu0
    %v564 = vadd.f32 0.0, %v563
    %v565 = vpop.f32.mrb[0].mxu0
    %566 = vmatprep.mubr.f32.mxu0 0.0
    %567 = vmatmul.mubr.f32.gmra.mrb[0].mxu0 %v402
    %v568 = vpop.f32.mrb[0].mxu0
    %v569 = vadd.f32 0.0, %v568
    %v570 = vpop.f32.mrb[0].mxu0
    %571 = vmatprep.mubr.f32.mxu0 0.0
    %572 = vmatmul.mubr.f32.gmra.mrb[0].mxu0 %v405
    %v573 = vpop.f32.mrb[0].mxu0
    %v574 = vadd.f32 0.0, %v573
    %v575 = vpop.f32.mrb[0].mxu0
    %576 = vmatprep.mubr.f32.mxu0 0.0
    %577 = vmatmul.mubr.f32.gmra.mrb[0].mxu0 %v408
    %v578 = vpop.f32.mrb[0].mxu0
    %v579 = vadd.f32 0.0, %v578
    %v580 = vpop.f32.mrb[0].mxu0
    %581 = vmatprep.mubr.f32.mxu0 0.0
    %582 = vmatmul.mubr.f32.gmra.mrb[0].mxu0 %v411
    %v583 = vpop.f32.mrb[0].mxu0
    %v584 = vadd.f32 0.0, %v583
    %v585 = vpop.f32.mrb[0].mxu0
    %586 = vmatprep.mubr.f32.mxu0 0.0
    %587 = vmatmul.mubr.f32.gmra.mrb[0].mxu0 %v414
    %v588 = vpop.f32.mrb[0].mxu0
    %v589 = vadd.f32 0.0, %v588
    %v590 = vpop.f32.mrb[0].mxu0
    %591 = vmatprep.mubr.f32.mxu0 0.0
    %592 = vmatmul.mubr.f32.gmra.mrb[0].mxu0 %v417
    %v593 = vpop.f32.mrb[0].mxu0
    %v594 = vadd.f32 0.0, %v593
    %v595 = vpop.f32.mrb[0].mxu0
    %596 = vmatprep.mubr.f32.mxu0 0.0
    %597 = vmatmul.mubr.f32.gmra.mrb[0].mxu0 %v420
    %v598 = vpop.f32.mrb[0].mxu0
    %v599 = vadd.f32 0.0, %v598
    %v600 = vpop.f32.mrb[0].mxu0
    %601 = vmatprep.mubr.f32.mxu0 0.0
    %602 = vmatmul.mubr.f32.gmra.mrb[0].mxu0 %v423
    %v603 = vpop.f32.mrb[0].mxu0
    %v604 = vadd.f32 0.0, %v603
    %v605 = vpop.f32.mrb[0].mxu0
    %606 = vmatprep.mubr.f32.mxu0 0.0
    %607 = vmatmul.mubr.f32.gmra.mrb[0].mxu0 %v426
    %v608 = vpop.f32.mrb[0].mxu0
    %v609 = vadd.f32 0.0, %v608
    %v610 = vpop.f32.mrb[0].mxu0
    %611 = vmatprep.mubr.f32.mxu0 0.0
    %612 = vmatmul.mubr.f32.gmra.mrb[0].mxu0 %v429
    %v613 = vpop.f32.mrb[0].mxu0
    %v614 = vadd.f32 0.0, %v613
    %v615 = vpop.f32.mrb[0].mxu0
    %616 = vmatprep.mubr.f32.mxu0 0.0
    %617 = vmatmul.mubr.f32.gmra.mrb[0].mxu0 %v432
    %v618 = vpop.f32.mrb[0].mxu0
    %v619 = vadd.f32 0.0, %v618
    %v620 = vpop.f32.mrb[0].mxu0
    %621 = vmatprep.mubr.f32.mxu0 0.0
    %622 = vmatmul.mubr.f32.gmra.mrb[0].mxu0 %v435
    %v623 = vpop.f32.mrb[0].mxu0
    %v624 = vadd.f32 0.0, %v623
    %v625 = vpop.f32.mrb[0].mxu0
    %626 = vmatprep.mubr.f32.mxu0 0.0
    %627 = vmatmul.mubr.f32.gmra.mrb[0].mxu0 %v438
    %v628 = vpop.f32.mrb[0].mxu0
    %v629 = vadd.f32 0.0, %v628
    %v630 = vpop.f32.mrb[0].mxu0
    %631 = vmatprep.mubr.f32.mxu0 0.0
    %632 = vmatmul.mubr.f32.gmra.mrb[0].mxu0 %v441
    %v633 = vpop.f32.mrb[0].mxu0
    %v634 = vadd.f32 0.0, %v633
    %v635 = vpop.f32.mrb[0].mxu0
    %636 = vdwg.mxu0
    %v638 = vsel %vm367, %v214, 0
    %v641 = vsel %vm367, %v215, 0
    %v644 = vsel %vm367, %v216, 0
    %v647 = vsel %vm367, %v217, 0
    %v650 = vsel %vm367, %v218, 0
    %v653 = vsel %vm367, %v219, 0
    %v656 = vsel %vm367, %v220, 0
    %v659 = vsel %vm367, %v221, 0
    %v662 = vsel %vm367, %v222, 0
    %v665 = vsel %vm367, %v223, 0
    %v668 = vsel %vm367, %v224, 0
    %v671 = vsel %vm367, %v225, 0
    %v674 = vsel %vm367, %v226, 0
    %v677 = vsel %vm367, %v227, 0
    %v680 = vsel %vm367, %v228, 0
    %v683 = vsel %vm367, %v229, 0
    %v686 = vsel %vm367, %v230, 0
    %v689 = vsel %vm367, %v231, 0
    %v692 = vsel %vm367, %v232, 0
    %v695 = vsel %vm367, %v233, 0
    %v698 = vsel %vm367, %v234, 0
    %v701 = vsel %vm367, %v235, 0
    %v704 = vsel %vm367, %v236, 0
    %v707 = vsel %vm367, %v237, 0
    %v710 = vsel %vm367, %v238, 0
    %v713 = vsel %vm443, %v239, 0
    %715 = vmatprep.subr.mxu0 0.0
    %716 = vmatpush1.msra.mxu0 %v713
    %717 = vmatprep.subr.mxu0 0.0
    %718 = vmatpush1.msra.mxu0 0.0
    %719 = vmatprep.subr.mxu0 0.0
    %720 = vmatpush1.msra.mxu0 0.0
    %721 = vmatprep.subr.mxu0 0.0
    %722 = vmatpush1.msra.mxu0 0.0
    %723 = vmatprep.subr.mxu0 0.0
    %724 = vmatpush1.msra.mxu0 0.0
    %725 = vmatprep.subr.mxu0 0.0
    %726 = vmatpush1.msra.mxu0 0.0
    %727 = vmatprep.subr.mxu0 0.0
    %728 = vmatpush1.msra.mxu0 0.0
    %729 = vmatprep.subr.mxu0 0.0
    %730 = vmatpush1.msra.mxu0 0.0
    %731 = vmatprep.subr.mxu0 0.0
    %732 = vmatpush1.msra.mxu0 0.0
    %733 = vmatprep.subr.mxu0 0.0
    %734 = vmatpush1.msra.mxu0 0.0
    %735 = vmatprep.subr.mxu0 0.0
    %736 = vmatpush1.msra.mxu0 0.0
    %737 = vmatprep.subr.mxu0 0.0
    %738 = vmatpush1.msra.mxu0 0.0
    %739 = vmatprep.subr.mxu0 0.0
    %740 = vmatpush1.msra.mxu0 0.0
    %741 = vmatprep.subr.mxu0 0.0
    %742 = vmatpush1.msra.mxu0 0.0
    %743 = vmatprep.subr.mxu0 0.0
    %744 = vmatpush1.msra.mxu0 0.0
    %745 = vmatprep.subr.mxu0 0.0
    %746 = vmatpush1.msra.mxu0 0.0
    %747 = vmatprep.subr.mxu0 0.0
    %748 = vmatpush1.msra.mxu0 0.0
    %749 = vmatprep.subr.mxu0 0.0
    %750 = vmatpush1.msra.mxu0 0.0
    %751 = vmatprep.subr.mxu0 0.0
    %752 = vmatpush1.msra.mxu0 0.0
    %753 = vmatprep.subr.mxu0 0.0
    %754 = vmatpush1.msra.mxu0 0.0
    %755 = vmatprep.subr.mxu0 0.0
    %756 = vmatpush1.msra.mxu0 0.0
    %757 = vmatprep.subr.mxu0 0.0
    %758 = vmatpush1.msra.mxu0 0.0
    %759 = vmatprep.subr.mxu0 0.0
    %760 = vmatpush1.msra.mxu0 0.0
    %761 = vmatprep.subr.mxu0 0.0
    %762 = vmatpush1.msra.mxu0 0.0
    %763 = vmatprep.subr.mxu0 0.0
    %764 = vmatpush1.msra.mxu0 0.0
    %765 = vmatprep.subr.mxu0 0.0
    %766 = vmatpush1.msra.mxu0 0.0
    %767 = vmatprep.subr.mxu0 0.0
    %768 = vmatpush1.msra.mxu0 0.0
    %769 = vmatprep.subr.mxu0 0.0
    %770 = vmatpush1.msra.mxu0 0.0
    %771 = vmatprep.subr.mxu0 0.0
    %772 = vmatpush1.msra.mxu0 0.0
    %773 = vmatprep.subr.mxu0 0.0
    %774 = vmatpush1.msra.mxu0 0.0
    %775 = vmatprep.subr.mxu0 0.0
    %776 = vmatpush1.msra.mxu0 0.0
    %777 = vmatprep.subr.mxu0 0.0
    %778 = vmatpush1.msra.mxu0 0.0
    %779 = vmatprep.mubr.f32.mxu0 0.0
    %780 = vmatmul.mubr.f32.gmra.mrb[0].mxu0 %v638
    %v781 = vpop.f32.mrb[0].mxu0
    %v782 = vadd.f32 %v514, %v781
    %v783 = vpop.f32.mrb[0].mxu0
    %784 = vmatprep.mubr.f32.mxu0 0.0
    %785 = vmatmul.mubr.f32.gmra.mrb[0].mxu0 %v641
    %v786 = vpop.f32.mrb[0].mxu0
    %v787 = vadd.f32 %v519, %v786
    %v788 = vpop.f32.mrb[0].mxu0
    %789 = vmatprep.mubr.f32.mxu0 0.0
    %790 = vmatmul.mubr.f32.gmra.mrb[0].mxu0 %v644
    %v791 = vpop.f32.mrb[0].mxu0
    %v792 = vadd.f32 %v524, %v791
    %v793 = vpop.f32.mrb[0].mxu0
    %794 = vmatprep.mubr.f32.mxu0 0.0
    %795 = vmatmul.mubr.f32.gmra.mrb[0].mxu0 %v647
    %v796 = vpop.f32.mrb[0].mxu0
    %v797 = vadd.f32 %v529, %v796
    %v798 = vpop.f32.mrb[0].mxu0
    %799 = vmatprep.mubr.f32.mxu0 0.0
    %800 = vmatmul.mubr.f32.gmra.mrb[0].mxu0 %v650
    %v801 = vpop.f32.mrb[0].mxu0
    %v802 = vadd.f32 %v534, %v801
    %v803 = vpop.f32.mrb[0].mxu0
    %804 = vmatprep.mubr.f32.mxu0 0.0
    %805 = vmatmul.mubr.f32.gmra.mrb[0].mxu0 %v653
    %v806 = vpop.f32.mrb[0].mxu0
    %v807 = vadd.f32 %v539, %v806
    %v808 = vpop.f32.mrb[0].mxu0
    %809 = vmatprep.mubr.f32.mxu0 0.0
    %810 = vmatmul.mubr.f32.gmra.mrb[0].mxu0 %v656
    %v811 = vpop.f32.mrb[0].mxu0
    %v812 = vadd.f32 %v544, %v811
    %v813 = vpop.f32.mrb[0].mxu0
    %814 = vmatprep.mubr.f32.mxu0 0.0
    %815 = vmatmul.mubr.f32.gmra.mrb[0].mxu0 %v659
    %v816 = vpop.f32.mrb[0].mxu0
    %v817 = vadd.f32 %v549, %v816
    %v818 = vpop.f32.mrb[0].mxu0
    %819 = vmatprep.mubr.f32.mxu0 0.0
    %820 = vmatmul.mubr.f32.gmra.mrb[0].mxu0 %v662
    %v821 = vpop.f32.mrb[0].mxu0
    %v822 = vadd.f32 %v554, %v821
    %v823 = vpop.f32.mrb[0].mxu0
    %824 = vmatprep.mubr.f32.mxu0 0.0
    %825 = vmatmul.mubr.f32.gmra.mrb[0].mxu0 %v665
    %v826 = vpop.f32.mrb[0].mxu0
    %v827 = vadd.f32 %v559, %v826
    %v828 = vpop.f32.mrb[0].mxu0
    %829 = vmatprep.mubr.f32.mxu0 0.0
    %830 = vmatmul.mubr.f32.gmra.mrb[0].mxu0 %v668
    %v831 = vpop.f32.mrb[0].mxu0
    %v832 = vadd.f32 %v564, %v831
    %v833 = vpop.f32.mrb[0].mxu0
    %834 = vmatprep.mubr.f32.mxu0 0.0
    %835 = vmatmul.mubr.f32.gmra.mrb[0].mxu0 %v671
    %v836 = vpop.f32.mrb[0].mxu0
    %v837 = vadd.f32 %v569, %v836
    %v838 = vpop.f32.mrb[0].mxu0
    %839 = vmatprep.mubr.f32.mxu0 0.0
    %840 = vmatmul.mubr.f32.gmra.mrb[0].mxu0 %v674
    %v841 = vpop.f32.mrb[0].mxu0
    %v842 = vadd.f32 %v574, %v841
    %v843 = vpop.f32.mrb[0].mxu0
    %844 = vmatprep.mubr.f32.mxu0 0.0
    %845 = vmatmul.mubr.f32.gmra.mrb[0].mxu0 %v677
    %v846 = vpop.f32.mrb[0].mxu0
    %v847 = vadd.f32 %v579, %v846
    %v848 = vpop.f32.mrb[0].mxu0
    %849 = vmatprep.mubr.f32.mxu0 0.0
    %850 = vmatmul.mubr.f32.gmra.mrb[0].mxu0 %v680
    %v851 = vpop.f32.mrb[0].mxu0
    %v852 = vadd.f32 %v584, %v851
    %v853 = vpop.f32.mrb[0].mxu0
    %854 = vmatprep.mubr.f32.mxu0 0.0
    %855 = vmatmul.mubr.f32.gmra.mrb[0].mxu0 %v683
    %v856 = vpop.f32.mrb[0].mxu0
    %v857 = vadd.f32 %v589, %v856
    %v858 = vpop.f32.mrb[0].mxu0
    %859 = vmatprep.mubr.f32.mxu0 0.0
    %860 = vmatmul.mubr.f32.gmra.mrb[0].mxu0 %v686
    %v861 = vpop.f32.mrb[0].mxu0
    %v862 = vadd.f32 %v594, %v861
    %v863 = vpop.f32.mrb[0].mxu0
    %864 = vmatprep.mubr.f32.mxu0 0.0
    %865 = vmatmul.mubr.f32.gmra.mrb[0].mxu0 %v689
    %v866 = vpop.f32.mrb[0].mxu0
    %v867 = vadd.f32 %v599, %v866
    %v868 = vpop.f32.mrb[0].mxu0
    %869 = vmatprep.mubr.f32.mxu0 0.0
    %870 = vmatmul.mubr.f32.gmra.mrb[0].mxu0 %v692
    %v871 = vpop.f32.mrb[0].mxu0
    %v872 = vadd.f32 %v604, %v871
    %v873 = vpop.f32.mrb[0].mxu0
    %874 = vmatprep.mubr.f32.mxu0 0.0
    %875 = vmatmul.mubr.f32.gmra.mrb[0].mxu0 %v695
    %v876 = vpop.f32.mrb[0].mxu0
    %v877 = vadd.f32 %v609, %v876
    %v878 = vpop.f32.mrb[0].mxu0
    %879 = vmatprep.mubr.f32.mxu0 0.0
    %880 = vmatmul.mubr.f32.gmra.mrb[0].mxu0 %v698
    %v881 = vpop.f32.mrb[0].mxu0
    %v882 = vadd.f32 %v614, %v881
    %v883 = vpop.f32.mrb[0].mxu0
    %884 = vmatprep.mubr.f32.mxu0 0.0
    %885 = vmatmul.mubr.f32.gmra.mrb[0].mxu0 %v701
    %v886 = vpop.f32.mrb[0].mxu0
    %v887 = vadd.f32 %v619, %v886
    %v888 = vpop.f32.mrb[0].mxu0
    %889 = vmatprep.mubr.f32.mxu0 0.0
    %890 = vmatmul.mubr.f32.gmra.mrb[0].mxu0 %v704
    %v891 = vpop.f32.mrb[0].mxu0
    %v892 = vadd.f32 %v624, %v891
    %v893 = vpop.f32.mrb[0].mxu0
    %894 = vmatprep.mubr.f32.mxu0 0.0
    %895 = vmatmul.mubr.f32.gmra.mrb[0].mxu0 %v707
    %v896 = vpop.f32.mrb[0].mxu0
    %v897 = vadd.f32 %v629, %v896
    %v898 = vpop.f32.mrb[0].mxu0
    %899 = vmatprep.mubr.f32.mxu0 0.0
    %900 = vmatmul.mubr.f32.gmra.mrb[0].mxu0 %v710
    %v901 = vpop.f32.mrb[0].mxu0
    %v902 = vadd.f32 %v634, %v901
    %v903 = vpop.f32.mrb[0].mxu0
    %904 = vdwg.mxu0
    %905 = vset.pattern.permute.xlu0 2
    %906 = vperm.xlu0 %905, %v63
    %v907 = vpop.permute.xlu0 %906
    %909 = vset.pattern.permute.xlu0 2
    %910 = vperm.xlu0 %909, %v64
    %v911 = vpop.permute.xlu0 %910
    %913 = vset.pattern.permute.xlu0 2
    %914 = vperm.xlu0 %913, %v65
    %v915 = vpop.permute.xlu0 %914
    %917 = vset.pattern.permute.xlu0 2
    %918 = vperm.xlu0 %917, %v66
    %v919 = vpop.permute.xlu0 %918
    %921 = vset.pattern.permute.xlu0 2
    %922 = vperm.xlu0 %921, %v67
    %v923 = vpop.permute.xlu0 %922
    %925 = vset.pattern.permute.xlu0 2
    %926 = vperm.xlu0 %925, %v68
    %v927 = vpop.permute.xlu0 %926
    %929 = vset.pattern.permute.xlu0 2
    %930 = vperm.xlu0 %929, %v69
    %v931 = vpop.permute.xlu0 %930
    %933 = vset.pattern.permute.xlu0 2
    %934 = vperm.xlu0 %933, %v70
    %v935 = vpop.permute.xlu0 %934
    %937 = vset.pattern.permute.xlu0 2
    %938 = vperm.xlu0 %937, %v71
    %v939 = vpop.permute.xlu0 %938
    %941 = vset.pattern.permute.xlu0 2
    %942 = vperm.xlu0 %941, %v72
    %v943 = vpop.permute.xlu0 %942
    %945 = vset.pattern.permute.xlu0 2
    %946 = vperm.xlu0 %945, %v73
    %v947 = vpop.permute.xlu0 %946
    %949 = vset.pattern.permute.xlu0 2
    %950 = vperm.xlu0 %949, %v74
    %v951 = vpop.permute.xlu0 %950
    %953 = vset.pattern.permute.xlu0 2
    %954 = vperm.xlu0 %953, %v75
    %v955 = vpop.permute.xlu0 %954
    %957 = vset.pattern.permute.xlu0 2
    %958 = vperm.xlu0 %957, %v76
    %v959 = vpop.permute.xlu0 %958
    %961 = vset.pattern.permute.xlu0 2
    %962 = vperm.xlu0 %961, %v77
    %v963 = vpop.permute.xlu0 %962
    %965 = vset.pattern.permute.xlu0 2
    %966 = vperm.xlu0 %965, %v78
    %v967 = vpop.permute.xlu0 %966
    %969 = vset.pattern.permute.xlu0 2
    %970 = vperm.xlu0 %969, %v79
    %v971 = vpop.permute.xlu0 %970
    %973 = vset.pattern.permute.xlu0 2
    %974 = vperm.xlu0 %973, %v80
    %v975 = vpop.permute.xlu0 %974
    %977 = vset.pattern.permute.xlu0 2
    %978 = vperm.xlu0 %977, %v81
    %v979 = vpop.permute.xlu0 %978
    %981 = vset.pattern.permute.xlu0 2
    %982 = vperm.xlu0 %981, %v82
    %v983 = vpop.permute.xlu0 %982
    %985 = vset.pattern.permute.xlu0 2
    %986 = vperm.xlu0 %985, %v83
    %v987 = vpop.permute.xlu0 %986
    %989 = vset.pattern.permute.xlu0 2
    %990 = vperm.xlu0 %989, %v84
    %v991 = vpop.permute.xlu0 %990
    %993 = vset.pattern.permute.xlu0 2
    %994 = vperm.xlu0 %993, %v85
    %v995 = vpop.permute.xlu0 %994
    %997 = vset.pattern.permute.xlu0 2
    %998 = vperm.xlu0 %997, %v86
    %v999 = vpop.permute.xlu0 %998
    %1001 = vset.pattern.permute.xlu0 2
    %1002 = vperm.xlu0 %1001, %v87
    %v1003 = vpop.permute.xlu0 %1002
    %v1005 = vmul.f32 %v59, %v907
    %v1006 = vmul.f32 %v60, %v911
    %v1007 = vmul.f32 %v61, %v915
    %v1008 = vmul.f32 %v62, %v919
    %v1009 = vmul.f32 %v38, %v923
    %v1010 = vmul.f32 %v39, %v927
    %v1011 = vmul.f32 %v40, %v931
    %v1012 = vmul.f32 %v41, %v935
    %v1013 = vmul.f32 %v42, %v939
    %v1014 = vmul.f32 %v43, %v943
    %v1015 = vmul.f32 %v44, %v947
    %v1016 = vmul.f32 %v45, %v951
    %v1017 = vmul.f32 %v46, %v955
    %v1018 = vmul.f32 %v47, %v959
    %v1019 = vmul.f32 %v48, %v963
    %v1020 = vmul.f32 %v49, %v967
    %v1021 = vmul.f32 %v50, %v971
    %v1022 = vmul.f32 %v51, %v975
    %v1023 = vmul.f32 %v52, %v979
    %v1024 = vmul.f32 %v53, %v983
    %v1025 = vmul.f32 %v54, %v987
    %v1026 = vmul.f32 %v55, %v991
    %v1027 = vmul.f32 %v56, %v995
    %v1028 = vmul.f32 %v57, %v999
    %v1029 = vmul.f32 %v58, %v1003
    %s1030 = scalar_lea.vmem %s2, 16
    %v1031 = vld [vmem:[%s1030] sm:$0x3f]
    %v1033 = vsel %vm367, %v1005, 0
    %v1036 = vsel %vm367, %v1006, 0
    %v1039 = vsel %vm367, %v1007, 0
    %v1042 = vsel %vm367, %v1008, 0
    %v1045 = vsel %vm367, %v1009, 0
    %v1048 = vsel %vm367, %v1010, 0
    %v1051 = vsel %vm367, %v1011, 0
    %v1054 = vsel %vm367, %v1012, 0
    %v1057 = vsel %vm367, %v1013, 0
    %v1060 = vsel %vm367, %v1014, 0
    %v1063 = vsel %vm367, %v1015, 0
    %v1066 = vsel %vm367, %v1016, 0
    %v1069 = vsel %vm367, %v1017, 0
    %v1072 = vsel %vm367, %v1018, 0
    %v1075 = vsel %vm367, %v1019, 0
    %v1078 = vsel %vm367, %v1020, 0
    %v1081 = vsel %vm367, %v1021, 0
    %v1084 = vsel %vm367, %v1022, 0
    %v1087 = vsel %vm367, %v1023, 0
    %v1090 = vsel %vm367, %v1024, 0
    %v1093 = vsel %vm367, %v1025, 0
    %v1096 = vsel %vm367, %v1026, 0
    %v1099 = vsel %vm367, %v1027, 0
    %v1102 = vsel %vm367, %v1028, 0
    %v1105 = vsel %vm367, %v1029, 0
    %v1108 = vsel %vm443, %v1031, 0
    %1110 = vmatprep.subr.mxu0 0.0
    %1111 = vmatpush1.msra.mxu0 %v1108
    %1112 = vmatprep.subr.mxu0 0.0
    %1113 = vmatpush1.msra.mxu0 0.0
    %1114 = vmatprep.subr.mxu0 0.0
    %1115 = vmatpush1.msra.mxu0 0.0
    %1116 = vmatprep.subr.mxu0 0.0
    %1117 = vmatpush1.msra.mxu0 0.0
    %1118 = vmatprep.subr.mxu0 0.0
    %1119 = vmatpush1.msra.mxu0 0.0
    %1120 = vmatprep.subr.mxu0 0.0
    %1121 = vmatpush1.msra.mxu0 0.0
    %1122 = vmatprep.subr.mxu0 0.0
    %1123 = vmatpush1.msra.mxu0 0.0
    %1124 = vmatprep.subr.mxu0 0.0
    %1125 = vmatpush1.msra.mxu0 0.0
    %1126 = vmatprep.subr.mxu0 0.0
    %1127 = vmatpush1.msra.mxu0 0.0
    %1128 = vmatprep.subr.mxu0 0.0
    %1129 = vmatpush1.msra.mxu0 0.0
    %1130 = vmatprep.subr.mxu0 0.0
    %1131 = vmatpush1.msra.mxu0 0.0
    %1132 = vmatprep.subr.mxu0 0.0
    %1133 = vmatpush1.msra.mxu0 0.0
    %1134 = vmatprep.subr.mxu0 0.0
    %1135 = vmatpush1.msra.mxu0 0.0
    %1136 = vmatprep.subr.mxu0 0.0
    %1137 = vmatpush1.msra.mxu0 0.0
    %1138 = vmatprep.subr.mxu0 0.0
    %1139 = vmatpush1.msra.mxu0 0.0
    %1140 = vmatprep.subr.mxu0 0.0
    %1141 = vmatpush1.msra.mxu0 0.0
    %1142 = vmatprep.subr.mxu0 0.0
    %1143 = vmatpush1.msra.mxu0 0.0
    %1144 = vmatprep.subr.mxu0 0.0
    %1145 = vmatpush1.msra.mxu0 0.0
    %1146 = vmatprep.subr.mxu0 0.0
    %1147 = vmatpush1.msra.mxu0 0.0
    %1148 = vmatprep.subr.mxu0 0.0
    %1149 = vmatpush1.msra.mxu0 0.0
    %1150 = vmatprep.subr.mxu0 0.0
    %1151 = vmatpush1.msra.mxu0 0.0
    %1152 = vmatprep.subr.mxu0 0.0
    %1153 = vmatpush1.msra.mxu0 0.0
    %1154 = vmatprep.subr.mxu0 0.0
    %1155 = vmatpush1.msra.mxu0 0.0
    %1156 = vmatprep.subr.mxu0 0.0
    %1157 = vmatpush1.msra.mxu0 0.0
    %1158 = vmatprep.subr.mxu0 0.0
    %1159 = vmatpush1.msra.mxu0 0.0
    %1160 = vmatprep.subr.mxu0 0.0
    %1161 = vmatpush1.msra.mxu0 0.0
    %1162 = vmatprep.subr.mxu0 0.0
    %1163 = vmatpush1.msra.mxu0 0.0
    %1164 = vmatprep.subr.mxu0 0.0
    %1165 = vmatpush1.msra.mxu0 0.0
    %1166 = vmatprep.subr.mxu0 0.0
    %1167 = vmatpush1.msra.mxu0 0.0
    %1168 = vmatprep.subr.mxu0 0.0
    %1169 = vmatpush1.msra.mxu0 0.0
    %1170 = vmatprep.subr.mxu0 0.0
    %1171 = vmatpush1.msra.mxu0 0.0
    %1172 = vmatprep.subr.mxu0 0.0
    %1173 = vmatpush1.msra.mxu0 0.0
    %1174 = vmatprep.mubr.f32.mxu0 0.0
    %1175 = vmatmul.mubr.f32.gmra.mrb[0].mxu0 %v1033
    %v1176 = vpop.f32.mrb[0].mxu0
    %v1177 = vadd.f32 0.0, %v1176
    %v1178 = vpop.f32.mrb[0].mxu0
    %1179 = vmatprep.mubr.f32.mxu0 0.0
    %1180 = vmatmul.mubr.f32.gmra.mrb[0].mxu0 %v1036
    %v1181 = vpop.f32.mrb[0].mxu0
    %v1182 = vadd.f32 0.0, %v1181
    %v1183 = vpop.f32.mrb[0].mxu0
    %1184 = vmatprep.mubr.f32.mxu0 0.0
    %1185 = vmatmul.mubr.f32.gmra.mrb[0].mxu0 %v1039
    %v1186 = vpop.f32.mrb[0].mxu0
    %v1187 = vadd.f32 0.0, %v1186
    %v1188 = vpop.f32.mrb[0].mxu0
    %1189 = vmatprep.mubr.f32.mxu0 0.0
    %1190 = vmatmul.mubr.f32.gmra.mrb[0].mxu0 %v1042
    %v1191 = vpop.f32.mrb[0].mxu0
    %v1192 = vadd.f32 0.0, %v1191
    %v1193 = vpop.f32.mrb[0].mxu0
    %1194 = vmatprep.mubr.f32.mxu0 0.0
    %1195 = vmatmul.mubr.f32.gmra.mrb[0].mxu0 %v1045
    %v1196 = vpop.f32.mrb[0].mxu0
    %v1197 = vadd.f32 0.0, %v1196
    %v1198 = vpop.f32.mrb[0].mxu0
    %1199 = vmatprep.mubr.f32.mxu0 0.0
    %1200 = vmatmul.mubr.f32.gmra.mrb[0].mxu0 %v1048
    %v1201 = vpop.f32.mrb[0].mxu0
    %v1202 = vadd.f32 0.0, %v1201
    %v1203 = vpop.f32.mrb[0].mxu0
    %1204 = vmatprep.mubr.f32.mxu0 0.0
    %1205 = vmatmul.mubr.f32.gmra.mrb[0].mxu0 %v1051
    %v1206 = vpop.f32.mrb[0].mxu0
    %v1207 = vadd.f32 0.0, %v1206
    %v1208 = vpop.f32.mrb[0].mxu0
    %1209 = vmatprep.mubr.f32.mxu0 0.0
    %1210 = vmatmul.mubr.f32.gmra.mrb[0].mxu0 %v1054
    %v1211 = vpop.f32.mrb[0].mxu0
    %v1212 = vadd.f32 0.0, %v1211
    %v1213 = vpop.f32.mrb[0].mxu0
    %1214 = vmatprep.mubr.f32.mxu0 0.0
    %1215 = vmatmul.mubr.f32.gmra.mrb[0].mxu0 %v1057
    %v1216 = vpop.f32.mrb[0].mxu0
    %v1217 = vadd.f32 0.0, %v1216
    %v1218 = vpop.f32.mrb[0].mxu0
    %1219 = vmatprep.mubr.f32.mxu0 0.0
    %1220 = vmatmul.mubr.f32.gmra.mrb[0].mxu0 %v1060
    %v1221 = vpop.f32.mrb[0].mxu0
    %v1222 = vadd.f32 0.0, %v1221
    %v1223 = vpop.f32.mrb[0].mxu0
    %1224 = vmatprep.mubr.f32.mxu0 0.0
    %1225 = vmatmul.mubr.f32.gmra.mrb[0].mxu0 %v1063
    %v1226 = vpop.f32.mrb[0].mxu0
    %v1227 = vadd.f32 0.0, %v1226
    %v1228 = vpop.f32.mrb[0].mxu0
    %1229 = vmatprep.mubr.f32.mxu0 0.0
    %1230 = vmatmul.mubr.f32.gmra.mrb[0].mxu0 %v1066
    %v1231 = vpop.f32.mrb[0].mxu0
    %v1232 = vadd.f32 0.0, %v1231
    %v1233 = vpop.f32.mrb[0].mxu0
    %1234 = vmatprep.mubr.f32.mxu0 0.0
    %1235 = vmatmul.mubr.f32.gmra.mrb[0].mxu0 %v1069
    %v1236 = vpop.f32.mrb[0].mxu0
    %v1237 = vadd.f32 0.0, %v1236
    %v1238 = vpop.f32.mrb[0].mxu0
    %1239 = vmatprep.mubr.f32.mxu0 0.0
    %1240 = vmatmul.mubr.f32.gmra.mrb[0].mxu0 %v1072
    %v1241 = vpop.f32.mrb[0].mxu0
    %v1242 = vadd.f32 0.0, %v1241
    %v1243 = vpop.f32.mrb[0].mxu0
    %1244 = vmatprep.mubr.f32.mxu0 0.0
    %1245 = vmatmul.mubr.f32.gmra.mrb[0].mxu0 %v1075
    %v1246 = vpop.f32.mrb[0].mxu0
    %v1247 = vadd.f32 0.0, %v1246
    %v1248 = vpop.f32.mrb[0].mxu0
    %1249 = vmatprep.mubr.f32.mxu0 0.0
    %1250 = vmatmul.mubr.f32.gmra.mrb[0].mxu0 %v1078
    %v1251 = vpop.f32.mrb[0].mxu0
    %v1252 = vadd.f32 0.0, %v1251
    %v1253 = vpop.f32.mrb[0].mxu0
    %1254 = vmatprep.mubr.f32.mxu0 0.0
    %1255 = vmatmul.mubr.f32.gmra.mrb[0].mxu0 %v1081
    %v1256 = vpop.f32.mrb[0].mxu0
    %v1257 = vadd.f32 0.0, %v1256
    %v1258 = vpop.f32.mrb[0].mxu0
    %1259 = vmatprep.mubr.f32.mxu0 0.0
    %1260 = vmatmul.mubr.f32.gmra.mrb[0].mxu0 %v1084
    %v1261 = vpop.f32.mrb[0].mxu0
    %v1262 = vadd.f32 0.0, %v1261
    %v1263 = vpop.f32.mrb[0].mxu0
    %1264 = vmatprep.mubr.f32.mxu0 0.0
    %1265 = vmatmul.mubr.f32.gmra.mrb[0].mxu0 %v1087
    %v1266 = vpop.f32.mrb[0].mxu0
    %v1267 = vadd.f32 0.0, %v1266
    %v1268 = vpop.f32.mrb[0].mxu0
    %1269 = vmatprep.mubr.f32.mxu0 0.0
    %1270 = vmatmul.mubr.f32.gmra.mrb[0].mxu0 %v1090
    %v1271 = vpop.f32.mrb[0].mxu0
    %v1272 = vadd.f32 0.0, %v1271
    %v1273 = vpop.f32.mrb[0].mxu0
    %1274 = vmatprep.mubr.f32.mxu0 0.0
    %1275 = vmatmul.mubr.f32.gmra.mrb[0].mxu0 %v1093
    %v1276 = vpop.f32.mrb[0].mxu0
    %v1277 = vadd.f32 0.0, %v1276
    %v1278 = vpop.f32.mrb[0].mxu0
    %1279 = vmatprep.mubr.f32.mxu0 0.0
    %1280 = vmatmul.mubr.f32.gmra.mrb[0].mxu0 %v1096
    %v1281 = vpop.f32.mrb[0].mxu0
    %v1282 = vadd.f32 0.0, %v1281
    %v1283 = vpop.f32.mrb[0].mxu0
    %1284 = vmatprep.mubr.f32.mxu0 0.0
    %1285 = vmatmul.mubr.f32.gmra.mrb[0].mxu0 %v1099
    %v1286 = vpop.f32.mrb[0].mxu0
    %v1287 = vadd.f32 0.0, %v1286
    %v1288 = vpop.f32.mrb[0].mxu0
    %1289 = vmatprep.mubr.f32.mxu0 0.0
    %1290 = vmatmul.mubr.f32.gmra.mrb[0].mxu0 %v1102
    %v1291 = vpop.f32.mrb[0].mxu0
    %v1292 = vadd.f32 0.0, %v1291
    %v1293 = vpop.f32.mrb[0].mxu0
    %1294 = vmatprep.mubr.f32.mxu0 0.0
    %1295 = vmatmul.mubr.f32.gmra.mrb[0].mxu0 %v1105
    %v1296 = vpop.f32.mrb[0].mxu0
    %v1297 = vadd.f32 0.0, %v1296
    %v1298 = vpop.f32.mrb[0].mxu0
    %1299 = vdwg.mxu0
    %v1300 = vadd.f32 %v782, %v1177
    %v1301 = vadd.f32 %v787, %v1182
    %v1302 = vadd.f32 %v792, %v1187
    %v1303 = vadd.f32 %v797, %v1192
    %v1304 = vadd.f32 %v802, %v1197
    %v1305 = vadd.f32 %v807, %v1202
    %v1306 = vadd.f32 %v812, %v1207
    %v1307 = vadd.f32 %v817, %v1212
    %v1308 = vadd.f32 %v822, %v1217
    %v1309 = vadd.f32 %v827, %v1222
    %v1310 = vadd.f32 %v832, %v1227
    %v1311 = vadd.f32 %v837, %v1232
    %v1312 = vadd.f32 %v842, %v1237
    %v1313 = vadd.f32 %v847, %v1242
    %v1314 = vadd.f32 %v852, %v1247
    %v1315 = vadd.f32 %v857, %v1252
    %v1316 = vadd.f32 %v862, %v1257
    %v1317 = vadd.f32 %v867, %v1262
    %v1318 = vadd.f32 %v872, %v1267
    %v1319 = vadd.f32 %v877, %v1272
    %v1320 = vadd.f32 %v882, %v1277
    %v1321 = vadd.f32 %v887, %v1282
    %v1322 = vadd.f32 %v892, %v1287
    %v1323 = vadd.f32 %v897, %v1292
    %v1324 = vadd.f32 %v902, %v1297
    %1325 = vset.pattern.permute.xlu0 3
    %1326 = vperm.xlu0 %1325, %v63
    %v1327 = vpop.permute.xlu0 %1326
    %1329 = vset.pattern.permute.xlu0 3
    %1330 = vperm.xlu0 %1329, %v64
    %v1331 = vpop.permute.xlu0 %1330
    %1333 = vset.pattern.permute.xlu0 3
    %1334 = vperm.xlu0 %1333, %v65
    %v1335 = vpop.permute.xlu0 %1334
    %1337 = vset.pattern.permute.xlu0 3
    %1338 = vperm.xlu0 %1337, %v66
    %v1339 = vpop.permute.xlu0 %1338
    %1341 = vset.pattern.permute.xlu0 3
    %1342 = vperm.xlu0 %1341, %v67
    %v1343 = vpop.permute.xlu0 %1342
    %1345 = vset.pattern.permute.xlu0 3
    %1346 = vperm.xlu0 %1345, %v68
    %v1347 = vpop.permute.xlu0 %1346
    %1349 = vset.pattern.permute.xlu0 3
    %1350 = vperm.xlu0 %1349, %v69
    %v1351 = vpop.permute.xlu0 %1350
    %1353 = vset.pattern.permute.xlu0 3
    %1354 = vperm.xlu0 %1353, %v70
    %v1355 = vpop.permute.xlu0 %1354
    %1357 = vset.pattern.permute.xlu0 3
    %1358 = vperm.xlu0 %1357, %v71
    %v1359 = vpop.permute.xlu0 %1358
    %1361 = vset.pattern.permute.xlu0 3
    %1362 = vperm.xlu0 %1361, %v72
    %v1363 = vpop.permute.xlu0 %1362
    %1365 = vset.pattern.permute.xlu0 3
    %1366 = vperm.xlu0 %1365, %v73
    %v1367 = vpop.permute.xlu0 %1366
    %1369 = vset.pattern.permute.xlu0 3
    %1370 = vperm.xlu0 %1369, %v74
    %v1371 = vpop.permute.xlu0 %1370
    %1373 = vset.pattern.permute.xlu0 3
    %1374 = vperm.xlu0 %1373, %v75
    %v1375 = vpop.permute.xlu0 %1374
    %1377 = vset.pattern.permute.xlu0 3
    %1378 = vperm.xlu0 %1377, %v76
    %v1379 = vpop.permute.xlu0 %1378
    %1381 = vset.pattern.permute.xlu0 3
    %1382 = vperm.xlu0 %1381, %v77
    %v1383 = vpop.permute.xlu0 %1382
    %1385 = vset.pattern.permute.xlu0 3
    %1386 = vperm.xlu0 %1385, %v78
    %v1387 = vpop.permute.xlu0 %1386
    %1389 = vset.pattern.permute.xlu0 3
    %1390 = vperm.xlu0 %1389, %v79
    %v1391 = vpop.permute.xlu0 %1390
    %1393 = vset.pattern.permute.xlu0 3
    %1394 = vperm.xlu0 %1393, %v80
    %v1395 = vpop.permute.xlu0 %1394
    %1397 = vset.pattern.permute.xlu0 3
    %1398 = vperm.xlu0 %1397, %v81
    %v1399 = vpop.permute.xlu0 %1398
    %1401 = vset.pattern.permute.xlu0 3
    %1402 = vperm.xlu0 %1401, %v82
    %v1403 = vpop.permute.xlu0 %1402
    %1405 = vset.pattern.permute.xlu0 3
    %1406 = vperm.xlu0 %1405, %v83
    %v1407 = vpop.permute.xlu0 %1406
    %1409 = vset.pattern.permute.xlu0 3
    %1410 = vperm.xlu0 %1409, %v84
    %v1411 = vpop.permute.xlu0 %1410
    %1413 = vset.pattern.permute.xlu0 3
    %1414 = vperm.xlu0 %1413, %v85
    %v1415 = vpop.permute.xlu0 %1414
    %1417 = vset.pattern.permute.xlu0 3
    %1418 = vperm.xlu0 %1417, %v86
    %v1419 = vpop.permute.xlu0 %1418
    %1421 = vset.pattern.permute.xlu0 3
    %1422 = vperm.xlu0 %1421, %v87
    %v1423 = vpop.permute.xlu0 %1422
    %v1425 = vmul.f32 %v62, %v1327
    %v1426 = vmul.f32 %v38, %v1331
    %v1427 = vmul.f32 %v39, %v1335
    %v1428 = vmul.f32 %v40, %v1339
    %v1429 = vmul.f32 %v41, %v1343
    %v1430 = vmul.f32 %v42, %v1347
    %v1431 = vmul.f32 %v43, %v1351
    %v1432 = vmul.f32 %v44, %v1355
    %v1433 = vmul.f32 %v45, %v1359
    %v1434 = vmul.f32 %v46, %v1363
    %v1435 = vmul.f32 %v47, %v1367
    %v1436 = vmul.f32 %v48, %v1371
    %v1437 = vmul.f32 %v49, %v1375
    %v1438 = vmul.f32 %v50, %v1379
    %v1439 = vmul.f32 %v51, %v1383
    %v1440 = vmul.f32 %v52, %v1387
    %v1441 = vmul.f32 %v53, %v1391
    %v1442 = vmul.f32 %v54, %v1395
    %v1443 = vmul.f32 %v55, %v1399
    %v1444 = vmul.f32 %v56, %v1403
    %v1445 = vmul.f32 %v57, %v1407
    %v1446 = vmul.f32 %v58, %v1411
    %v1447 = vmul.f32 %v59, %v1415
    %v1448 = vmul.f32 %v60, %v1419
    %v1449 = vmul.f32 %v61, %v1423
    %s1450 = scalar_lea.vmem %s2, 24
    %v1451 = vld [vmem:[%s1450] sm:$0x3f]
    %v1453 = vsel %vm367, %v1425, 0
    %v1456 = vsel %vm367, %v1426, 0
    %v1459 = vsel %vm367, %v1427, 0
    %v1462 = vsel %vm367, %v1428, 0
    %v1465 = vsel %vm367, %v1429, 0
    %v1468 = vsel %vm367, %v1430, 0
    %v1471 = vsel %vm367, %v1431, 0
    %v1474 = vsel %vm367, %v1432, 0
    %v1477 = vsel %vm367, %v1433, 0
    %v1480 = vsel %vm367, %v1434, 0
    %v1483 = vsel %vm367, %v1435, 0
    %v1486 = vsel %vm367, %v1436, 0
    %v1489 = vsel %vm367, %v1437, 0
    %v1492 = vsel %vm367, %v1438, 0
    %v1495 = vsel %vm367, %v1439, 0
    %v1498 = vsel %vm367, %v1440, 0
    %v1501 = vsel %vm367, %v1441, 0
    %v1504 = vsel %vm367, %v1442, 0
    %v1507 = vsel %vm367, %v1443, 0
    %v1510 = vsel %vm367, %v1444, 0
    %v1513 = vsel %vm367, %v1445, 0
    %v1516 = vsel %vm367, %v1446, 0
    %v1519 = vsel %vm367, %v1447, 0
    %v1522 = vsel %vm367, %v1448, 0
    %v1525 = vsel %vm367, %v1449, 0
    %v1528 = vsel %vm443, %v1451, 0
    %1530 = vmatprep.subr.mxu0 0.0
    %1531 = vmatpush1.msra.mxu0 %v1528
    %1532 = vmatprep.subr.mxu0 0.0
    %1533 = vmatpush1.msra.mxu0 0.0
    %1534 = vmatprep.subr.mxu0 0.0
    %1535 = vmatpush1.msra.mxu0 0.0
    %1536 = vmatprep.subr.mxu0 0.0
    %1537 = vmatpush1.msra.mxu0 0.0
    %1538 = vmatprep.subr.mxu0 0.0
    %1539 = vmatpush1.msra.mxu0 0.0
    %1540 = vmatprep.subr.mxu0 0.0
    %1541 = vmatpush1.msra.mxu0 0.0
    %1542 = vmatprep.subr.mxu0 0.0
    %1543 = vmatpush1.msra.mxu0 0.0
    %1544 = vmatprep.subr.mxu0 0.0
    %1545 = vmatpush1.msra.mxu0 0.0
    %1546 = vmatprep.subr.mxu0 0.0
    %1547 = vmatpush1.msra.mxu0 0.0
    %1548 = vmatprep.subr.mxu0 0.0
    %1549 = vmatpush1.msra.mxu0 0.0
    %1550 = vmatprep.subr.mxu0 0.0
    %1551 = vmatpush1.msra.mxu0 0.0
    %1552 = vmatprep.subr.mxu0 0.0
    %1553 = vmatpush1.msra.mxu0 0.0
    %1554 = vmatprep.subr.mxu0 0.0
    %1555 = vmatpush1.msra.mxu0 0.0
    %1556 = vmatprep.subr.mxu0 0.0
    %1557 = vmatpush1.msra.mxu0 0.0
    %1558 = vmatprep.subr.mxu0 0.0
    %1559 = vmatpush1.msra.mxu0 0.0
    %1560 = vmatprep.subr.mxu0 0.0
    %1561 = vmatpush1.msra.mxu0 0.0
    %1562 = vmatprep.subr.mxu0 0.0
    %1563 = vmatpush1.msra.mxu0 0.0
    %1564 = vmatprep.subr.mxu0 0.0
    %1565 = vmatpush1.msra.mxu0 0.0
    %1566 = vmatprep.subr.mxu0 0.0
    %1567 = vmatpush1.msra.mxu0 0.0
    %1568 = vmatprep.subr.mxu0 0.0
    %1569 = vmatpush1.msra.mxu0 0.0
    %1570 = vmatprep.subr.mxu0 0.0
    %1571 = vmatpush1.msra.mxu0 0.0
    %1572 = vmatprep.subr.mxu0 0.0
    %1573 = vmatpush1.msra.mxu0 0.0
    %1574 = vmatprep.subr.mxu0 0.0
    %1575 = vmatpush1.msra.mxu0 0.0
    %1576 = vmatprep.subr.mxu0 0.0
    %1577 = vmatpush1.msra.mxu0 0.0
    %1578 = vmatprep.subr.mxu0 0.0
    %1579 = vmatpush1.msra.mxu0 0.0
    %1580 = vmatprep.subr.mxu0 0.0
    %1581 = vmatpush1.msra.mxu0 0.0
    %1582 = vmatprep.subr.mxu0 0.0
    %1583 = vmatpush1.msra.mxu0 0.0
    %1584 = vmatprep.subr.mxu0 0.0
    %1585 = vmatpush1.msra.mxu0 0.0
    %1586 = vmatprep.subr.mxu0 0.0
    %1587 = vmatpush1.msra.mxu0 0.0
    %1588 = vmatprep.subr.mxu0 0.0
    %1589 = vmatpush1.msra.mxu0 0.0
    %1590 = vmatprep.subr.mxu0 0.0
    %1591 = vmatpush1.msra.mxu0 0.0
    %1592 = vmatprep.subr.mxu0 0.0
    %1593 = vmatpush1.msra.mxu0 0.0
    %1594 = vmatprep.mubr.f32.mxu0 0.0
    %1595 = vmatmul.mubr.f32.gmra.mrb[0].mxu0 %v1453
    %v1596 = vpop.f32.mrb[0].mxu0
    %v1597 = vadd.f32 0.0, %v1596
    %v1598 = vpop.f32.mrb[0].mxu0
    %1599 = vmatprep.mubr.f32.mxu0 0.0
    %1600 = vmatmul.mubr.f32.gmra.mrb[0].mxu0 %v1456
    %v1601 = vpop.f32.mrb[0].mxu0
    %v1602 = vadd.f32 0.0, %v1601
    %v1603 = vpop.f32.mrb[0].mxu0
    %1604 = vmatprep.mubr.f32.mxu0 0.0
    %1605 = vmatmul.mubr.f32.gmra.mrb[0].mxu0 %v1459
    %v1606 = vpop.f32.mrb[0].mxu0
    %v1607 = vadd.f32 0.0, %v1606
    %v1608 = vpop.f32.mrb[0].mxu0
    %1609 = vmatprep.mubr.f32.mxu0 0.0
    %1610 = vmatmul.mubr.f32.gmra.mrb[0].mxu0 %v1462
    %v1611 = vpop.f32.mrb[0].mxu0
    %v1612 = vadd.f32 0.0, %v1611
    %v1613 = vpop.f32.mrb[0].mxu0
    %1614 = vmatprep.mubr.f32.mxu0 0.0
    %1615 = vmatmul.mubr.f32.gmra.mrb[0].mxu0 %v1465
    %v1616 = vpop.f32.mrb[0].mxu0
    %v1617 = vadd.f32 0.0, %v1616
    %v1618 = vpop.f32.mrb[0].mxu0
    %1619 = vmatprep.mubr.f32.mxu0 0.0
    %1620 = vmatmul.mubr.f32.gmra.mrb[0].mxu0 %v1468
    %v1621 = vpop.f32.mrb[0].mxu0
    %v1622 = vadd.f32 0.0, %v1621
    %v1623 = vpop.f32.mrb[0].mxu0
    %1624 = vmatprep.mubr.f32.mxu0 0.0
    %1625 = vmatmul.mubr.f32.gmra.mrb[0].mxu0 %v1471
    %v1626 = vpop.f32.mrb[0].mxu0
    %v1627 = vadd.f32 0.0, %v1626
    %v1628 = vpop.f32.mrb[0].mxu0
    %1629 = vmatprep.mubr.f32.mxu0 0.0
    %1630 = vmatmul.mubr.f32.gmra.mrb[0].mxu0 %v1474
    %v1631 = vpop.f32.mrb[0].mxu0
    %v1632 = vadd.f32 0.0, %v1631
    %v1633 = vpop.f32.mrb[0].mxu0
    %1634 = vmatprep.mubr.f32.mxu0 0.0
    %1635 = vmatmul.mubr.f32.gmra.mrb[0].mxu0 %v1477
    %v1636 = vpop.f32.mrb[0].mxu0
    %v1637 = vadd.f32 0.0, %v1636
    %v1638 = vpop.f32.mrb[0].mxu0
    %1639 = vmatprep.mubr.f32.mxu0 0.0
    %1640 = vmatmul.mubr.f32.gmra.mrb[0].mxu0 %v1480
    %v1641 = vpop.f32.mrb[0].mxu0
    %v1642 = vadd.f32 0.0, %v1641
    %v1643 = vpop.f32.mrb[0].mxu0
    %1644 = vmatprep.mubr.f32.mxu0 0.0
    %1645 = vmatmul.mubr.f32.gmra.mrb[0].mxu0 %v1483
    %v1646 = vpop.f32.mrb[0].mxu0
    %v1647 = vadd.f32 0.0, %v1646
    %v1648 = vpop.f32.mrb[0].mxu0
    %1649 = vmatprep.mubr.f32.mxu0 0.0
    %1650 = vmatmul.mubr.f32.gmra.mrb[0].mxu0 %v1486
    %v1651 = vpop.f32.mrb[0].mxu0
    %v1652 = vadd.f32 0.0, %v1651
    %v1653 = vpop.f32.mrb[0].mxu0
    %1654 = vmatprep.mubr.f32.mxu0 0.0
    %1655 = vmatmul.mubr.f32.gmra.mrb[0].mxu0 %v1489
    %v1656 = vpop.f32.mrb[0].mxu0
    %v1657 = vadd.f32 0.0, %v1656
    %v1658 = vpop.f32.mrb[0].mxu0
    %1659 = vmatprep.mubr.f32.mxu0 0.0
    %1660 = vmatmul.mubr.f32.gmra.mrb[0].mxu0 %v1492
    %v1661 = vpop.f32.mrb[0].mxu0
    %v1662 = vadd.f32 0.0, %v1661
    %v1663 = vpop.f32.mrb[0].mxu0
    %1664 = vmatprep.mubr.f32.mxu0 0.0
    %1665 = vmatmul.mubr.f32.gmra.mrb[0].mxu0 %v1495
    %v1666 = vpop.f32.mrb[0].mxu0
    %v1667 = vadd.f32 0.0, %v1666
    %v1668 = vpop.f32.mrb[0].mxu0
    %1669 = vmatprep.mubr.f32.mxu0 0.0
    %1670 = vmatmul.mubr.f32.gmra.mrb[0].mxu0 %v1498
    %v1671 = vpop.f32.mrb[0].mxu0
    %v1672 = vadd.f32 0.0, %v1671
    %v1673 = vpop.f32.mrb[0].mxu0
    %1674 = vmatprep.mubr.f32.mxu0 0.0
    %1675 = vmatmul.mubr.f32.gmra.mrb[0].mxu0 %v1501
    %v1676 = vpop.f32.mrb[0].mxu0
    %v1677 = vadd.f32 0.0, %v1676
    %v1678 = vpop.f32.mrb[0].mxu0
    %1679 = vmatprep.mubr.f32.mxu0 0.0
    %1680 = vmatmul.mubr.f32.gmra.mrb[0].mxu0 %v1504
    %v1681 = vpop.f32.mrb[0].mxu0
    %v1682 = vadd.f32 0.0, %v1681
    %v1683 = vpop.f32.mrb[0].mxu0
    %1684 = vmatprep.mubr.f32.mxu0 0.0
    %1685 = vmatmul.mubr.f32.gmra.mrb[0].mxu0 %v1507
    %v1686 = vpop.f32.mrb[0].mxu0
    %v1687 = vadd.f32 0.0, %v1686
    %v1688 = vpop.f32.mrb[0].mxu0
    %1689 = vmatprep.mubr.f32.mxu0 0.0
    %1690 = vmatmul.mubr.f32.gmra.mrb[0].mxu0 %v1510
    %v1691 = vpop.f32.mrb[0].mxu0
    %v1692 = vadd.f32 0.0, %v1691
    %v1693 = vpop.f32.mrb[0].mxu0
    %1694 = vmatprep.mubr.f32.mxu0 0.0
    %1695 = vmatmul.mubr.f32.gmra.mrb[0].mxu0 %v1513
    %v1696 = vpop.f32.mrb[0].mxu0
    %v1697 = vadd.f32 0.0, %v1696
    %v1698 = vpop.f32.mrb[0].mxu0
    %1699 = vmatprep.mubr.f32.mxu0 0.0
    %1700 = vmatmul.mubr.f32.gmra.mrb[0].mxu0 %v1516
    %v1701 = vpop.f32.mrb[0].mxu0
    %v1702 = vadd.f32 0.0, %v1701
    %v1703 = vpop.f32.mrb[0].mxu0
    %1704 = vmatprep.mubr.f32.mxu0 0.0
    %1705 = vmatmul.mubr.f32.gmra.mrb[0].mxu0 %v1519
    %v1706 = vpop.f32.mrb[0].mxu0
    %v1707 = vadd.f32 0.0, %v1706
    %v1708 = vpop.f32.mrb[0].mxu0
    %1709 = vmatprep.mubr.f32.mxu0 0.0
    %1710 = vmatmul.mubr.f32.gmra.mrb[0].mxu0 %v1522
    %v1711 = vpop.f32.mrb[0].mxu0
    %v1712 = vadd.f32 0.0, %v1711
    %v1713 = vpop.f32.mrb[0].mxu0
    %1714 = vmatprep.mubr.f32.mxu0 0.0
    %1715 = vmatmul.mubr.f32.gmra.mrb[0].mxu0 %v1525
    %v1716 = vpop.f32.mrb[0].mxu0
    %v1717 = vadd.f32 0.0, %v1716
    %v1718 = vpop.f32.mrb[0].mxu0
    %1719 = vdwg.mxu0
    %v1720 = vadd.f32 %v1300, %v1597
    %v1721 = vadd.f32 %v1301, %v1602
    %v1722 = vadd.f32 %v1302, %v1607
    %v1723 = vadd.f32 %v1303, %v1612
    %v1724 = vadd.f32 %v1304, %v1617
    %v1725 = vadd.f32 %v1305, %v1622
    %v1726 = vadd.f32 %v1306, %v1627
    %v1727 = vadd.f32 %v1307, %v1632
    %v1728 = vadd.f32 %v1308, %v1637
    %v1729 = vadd.f32 %v1309, %v1642
    %v1730 = vadd.f32 %v1310, %v1647
    %v1731 = vadd.f32 %v1311, %v1652
    %v1732 = vadd.f32 %v1312, %v1657
    %v1733 = vadd.f32 %v1313, %v1662
    %v1734 = vadd.f32 %v1314, %v1667
    %v1735 = vadd.f32 %v1315, %v1672
    %v1736 = vadd.f32 %v1316, %v1677
    %v1737 = vadd.f32 %v1317, %v1682
    %v1738 = vadd.f32 %v1318, %v1687
    %v1739 = vadd.f32 %v1319, %v1692
    %v1740 = vadd.f32 %v1320, %v1697
    %v1741 = vadd.f32 %v1321, %v1702
    %v1742 = vadd.f32 %v1322, %v1707
    %v1743 = vadd.f32 %v1323, %v1712
    %v1744 = vadd.f32 %v1324, %v1717
    %s1745 = scalar_lea.vmem %s2, 32
    %v1746 = vld [vmem:[%s1745] sm:$0x3f]
    %v1748 = vsel %vm367, %v38, 0
    %v1751 = vsel %vm367, %v39, 0
    %v1754 = vsel %vm367, %v40, 0
    %v1757 = vsel %vm367, %v41, 0
    %v1760 = vsel %vm367, %v42, 0
    %v1763 = vsel %vm367, %v43, 0
    %v1766 = vsel %vm367, %v44, 0
    %v1769 = vsel %vm367, %v45, 0
    %v1772 = vsel %vm367, %v46, 0
    %v1775 = vsel %vm367, %v47, 0
    %v1778 = vsel %vm367, %v48, 0
    %v1781 = vsel %vm367, %v49, 0
    %v1784 = vsel %vm367, %v50, 0
    %v1787 = vsel %vm367, %v51, 0
    %v1790 = vsel %vm367, %v52, 0
    %v1793 = vsel %vm367, %v53, 0
    %v1796 = vsel %vm367, %v54, 0
    %v1799 = vsel %vm367, %v55, 0
    %v1802 = vsel %vm367, %v56, 0
    %v1805 = vsel %vm367, %v57, 0
    %v1808 = vsel %vm367, %v58, 0
    %v1811 = vsel %vm367, %v59, 0
    %v1814 = vsel %vm367, %v60, 0
    %v1817 = vsel %vm367, %v61, 0
    %v1820 = vsel %vm367, %v62, 0
    %v1823 = vsel %vm443, %v1746, 0
    %1825 = vmatprep.subr.mxu0 0.0
    %1826 = vmatpush1.msra.mxu0 %v1823
    %1827 = vmatprep.subr.mxu0 0.0
    %1828 = vmatpush1.msra.mxu0 0.0
    %1829 = vmatprep.subr.mxu0 0.0
    %1830 = vmatpush1.msra.mxu0 0.0
    %1831 = vmatprep.subr.mxu0 0.0
    %1832 = vmatpush1.msra.mxu0 0.0
    %1833 = vmatprep.subr.mxu0 0.0
    %1834 = vmatpush1.msra.mxu0 0.0
    %1835 = vmatprep.subr.mxu0 0.0
    %1836 = vmatpush1.msra.mxu0 0.0
    %1837 = vmatprep.subr.mxu0 0.0
    %1838 = vmatpush1.msra.mxu0 0.0
    %1839 = vmatprep.subr.mxu0 0.0
    %1840 = vmatpush1.msra.mxu0 0.0
    %1841 = vmatprep.subr.mxu0 0.0
    %1842 = vmatpush1.msra.mxu0 0.0
    %1843 = vmatprep.subr.mxu0 0.0
    %1844 = vmatpush1.msra.mxu0 0.0
    %1845 = vmatprep.subr.mxu0 0.0
    %1846 = vmatpush1.msra.mxu0 0.0
    %1847 = vmatprep.subr.mxu0 0.0
    %1848 = vmatpush1.msra.mxu0 0.0
    %1849 = vmatprep.subr.mxu0 0.0
    %1850 = vmatpush1.msra.mxu0 0.0
    %1851 = vmatprep.subr.mxu0 0.0
    %1852 = vmatpush1.msra.mxu0 0.0
    %1853 = vmatprep.subr.mxu0 0.0
    %1854 = vmatpush1.msra.mxu0 0.0
    %1855 = vmatprep.subr.mxu0 0.0
    %1856 = vmatpush1.msra.mxu0 0.0
    %1857 = vmatprep.subr.mxu0 0.0
    %1858 = vmatpush1.msra.mxu0 0.0
    %1859 = vmatprep.subr.mxu0 0.0
    %1860 = vmatpush1.msra.mxu0 0.0
    %1861 = vmatprep.subr.mxu0 0.0
    %1862 = vmatpush1.msra.mxu0 0.0
    %1863 = vmatprep.subr.mxu0 0.0
    %1864 = vmatpush1.msra.mxu0 0.0
    %1865 = vmatprep.subr.mxu0 0.0
    %1866 = vmatpush1.msra.mxu0 0.0
    %1867 = vmatprep.subr.mxu0 0.0
    %1868 = vmatpush1.msra.mxu0 0.0
    %1869 = vmatprep.subr.mxu0 0.0
    %1870 = vmatpush1.msra.mxu0 0.0
    %1871 = vmatprep.subr.mxu0 0.0
    %1872 = vmatpush1.msra.mxu0 0.0
    %1873 = vmatprep.subr.mxu0 0.0
    %1874 = vmatpush1.msra.mxu0 0.0
    %1875 = vmatprep.subr.mxu0 0.0
    %1876 = vmatpush1.msra.mxu0 0.0
    %1877 = vmatprep.subr.mxu0 0.0
    %1878 = vmatpush1.msra.mxu0 0.0
    %1879 = vmatprep.subr.mxu0 0.0
    %1880 = vmatpush1.msra.mxu0 0.0
    %1881 = vmatprep.subr.mxu0 0.0
    %1882 = vmatpush1.msra.mxu0 0.0
    %1883 = vmatprep.subr.mxu0 0.0
    %1884 = vmatpush1.msra.mxu0 0.0
    %1885 = vmatprep.subr.mxu0 0.0
    %1886 = vmatpush1.msra.mxu0 0.0
    %1887 = vmatprep.subr.mxu0 0.0
    %1888 = vmatpush1.msra.mxu0 0.0
    %1889 = vmatprep.mubr.f32.mxu0 0.0
    %1890 = vmatmul.mubr.f32.gmra.mrb[0].mxu0 %v1748
    %v1891 = vpop.f32.mrb[0].mxu0
    %v1892 = vadd.f32 0.0, %v1891
    %v1893 = vpop.f32.mrb[0].mxu0
    %1894 = vmatprep.mubr.f32.mxu0 0.0
    %1895 = vmatmul.mubr.f32.gmra.mrb[0].mxu0 %v1751
    %v1896 = vpop.f32.mrb[0].mxu0
    %v1897 = vadd.f32 0.0, %v1896
    %v1898 = vpop.f32.mrb[0].mxu0
    %1899 = vmatprep.mubr.f32.mxu0 0.0
    %1900 = vmatmul.mubr.f32.gmra.mrb[0].mxu0 %v1754
    %v1901 = vpop.f32.mrb[0].mxu0
    %v1902 = vadd.f32 0.0, %v1901
    %v1903 = vpop.f32.mrb[0].mxu0
    %1904 = vmatprep.mubr.f32.mxu0 0.0
    %1905 = vmatmul.mubr.f32.gmra.mrb[0].mxu0 %v1757
    %v1906 = vpop.f32.mrb[0].mxu0
    %v1907 = vadd.f32 0.0, %v1906
    %v1908 = vpop.f32.mrb[0].mxu0
    %1909 = vmatprep.mubr.f32.mxu0 0.0
    %1910 = vmatmul.mubr.f32.gmra.mrb[0].mxu0 %v1760
    %v1911 = vpop.f32.mrb[0].mxu0
    %v1912 = vadd.f32 0.0, %v1911
    %v1913 = vpop.f32.mrb[0].mxu0
    %1914 = vmatprep.mubr.f32.mxu0 0.0
    %1915 = vmatmul.mubr.f32.gmra.mrb[0].mxu0 %v1763
    %v1916 = vpop.f32.mrb[0].mxu0
    %v1917 = vadd.f32 0.0, %v1916
    %v1918 = vpop.f32.mrb[0].mxu0
    %1919 = vmatprep.mubr.f32.mxu0 0.0
    %1920 = vmatmul.mubr.f32.gmra.mrb[0].mxu0 %v1766
    %v1921 = vpop.f32.mrb[0].mxu0
    %v1922 = vadd.f32 0.0, %v1921
    %v1923 = vpop.f32.mrb[0].mxu0
    %1924 = vmatprep.mubr.f32.mxu0 0.0
    %1925 = vmatmul.mubr.f32.gmra.mrb[0].mxu0 %v1769
    %v1926 = vpop.f32.mrb[0].mxu0
    %v1927 = vadd.f32 0.0, %v1926
    %v1928 = vpop.f32.mrb[0].mxu0
    %1929 = vmatprep.mubr.f32.mxu0 0.0
    %1930 = vmatmul.mubr.f32.gmra.mrb[0].mxu0 %v1772
    %v1931 = vpop.f32.mrb[0].mxu0
    %v1932 = vadd.f32 0.0, %v1931
    %v1933 = vpop.f32.mrb[0].mxu0
    %1934 = vmatprep.mubr.f32.mxu0 0.0
    %1935 = vmatmul.mubr.f32.gmra.mrb[0].mxu0 %v1775
    %v1936 = vpop.f32.mrb[0].mxu0
    %v1937 = vadd.f32 0.0, %v1936
    %v1938 = vpop.f32.mrb[0].mxu0
    %1939 = vmatprep.mubr.f32.mxu0 0.0
    %1940 = vmatmul.mubr.f32.gmra.mrb[0].mxu0 %v1778
    %v1941 = vpop.f32.mrb[0].mxu0
    %v1942 = vadd.f32 0.0, %v1941
    %v1943 = vpop.f32.mrb[0].mxu0
    %1944 = vmatprep.mubr.f32.mxu0 0.0
    %1945 = vmatmul.mubr.f32.gmra.mrb[0].mxu0 %v1781
    %v1946 = vpop.f32.mrb[0].mxu0
    %v1947 = vadd.f32 0.0, %v1946
    %v1948 = vpop.f32.mrb[0].mxu0
    %1949 = vmatprep.mubr.f32.mxu0 0.0
    %1950 = vmatmul.mubr.f32.gmra.mrb[0].mxu0 %v1784
    %v1951 = vpop.f32.mrb[0].mxu0
    %v1952 = vadd.f32 0.0, %v1951
    %v1953 = vpop.f32.mrb[0].mxu0
    %1954 = vmatprep.mubr.f32.mxu0 0.0
    %1955 = vmatmul.mubr.f32.gmra.mrb[0].mxu0 %v1787
    %v1956 = vpop.f32.mrb[0].mxu0
    %v1957 = vadd.f32 0.0, %v1956
    %v1958 = vpop.f32.mrb[0].mxu0
    %1959 = vmatprep.mubr.f32.mxu0 0.0
    %1960 = vmatmul.mubr.f32.gmra.mrb[0].mxu0 %v1790
    %v1961 = vpop.f32.mrb[0].mxu0
    %v1962 = vadd.f32 0.0, %v1961
    %v1963 = vpop.f32.mrb[0].mxu0
    %1964 = vmatprep.mubr.f32.mxu0 0.0
    %1965 = vmatmul.mubr.f32.gmra.mrb[0].mxu0 %v1793
    %v1966 = vpop.f32.mrb[0].mxu0
    %v1967 = vadd.f32 0.0, %v1966
    %v1968 = vpop.f32.mrb[0].mxu0
    %1969 = vmatprep.mubr.f32.mxu0 0.0
    %1970 = vmatmul.mubr.f32.gmra.mrb[0].mxu0 %v1796
    %v1971 = vpop.f32.mrb[0].mxu0
    %v1972 = vadd.f32 0.0, %v1971
    %v1973 = vpop.f32.mrb[0].mxu0
    %1974 = vmatprep.mubr.f32.mxu0 0.0
    %1975 = vmatmul.mubr.f32.gmra.mrb[0].mxu0 %v1799
    %v1976 = vpop.f32.mrb[0].mxu0
    %v1977 = vadd.f32 0.0, %v1976
    %v1978 = vpop.f32.mrb[0].mxu0
    %1979 = vmatprep.mubr.f32.mxu0 0.0
    %1980 = vmatmul.mubr.f32.gmra.mrb[0].mxu0 %v1802
    %v1981 = vpop.f32.mrb[0].mxu0
    %v1982 = vadd.f32 0.0, %v1981
    %v1983 = vpop.f32.mrb[0].mxu0
    %1984 = vmatprep.mubr.f32.mxu0 0.0
    %1985 = vmatmul.mubr.f32.gmra.mrb[0].mxu0 %v1805
    %v1986 = vpop.f32.mrb[0].mxu0
    %v1987 = vadd.f32 0.0, %v1986
    %v1988 = vpop.f32.mrb[0].mxu0
    %1989 = vmatprep.mubr.f32.mxu0 0.0
    %1990 = vmatmul.mubr.f32.gmra.mrb[0].mxu0 %v1808
    %v1991 = vpop.f32.mrb[0].mxu0
    %v1992 = vadd.f32 0.0, %v1991
    %v1993 = vpop.f32.mrb[0].mxu0
    %1994 = vmatprep.mubr.f32.mxu0 0.0
    %1995 = vmatmul.mubr.f32.gmra.mrb[0].mxu0 %v1811
    %v1996 = vpop.f32.mrb[0].mxu0
    %v1997 = vadd.f32 0.0, %v1996
    %v1998 = vpop.f32.mrb[0].mxu0
    %1999 = vmatprep.mubr.f32.mxu0 0.0
    %2000 = vmatmul.mubr.f32.gmra.mrb[0].mxu0 %v1814
    %v2001 = vpop.f32.mrb[0].mxu0
    %v2002 = vadd.f32 0.0, %v2001
    %v2003 = vpop.f32.mrb[0].mxu0
    %2004 = vmatprep.mubr.f32.mxu0 0.0
    %2005 = vmatmul.mubr.f32.gmra.mrb[0].mxu0 %v1817
    %v2006 = vpop.f32.mrb[0].mxu0
    %v2007 = vadd.f32 0.0, %v2006
    %v2008 = vpop.f32.mrb[0].mxu0
    %2009 = vmatprep.mubr.f32.mxu0 0.0
    %2010 = vmatmul.mubr.f32.gmra.mrb[0].mxu0 %v1820
    %v2011 = vpop.f32.mrb[0].mxu0
    %v2012 = vadd.f32 0.0, %v2011
    %v2013 = vpop.f32.mrb[0].mxu0
    %2014 = vdwg.mxu0
    %v2015 = vadd.f32 %v1720, %v1892
    %v2016 = vadd.f32 %v1721, %v1897
    %v2017 = vadd.f32 %v1722, %v1902
    %v2018 = vadd.f32 %v1723, %v1907
    %v2019 = vadd.f32 %v1724, %v1912
    %v2020 = vadd.f32 %v1725, %v1917
    %v2021 = vadd.f32 %v1726, %v1922
    %v2022 = vadd.f32 %v1727, %v1927
    %v2023 = vadd.f32 %v1728, %v1932
    %v2024 = vadd.f32 %v1729, %v1937
    %v2025 = vadd.f32 %v1730, %v1942
    %v2026 = vadd.f32 %v1731, %v1947
    %v2027 = vadd.f32 %v1732, %v1952
    %v2028 = vadd.f32 %v1733, %v1957
    %v2029 = vadd.f32 %v1734, %v1962
    %v2030 = vadd.f32 %v1735, %v1967
    %v2031 = vadd.f32 %v1736, %v1972
    %v2032 = vadd.f32 %v1737, %v1977
    %v2033 = vadd.f32 %v1738, %v1982
    %v2034 = vadd.f32 %v1739, %v1987
    %v2035 = vadd.f32 %v1740, %v1992
    %v2036 = vadd.f32 %v1741, %v1997
    %v2037 = vadd.f32 %v1742, %v2002
    %v2038 = vadd.f32 %v1743, %v2007
    %v2039 = vadd.f32 %v1744, %v2012
    %2040 = vset.pattern.permute.xlu0 5
    %2041 = vperm.xlu0 %2040, %v63
    %v2042 = vpop.permute.xlu0 %2041
    %2044 = vset.pattern.permute.xlu0 5
    %2045 = vperm.xlu0 %2044, %v64
    %v2046 = vpop.permute.xlu0 %2045
    %2048 = vset.pattern.permute.xlu0 5
    %2049 = vperm.xlu0 %2048, %v65
    %v2050 = vpop.permute.xlu0 %2049
    %2052 = vset.pattern.permute.xlu0 5
    %2053 = vperm.xlu0 %2052, %v66
    %v2054 = vpop.permute.xlu0 %2053
    %2056 = vset.pattern.permute.xlu0 5
    %2057 = vperm.xlu0 %2056, %v67
    %v2058 = vpop.permute.xlu0 %2057
    %2060 = vset.pattern.permute.xlu0 5
    %2061 = vperm.xlu0 %2060, %v68
    %v2062 = vpop.permute.xlu0 %2061
    %2064 = vset.pattern.permute.xlu0 5
    %2065 = vperm.xlu0 %2064, %v69
    %v2066 = vpop.permute.xlu0 %2065
    %2068 = vset.pattern.permute.xlu0 5
    %2069 = vperm.xlu0 %2068, %v70
    %v2070 = vpop.permute.xlu0 %2069
    %2072 = vset.pattern.permute.xlu0 5
    %2073 = vperm.xlu0 %2072, %v71
    %v2074 = vpop.permute.xlu0 %2073
    %2076 = vset.pattern.permute.xlu0 5
    %2077 = vperm.xlu0 %2076, %v72
    %v2078 = vpop.permute.xlu0 %2077
    %2080 = vset.pattern.permute.xlu0 5
    %2081 = vperm.xlu0 %2080, %v73
    %v2082 = vpop.permute.xlu0 %2081
    %2084 = vset.pattern.permute.xlu0 5
    %2085 = vperm.xlu0 %2084, %v74
    %v2086 = vpop.permute.xlu0 %2085
    %2088 = vset.pattern.permute.xlu0 5
    %2089 = vperm.xlu0 %2088, %v75
    %v2090 = vpop.permute.xlu0 %2089
    %2092 = vset.pattern.permute.xlu0 5
    %2093 = vperm.xlu0 %2092, %v76
    %v2094 = vpop.permute.xlu0 %2093
    %2096 = vset.pattern.permute.xlu0 5
    %2097 = vperm.xlu0 %2096, %v77
    %v2098 = vpop.permute.xlu0 %2097
    %2100 = vset.pattern.permute.xlu0 5
    %2101 = vperm.xlu0 %2100, %v78
    %v2102 = vpop.permute.xlu0 %2101
    %2104 = vset.pattern.permute.xlu0 5
    %2105 = vperm.xlu0 %2104, %v79
    %v2106 = vpop.permute.xlu0 %2105
    %2108 = vset.pattern.permute.xlu0 5
    %2109 = vperm.xlu0 %2108, %v80
    %v2110 = vpop.permute.xlu0 %2109
    %2112 = vset.pattern.permute.xlu0 5
    %2113 = vperm.xlu0 %2112, %v81
    %v2114 = vpop.permute.xlu0 %2113
    %2116 = vset.pattern.permute.xlu0 5
    %2117 = vperm.xlu0 %2116, %v82
    %v2118 = vpop.permute.xlu0 %2117
    %2120 = vset.pattern.permute.xlu0 5
    %2121 = vperm.xlu0 %2120, %v83
    %v2122 = vpop.permute.xlu0 %2121
    %2124 = vset.pattern.permute.xlu0 5
    %2125 = vperm.xlu0 %2124, %v84
    %v2126 = vpop.permute.xlu0 %2125
    %2128 = vset.pattern.permute.xlu0 5
    %2129 = vperm.xlu0 %2128, %v85
    %v2130 = vpop.permute.xlu0 %2129
    %2132 = vset.pattern.permute.xlu0 5
    %2133 = vperm.xlu0 %2132, %v86
    %v2134 = vpop.permute.xlu0 %2133
    %2136 = vset.pattern.permute.xlu0 5
    %2137 = vperm.xlu0 %2136, %v87
    %v2138 = vpop.permute.xlu0 %2137
    %v2140 = vmul.f32 %v39, %v2042
    %v2141 = vmul.f32 %v40, %v2046
    %v2142 = vmul.f32 %v41, %v2050
    %v2143 = vmul.f32 %v42, %v2054
    %v2144 = vmul.f32 %v43, %v2058
    %v2145 = vmul.f32 %v44, %v2062
    %v2146 = vmul.f32 %v45, %v2066
    %v2147 = vmul.f32 %v46, %v2070
    %v2148 = vmul.f32 %v47, %v2074
    %v2149 = vmul.f32 %v48, %v2078
    %v2150 = vmul.f32 %v49, %v2082
    %v2151 = vmul.f32 %v50, %v2086
    %v2152 = vmul.f32 %v51, %v2090
    %v2153 = vmul.f32 %v52, %v2094
    %v2154 = vmul.f32 %v53, %v2098
    %v2155 = vmul.f32 %v54, %v2102
    %v2156 = vmul.f32 %v55, %v2106
    %v2157 = vmul.f32 %v56, %v2110
    %v2158 = vmul.f32 %v57, %v2114
    %v2159 = vmul.f32 %v58, %v2118
    %v2160 = vmul.f32 %v59, %v2122
    %v2161 = vmul.f32 %v60, %v2126
    %v2162 = vmul.f32 %v61, %v2130
    %v2163 = vmul.f32 %v62, %v2134
    %v2164 = vmul.f32 %v38, %v2138
    %s2165 = scalar_lea.vmem %s2, 40
    %v2166 = vld [vmem:[%s2165] sm:$0x3f]
    %v2168 = vsel %vm367, %v2140, 0
    %v2171 = vsel %vm367, %v2141, 0
    %v2174 = vsel %vm367, %v2142, 0
    %v2177 = vsel %vm367, %v2143, 0
    %v2180 = vsel %vm367, %v2144, 0
    %v2183 = vsel %vm367, %v2145, 0
    %v2186 = vsel %vm367, %v2146, 0
    %v2189 = vsel %vm367, %v2147, 0
    %v2192 = vsel %vm367, %v2148, 0
    %v2195 = vsel %vm367, %v2149, 0
    %v2198 = vsel %vm367, %v2150, 0
    %v2201 = vsel %vm367, %v2151, 0
    %v2204 = vsel %vm367, %v2152, 0
    %v2207 = vsel %vm367, %v2153, 0
    %v2210 = vsel %vm367, %v2154, 0
    %v2213 = vsel %vm367, %v2155, 0
    %v2216 = vsel %vm367, %v2156, 0
    %v2219 = vsel %vm367, %v2157, 0
    %v2222 = vsel %vm367, %v2158, 0
    %v2225 = vsel %vm367, %v2159, 0
    %v2228 = vsel %vm367, %v2160, 0
    %v2231 = vsel %vm367, %v2161, 0
    %v2234 = vsel %vm367, %v2162, 0
    %v2237 = vsel %vm367, %v2163, 0
    %v2240 = vsel %vm367, %v2164, 0
    %v2243 = vsel %vm443, %v2166, 0
    %2245 = vmatprep.subr.mxu0 0.0
    %2246 = vmatpush1.msra.mxu0 %v2243
    %2247 = vmatprep.subr.mxu0 0.0
    %2248 = vmatpush1.msra.mxu0 0.0
    %2249 = vmatprep.subr.mxu0 0.0
    %2250 = vmatpush1.msra.mxu0 0.0
    %2251 = vmatprep.subr.mxu0 0.0
    %2252 = vmatpush1.msra.mxu0 0.0
    %2253 = vmatprep.subr.mxu0 0.0
    %2254 = vmatpush1.msra.mxu0 0.0
    %2255 = vmatprep.subr.mxu0 0.0
    %2256 = vmatpush1.msra.mxu0 0.0
    %2257 = vmatprep.subr.mxu0 0.0
    %2258 = vmatpush1.msra.mxu0 0.0
    %2259 = vmatprep.subr.mxu0 0.0
    %2260 = vmatpush1.msra.mxu0 0.0
    %2261 = vmatprep.subr.mxu0 0.0
    %2262 = vmatpush1.msra.mxu0 0.0
    %2263 = vmatprep.subr.mxu0 0.0
    %2264 = vmatpush1.msra.mxu0 0.0
    %2265 = vmatprep.subr.mxu0 0.0
    %2266 = vmatpush1.msra.mxu0 0.0
    %2267 = vmatprep.subr.mxu0 0.0
    %2268 = vmatpush1.msra.mxu0 0.0
    %2269 = vmatprep.subr.mxu0 0.0
    %2270 = vmatpush1.msra.mxu0 0.0
    %2271 = vmatprep.subr.mxu0 0.0
    %2272 = vmatpush1.msra.mxu0 0.0
    %2273 = vmatprep.subr.mxu0 0.0
    %2274 = vmatpush1.msra.mxu0 0.0
    %2275 = vmatprep.subr.mxu0 0.0
    %2276 = vmatpush1.msra.mxu0 0.0
    %2277 = vmatprep.subr.mxu0 0.0
    %2278 = vmatpush1.msra.mxu0 0.0
    %2279 = vmatprep.subr.mxu0 0.0
    %2280 = vmatpush1.msra.mxu0 0.0
    %2281 = vmatprep.subr.mxu0 0.0
    %2282 = vmatpush1.msra.mxu0 0.0
    %2283 = vmatprep.subr.mxu0 0.0
    %2284 = vmatpush1.msra.mxu0 0.0
    %2285 = vmatprep.subr.mxu0 0.0
    %2286 = vmatpush1.msra.mxu0 0.0
    %2287 = vmatprep.subr.mxu0 0.0
    %2288 = vmatpush1.msra.mxu0 0.0
    %2289 = vmatprep.subr.mxu0 0.0
    %2290 = vmatpush1.msra.mxu0 0.0
    %2291 = vmatprep.subr.mxu0 0.0
    %2292 = vmatpush1.msra.mxu0 0.0
    %2293 = vmatprep.subr.mxu0 0.0
    %2294 = vmatpush1.msra.mxu0 0.0
    %2295 = vmatprep.subr.mxu0 0.0
    %2296 = vmatpush1.msra.mxu0 0.0
    %2297 = vmatprep.subr.mxu0 0.0
    %2298 = vmatpush1.msra.mxu0 0.0
    %2299 = vmatprep.subr.mxu0 0.0
    %2300 = vmatpush1.msra.mxu0 0.0
    %2301 = vmatprep.subr.mxu0 0.0
    %2302 = vmatpush1.msra.mxu0 0.0
    %2303 = vmatprep.subr.mxu0 0.0
    %2304 = vmatpush1.msra.mxu0 0.0
    %2305 = vmatprep.subr.mxu0 0.0
    %2306 = vmatpush1.msra.mxu0 0.0
    %2307 = vmatprep.subr.mxu0 0.0
    %2308 = vmatpush1.msra.mxu0 0.0
    %2309 = vmatprep.mubr.f32.mxu0 0.0
    %2310 = vmatmul.mubr.f32.gmra.mrb[0].mxu0 %v2168
    %v2311 = vpop.f32.mrb[0].mxu0
    %v2312 = vadd.f32 0.0, %v2311
    %v2313 = vpop.f32.mrb[0].mxu0
    %2314 = vmatprep.mubr.f32.mxu0 0.0
    %2315 = vmatmul.mubr.f32.gmra.mrb[0].mxu0 %v2171
    %v2316 = vpop.f32.mrb[0].mxu0
    %v2317 = vadd.f32 0.0, %v2316
    %v2318 = vpop.f32.mrb[0].mxu0
    %2319 = vmatprep.mubr.f32.mxu0 0.0
    %2320 = vmatmul.mubr.f32.gmra.mrb[0].mxu0 %v2174
    %v2321 = vpop.f32.mrb[0].mxu0
    %v2322 = vadd.f32 0.0, %v2321
    %v2323 = vpop.f32.mrb[0].mxu0
    %2324 = vmatprep.mubr.f32.mxu0 0.0
    %2325 = vmatmul.mubr.f32.gmra.mrb[0].mxu0 %v2177
    %v2326 = vpop.f32.mrb[0].mxu0
    %v2327 = vadd.f32 0.0, %v2326
    %v2328 = vpop.f32.mrb[0].mxu0
    %2329 = vmatprep.mubr.f32.mxu0 0.0
    %2330 = vmatmul.mubr.f32.gmra.mrb[0].mxu0 %v2180
    %v2331 = vpop.f32.mrb[0].mxu0
    %v2332 = vadd.f32 0.0, %v2331
    %v2333 = vpop.f32.mrb[0].mxu0
    %2334 = vmatprep.mubr.f32.mxu0 0.0
    %2335 = vmatmul.mubr.f32.gmra.mrb[0].mxu0 %v2183
    %v2336 = vpop.f32.mrb[0].mxu0
    %v2337 = vadd.f32 0.0, %v2336
    %v2338 = vpop.f32.mrb[0].mxu0
    %2339 = vmatprep.mubr.f32.mxu0 0.0
    %2340 = vmatmul.mubr.f32.gmra.mrb[0].mxu0 %v2186
    %v2341 = vpop.f32.mrb[0].mxu0
    %v2342 = vadd.f32 0.0, %v2341
    %v2343 = vpop.f32.mrb[0].mxu0
    %2344 = vmatprep.mubr.f32.mxu0 0.0
    %2345 = vmatmul.mubr.f32.gmra.mrb[0].mxu0 %v2189
    %v2346 = vpop.f32.mrb[0].mxu0
    %v2347 = vadd.f32 0.0, %v2346
    %v2348 = vpop.f32.mrb[0].mxu0
    %2349 = vmatprep.mubr.f32.mxu0 0.0
    %2350 = vmatmul.mubr.f32.gmra.mrb[0].mxu0 %v2192
    %v2351 = vpop.f32.mrb[0].mxu0
    %v2352 = vadd.f32 0.0, %v2351
    %v2353 = vpop.f32.mrb[0].mxu0
    %2354 = vmatprep.mubr.f32.mxu0 0.0
    %2355 = vmatmul.mubr.f32.gmra.mrb[0].mxu0 %v2195
    %v2356 = vpop.f32.mrb[0].mxu0
    %v2357 = vadd.f32 0.0, %v2356
    %v2358 = vpop.f32.mrb[0].mxu0
    %2359 = vmatprep.mubr.f32.mxu0 0.0
    %2360 = vmatmul.mubr.f32.gmra.mrb[0].mxu0 %v2198
    %v2361 = vpop.f32.mrb[0].mxu0
    %v2362 = vadd.f32 0.0, %v2361
    %v2363 = vpop.f32.mrb[0].mxu0
    %2364 = vmatprep.mubr.f32.mxu0 0.0
    %2365 = vmatmul.mubr.f32.gmra.mrb[0].mxu0 %v2201
    %v2366 = vpop.f32.mrb[0].mxu0
    %v2367 = vadd.f32 0.0, %v2366
    %v2368 = vpop.f32.mrb[0].mxu0
    %2369 = vmatprep.mubr.f32.mxu0 0.0
    %2370 = vmatmul.mubr.f32.gmra.mrb[0].mxu0 %v2204
    %v2371 = vpop.f32.mrb[0].mxu0
    %v2372 = vadd.f32 0.0, %v2371
    %v2373 = vpop.f32.mrb[0].mxu0
    %2374 = vmatprep.mubr.f32.mxu0 0.0
    %2375 = vmatmul.mubr.f32.gmra.mrb[0].mxu0 %v2207
    %v2376 = vpop.f32.mrb[0].mxu0
    %v2377 = vadd.f32 0.0, %v2376
    %v2378 = vpop.f32.mrb[0].mxu0
    %2379 = vmatprep.mubr.f32.mxu0 0.0
    %2380 = vmatmul.mubr.f32.gmra.mrb[0].mxu0 %v2210
    %v2381 = vpop.f32.mrb[0].mxu0
    %v2382 = vadd.f32 0.0, %v2381
    %v2383 = vpop.f32.mrb[0].mxu0
    %2384 = vmatprep.mubr.f32.mxu0 0.0
    %2385 = vmatmul.mubr.f32.gmra.mrb[0].mxu0 %v2213
    %v2386 = vpop.f32.mrb[0].mxu0
    %v2387 = vadd.f32 0.0, %v2386
    %v2388 = vpop.f32.mrb[0].mxu0
    %2389 = vmatprep.mubr.f32.mxu0 0.0
    %2390 = vmatmul.mubr.f32.gmra.mrb[0].mxu0 %v2216
    %v2391 = vpop.f32.mrb[0].mxu0
    %v2392 = vadd.f32 0.0, %v2391
    %v2393 = vpop.f32.mrb[0].mxu0
    %2394 = vmatprep.mubr.f32.mxu0 0.0
    %2395 = vmatmul.mubr.f32.gmra.mrb[0].mxu0 %v2219
    %v2396 = vpop.f32.mrb[0].mxu0
    %v2397 = vadd.f32 0.0, %v2396
    %v2398 = vpop.f32.mrb[0].mxu0
    %2399 = vmatprep.mubr.f32.mxu0 0.0
    %2400 = vmatmul.mubr.f32.gmra.mrb[0].mxu0 %v2222
    %v2401 = vpop.f32.mrb[0].mxu0
    %v2402 = vadd.f32 0.0, %v2401
    %v2403 = vpop.f32.mrb[0].mxu0
    %2404 = vmatprep.mubr.f32.mxu0 0.0
    %2405 = vmatmul.mubr.f32.gmra.mrb[0].mxu0 %v2225
    %v2406 = vpop.f32.mrb[0].mxu0
    %v2407 = vadd.f32 0.0, %v2406
    %v2408 = vpop.f32.mrb[0].mxu0
    %2409 = vmatprep.mubr.f32.mxu0 0.0
    %2410 = vmatmul.mubr.f32.gmra.mrb[0].mxu0 %v2228
    %v2411 = vpop.f32.mrb[0].mxu0
    %v2412 = vadd.f32 0.0, %v2411
    %v2413 = vpop.f32.mrb[0].mxu0
    %2414 = vmatprep.mubr.f32.mxu0 0.0
    %2415 = vmatmul.mubr.f32.gmra.mrb[0].mxu0 %v2231
    %v2416 = vpop.f32.mrb[0].mxu0
    %v2417 = vadd.f32 0.0, %v2416
    %v2418 = vpop.f32.mrb[0].mxu0
    %2419 = vmatprep.mubr.f32.mxu0 0.0
    %2420 = vmatmul.mubr.f32.gmra.mrb[0].mxu0 %v2234
    %v2421 = vpop.f32.mrb[0].mxu0
    %v2422 = vadd.f32 0.0, %v2421
    %v2423 = vpop.f32.mrb[0].mxu0
    %2424 = vmatprep.mubr.f32.mxu0 0.0
    %2425 = vmatmul.mubr.f32.gmra.mrb[0].mxu0 %v2237
    %v2426 = vpop.f32.mrb[0].mxu0
    %v2427 = vadd.f32 0.0, %v2426
    %v2428 = vpop.f32.mrb[0].mxu0
    %2429 = vmatprep.mubr.f32.mxu0 0.0
    %2430 = vmatmul.mubr.f32.gmra.mrb[0].mxu0 %v2240
    %v2431 = vpop.f32.mrb[0].mxu0
    %v2432 = vadd.f32 0.0, %v2431
    %v2433 = vpop.f32.mrb[0].mxu0
    %2434 = vdwg.mxu0
    %v2435 = vadd.f32 %v2015, %v2312
    %v2436 = vadd.f32 %v2016, %v2317
    %v2437 = vadd.f32 %v2017, %v2322
    %v2438 = vadd.f32 %v2018, %v2327
    %v2439 = vadd.f32 %v2019, %v2332
    %v2440 = vadd.f32 %v2020, %v2337
    %v2441 = vadd.f32 %v2021, %v2342
    %v2442 = vadd.f32 %v2022, %v2347
    %v2443 = vadd.f32 %v2023, %v2352
    %v2444 = vadd.f32 %v2024, %v2357
    %v2445 = vadd.f32 %v2025, %v2362
    %v2446 = vadd.f32 %v2026, %v2367
    %v2447 = vadd.f32 %v2027, %v2372
    %v2448 = vadd.f32 %v2028, %v2377
    %v2449 = vadd.f32 %v2029, %v2382
    %v2450 = vadd.f32 %v2030, %v2387
    %v2451 = vadd.f32 %v2031, %v2392
    %v2452 = vadd.f32 %v2032, %v2397
    %v2453 = vadd.f32 %v2033, %v2402
    %v2454 = vadd.f32 %v2034, %v2407
    %v2455 = vadd.f32 %v2035, %v2412
    %v2456 = vadd.f32 %v2036, %v2417
    %v2457 = vadd.f32 %v2037, %v2422
    %v2458 = vadd.f32 %v2038, %v2427
    %v2459 = vadd.f32 %v2039, %v2432
    %2460 = vset.pattern.permute.xlu0 6
    %2461 = vperm.xlu0 %2460, %v63
    %v2462 = vpop.permute.xlu0 %2461
    %2464 = vset.pattern.permute.xlu0 6
    %2465 = vperm.xlu0 %2464, %v64
    %v2466 = vpop.permute.xlu0 %2465
    %2468 = vset.pattern.permute.xlu0 6
    %2469 = vperm.xlu0 %2468, %v65
    %v2470 = vpop.permute.xlu0 %2469
    %2472 = vset.pattern.permute.xlu0 6
    %2473 = vperm.xlu0 %2472, %v66
    %v2474 = vpop.permute.xlu0 %2473
    %2476 = vset.pattern.permute.xlu0 6
    %2477 = vperm.xlu0 %2476, %v67
    %v2478 = vpop.permute.xlu0 %2477
    %2480 = vset.pattern.permute.xlu0 6
    %2481 = vperm.xlu0 %2480, %v68
    %v2482 = vpop.permute.xlu0 %2481
    %2484 = vset.pattern.permute.xlu0 6
    %2485 = vperm.xlu0 %2484, %v69
    %v2486 = vpop.permute.xlu0 %2485
    %2488 = vset.pattern.permute.xlu0 6
    %2489 = vperm.xlu0 %2488, %v70
    %v2490 = vpop.permute.xlu0 %2489
    %2492 = vset.pattern.permute.xlu0 6
    %2493 = vperm.xlu0 %2492, %v71
    %v2494 = vpop.permute.xlu0 %2493
    %2496 = vset.pattern.permute.xlu0 6
    %2497 = vperm.xlu0 %2496, %v72
    %v2498 = vpop.permute.xlu0 %2497
    %2500 = vset.pattern.permute.xlu0 6
    %2501 = vperm.xlu0 %2500, %v73
    %v2502 = vpop.permute.xlu0 %2501
    %2504 = vset.pattern.permute.xlu0 6
    %2505 = vperm.xlu0 %2504, %v74
    %v2506 = vpop.permute.xlu0 %2505
    %2508 = vset.pattern.permute.xlu0 6
    %2509 = vperm.xlu0 %2508, %v75
    %v2510 = vpop.permute.xlu0 %2509
    %2512 = vset.pattern.permute.xlu0 6
    %2513 = vperm.xlu0 %2512, %v76
    %v2514 = vpop.permute.xlu0 %2513
    %2516 = vset.pattern.permute.xlu0 6
    %2517 = vperm.xlu0 %2516, %v77
    %v2518 = vpop.permute.xlu0 %2517
    %2520 = vset.pattern.permute.xlu0 6
    %2521 = vperm.xlu0 %2520, %v78
    %v2522 = vpop.permute.xlu0 %2521
    %2524 = vset.pattern.permute.xlu0 6
    %2525 = vperm.xlu0 %2524, %v79
    %v2526 = vpop.permute.xlu0 %2525
    %2528 = vset.pattern.permute.xlu0 6
    %2529 = vperm.xlu0 %2528, %v80
    %v2530 = vpop.permute.xlu0 %2529
    %2532 = vset.pattern.permute.xlu0 6
    %2533 = vperm.xlu0 %2532, %v81
    %v2534 = vpop.permute.xlu0 %2533
    %2536 = vset.pattern.permute.xlu0 6
    %2537 = vperm.xlu0 %2536, %v82
    %v2538 = vpop.permute.xlu0 %2537
    %2540 = vset.pattern.permute.xlu0 6
    %2541 = vperm.xlu0 %2540, %v83
    %v2542 = vpop.permute.xlu0 %2541
    %2544 = vset.pattern.permute.xlu0 6
    %2545 = vperm.xlu0 %2544, %v84
    %v2546 = vpop.permute.xlu0 %2545
    %2548 = vset.pattern.permute.xlu0 6
    %2549 = vperm.xlu0 %2548, %v85
    %v2550 = vpop.permute.xlu0 %2549
    %2552 = vset.pattern.permute.xlu0 6
    %2553 = vperm.xlu0 %2552, %v86
    %v2554 = vpop.permute.xlu0 %2553
    %2556 = vset.pattern.permute.xlu0 6
    %2557 = vperm.xlu0 %2556, %v87
    %v2558 = vpop.permute.xlu0 %2557
    %v2560 = vmul.f32 %v42, %v2462
    %v2561 = vmul.f32 %v43, %v2466
    %v2562 = vmul.f32 %v44, %v2470
    %v2563 = vmul.f32 %v45, %v2474
    %v2564 = vmul.f32 %v46, %v2478
    %v2565 = vmul.f32 %v47, %v2482
    %v2566 = vmul.f32 %v48, %v2486
    %v2567 = vmul.f32 %v49, %v2490
    %v2568 = vmul.f32 %v50, %v2494
    %v2569 = vmul.f32 %v51, %v2498
    %v2570 = vmul.f32 %v52, %v2502
    %v2571 = vmul.f32 %v53, %v2506
    %v2572 = vmul.f32 %v54, %v2510
    %v2573 = vmul.f32 %v55, %v2514
    %v2574 = vmul.f32 %v56, %v2518
    %v2575 = vmul.f32 %v57, %v2522
    %v2576 = vmul.f32 %v58, %v2526
    %v2577 = vmul.f32 %v59, %v2530
    %v2578 = vmul.f32 %v60, %v2534
    %v2579 = vmul.f32 %v61, %v2538
    %v2580 = vmul.f32 %v62, %v2542
    %v2581 = vmul.f32 %v38, %v2546
    %v2582 = vmul.f32 %v39, %v2550
    %v2583 = vmul.f32 %v40, %v2554
    %v2584 = vmul.f32 %v41, %v2558
    %s2585 = scalar_lea.vmem %s2, 48
    %v2586 = vld [vmem:[%s2585] sm:$0x3f]
    %v2588 = vsel %vm367, %v2560, 0
    %v2591 = vsel %vm367, %v2561, 0
    %v2594 = vsel %vm367, %v2562, 0
    %v2597 = vsel %vm367, %v2563, 0
    %v2600 = vsel %vm367, %v2564, 0
    %v2603 = vsel %vm367, %v2565, 0
    %v2606 = vsel %vm367, %v2566, 0
    %v2609 = vsel %vm367, %v2567, 0
    %v2612 = vsel %vm367, %v2568, 0
    %v2615 = vsel %vm367, %v2569, 0
    %v2618 = vsel %vm367, %v2570, 0
    %v2621 = vsel %vm367, %v2571, 0
    %v2624 = vsel %vm367, %v2572, 0
    %v2627 = vsel %vm367, %v2573, 0
    %v2630 = vsel %vm367, %v2574, 0
    %v2633 = vsel %vm367, %v2575, 0
    %v2636 = vsel %vm367, %v2576, 0
    %v2639 = vsel %vm367, %v2577, 0
    %v2642 = vsel %vm367, %v2578, 0
    %v2645 = vsel %vm367, %v2579, 0
    %v2648 = vsel %vm367, %v2580, 0
    %v2651 = vsel %vm367, %v2581, 0
    %v2654 = vsel %vm367, %v2582, 0
    %v2657 = vsel %vm367, %v2583, 0
    %v2660 = vsel %vm367, %v2584, 0
    %v2663 = vsel %vm443, %v2586, 0
    %2665 = vmatprep.subr.mxu0 0.0
    %2666 = vmatpush1.msra.mxu0 %v2663
    %2667 = vmatprep.subr.mxu0 0.0
    %2668 = vmatpush1.msra.mxu0 0.0
    %2669 = vmatprep.subr.mxu0 0.0
    %2670 = vmatpush1.msra.mxu0 0.0
    %2671 = vmatprep.subr.mxu0 0.0
    %2672 = vmatpush1.msra.mxu0 0.0
    %2673 = vmatprep.subr.mxu0 0.0
    %2674 = vmatpush1.msra.mxu0 0.0
    %2675 = vmatprep.subr.mxu0 0.0
    %2676 = vmatpush1.msra.mxu0 0.0
    %2677 = vmatprep.subr.mxu0 0.0
    %2678 = vmatpush1.msra.mxu0 0.0
    %2679 = vmatprep.subr.mxu0 0.0
    %2680 = vmatpush1.msra.mxu0 0.0
    %2681 = vmatprep.subr.mxu0 0.0
    %2682 = vmatpush1.msra.mxu0 0.0
    %2683 = vmatprep.subr.mxu0 0.0
    %2684 = vmatpush1.msra.mxu0 0.0
    %2685 = vmatprep.subr.mxu0 0.0
    %2686 = vmatpush1.msra.mxu0 0.0
    %2687 = vmatprep.subr.mxu0 0.0
    %2688 = vmatpush1.msra.mxu0 0.0
    %2689 = vmatprep.subr.mxu0 0.0
    %2690 = vmatpush1.msra.mxu0 0.0
    %2691 = vmatprep.subr.mxu0 0.0
    %2692 = vmatpush1.msra.mxu0 0.0
    %2693 = vmatprep.subr.mxu0 0.0
    %2694 = vmatpush1.msra.mxu0 0.0
    %2695 = vmatprep.subr.mxu0 0.0
    %2696 = vmatpush1.msra.mxu0 0.0
    %2697 = vmatprep.subr.mxu0 0.0
    %2698 = vmatpush1.msra.mxu0 0.0
    %2699 = vmatprep.subr.mxu0 0.0
    %2700 = vmatpush1.msra.mxu0 0.0
    %2701 = vmatprep.subr.mxu0 0.0
    %2702 = vmatpush1.msra.mxu0 0.0
    %2703 = vmatprep.subr.mxu0 0.0
    %2704 = vmatpush1.msra.mxu0 0.0
    %2705 = vmatprep.subr.mxu0 0.0
    %2706 = vmatpush1.msra.mxu0 0.0
    %2707 = vmatprep.subr.mxu0 0.0
    %2708 = vmatpush1.msra.mxu0 0.0
    %2709 = vmatprep.subr.mxu0 0.0
    %2710 = vmatpush1.msra.mxu0 0.0
    %2711 = vmatprep.subr.mxu0 0.0
    %2712 = vmatpush1.msra.mxu0 0.0
    %2713 = vmatprep.subr.mxu0 0.0
    %2714 = vmatpush1.msra.mxu0 0.0
    %2715 = vmatprep.subr.mxu0 0.0
    %2716 = vmatpush1.msra.mxu0 0.0
    %2717 = vmatprep.subr.mxu0 0.0
    %2718 = vmatpush1.msra.mxu0 0.0
    %2719 = vmatprep.subr.mxu0 0.0
    %2720 = vmatpush1.msra.mxu0 0.0
    %2721 = vmatprep.subr.mxu0 0.0
    %2722 = vmatpush1.msra.mxu0 0.0
    %2723 = vmatprep.subr.mxu0 0.0
    %2724 = vmatpush1.msra.mxu0 0.0
    %2725 = vmatprep.subr.mxu0 0.0
    %2726 = vmatpush1.msra.mxu0 0.0
    %2727 = vmatprep.subr.mxu0 0.0
    %2728 = vmatpush1.msra.mxu0 0.0
    %2729 = vmatprep.mubr.f32.mxu0 0.0
    %2730 = vmatmul.mubr.f32.gmra.mrb[0].mxu0 %v2588
    %v2731 = vpop.f32.mrb[0].mxu0
    %v2732 = vadd.f32 0.0, %v2731
    %v2733 = vpop.f32.mrb[0].mxu0
    %2734 = vmatprep.mubr.f32.mxu0 0.0
    %2735 = vmatmul.mubr.f32.gmra.mrb[0].mxu0 %v2591
    %v2736 = vpop.f32.mrb[0].mxu0
    %v2737 = vadd.f32 0.0, %v2736
    %v2738 = vpop.f32.mrb[0].mxu0
    %2739 = vmatprep.mubr.f32.mxu0 0.0
    %2740 = vmatmul.mubr.f32.gmra.mrb[0].mxu0 %v2594
    %v2741 = vpop.f32.mrb[0].mxu0
    %v2742 = vadd.f32 0.0, %v2741
    %v2743 = vpop.f32.mrb[0].mxu0
    %2744 = vmatprep.mubr.f32.mxu0 0.0
    %2745 = vmatmul.mubr.f32.gmra.mrb[0].mxu0 %v2597
    %v2746 = vpop.f32.mrb[0].mxu0
    %v2747 = vadd.f32 0.0, %v2746
    %v2748 = vpop.f32.mrb[0].mxu0
    %2749 = vmatprep.mubr.f32.mxu0 0.0
    %2750 = vmatmul.mubr.f32.gmra.mrb[0].mxu0 %v2600
    %v2751 = vpop.f32.mrb[0].mxu0
    %v2752 = vadd.f32 0.0, %v2751
    %v2753 = vpop.f32.mrb[0].mxu0
    %2754 = vmatprep.mubr.f32.mxu0 0.0
    %2755 = vmatmul.mubr.f32.gmra.mrb[0].mxu0 %v2603
    %v2756 = vpop.f32.mrb[0].mxu0
    %v2757 = vadd.f32 0.0, %v2756
    %v2758 = vpop.f32.mrb[0].mxu0
    %2759 = vmatprep.mubr.f32.mxu0 0.0
    %2760 = vmatmul.mubr.f32.gmra.mrb[0].mxu0 %v2606
    %v2761 = vpop.f32.mrb[0].mxu0
    %v2762 = vadd.f32 0.0, %v2761
    %v2763 = vpop.f32.mrb[0].mxu0
    %2764 = vmatprep.mubr.f32.mxu0 0.0
    %2765 = vmatmul.mubr.f32.gmra.mrb[0].mxu0 %v2609
    %v2766 = vpop.f32.mrb[0].mxu0
    %v2767 = vadd.f32 0.0, %v2766
    %v2768 = vpop.f32.mrb[0].mxu0
    %2769 = vmatprep.mubr.f32.mxu0 0.0
    %2770 = vmatmul.mubr.f32.gmra.mrb[0].mxu0 %v2612
    %v2771 = vpop.f32.mrb[0].mxu0
    %v2772 = vadd.f32 0.0, %v2771
    %v2773 = vpop.f32.mrb[0].mxu0
    %2774 = vmatprep.mubr.f32.mxu0 0.0
    %2775 = vmatmul.mubr.f32.gmra.mrb[0].mxu0 %v2615
    %v2776 = vpop.f32.mrb[0].mxu0
    %v2777 = vadd.f32 0.0, %v2776
    %v2778 = vpop.f32.mrb[0].mxu0
    %2779 = vmatprep.mubr.f32.mxu0 0.0
    %2780 = vmatmul.mubr.f32.gmra.mrb[0].mxu0 %v2618
    %v2781 = vpop.f32.mrb[0].mxu0
    %v2782 = vadd.f32 0.0, %v2781
    %v2783 = vpop.f32.mrb[0].mxu0
    %2784 = vmatprep.mubr.f32.mxu0 0.0
    %2785 = vmatmul.mubr.f32.gmra.mrb[0].mxu0 %v2621
    %v2786 = vpop.f32.mrb[0].mxu0
    %v2787 = vadd.f32 0.0, %v2786
    %v2788 = vpop.f32.mrb[0].mxu0
    %2789 = vmatprep.mubr.f32.mxu0 0.0
    %2790 = vmatmul.mubr.f32.gmra.mrb[0].mxu0 %v2624
    %v2791 = vpop.f32.mrb[0].mxu0
    %v2792 = vadd.f32 0.0, %v2791
    %v2793 = vpop.f32.mrb[0].mxu0
    %2794 = vmatprep.mubr.f32.mxu0 0.0
    %2795 = vmatmul.mubr.f32.gmra.mrb[0].mxu0 %v2627
    %v2796 = vpop.f32.mrb[0].mxu0
    %v2797 = vadd.f32 0.0, %v2796
    %v2798 = vpop.f32.mrb[0].mxu0
    %2799 = vmatprep.mubr.f32.mxu0 0.0
    %2800 = vmatmul.mubr.f32.gmra.mrb[0].mxu0 %v2630
    %v2801 = vpop.f32.mrb[0].mxu0
    %v2802 = vadd.f32 0.0, %v2801
    %v2803 = vpop.f32.mrb[0].mxu0
    %2804 = vmatprep.mubr.f32.mxu0 0.0
    %2805 = vmatmul.mubr.f32.gmra.mrb[0].mxu0 %v2633
    %v2806 = vpop.f32.mrb[0].mxu0
    %v2807 = vadd.f32 0.0, %v2806
    %v2808 = vpop.f32.mrb[0].mxu0
    %2809 = vmatprep.mubr.f32.mxu0 0.0
    %2810 = vmatmul.mubr.f32.gmra.mrb[0].mxu0 %v2636
    %v2811 = vpop.f32.mrb[0].mxu0
    %v2812 = vadd.f32 0.0, %v2811
    %v2813 = vpop.f32.mrb[0].mxu0
    %2814 = vmatprep.mubr.f32.mxu0 0.0
    %2815 = vmatmul.mubr.f32.gmra.mrb[0].mxu0 %v2639
    %v2816 = vpop.f32.mrb[0].mxu0
    %v2817 = vadd.f32 0.0, %v2816
    %v2818 = vpop.f32.mrb[0].mxu0
    %2819 = vmatprep.mubr.f32.mxu0 0.0
    %2820 = vmatmul.mubr.f32.gmra.mrb[0].mxu0 %v2642
    %v2821 = vpop.f32.mrb[0].mxu0
    %v2822 = vadd.f32 0.0, %v2821
    %v2823 = vpop.f32.mrb[0].mxu0
    %2824 = vmatprep.mubr.f32.mxu0 0.0
    %2825 = vmatmul.mubr.f32.gmra.mrb[0].mxu0 %v2645
    %v2826 = vpop.f32.mrb[0].mxu0
    %v2827 = vadd.f32 0.0, %v2826
    %v2828 = vpop.f32.mrb[0].mxu0
    %2829 = vmatprep.mubr.f32.mxu0 0.0
    %2830 = vmatmul.mubr.f32.gmra.mrb[0].mxu0 %v2648
    %v2831 = vpop.f32.mrb[0].mxu0
    %v2832 = vadd.f32 0.0, %v2831
    %v2833 = vpop.f32.mrb[0].mxu0
    %2834 = vmatprep.mubr.f32.mxu0 0.0
    %2835 = vmatmul.mubr.f32.gmra.mrb[0].mxu0 %v2651
    %v2836 = vpop.f32.mrb[0].mxu0
    %v2837 = vadd.f32 0.0, %v2836
    %v2838 = vpop.f32.mrb[0].mxu0
    %2839 = vmatprep.mubr.f32.mxu0 0.0
    %2840 = vmatmul.mubr.f32.gmra.mrb[0].mxu0 %v2654
    %v2841 = vpop.f32.mrb[0].mxu0
    %v2842 = vadd.f32 0.0, %v2841
    %v2843 = vpop.f32.mrb[0].mxu0
    %2844 = vmatprep.mubr.f32.mxu0 0.0
    %2845 = vmatmul.mubr.f32.gmra.mrb[0].mxu0 %v2657
    %v2846 = vpop.f32.mrb[0].mxu0
    %v2847 = vadd.f32 0.0, %v2846
    %v2848 = vpop.f32.mrb[0].mxu0
    %2849 = vmatprep.mubr.f32.mxu0 0.0
    %2850 = vmatmul.mubr.f32.gmra.mrb[0].mxu0 %v2660
    %v2851 = vpop.f32.mrb[0].mxu0
    %v2852 = vadd.f32 0.0, %v2851
    %v2853 = vpop.f32.mrb[0].mxu0
    %2854 = vdwg.mxu0
    %v2855 = vadd.f32 %v2435, %v2732
    %v2856 = vadd.f32 %v2436, %v2737
    %v2857 = vadd.f32 %v2437, %v2742
    %v2858 = vadd.f32 %v2438, %v2747
    %v2859 = vadd.f32 %v2439, %v2752
    %v2860 = vadd.f32 %v2440, %v2757
    %v2861 = vadd.f32 %v2441, %v2762
    %v2862 = vadd.f32 %v2442, %v2767
    %v2863 = vadd.f32 %v2443, %v2772
    %v2864 = vadd.f32 %v2444, %v2777
    %v2865 = vadd.f32 %v2445, %v2782
    %v2866 = vadd.f32 %v2446, %v2787
    %v2867 = vadd.f32 %v2447, %v2792
    %v2868 = vadd.f32 %v2448, %v2797
    %v2869 = vadd.f32 %v2449, %v2802
    %v2870 = vadd.f32 %v2450, %v2807
    %v2871 = vadd.f32 %v2451, %v2812
    %v2872 = vadd.f32 %v2452, %v2817
    %v2873 = vadd.f32 %v2453, %v2822
    %v2874 = vadd.f32 %v2454, %v2827
    %v2875 = vadd.f32 %v2455, %v2832
    %v2876 = vadd.f32 %v2456, %v2837
    %v2877 = vadd.f32 %v2457, %v2842
    %v2878 = vadd.f32 %v2458, %v2847
    %v2879 = vadd.f32 %v2459, %v2852
    %2880 = vset.pattern.permute.xlu0 7
    %2881 = vperm.xlu0 %2880, %v63
    %v2882 = vpop.permute.xlu0 %2881
    %2884 = vset.pattern.permute.xlu0 7
    %2885 = vperm.xlu0 %2884, %v64
    %v2886 = vpop.permute.xlu0 %2885
    %2888 = vset.pattern.permute.xlu0 7
    %2889 = vperm.xlu0 %2888, %v65
    %v2890 = vpop.permute.xlu0 %2889
    %2892 = vset.pattern.permute.xlu0 7
    %2893 = vperm.xlu0 %2892, %v66
    %v2894 = vpop.permute.xlu0 %2893
    %2896 = vset.pattern.permute.xlu0 7
    %2897 = vperm.xlu0 %2896, %v67
    %v2898 = vpop.permute.xlu0 %2897
    %2900 = vset.pattern.permute.xlu0 7
    %2901 = vperm.xlu0 %2900, %v68
    %v2902 = vpop.permute.xlu0 %2901
    %2904 = vset.pattern.permute.xlu0 7
    %2905 = vperm.xlu0 %2904, %v69
    %v2906 = vpop.permute.xlu0 %2905
    %2908 = vset.pattern.permute.xlu0 7
    %2909 = vperm.xlu0 %2908, %v70
    %v2910 = vpop.permute.xlu0 %2909
    %2912 = vset.pattern.permute.xlu0 7
    %2913 = vperm.xlu0 %2912, %v71
    %v2914 = vpop.permute.xlu0 %2913
    %2916 = vset.pattern.permute.xlu0 7
    %2917 = vperm.xlu0 %2916, %v72
    %v2918 = vpop.permute.xlu0 %2917
    %2920 = vset.pattern.permute.xlu0 7
    %2921 = vperm.xlu0 %2920, %v73
    %v2922 = vpop.permute.xlu0 %2921
    %2924 = vset.pattern.permute.xlu0 7
    %2925 = vperm.xlu0 %2924, %v74
    %v2926 = vpop.permute.xlu0 %2925
    %2928 = vset.pattern.permute.xlu0 7
    %2929 = vperm.xlu0 %2928, %v75
    %v2930 = vpop.permute.xlu0 %2929
    %2932 = vset.pattern.permute.xlu0 7
    %2933 = vperm.xlu0 %2932, %v76
    %v2934 = vpop.permute.xlu0 %2933
    %2936 = vset.pattern.permute.xlu0 7
    %2937 = vperm.xlu0 %2936, %v77
    %v2938 = vpop.permute.xlu0 %2937
    %2940 = vset.pattern.permute.xlu0 7
    %2941 = vperm.xlu0 %2940, %v78
    %v2942 = vpop.permute.xlu0 %2941
    %2944 = vset.pattern.permute.xlu0 7
    %2945 = vperm.xlu0 %2944, %v79
    %v2946 = vpop.permute.xlu0 %2945
    %2948 = vset.pattern.permute.xlu0 7
    %2949 = vperm.xlu0 %2948, %v80
    %v2950 = vpop.permute.xlu0 %2949
    %2952 = vset.pattern.permute.xlu0 7
    %2953 = vperm.xlu0 %2952, %v81
    %v2954 = vpop.permute.xlu0 %2953
    %2956 = vset.pattern.permute.xlu0 7
    %2957 = vperm.xlu0 %2956, %v82
    %v2958 = vpop.permute.xlu0 %2957
    %2960 = vset.pattern.permute.xlu0 7
    %2961 = vperm.xlu0 %2960, %v83
    %v2962 = vpop.permute.xlu0 %2961
    %2964 = vset.pattern.permute.xlu0 7
    %2965 = vperm.xlu0 %2964, %v84
    %v2966 = vpop.permute.xlu0 %2965
    %2968 = vset.pattern.permute.xlu0 7
    %2969 = vperm.xlu0 %2968, %v85
    %v2970 = vpop.permute.xlu0 %2969
    %2972 = vset.pattern.permute.xlu0 7
    %2973 = vperm.xlu0 %2972, %v86
    %v2974 = vpop.permute.xlu0 %2973
    %2976 = vset.pattern.permute.xlu0 7
    %2977 = vperm.xlu0 %2976, %v87
    %v2978 = vpop.permute.xlu0 %2977
    %v2980 = vmul.f32 %v43, %v2882
    %v2981 = vmul.f32 %v44, %v2886
    %v2982 = vmul.f32 %v45, %v2890
    %v2983 = vmul.f32 %v46, %v2894
    %v2984 = vmul.f32 %v47, %v2898
    %v2985 = vmul.f32 %v48, %v2902
    %v2986 = vmul.f32 %v49, %v2906
    %v2987 = vmul.f32 %v50, %v2910
    %v2988 = vmul.f32 %v51, %v2914
    %v2989 = vmul.f32 %v52, %v2918
    %v2990 = vmul.f32 %v53, %v2922
    %v2991 = vmul.f32 %v54, %v2926
    %v2992 = vmul.f32 %v55, %v2930
    %v2993 = vmul.f32 %v56, %v2934
    %v2994 = vmul.f32 %v57, %v2938
    %v2995 = vmul.f32 %v58, %v2942
    %v2996 = vmul.f32 %v59, %v2946
    %v2997 = vmul.f32 %v60, %v2950
    %v2998 = vmul.f32 %v61, %v2954
    %v2999 = vmul.f32 %v62, %v2958
    %v3000 = vmul.f32 %v38, %v2962
    %v3001 = vmul.f32 %v39, %v2966
    %v3002 = vmul.f32 %v40, %v2970
    %v3003 = vmul.f32 %v41, %v2974
    %v3004 = vmul.f32 %v42, %v2978
    %s3005 = scalar_lea.vmem %s2, 56
    %v3006 = vld [vmem:[%s3005] sm:$0x3f]
    %v3008 = vsel %vm367, %v2980, 0
    %v3011 = vsel %vm367, %v2981, 0
    %v3014 = vsel %vm367, %v2982, 0
    %v3017 = vsel %vm367, %v2983, 0
    %v3020 = vsel %vm367, %v2984, 0
    %v3023 = vsel %vm367, %v2985, 0
    %v3026 = vsel %vm367, %v2986, 0
    %v3029 = vsel %vm367, %v2987, 0
    %v3032 = vsel %vm367, %v2988, 0
    %v3035 = vsel %vm367, %v2989, 0
    %v3038 = vsel %vm367, %v2990, 0
    %v3041 = vsel %vm367, %v2991, 0
    %v3044 = vsel %vm367, %v2992, 0
    %v3047 = vsel %vm367, %v2993, 0
    %v3050 = vsel %vm367, %v2994, 0
    %v3053 = vsel %vm367, %v2995, 0
    %v3056 = vsel %vm367, %v2996, 0
    %v3059 = vsel %vm367, %v2997, 0
    %v3062 = vsel %vm367, %v2998, 0
    %v3065 = vsel %vm367, %v2999, 0
    %v3068 = vsel %vm367, %v3000, 0
    %v3071 = vsel %vm367, %v3001, 0
    %v3074 = vsel %vm367, %v3002, 0
    %v3077 = vsel %vm367, %v3003, 0
    %v3080 = vsel %vm367, %v3004, 0
    %v3083 = vsel %vm443, %v3006, 0
    %3085 = vmatprep.subr.mxu0 0.0
    %3086 = vmatpush1.msra.mxu0 %v3083
    %3087 = vmatprep.subr.mxu0 0.0
    %3088 = vmatpush1.msra.mxu0 0.0
    %3089 = vmatprep.subr.mxu0 0.0
    %3090 = vmatpush1.msra.mxu0 0.0
    %3091 = vmatprep.subr.mxu0 0.0
    %3092 = vmatpush1.msra.mxu0 0.0
    %3093 = vmatprep.subr.mxu0 0.0
    %3094 = vmatpush1.msra.mxu0 0.0
    %3095 = vmatprep.subr.mxu0 0.0
    %3096 = vmatpush1.msra.mxu0 0.0
    %3097 = vmatprep.subr.mxu0 0.0
    %3098 = vmatpush1.msra.mxu0 0.0
    %3099 = vmatprep.subr.mxu0 0.0
    %3100 = vmatpush1.msra.mxu0 0.0
    %3101 = vmatprep.subr.mxu0 0.0
    %3102 = vmatpush1.msra.mxu0 0.0
    %3103 = vmatprep.subr.mxu0 0.0
    %3104 = vmatpush1.msra.mxu0 0.0
    %3105 = vmatprep.subr.mxu0 0.0
    %3106 = vmatpush1.msra.mxu0 0.0
    %3107 = vmatprep.subr.mxu0 0.0
    %3108 = vmatpush1.msra.mxu0 0.0
    %3109 = vmatprep.subr.mxu0 0.0
    %3110 = vmatpush1.msra.mxu0 0.0
    %3111 = vmatprep.subr.mxu0 0.0
    %3112 = vmatpush1.msra.mxu0 0.0
    %3113 = vmatprep.subr.mxu0 0.0
    %3114 = vmatpush1.msra.mxu0 0.0
    %3115 = vmatprep.subr.mxu0 0.0
    %3116 = vmatpush1.msra.mxu0 0.0
    %3117 = vmatprep.subr.mxu0 0.0
    %3118 = vmatpush1.msra.mxu0 0.0
    %3119 = vmatprep.subr.mxu0 0.0
    %3120 = vmatpush1.msra.mxu0 0.0
    %3121 = vmatprep.subr.mxu0 0.0
    %3122 = vmatpush1.msra.mxu0 0.0
    %3123 = vmatprep.subr.mxu0 0.0
    %3124 = vmatpush1.msra.mxu0 0.0
    %3125 = vmatprep.subr.mxu0 0.0
    %3126 = vmatpush1.msra.mxu0 0.0
    %3127 = vmatprep.subr.mxu0 0.0
    %3128 = vmatpush1.msra.mxu0 0.0
    %3129 = vmatprep.subr.mxu0 0.0
    %3130 = vmatpush1.msra.mxu0 0.0
    %3131 = vmatprep.subr.mxu0 0.0
    %3132 = vmatpush1.msra.mxu0 0.0
    %3133 = vmatprep.subr.mxu0 0.0
    %3134 = vmatpush1.msra.mxu0 0.0
    %3135 = vmatprep.subr.mxu0 0.0
    %3136 = vmatpush1.msra.mxu0 0.0
    %3137 = vmatprep.subr.mxu0 0.0
    %3138 = vmatpush1.msra.mxu0 0.0
    %3139 = vmatprep.subr.mxu0 0.0
    %3140 = vmatpush1.msra.mxu0 0.0
    %3141 = vmatprep.subr.mxu0 0.0
    %3142 = vmatpush1.msra.mxu0 0.0
    %3143 = vmatprep.subr.mxu0 0.0
    %3144 = vmatpush1.msra.mxu0 0.0
    %3145 = vmatprep.subr.mxu0 0.0
    %3146 = vmatpush1.msra.mxu0 0.0
    %3147 = vmatprep.subr.mxu0 0.0
    %3148 = vmatpush1.msra.mxu0 0.0
    %3149 = vmatprep.mubr.f32.mxu0 0.0
    %3150 = vmatmul.mubr.f32.gmra.mrb[0].mxu0 %v3008
    %v3151 = vpop.f32.mrb[0].mxu0
    %v3152 = vadd.f32 0.0, %v3151
    %v3153 = vpop.f32.mrb[0].mxu0
    %3154 = vmatprep.mubr.f32.mxu0 0.0
    %3155 = vmatmul.mubr.f32.gmra.mrb[0].mxu0 %v3011
    %v3156 = vpop.f32.mrb[0].mxu0
    %v3157 = vadd.f32 0.0, %v3156
    %v3158 = vpop.f32.mrb[0].mxu0
    %3159 = vmatprep.mubr.f32.mxu0 0.0
    %3160 = vmatmul.mubr.f32.gmra.mrb[0].mxu0 %v3014
    %v3161 = vpop.f32.mrb[0].mxu0
    %v3162 = vadd.f32 0.0, %v3161
    %v3163 = vpop.f32.mrb[0].mxu0
    %3164 = vmatprep.mubr.f32.mxu0 0.0
    %3165 = vmatmul.mubr.f32.gmra.mrb[0].mxu0 %v3017
    %v3166 = vpop.f32.mrb[0].mxu0
    %v3167 = vadd.f32 0.0, %v3166
    %v3168 = vpop.f32.mrb[0].mxu0
    %3169 = vmatprep.mubr.f32.mxu0 0.0
    %3170 = vmatmul.mubr.f32.gmra.mrb[0].mxu0 %v3020
    %v3171 = vpop.f32.mrb[0].mxu0
    %v3172 = vadd.f32 0.0, %v3171
    %v3173 = vpop.f32.mrb[0].mxu0
    %3174 = vmatprep.mubr.f32.mxu0 0.0
    %3175 = vmatmul.mubr.f32.gmra.mrb[0].mxu0 %v3023
    %v3176 = vpop.f32.mrb[0].mxu0
    %v3177 = vadd.f32 0.0, %v3176
    %v3178 = vpop.f32.mrb[0].mxu0
    %3179 = vmatprep.mubr.f32.mxu0 0.0
    %3180 = vmatmul.mubr.f32.gmra.mrb[0].mxu0 %v3026
    %v3181 = vpop.f32.mrb[0].mxu0
    %v3182 = vadd.f32 0.0, %v3181
    %v3183 = vpop.f32.mrb[0].mxu0
    %3184 = vmatprep.mubr.f32.mxu0 0.0
    %3185 = vmatmul.mubr.f32.gmra.mrb[0].mxu0 %v3029
    %v3186 = vpop.f32.mrb[0].mxu0
    %v3187 = vadd.f32 0.0, %v3186
    %v3188 = vpop.f32.mrb[0].mxu0
    %3189 = vmatprep.mubr.f32.mxu0 0.0
    %3190 = vmatmul.mubr.f32.gmra.mrb[0].mxu0 %v3032
    %v3191 = vpop.f32.mrb[0].mxu0
    %v3192 = vadd.f32 0.0, %v3191
    %v3193 = vpop.f32.mrb[0].mxu0
    %3194 = vmatprep.mubr.f32.mxu0 0.0
    %3195 = vmatmul.mubr.f32.gmra.mrb[0].mxu0 %v3035
    %v3196 = vpop.f32.mrb[0].mxu0
    %v3197 = vadd.f32 0.0, %v3196
    %v3198 = vpop.f32.mrb[0].mxu0
    %3199 = vmatprep.mubr.f32.mxu0 0.0
    %3200 = vmatmul.mubr.f32.gmra.mrb[0].mxu0 %v3038
    %v3201 = vpop.f32.mrb[0].mxu0
    %v3202 = vadd.f32 0.0, %v3201
    %v3203 = vpop.f32.mrb[0].mxu0
    %3204 = vmatprep.mubr.f32.mxu0 0.0
    %3205 = vmatmul.mubr.f32.gmra.mrb[0].mxu0 %v3041
    %v3206 = vpop.f32.mrb[0].mxu0
    %v3207 = vadd.f32 0.0, %v3206
    %v3208 = vpop.f32.mrb[0].mxu0
    %3209 = vmatprep.mubr.f32.mxu0 0.0
    %3210 = vmatmul.mubr.f32.gmra.mrb[0].mxu0 %v3044
    %v3211 = vpop.f32.mrb[0].mxu0
    %v3212 = vadd.f32 0.0, %v3211
    %v3213 = vpop.f32.mrb[0].mxu0
    %3214 = vmatprep.mubr.f32.mxu0 0.0
    %3215 = vmatmul.mubr.f32.gmra.mrb[0].mxu0 %v3047
    %v3216 = vpop.f32.mrb[0].mxu0
    %v3217 = vadd.f32 0.0, %v3216
    %v3218 = vpop.f32.mrb[0].mxu0
    %3219 = vmatprep.mubr.f32.mxu0 0.0
    %3220 = vmatmul.mubr.f32.gmra.mrb[0].mxu0 %v3050
    %v3221 = vpop.f32.mrb[0].mxu0
    %v3222 = vadd.f32 0.0, %v3221
    %v3223 = vpop.f32.mrb[0].mxu0
    %3224 = vmatprep.mubr.f32.mxu0 0.0
    %3225 = vmatmul.mubr.f32.gmra.mrb[0].mxu0 %v3053
    %v3226 = vpop.f32.mrb[0].mxu0
    %v3227 = vadd.f32 0.0, %v3226
    %v3228 = vpop.f32.mrb[0].mxu0
    %3229 = vmatprep.mubr.f32.mxu0 0.0
    %3230 = vmatmul.mubr.f32.gmra.mrb[0].mxu0 %v3056
    %v3231 = vpop.f32.mrb[0].mxu0
    %v3232 = vadd.f32 0.0, %v3231
    %v3233 = vpop.f32.mrb[0].mxu0
    %3234 = vmatprep.mubr.f32.mxu0 0.0
    %3235 = vmatmul.mubr.f32.gmra.mrb[0].mxu0 %v3059
    %v3236 = vpop.f32.mrb[0].mxu0
    %v3237 = vadd.f32 0.0, %v3236
    %v3238 = vpop.f32.mrb[0].mxu0
    %3239 = vmatprep.mubr.f32.mxu0 0.0
    %3240 = vmatmul.mubr.f32.gmra.mrb[0].mxu0 %v3062
    %v3241 = vpop.f32.mrb[0].mxu0
    %v3242 = vadd.f32 0.0, %v3241
    %v3243 = vpop.f32.mrb[0].mxu0
    %3244 = vmatprep.mubr.f32.mxu0 0.0
    %3245 = vmatmul.mubr.f32.gmra.mrb[0].mxu0 %v3065
    %v3246 = vpop.f32.mrb[0].mxu0
    %v3247 = vadd.f32 0.0, %v3246
    %v3248 = vpop.f32.mrb[0].mxu0
    %3249 = vmatprep.mubr.f32.mxu0 0.0
    %3250 = vmatmul.mubr.f32.gmra.mrb[0].mxu0 %v3068
    %v3251 = vpop.f32.mrb[0].mxu0
    %v3252 = vadd.f32 0.0, %v3251
    %v3253 = vpop.f32.mrb[0].mxu0
    %3254 = vmatprep.mubr.f32.mxu0 0.0
    %3255 = vmatmul.mubr.f32.gmra.mrb[0].mxu0 %v3071
    %v3256 = vpop.f32.mrb[0].mxu0
    %v3257 = vadd.f32 0.0, %v3256
    %v3258 = vpop.f32.mrb[0].mxu0
    %3259 = vmatprep.mubr.f32.mxu0 0.0
    %3260 = vmatmul.mubr.f32.gmra.mrb[0].mxu0 %v3074
    %v3261 = vpop.f32.mrb[0].mxu0
    %v3262 = vadd.f32 0.0, %v3261
    %v3263 = vpop.f32.mrb[0].mxu0
    %3264 = vmatprep.mubr.f32.mxu0 0.0
    %3265 = vmatmul.mubr.f32.gmra.mrb[0].mxu0 %v3077
    %v3266 = vpop.f32.mrb[0].mxu0
    %v3267 = vadd.f32 0.0, %v3266
    %v3268 = vpop.f32.mrb[0].mxu0
    %3269 = vmatprep.mubr.f32.mxu0 0.0
    %3270 = vmatmul.mubr.f32.gmra.mrb[0].mxu0 %v3080
    %v3271 = vpop.f32.mrb[0].mxu0
    %v3272 = vadd.f32 0.0, %v3271
    %v3273 = vpop.f32.mrb[0].mxu0
    %3274 = vdwg.mxu0
    %v3275 = vadd.f32 %v2855, %v3152
    %v3276 = vadd.f32 %v2856, %v3157
    %v3277 = vadd.f32 %v2857, %v3162
    %v3278 = vadd.f32 %v2858, %v3167
    %v3279 = vadd.f32 %v2859, %v3172
    %v3280 = vadd.f32 %v2860, %v3177
    %v3281 = vadd.f32 %v2861, %v3182
    %v3282 = vadd.f32 %v2862, %v3187
    %v3283 = vadd.f32 %v2863, %v3192
    %v3284 = vadd.f32 %v2864, %v3197
    %v3285 = vadd.f32 %v2865, %v3202
    %v3286 = vadd.f32 %v2866, %v3207
    %v3287 = vadd.f32 %v2867, %v3212
    %v3288 = vadd.f32 %v2868, %v3217
    %v3289 = vadd.f32 %v2869, %v3222
    %v3290 = vadd.f32 %v2870, %v3227
    %v3291 = vadd.f32 %v2871, %v3232
    %v3292 = vadd.f32 %v2872, %v3237
    %v3293 = vadd.f32 %v2873, %v3242
    %v3294 = vadd.f32 %v2874, %v3247
    %v3295 = vadd.f32 %v2875, %v3252
    %v3296 = vadd.f32 %v2876, %v3257
    %v3297 = vadd.f32 %v2877, %v3262
    %v3298 = vadd.f32 %v2878, %v3267
    %v3299 = vadd.f32 %v2879, %v3272
    %3300 = vset.pattern.permute.xlu0 8
    %3301 = vperm.xlu0 %3300, %v63
    %v3302 = vpop.permute.xlu0 %3301
    %3304 = vset.pattern.permute.xlu0 8
    %3305 = vperm.xlu0 %3304, %v64
    %v3306 = vpop.permute.xlu0 %3305
    %3308 = vset.pattern.permute.xlu0 8
    %3309 = vperm.xlu0 %3308, %v65
    %v3310 = vpop.permute.xlu0 %3309
    %3312 = vset.pattern.permute.xlu0 8
    %3313 = vperm.xlu0 %3312, %v66
    %v3314 = vpop.permute.xlu0 %3313
    %3316 = vset.pattern.permute.xlu0 8
    %3317 = vperm.xlu0 %3316, %v67
    %v3318 = vpop.permute.xlu0 %3317
    %3320 = vset.pattern.permute.xlu0 8
    %3321 = vperm.xlu0 %3320, %v68
    %v3322 = vpop.permute.xlu0 %3321
    %3324 = vset.pattern.permute.xlu0 8
    %3325 = vperm.xlu0 %3324, %v69
    %v3326 = vpop.permute.xlu0 %3325
    %3328 = vset.pattern.permute.xlu0 8
    %3329 = vperm.xlu0 %3328, %v70
    %v3330 = vpop.permute.xlu0 %3329
    %3332 = vset.pattern.permute.xlu0 8
    %3333 = vperm.xlu0 %3332, %v71
    %v3334 = vpop.permute.xlu0 %3333
    %3336 = vset.pattern.permute.xlu0 8
    %3337 = vperm.xlu0 %3336, %v72
    %v3338 = vpop.permute.xlu0 %3337
    %3340 = vset.pattern.permute.xlu0 8
    %3341 = vperm.xlu0 %3340, %v73
    %v3342 = vpop.permute.xlu0 %3341
    %3344 = vset.pattern.permute.xlu0 8
    %3345 = vperm.xlu0 %3344, %v74
    %v3346 = vpop.permute.xlu0 %3345
    %3348 = vset.pattern.permute.xlu0 8
    %3349 = vperm.xlu0 %3348, %v75
    %v3350 = vpop.permute.xlu0 %3349
    %3352 = vset.pattern.permute.xlu0 8
    %3353 = vperm.xlu0 %3352, %v76
    %v3354 = vpop.permute.xlu0 %3353
    %3356 = vset.pattern.permute.xlu0 8
    %3357 = vperm.xlu0 %3356, %v77
    %v3358 = vpop.permute.xlu0 %3357
    %3360 = vset.pattern.permute.xlu0 8
    %3361 = vperm.xlu0 %3360, %v78
    %v3362 = vpop.permute.xlu0 %3361
    %3364 = vset.pattern.permute.xlu0 8
    %3365 = vperm.xlu0 %3364, %v79
    %v3366 = vpop.permute.xlu0 %3365
    %3368 = vset.pattern.permute.xlu0 8
    %3369 = vperm.xlu0 %3368, %v80
    %v3370 = vpop.permute.xlu0 %3369
    %3372 = vset.pattern.permute.xlu0 8
    %3373 = vperm.xlu0 %3372, %v81
    %v3374 = vpop.permute.xlu0 %3373
    %3376 = vset.pattern.permute.xlu0 8
    %3377 = vperm.xlu0 %3376, %v82
    %v3378 = vpop.permute.xlu0 %3377
    %3380 = vset.pattern.permute.xlu0 8
    %3381 = vperm.xlu0 %3380, %v83
    %v3382 = vpop.permute.xlu0 %3381
    %3384 = vset.pattern.permute.xlu0 8
    %3385 = vperm.xlu0 %3384, %v84
    %v3386 = vpop.permute.xlu0 %3385
    %3388 = vset.pattern.permute.xlu0 8
    %3389 = vperm.xlu0 %3388, %v85
    %v3390 = vpop.permute.xlu0 %3389
    %3392 = vset.pattern.permute.xlu0 8
    %3393 = vperm.xlu0 %3392, %v86
    %v3394 = vpop.permute.xlu0 %3393
    %3396 = vset.pattern.permute.xlu0 8
    %3397 = vperm.xlu0 %3396, %v87
    %v3398 = vpop.permute.xlu0 %3397
    %v3400 = vmul.f32 %v44, %v3302
    %v3401 = vmul.f32 %v45, %v3306
    %v3402 = vmul.f32 %v46, %v3310
    %v3403 = vmul.f32 %v47, %v3314
    %v3404 = vmul.f32 %v48, %v3318
    %v3405 = vmul.f32 %v49, %v3322
    %v3406 = vmul.f32 %v50, %v3326
    %v3407 = vmul.f32 %v51, %v3330
    %v3408 = vmul.f32 %v52, %v3334
    %v3409 = vmul.f32 %v53, %v3338
    %v3410 = vmul.f32 %v54, %v3342
    %v3411 = vmul.f32 %v55, %v3346
    %v3412 = vmul.f32 %v56, %v3350
    %v3413 = vmul.f32 %v57, %v3354
    %v3414 = vmul.f32 %v58, %v3358
    %v3415 = vmul.f32 %v59, %v3362
    %v3416 = vmul.f32 %v60, %v3366
    %v3417 = vmul.f32 %v61, %v3370
    %v3418 = vmul.f32 %v62, %v3374
    %v3419 = vmul.f32 %v38, %v3378
    %v3420 = vmul.f32 %v39, %v3382
    %v3421 = vmul.f32 %v40, %v3386
    %v3422 = vmul.f32 %v41, %v3390
    %v3423 = vmul.f32 %v42, %v3394
    %v3424 = vmul.f32 %v43, %v3398
    %s3425 = scalar_lea.vmem %s2, 64
    %v3426 = vld [vmem:[%s3425] sm:$0x3f]
    %v3428 = vsel %vm367, %v3400, 0
    %v3431 = vsel %vm367, %v3401, 0
    %v3434 = vsel %vm367, %v3402, 0
    %v3437 = vsel %vm367, %v3403, 0
    %v3440 = vsel %vm367, %v3404, 0
    %v3443 = vsel %vm367, %v3405, 0
    %v3446 = vsel %vm367, %v3406, 0
    %v3449 = vsel %vm367, %v3407, 0
    %v3452 = vsel %vm367, %v3408, 0
    %v3455 = vsel %vm367, %v3409, 0
    %v3458 = vsel %vm367, %v3410, 0
    %v3461 = vsel %vm367, %v3411, 0
    %v3464 = vsel %vm367, %v3412, 0
    %v3467 = vsel %vm367, %v3413, 0
    %v3470 = vsel %vm367, %v3414, 0
    %v3473 = vsel %vm367, %v3415, 0
    %v3476 = vsel %vm367, %v3416, 0
    %v3479 = vsel %vm367, %v3417, 0
    %v3482 = vsel %vm367, %v3418, 0
    %v3485 = vsel %vm367, %v3419, 0
    %v3488 = vsel %vm367, %v3420, 0
    %v3491 = vsel %vm367, %v3421, 0
    %v3494 = vsel %vm367, %v3422, 0
    %v3497 = vsel %vm367, %v3423, 0
    %v3500 = vsel %vm367, %v3424, 0
    %v3503 = vsel %vm443, %v3426, 0
    %3505 = vmatprep.subr.mxu0 0.0
    %3506 = vmatpush1.msra.mxu0 %v3503
    %3507 = vmatprep.subr.mxu0 0.0
    %3508 = vmatpush1.msra.mxu0 0.0
    %3509 = vmatprep.subr.mxu0 0.0
    %3510 = vmatpush1.msra.mxu0 0.0
    %3511 = vmatprep.subr.mxu0 0.0
    %3512 = vmatpush1.msra.mxu0 0.0
    %3513 = vmatprep.subr.mxu0 0.0
    %3514 = vmatpush1.msra.mxu0 0.0
    %3515 = vmatprep.subr.mxu0 0.0
    %3516 = vmatpush1.msra.mxu0 0.0
    %3517 = vmatprep.subr.mxu0 0.0
    %3518 = vmatpush1.msra.mxu0 0.0
    %3519 = vmatprep.subr.mxu0 0.0
    %3520 = vmatpush1.msra.mxu0 0.0
    %3521 = vmatprep.subr.mxu0 0.0
    %3522 = vmatpush1.msra.mxu0 0.0
    %3523 = vmatprep.subr.mxu0 0.0
    %3524 = vmatpush1.msra.mxu0 0.0
    %3525 = vmatprep.subr.mxu0 0.0
    %3526 = vmatpush1.msra.mxu0 0.0
    %3527 = vmatprep.subr.mxu0 0.0
    %3528 = vmatpush1.msra.mxu0 0.0
    %3529 = vmatprep.subr.mxu0 0.0
    %3530 = vmatpush1.msra.mxu0 0.0
    %3531 = vmatprep.subr.mxu0 0.0
    %3532 = vmatpush1.msra.mxu0 0.0
    %3533 = vmatprep.subr.mxu0 0.0
    %3534 = vmatpush1.msra.mxu0 0.0
    %3535 = vmatprep.subr.mxu0 0.0
    %3536 = vmatpush1.msra.mxu0 0.0
    %3537 = vmatprep.subr.mxu0 0.0
    %3538 = vmatpush1.msra.mxu0 0.0
    %3539 = vmatprep.subr.mxu0 0.0
    %3540 = vmatpush1.msra.mxu0 0.0
    %3541 = vmatprep.subr.mxu0 0.0
    %3542 = vmatpush1.msra.mxu0 0.0
    %3543 = vmatprep.subr.mxu0 0.0
    %3544 = vmatpush1.msra.mxu0 0.0
    %3545 = vmatprep.subr.mxu0 0.0
    %3546 = vmatpush1.msra.mxu0 0.0
    %3547 = vmatprep.subr.mxu0 0.0
    %3548 = vmatpush1.msra.mxu0 0.0
    %3549 = vmatprep.subr.mxu0 0.0
    %3550 = vmatpush1.msra.mxu0 0.0
    %3551 = vmatprep.subr.mxu0 0.0
    %3552 = vmatpush1.msra.mxu0 0.0
    %3553 = vmatprep.subr.mxu0 0.0
    %3554 = vmatpush1.msra.mxu0 0.0
    %3555 = vmatprep.subr.mxu0 0.0
    %3556 = vmatpush1.msra.mxu0 0.0
    %3557 = vmatprep.subr.mxu0 0.0
    %3558 = vmatpush1.msra.mxu0 0.0
    %3559 = vmatprep.subr.mxu0 0.0
    %3560 = vmatpush1.msra.mxu0 0.0
    %3561 = vmatprep.subr.mxu0 0.0
    %3562 = vmatpush1.msra.mxu0 0.0
    %3563 = vmatprep.subr.mxu0 0.0
    %3564 = vmatpush1.msra.mxu0 0.0
    %3565 = vmatprep.subr.mxu0 0.0
    %3566 = vmatpush1.msra.mxu0 0.0
    %3567 = vmatprep.subr.mxu0 0.0
    %3568 = vmatpush1.msra.mxu0 0.0
    %3569 = vmatprep.mubr.f32.mxu0 0.0
    %3570 = vmatmul.mubr.f32.gmra.mrb[0].mxu0 %v3428
    %v3571 = vpop.f32.mrb[0].mxu0
    %v3572 = vadd.f32 0.0, %v3571
    %v3573 = vpop.f32.mrb[0].mxu0
    %3574 = vmatprep.mubr.f32.mxu0 0.0
    %3575 = vmatmul.mubr.f32.gmra.mrb[0].mxu0 %v3431
    %v3576 = vpop.f32.mrb[0].mxu0
    %v3577 = vadd.f32 0.0, %v3576
    %v3578 = vpop.f32.mrb[0].mxu0
    %3579 = vmatprep.mubr.f32.mxu0 0.0
    %3580 = vmatmul.mubr.f32.gmra.mrb[0].mxu0 %v3434
    %v3581 = vpop.f32.mrb[0].mxu0
    %v3582 = vadd.f32 0.0, %v3581
    %v3583 = vpop.f32.mrb[0].mxu0
    %3584 = vmatprep.mubr.f32.mxu0 0.0
    %3585 = vmatmul.mubr.f32.gmra.mrb[0].mxu0 %v3437
    %v3586 = vpop.f32.mrb[0].mxu0
    %v3587 = vadd.f32 0.0, %v3586
    %v3588 = vpop.f32.mrb[0].mxu0
    %3589 = vmatprep.mubr.f32.mxu0 0.0
    %3590 = vmatmul.mubr.f32.gmra.mrb[0].mxu0 %v3440
    %v3591 = vpop.f32.mrb[0].mxu0
    %v3592 = vadd.f32 0.0, %v3591
    %v3593 = vpop.f32.mrb[0].mxu0
    %3594 = vmatprep.mubr.f32.mxu0 0.0
    %3595 = vmatmul.mubr.f32.gmra.mrb[0].mxu0 %v3443
    %v3596 = vpop.f32.mrb[0].mxu0
    %v3597 = vadd.f32 0.0, %v3596
    %v3598 = vpop.f32.mrb[0].mxu0
    %3599 = vmatprep.mubr.f32.mxu0 0.0
    %3600 = vmatmul.mubr.f32.gmra.mrb[0].mxu0 %v3446
    %v3601 = vpop.f32.mrb[0].mxu0
    %v3602 = vadd.f32 0.0, %v3601
    %v3603 = vpop.f32.mrb[0].mxu0
    %3604 = vmatprep.mubr.f32.mxu0 0.0
    %3605 = vmatmul.mubr.f32.gmra.mrb[0].mxu0 %v3449
    %v3606 = vpop.f32.mrb[0].mxu0
    %v3607 = vadd.f32 0.0, %v3606
    %v3608 = vpop.f32.mrb[0].mxu0
    %3609 = vmatprep.mubr.f32.mxu0 0.0
    %3610 = vmatmul.mubr.f32.gmra.mrb[0].mxu0 %v3452
    %v3611 = vpop.f32.mrb[0].mxu0
    %v3612 = vadd.f32 0.0, %v3611
    %v3613 = vpop.f32.mrb[0].mxu0
    %3614 = vmatprep.mubr.f32.mxu0 0.0
    %3615 = vmatmul.mubr.f32.gmra.mrb[0].mxu0 %v3455
    %v3616 = vpop.f32.mrb[0].mxu0
    %v3617 = vadd.f32 0.0, %v3616
    %v3618 = vpop.f32.mrb[0].mxu0
    %3619 = vmatprep.mubr.f32.mxu0 0.0
    %3620 = vmatmul.mubr.f32.gmra.mrb[0].mxu0 %v3458
    %v3621 = vpop.f32.mrb[0].mxu0
    %v3622 = vadd.f32 0.0, %v3621
    %v3623 = vpop.f32.mrb[0].mxu0
    %3624 = vmatprep.mubr.f32.mxu0 0.0
    %3625 = vmatmul.mubr.f32.gmra.mrb[0].mxu0 %v3461
    %v3626 = vpop.f32.mrb[0].mxu0
    %v3627 = vadd.f32 0.0, %v3626
    %v3628 = vpop.f32.mrb[0].mxu0
    %3629 = vmatprep.mubr.f32.mxu0 0.0
    %3630 = vmatmul.mubr.f32.gmra.mrb[0].mxu0 %v3464
    %v3631 = vpop.f32.mrb[0].mxu0
    %v3632 = vadd.f32 0.0, %v3631
    %v3633 = vpop.f32.mrb[0].mxu0
    %3634 = vmatprep.mubr.f32.mxu0 0.0
    %3635 = vmatmul.mubr.f32.gmra.mrb[0].mxu0 %v3467
    %v3636 = vpop.f32.mrb[0].mxu0
    %v3637 = vadd.f32 0.0, %v3636
    %v3638 = vpop.f32.mrb[0].mxu0
    %3639 = vmatprep.mubr.f32.mxu0 0.0
    %3640 = vmatmul.mubr.f32.gmra.mrb[0].mxu0 %v3470
    %v3641 = vpop.f32.mrb[0].mxu0
    %v3642 = vadd.f32 0.0, %v3641
    %v3643 = vpop.f32.mrb[0].mxu0
    %3644 = vmatprep.mubr.f32.mxu0 0.0
    %3645 = vmatmul.mubr.f32.gmra.mrb[0].mxu0 %v3473
    %v3646 = vpop.f32.mrb[0].mxu0
    %v3647 = vadd.f32 0.0, %v3646
    %v3648 = vpop.f32.mrb[0].mxu0
    %3649 = vmatprep.mubr.f32.mxu0 0.0
    %3650 = vmatmul.mubr.f32.gmra.mrb[0].mxu0 %v3476
    %v3651 = vpop.f32.mrb[0].mxu0
    %v3652 = vadd.f32 0.0, %v3651
    %v3653 = vpop.f32.mrb[0].mxu0
    %3654 = vmatprep.mubr.f32.mxu0 0.0
    %3655 = vmatmul.mubr.f32.gmra.mrb[0].mxu0 %v3479
    %v3656 = vpop.f32.mrb[0].mxu0
    %v3657 = vadd.f32 0.0, %v3656
    %v3658 = vpop.f32.mrb[0].mxu0
    %3659 = vmatprep.mubr.f32.mxu0 0.0
    %3660 = vmatmul.mubr.f32.gmra.mrb[0].mxu0 %v3482
    %v3661 = vpop.f32.mrb[0].mxu0
    %v3662 = vadd.f32 0.0, %v3661
    %v3663 = vpop.f32.mrb[0].mxu0
    %3664 = vmatprep.mubr.f32.mxu0 0.0
    %3665 = vmatmul.mubr.f32.gmra.mrb[0].mxu0 %v3485
    %v3666 = vpop.f32.mrb[0].mxu0
    %v3667 = vadd.f32 0.0, %v3666
    %v3668 = vpop.f32.mrb[0].mxu0
    %3669 = vmatprep.mubr.f32.mxu0 0.0
    %3670 = vmatmul.mubr.f32.gmra.mrb[0].mxu0 %v3488
    %v3671 = vpop.f32.mrb[0].mxu0
    %v3672 = vadd.f32 0.0, %v3671
    %v3673 = vpop.f32.mrb[0].mxu0
    %3674 = vmatprep.mubr.f32.mxu0 0.0
    %3675 = vmatmul.mubr.f32.gmra.mrb[0].mxu0 %v3491
    %v3676 = vpop.f32.mrb[0].mxu0
    %v3677 = vadd.f32 0.0, %v3676
    %v3678 = vpop.f32.mrb[0].mxu0
    %3679 = vmatprep.mubr.f32.mxu0 0.0
    %3680 = vmatmul.mubr.f32.gmra.mrb[0].mxu0 %v3494
    %v3681 = vpop.f32.mrb[0].mxu0
    %v3682 = vadd.f32 0.0, %v3681
    %v3683 = vpop.f32.mrb[0].mxu0
    %3684 = vmatprep.mubr.f32.mxu0 0.0
    %3685 = vmatmul.mubr.f32.gmra.mrb[0].mxu0 %v3497
    %v3686 = vpop.f32.mrb[0].mxu0
    %v3687 = vadd.f32 0.0, %v3686
    %v3688 = vpop.f32.mrb[0].mxu0
    %3689 = vmatprep.mubr.f32.mxu0 0.0
    %3690 = vmatmul.mubr.f32.gmra.mrb[0].mxu0 %v3500
    %v3691 = vpop.f32.mrb[0].mxu0
    %v3692 = vadd.f32 0.0, %v3691
    %v3693 = vpop.f32.mrb[0].mxu0
    %3694 = vdwg.mxu0
    %v3695 = vadd.f32 %v3275, %v3572
    %v3696 = vadd.f32 %v3276, %v3577
    %v3697 = vadd.f32 %v3277, %v3582
    %v3698 = vadd.f32 %v3278, %v3587
    %v3699 = vadd.f32 %v3279, %v3592
    %v3700 = vadd.f32 %v3280, %v3597
    %v3701 = vadd.f32 %v3281, %v3602
    %v3702 = vadd.f32 %v3282, %v3607
    %v3703 = vadd.f32 %v3283, %v3612
    %v3704 = vadd.f32 %v3284, %v3617
    %v3705 = vadd.f32 %v3285, %v3622
    %v3706 = vadd.f32 %v3286, %v3627
    %v3707 = vadd.f32 %v3287, %v3632
    %v3708 = vadd.f32 %v3288, %v3637
    %v3709 = vadd.f32 %v3289, %v3642
    %v3710 = vadd.f32 %v3290, %v3647
    %v3711 = vadd.f32 %v3291, %v3652
    %v3712 = vadd.f32 %v3292, %v3657
    %v3713 = vadd.f32 %v3293, %v3662
    %v3714 = vadd.f32 %v3294, %v3667
    %v3715 = vadd.f32 %v3295, %v3672
    %v3716 = vadd.f32 %v3296, %v3677
    %v3717 = vadd.f32 %v3297, %v3682
    %v3718 = vadd.f32 %v3298, %v3687
    %v3719 = vadd.f32 %v3299, %v3692
    %v3720 = vlaneseq
    %v3721 = vshrl.u32 %v3720, 7
    %v3722 = vsub.s32 0, %v3721
    %v3723 = vrot.slane %v88, %v3722
    %v3724 = vadd.f32 %v3695, %v3723
    %v3725 = vadd.f32 %v3696, %v3723
    %v3726 = vadd.f32 %v3697, %v3723
    %v3727 = vadd.f32 %v3698, %v3723
    %v3728 = vadd.f32 %v3699, %v3723
    %v3729 = vadd.f32 %v3700, %v3723
    %v3730 = vadd.f32 %v3701, %v3723
    %v3731 = vadd.f32 %v3702, %v3723
    %v3732 = vadd.f32 %v3703, %v3723
    %v3733 = vadd.f32 %v3704, %v3723
    %v3734 = vadd.f32 %v3705, %v3723
    %v3735 = vadd.f32 %v3706, %v3723
    %v3736 = vadd.f32 %v3707, %v3723
    %v3737 = vadd.f32 %v3708, %v3723
    %v3738 = vadd.f32 %v3709, %v3723
    %v3739 = vadd.f32 %v3710, %v3723
    %v3740 = vadd.f32 %v3711, %v3723
    %v3741 = vadd.f32 %v3712, %v3723
    %v3742 = vadd.f32 %v3713, %v3723
    %v3743 = vadd.f32 %v3714, %v3723
    %v3744 = vadd.f32 %v3715, %v3723
    %v3745 = vadd.f32 %v3716, %v3723
    %v3746 = vadd.f32 %v3717, %v3723
    %v3747 = vadd.f32 %v3718, %v3723
    %v3748 = vadd.f32 %v3719, %v3723
    %v3749 = vmax.f32 %v3724, 0.0
    %v3750 = vmax.f32 %v3725, 0.0
    %v3751 = vmax.f32 %v3726, 0.0
    %v3752 = vmax.f32 %v3727, 0.0
    %v3753 = vmax.f32 %v3728, 0.0
    %v3754 = vmax.f32 %v3729, 0.0
    %v3755 = vmax.f32 %v3730, 0.0
    %v3756 = vmax.f32 %v3731, 0.0
    %v3757 = vmax.f32 %v3732, 0.0
    %v3758 = vmax.f32 %v3733, 0.0
    %v3759 = vmax.f32 %v3734, 0.0
    %v3760 = vmax.f32 %v3735, 0.0
    %v3761 = vmax.f32 %v3736, 0.0
    %v3762 = vmax.f32 %v3737, 0.0
    %v3763 = vmax.f32 %v3738, 0.0
    %v3764 = vmax.f32 %v3739, 0.0
    %v3765 = vmax.f32 %v3740, 0.0
    %v3766 = vmax.f32 %v3741, 0.0
    %v3767 = vmax.f32 %v3742, 0.0
    %v3768 = vmax.f32 %v3743, 0.0
    %v3769 = vmax.f32 %v3744, 0.0
    %v3770 = vmax.f32 %v3745, 0.0
    %v3771 = vmax.f32 %v3746, 0.0
    %v3772 = vmax.f32 %v3747, 0.0
    %v3773 = vmax.f32 %v3748, 0.0
    %v3774 = vmul.f32 %v3768, %v92
    %v3775 = vmul.f32 %v3769, %v97
    %v3776 = vmul.f32 %v3770, %v102
    %v3777 = vmul.f32 %v3771, %v107
    %v3778 = vmul.f32 %v3772, %v112
    %v3779 = vmul.f32 %v3773, %v117
    %v3780 = vmul.f32 %v3749, %v122
    %v3781 = vmul.f32 %v3750, %v127
    %v3782 = vmul.f32 %v3751, %v132
    %v3783 = vmul.f32 %v3752, %v137
    %v3784 = vmul.f32 %v3753, %v142
    %v3785 = vmul.f32 %v3754, %v147
    %v3786 = vmul.f32 %v3755, %v152
    %v3787 = vmul.f32 %v3756, %v157
    %v3788 = vmul.f32 %v3757, %v162
    %v3789 = vmul.f32 %v3758, %v167
    %v3790 = vmul.f32 %v3759, %v172
    %v3791 = vmul.f32 %v3760, %v177
    %v3792 = vmul.f32 %v3761, %v182
    %v3793 = vmul.f32 %v3762, %v187
    %v3794 = vmul.f32 %v3763, %v192
    %v3795 = vmul.f32 %v3764, %v197
    %v3796 = vmul.f32 %v3765, %v202
    %v3797 = vmul.f32 %v3766, %v207
    %v3798 = vmul.f32 %v3767, %v212
    %v3799 = vld [vmem:[%s3] sm:$0xff]
    %v3800 = vld [vmem:[%s3 + $0x8] sm:$0xff]
    %v3801 = vld [vmem:[%s3 + $0x10] sm:$0xff]
    %v3802 = vld [vmem:[%s3 + $0x18] sm:$0xff]
    %v3803 = vmul.f32 %v3769, %v242
    %v3804 = vmul.f32 %v3770, %v246
    %v3805 = vmul.f32 %v3771, %v250
    %v3806 = vmul.f32 %v3772, %v254
    %v3807 = vmul.f32 %v3773, %v258
    %v3808 = vmul.f32 %v3749, %v262
    %v3809 = vmul.f32 %v3750, %v266
    %v3810 = vmul.f32 %v3751, %v270
    %v3811 = vmul.f32 %v3752, %v274
    %v3812 = vmul.f32 %v3753, %v278
    %v3813 = vmul.f32 %v3754, %v282
    %v3814 = vmul.f32 %v3755, %v286
    %v3815 = vmul.f32 %v3756, %v290
    %v3816 = vmul.f32 %v3757, %v294
    %v3817 = vmul.f32 %v3758, %v298
    %v3818 = vmul.f32 %v3759, %v302
    %v3819 = vmul.f32 %v3760, %v306
    %v3820 = vmul.f32 %v3761, %v310
    %v3821 = vmul.f32 %v3762, %v314
    %v3822 = vmul.f32 %v3763, %v318
    %v3823 = vmul.f32 %v3764, %v322
    %v3824 = vmul.f32 %v3765, %v326
    %v3825 = vmul.f32 %v3766, %v330
    %v3826 = vmul.f32 %v3767, %v334
    %v3827 = vmul.f32 %v3768, %v338
    %s3828 = scalar_lea.vmem %s3, 32
    %v3829 = vld [vmem:[%s3828] sm:$0xff]
    %v3830 = vld [vmem:[%s3828 + $0x8] sm:$0xff]
    %v3831 = vld [vmem:[%s3828 + $0x10] sm:$0xff]
    %v3832 = vld [vmem:[%s3828 + $0x18] sm:$0xff]
    %vm3833 = vcmask 261120
    %v3835 = vsel %vm3833, %v3803, 0
    %v3838 = vsel %vm3833, %v3804, 0
    %v3841 = vsel %vm3833, %v3805, 0
    %v3844 = vsel %vm3833, %v3806, 0
    %v3847 = vsel %vm3833, %v3807, 0
    %v3850 = vsel %vm3833, %v3808, 0
    %v3853 = vsel %vm3833, %v3809, 0
    %v3856 = vsel %vm3833, %v3810, 0
    %v3859 = vsel %vm3833, %v3811, 0
    %v3862 = vsel %vm3833, %v3812, 0
    %v3865 = vsel %vm3833, %v3813, 0
    %v3868 = vsel %vm3833, %v3814, 0
    %v3871 = vsel %vm3833, %v3815, 0
    %v3874 = vsel %vm3833, %v3816, 0
    %v3877 = vsel %vm3833, %v3817, 0
    %v3880 = vsel %vm3833, %v3818, 0
    %v3883 = vsel %vm3833, %v3819, 0
    %v3886 = vsel %vm3833, %v3820, 0
    %v3889 = vsel %vm3833, %v3821, 0
    %v3892 = vsel %vm3833, %v3822, 0
    %v3895 = vsel %vm3833, %v3823, 0
    %v3898 = vsel %vm3833, %v3824, 0
    %v3901 = vsel %vm3833, %v3825, 0
    %v3904 = vsel %vm3833, %v3826, 0
    %v3907 = vsel %vm3833, %v3827, 0
    %3909 = vmatprep.subr.mxu0 0.0
    %3910 = vmatpush1.msra.mxu0 %v3829
    %3911 = vmatprep.subr.mxu0 0.0
    %3912 = vmatpush1.msra.mxu0 %v3830
    %3913 = vmatprep.subr.mxu0 0.0
    %3914 = vmatpush1.msra.mxu0 %v3831
    %3915 = vmatprep.subr.mxu0 0.0
    %3916 = vmatpush1.msra.mxu0 %v3832
    %3917 = vmatprep.subr.mxu0 0.0
    %3918 = vmatpush1.msra.mxu0 0.0
    %3919 = vmatprep.subr.mxu0 0.0
    %3920 = vmatpush1.msra.mxu0 0.0
    %3921 = vmatprep.subr.mxu0 0.0
    %3922 = vmatpush1.msra.mxu0 0.0
    %3923 = vmatprep.subr.mxu0 0.0
    %3924 = vmatpush1.msra.mxu0 0.0
    %3925 = vmatprep.subr.mxu0 0.0
    %3926 = vmatpush1.msra.mxu0 0.0
    %3927 = vmatprep.subr.mxu0 0.0
    %3928 = vmatpush1.msra.mxu0 0.0
    %3929 = vmatprep.subr.mxu0 0.0
    %3930 = vmatpush1.msra.mxu0 0.0
    %3931 = vmatprep.subr.mxu0 0.0
    %3932 = vmatpush1.msra.mxu0 0.0
    %3933 = vmatprep.subr.mxu0 0.0
    %3934 = vmatpush1.msra.mxu0 0.0
    %3935 = vmatprep.subr.mxu0 0.0
    %3936 = vmatpush1.msra.mxu0 0.0
    %3937 = vmatprep.subr.mxu0 0.0
    %3938 = vmatpush1.msra.mxu0 0.0
    %3939 = vmatprep.subr.mxu0 0.0
    %3940 = vmatpush1.msra.mxu0 0.0
    %3941 = vmatprep.subr.mxu0 0.0
    %3942 = vmatpush1.msra.mxu0 0.0
    %3943 = vmatprep.subr.mxu0 0.0
    %3944 = vmatpush1.msra.mxu0 0.0
    %3945 = vmatprep.subr.mxu0 0.0
    %3946 = vmatpush1.msra.mxu0 0.0
    %3947 = vmatprep.subr.mxu0 0.0
    %3948 = vmatpush1.msra.mxu0 0.0
    %3949 = vmatprep.subr.mxu0 0.0
    %3950 = vmatpush1.msra.mxu0 0.0
    %3951 = vmatprep.subr.mxu0 0.0
    %3952 = vmatpush1.msra.mxu0 0.0
    %3953 = vmatprep.subr.mxu0 0.0
    %3954 = vmatpush1.msra.mxu0 0.0
    %3955 = vmatprep.subr.mxu0 0.0
    %3956 = vmatpush1.msra.mxu0 0.0
    %3957 = vmatprep.subr.mxu0 0.0
    %3958 = vmatpush1.msra.mxu0 0.0
    %3959 = vmatprep.subr.mxu0 0.0
    %3960 = vmatpush1.msra.mxu0 0.0
    %3961 = vmatprep.subr.mxu0 0.0
    %3962 = vmatpush1.msra.mxu0 0.0
    %3963 = vmatprep.subr.mxu0 0.0
    %3964 = vmatpush1.msra.mxu0 0.0
    %3965 = vmatprep.subr.mxu0 0.0
    %3966 = vmatpush1.msra.mxu0 0.0
    %3967 = vmatprep.subr.mxu0 0.0
    %3968 = vmatpush1.msra.mxu0 0.0
    %3969 = vmatprep.subr.mxu0 0.0
    %3970 = vmatpush1.msra.mxu0 0.0
    %3971 = vmatprep.subr.mxu0 0.0
    %3972 = vmatpush1.msra.mxu0 0.0
    %3973 = vmatprep.mubr.f32.mxu0 0.0
    %3974 = vmatmul.mubr.f32.gmra.mrb[0].mxu0 %v3835
    %v3975 = vpop.f32.mrb[0].mxu0
    %v3976 = vadd.f32 0.0, %v3975
    %v3977 = vpop.f32.mrb[0].mxu0
    %3978 = vmatprep.mubr.f32.mxu0 0.0
    %3979 = vmatmul.mubr.f32.gmra.mrb[0].mxu0 %v3838
    %v3980 = vpop.f32.mrb[0].mxu0
    %v3981 = vadd.f32 0.0, %v3980
    %v3982 = vpop.f32.mrb[0].mxu0
    %3983 = vmatprep.mubr.f32.mxu0 0.0
    %3984 = vmatmul.mubr.f32.gmra.mrb[0].mxu0 %v3841
    %v3985 = vpop.f32.mrb[0].mxu0
    %v3986 = vadd.f32 0.0, %v3985
    %v3987 = vpop.f32.mrb[0].mxu0
    %3988 = vmatprep.mubr.f32.mxu0 0.0
    %3989 = vmatmul.mubr.f32.gmra.mrb[0].mxu0 %v3844
    %v3990 = vpop.f32.mrb[0].mxu0
    %v3991 = vadd.f32 0.0, %v3990
    %v3992 = vpop.f32.mrb[0].mxu0
    %3993 = vmatprep.mubr.f32.mxu0 0.0
    %3994 = vmatmul.mubr.f32.gmra.mrb[0].mxu0 %v3847
    %v3995 = vpop.f32.mrb[0].mxu0
    %v3996 = vadd.f32 0.0, %v3995
    %v3997 = vpop.f32.mrb[0].mxu0
    %3998 = vmatprep.mubr.f32.mxu0 0.0
    %3999 = vmatmul.mubr.f32.gmra.mrb[0].mxu0 %v3850
    %v4000 = vpop.f32.mrb[0].mxu0
    %v4001 = vadd.f32 0.0, %v4000
    %v4002 = vpop.f32.mrb[0].mxu0
    %4003 = vmatprep.mubr.f32.mxu0 0.0
    %4004 = vmatmul.mubr.f32.gmra.mrb[0].mxu0 %v3853
    %v4005 = vpop.f32.mrb[0].mxu0
    %v4006 = vadd.f32 0.0, %v4005
    %v4007 = vpop.f32.mrb[0].mxu0
    %4008 = vmatprep.mubr.f32.mxu0 0.0
    %4009 = vmatmul.mubr.f32.gmra.mrb[0].mxu0 %v3856
    %v4010 = vpop.f32.mrb[0].mxu0
    %v4011 = vadd.f32 0.0, %v4010
    %v4012 = vpop.f32.mrb[0].mxu0
    %4013 = vmatprep.mubr.f32.mxu0 0.0
    %4014 = vmatmul.mubr.f32.gmra.mrb[0].mxu0 %v3859
    %v4015 = vpop.f32.mrb[0].mxu0
    %v4016 = vadd.f32 0.0, %v4015
    %v4017 = vpop.f32.mrb[0].mxu0
    %4018 = vmatprep.mubr.f32.mxu0 0.0
    %4019 = vmatmul.mubr.f32.gmra.mrb[0].mxu0 %v3862
    %v4020 = vpop.f32.mrb[0].mxu0
    %v4021 = vadd.f32 0.0, %v4020
    %v4022 = vpop.f32.mrb[0].mxu0
    %4023 = vmatprep.mubr.f32.mxu0 0.0
    %4024 = vmatmul.mubr.f32.gmra.mrb[0].mxu0 %v3865
    %v4025 = vpop.f32.mrb[0].mxu0
    %v4026 = vadd.f32 0.0, %v4025
    %v4027 = vpop.f32.mrb[0].mxu0
    %4028 = vmatprep.mubr.f32.mxu0 0.0
    %4029 = vmatmul.mubr.f32.gmra.mrb[0].mxu0 %v3868
    %v4030 = vpop.f32.mrb[0].mxu0
    %v4031 = vadd.f32 0.0, %v4030
    %v4032 = vpop.f32.mrb[0].mxu0
    %4033 = vmatprep.mubr.f32.mxu0 0.0
    %4034 = vmatmul.mubr.f32.gmra.mrb[0].mxu0 %v3871
    %v4035 = vpop.f32.mrb[0].mxu0
    %v4036 = vadd.f32 0.0, %v4035
    %v4037 = vpop.f32.mrb[0].mxu0
    %4038 = vmatprep.mubr.f32.mxu0 0.0
    %4039 = vmatmul.mubr.f32.gmra.mrb[0].mxu0 %v3874
    %v4040 = vpop.f32.mrb[0].mxu0
    %v4041 = vadd.f32 0.0, %v4040
    %v4042 = vpop.f32.mrb[0].mxu0
    %4043 = vmatprep.mubr.f32.mxu0 0.0
    %4044 = vmatmul.mubr.f32.gmra.mrb[0].mxu0 %v3877
    %v4045 = vpop.f32.mrb[0].mxu0
    %v4046 = vadd.f32 0.0, %v4045
    %v4047 = vpop.f32.mrb[0].mxu0
    %4048 = vmatprep.mubr.f32.mxu0 0.0
    %4049 = vmatmul.mubr.f32.gmra.mrb[0].mxu0 %v3880
    %v4050 = vpop.f32.mrb[0].mxu0
    %v4051 = vadd.f32 0.0, %v4050
    %v4052 = vpop.f32.mrb[0].mxu0
    %4053 = vmatprep.mubr.f32.mxu0 0.0
    %4054 = vmatmul.mubr.f32.gmra.mrb[0].mxu0 %v3883
    %v4055 = vpop.f32.mrb[0].mxu0
    %v4056 = vadd.f32 0.0, %v4055
    %v4057 = vpop.f32.mrb[0].mxu0
    %4058 = vmatprep.mubr.f32.mxu0 0.0
    %4059 = vmatmul.mubr.f32.gmra.mrb[0].mxu0 %v3886
    %v4060 = vpop.f32.mrb[0].mxu0
    %v4061 = vadd.f32 0.0, %v4060
    %v4062 = vpop.f32.mrb[0].mxu0
    %4063 = vmatprep.mubr.f32.mxu0 0.0
    %4064 = vmatmul.mubr.f32.gmra.mrb[0].mxu0 %v3889
    %v4065 = vpop.f32.mrb[0].mxu0
    %v4066 = vadd.f32 0.0, %v4065
    %v4067 = vpop.f32.mrb[0].mxu0
    %4068 = vmatprep.mubr.f32.mxu0 0.0
    %4069 = vmatmul.mubr.f32.gmra.mrb[0].mxu0 %v3892
    %v4070 = vpop.f32.mrb[0].mxu0
    %v4071 = vadd.f32 0.0, %v4070
    %v4072 = vpop.f32.mrb[0].mxu0
    %4073 = vmatprep.mubr.f32.mxu0 0.0
    %4074 = vmatmul.mubr.f32.gmra.mrb[0].mxu0 %v3895
    %v4075 = vpop.f32.mrb[0].mxu0
    %v4076 = vadd.f32 0.0, %v4075
    %v4077 = vpop.f32.mrb[0].mxu0
    %4078 = vmatprep.mubr.f32.mxu0 0.0
    %4079 = vmatmul.mubr.f32.gmra.mrb[0].mxu0 %v3898
    %v4080 = vpop.f32.mrb[0].mxu0
    %v4081 = vadd.f32 0.0, %v4080
    %v4082 = vpop.f32.mrb[0].mxu0
    %4083 = vmatprep.mubr.f32.mxu0 0.0
    %4084 = vmatmul.mubr.f32.gmra.mrb[0].mxu0 %v3901
    %v4085 = vpop.f32.mrb[0].mxu0
    %v4086 = vadd.f32 0.0, %v4085
    %v4087 = vpop.f32.mrb[0].mxu0
    %4088 = vmatprep.mubr.f32.mxu0 0.0
    %4089 = vmatmul.mubr.f32.gmra.mrb[0].mxu0 %v3904
    %v4090 = vpop.f32.mrb[0].mxu0
    %v4091 = vadd.f32 0.0, %v4090
    %v4092 = vpop.f32.mrb[0].mxu0
    %4093 = vmatprep.mubr.f32.mxu0 0.0
    %4094 = vmatmul.mubr.f32.gmra.mrb[0].mxu0 %v3907
    %v4095 = vpop.f32.mrb[0].mxu0
    %v4096 = vadd.f32 0.0, %v4095
    %v4097 = vpop.f32.mrb[0].mxu0
    %4098 = vdwg.mxu0
    %v4100 = vsel %vm3833, %v3774, 0
    %v4103 = vsel %vm3833, %v3775, 0
    %v4106 = vsel %vm3833, %v3776, 0
    %v4109 = vsel %vm3833, %v3777, 0
    %v4112 = vsel %vm3833, %v3778, 0
    %v4115 = vsel %vm3833, %v3779, 0
    %v4118 = vsel %vm3833, %v3780, 0
    %v4121 = vsel %vm3833, %v3781, 0
    %v4124 = vsel %vm3833, %v3782, 0
    %v4127 = vsel %vm3833, %v3783, 0
    %v4130 = vsel %vm3833, %v3784, 0
    %v4133 = vsel %vm3833, %v3785, 0
    %v4136 = vsel %vm3833, %v3786, 0
    %v4139 = vsel %vm3833, %v3787, 0
    %v4142 = vsel %vm3833, %v3788, 0
    %v4145 = vsel %vm3833, %v3789, 0
    %v4148 = vsel %vm3833, %v3790, 0
    %v4151 = vsel %vm3833, %v3791, 0
    %v4154 = vsel %vm3833, %v3792, 0
    %v4157 = vsel %vm3833, %v3793, 0
    %v4160 = vsel %vm3833, %v3794, 0
    %v4163 = vsel %vm3833, %v3795, 0
    %v4166 = vsel %vm3833, %v3796, 0
    %v4169 = vsel %vm3833, %v3797, 0
    %v4172 = vsel %vm3833, %v3798, 0
    %4174 = vmatprep.subr.mxu0 0.0
    %4175 = vmatpush1.msra.mxu0 %v3799
    %4176 = vmatprep.subr.mxu0 0.0
    %4177 = vmatpush1.msra.mxu0 %v3800
    %4178 = vmatprep.subr.mxu0 0.0
    %4179 = vmatpush1.msra.mxu0 %v3801
    %4180 = vmatprep.subr.mxu0 0.0
    %4181 = vmatpush1.msra.mxu0 %v3802
    %4182 = vmatprep.subr.mxu0 0.0
    %4183 = vmatpush1.msra.mxu0 0.0
    %4184 = vmatprep.subr.mxu0 0.0
    %4185 = vmatpush1.msra.mxu0 0.0
    %4186 = vmatprep.subr.mxu0 0.0
    %4187 = vmatpush1.msra.mxu0 0.0
    %4188 = vmatprep.subr.mxu0 0.0
    %4189 = vmatpush1.msra.mxu0 0.0
    %4190 = vmatprep.subr.mxu0 0.0
    %4191 = vmatpush1.msra.mxu0 0.0
    %4192 = vmatprep.subr.mxu0 0.0
    %4193 = vmatpush1.msra.mxu0 0.0
    %4194 = vmatprep.subr.mxu0 0.0
    %4195 = vmatpush1.msra.mxu0 0.0
    %4196 = vmatprep.subr.mxu0 0.0
    %4197 = vmatpush1.msra.mxu0 0.0
    %4198 = vmatprep.subr.mxu0 0.0
    %4199 = vmatpush1.msra.mxu0 0.0
    %4200 = vmatprep.subr.mxu0 0.0
    %4201 = vmatpush1.msra.mxu0 0.0
    %4202 = vmatprep.subr.mxu0 0.0
    %4203 = vmatpush1.msra.mxu0 0.0
    %4204 = vmatprep.subr.mxu0 0.0
    %4205 = vmatpush1.msra.mxu0 0.0
    %4206 = vmatprep.subr.mxu0 0.0
    %4207 = vmatpush1.msra.mxu0 0.0
    %4208 = vmatprep.subr.mxu0 0.0
    %4209 = vmatpush1.msra.mxu0 0.0
    %4210 = vmatprep.subr.mxu0 0.0
    %4211 = vmatpush1.msra.mxu0 0.0
    %4212 = vmatprep.subr.mxu0 0.0
    %4213 = vmatpush1.msra.mxu0 0.0
    %4214 = vmatprep.subr.mxu0 0.0
    %4215 = vmatpush1.msra.mxu0 0.0
    %4216 = vmatprep.subr.mxu0 0.0
    %4217 = vmatpush1.msra.mxu0 0.0
    %4218 = vmatprep.subr.mxu0 0.0
    %4219 = vmatpush1.msra.mxu0 0.0
    %4220 = vmatprep.subr.mxu0 0.0
    %4221 = vmatpush1.msra.mxu0 0.0
    %4222 = vmatprep.subr.mxu0 0.0
    %4223 = vmatpush1.msra.mxu0 0.0
    %4224 = vmatprep.subr.mxu0 0.0
    %4225 = vmatpush1.msra.mxu0 0.0
    %4226 = vmatprep.subr.mxu0 0.0
    %4227 = vmatpush1.msra.mxu0 0.0
    %4228 = vmatprep.subr.mxu0 0.0
    %4229 = vmatpush1.msra.mxu0 0.0
    %4230 = vmatprep.subr.mxu0 0.0
    %4231 = vmatpush1.msra.mxu0 0.0
    %4232 = vmatprep.subr.mxu0 0.0
    %4233 = vmatpush1.msra.mxu0 0.0
    %4234 = vmatprep.subr.mxu0 0.0
    %4235 = vmatpush1.msra.mxu0 0.0
    %4236 = vmatprep.subr.mxu0 0.0
    %4237 = vmatpush1.msra.mxu0 0.0
    %4238 = vmatprep.mubr.f32.mxu0 0.0
    %4239 = vmatmul.mubr.f32.gmra.mrb[0].mxu0 %v4100
    %v4240 = vpop.f32.mrb[0].mxu0
    %v4241 = vadd.f32 %v3976, %v4240
    %v4242 = vpop.f32.mrb[0].mxu0
    %4243 = vmatprep.mubr.f32.mxu0 0.0
    %4244 = vmatmul.mubr.f32.gmra.mrb[0].mxu0 %v4103
    %v4245 = vpop.f32.mrb[0].mxu0
    %v4246 = vadd.f32 %v3981, %v4245
    %v4247 = vpop.f32.mrb[0].mxu0
    %4248 = vmatprep.mubr.f32.mxu0 0.0
    %4249 = vmatmul.mubr.f32.gmra.mrb[0].mxu0 %v4106
    %v4250 = vpop.f32.mrb[0].mxu0
    %v4251 = vadd.f32 %v3986, %v4250
    %v4252 = vpop.f32.mrb[0].mxu0
    %4253 = vmatprep.mubr.f32.mxu0 0.0
    %4254 = vmatmul.mubr.f32.gmra.mrb[0].mxu0 %v4109
    %v4255 = vpop.f32.mrb[0].mxu0
    %v4256 = vadd.f32 %v3991, %v4255
    %v4257 = vpop.f32.mrb[0].mxu0
    %4258 = vmatprep.mubr.f32.mxu0 0.0
    %4259 = vmatmul.mubr.f32.gmra.mrb[0].mxu0 %v4112
    %v4260 = vpop.f32.mrb[0].mxu0
    %v4261 = vadd.f32 %v3996, %v4260
    %v4262 = vpop.f32.mrb[0].mxu0
    %4263 = vmatprep.mubr.f32.mxu0 0.0
    %4264 = vmatmul.mubr.f32.gmra.mrb[0].mxu0 %v4115
    %v4265 = vpop.f32.mrb[0].mxu0
    %v4266 = vadd.f32 %v4001, %v4265
    %v4267 = vpop.f32.mrb[0].mxu0
    %4268 = vmatprep.mubr.f32.mxu0 0.0
    %4269 = vmatmul.mubr.f32.gmra.mrb[0].mxu0 %v4118
    %v4270 = vpop.f32.mrb[0].mxu0
    %v4271 = vadd.f32 %v4006, %v4270
    %v4272 = vpop.f32.mrb[0].mxu0
    %4273 = vmatprep.mubr.f32.mxu0 0.0
    %4274 = vmatmul.mubr.f32.gmra.mrb[0].mxu0 %v4121
    %v4275 = vpop.f32.mrb[0].mxu0
    %v4276 = vadd.f32 %v4011, %v4275
    %v4277 = vpop.f32.mrb[0].mxu0
    %4278 = vmatprep.mubr.f32.mxu0 0.0
    %4279 = vmatmul.mubr.f32.gmra.mrb[0].mxu0 %v4124
    %v4280 = vpop.f32.mrb[0].mxu0
    %v4281 = vadd.f32 %v4016, %v4280
    %v4282 = vpop.f32.mrb[0].mxu0
    %4283 = vmatprep.mubr.f32.mxu0 0.0
    %4284 = vmatmul.mubr.f32.gmra.mrb[0].mxu0 %v4127
    %v4285 = vpop.f32.mrb[0].mxu0
    %v4286 = vadd.f32 %v4021, %v4285
    %v4287 = vpop.f32.mrb[0].mxu0
    %4288 = vmatprep.mubr.f32.mxu0 0.0
    %4289 = vmatmul.mubr.f32.gmra.mrb[0].mxu0 %v4130
    %v4290 = vpop.f32.mrb[0].mxu0
    %v4291 = vadd.f32 %v4026, %v4290
    %v4292 = vpop.f32.mrb[0].mxu0
    %4293 = vmatprep.mubr.f32.mxu0 0.0
    %4294 = vmatmul.mubr.f32.gmra.mrb[0].mxu0 %v4133
    %v4295 = vpop.f32.mrb[0].mxu0
    %v4296 = vadd.f32 %v4031, %v4295
    %v4297 = vpop.f32.mrb[0].mxu0
    %4298 = vmatprep.mubr.f32.mxu0 0.0
    %4299 = vmatmul.mubr.f32.gmra.mrb[0].mxu0 %v4136
    %v4300 = vpop.f32.mrb[0].mxu0
    %v4301 = vadd.f32 %v4036, %v4300
    %v4302 = vpop.f32.mrb[0].mxu0
    %4303 = vmatprep.mubr.f32.mxu0 0.0
    %4304 = vmatmul.mubr.f32.gmra.mrb[0].mxu0 %v4139
    %v4305 = vpop.f32.mrb[0].mxu0
    %v4306 = vadd.f32 %v4041, %v4305
    %v4307 = vpop.f32.mrb[0].mxu0
    %4308 = vmatprep.mubr.f32.mxu0 0.0
    %4309 = vmatmul.mubr.f32.gmra.mrb[0].mxu0 %v4142
    %v4310 = vpop.f32.mrb[0].mxu0
    %v4311 = vadd.f32 %v4046, %v4310
    %v4312 = vpop.f32.mrb[0].mxu0
    %4313 = vmatprep.mubr.f32.mxu0 0.0
    %4314 = vmatmul.mubr.f32.gmra.mrb[0].mxu0 %v4145
    %v4315 = vpop.f32.mrb[0].mxu0
    %v4316 = vadd.f32 %v4051, %v4315
    %v4317 = vpop.f32.mrb[0].mxu0
    %4318 = vmatprep.mubr.f32.mxu0 0.0
    %4319 = vmatmul.mubr.f32.gmra.mrb[0].mxu0 %v4148
    %v4320 = vpop.f32.mrb[0].mxu0
    %v4321 = vadd.f32 %v4056, %v4320
    %v4322 = vpop.f32.mrb[0].mxu0
    %4323 = vmatprep.mubr.f32.mxu0 0.0
    %4324 = vmatmul.mubr.f32.gmra.mrb[0].mxu0 %v4151
    %v4325 = vpop.f32.mrb[0].mxu0
    %v4326 = vadd.f32 %v4061, %v4325
    %v4327 = vpop.f32.mrb[0].mxu0
    %4328 = vmatprep.mubr.f32.mxu0 0.0
    %4329 = vmatmul.mubr.f32.gmra.mrb[0].mxu0 %v4154
    %v4330 = vpop.f32.mrb[0].mxu0
    %v4331 = vadd.f32 %v4066, %v4330
    %v4332 = vpop.f32.mrb[0].mxu0
    %4333 = vmatprep.mubr.f32.mxu0 0.0
    %4334 = vmatmul.mubr.f32.gmra.mrb[0].mxu0 %v4157
    %v4335 = vpop.f32.mrb[0].mxu0
    %v4336 = vadd.f32 %v4071, %v4335
    %v4337 = vpop.f32.mrb[0].mxu0
    %4338 = vmatprep.mubr.f32.mxu0 0.0
    %4339 = vmatmul.mubr.f32.gmra.mrb[0].mxu0 %v4160
    %v4340 = vpop.f32.mrb[0].mxu0
    %v4341 = vadd.f32 %v4076, %v4340
    %v4342 = vpop.f32.mrb[0].mxu0
    %4343 = vmatprep.mubr.f32.mxu0 0.0
    %4344 = vmatmul.mubr.f32.gmra.mrb[0].mxu0 %v4163
    %v4345 = vpop.f32.mrb[0].mxu0
    %v4346 = vadd.f32 %v4081, %v4345
    %v4347 = vpop.f32.mrb[0].mxu0
    %4348 = vmatprep.mubr.f32.mxu0 0.0
    %4349 = vmatmul.mubr.f32.gmra.mrb[0].mxu0 %v4166
    %v4350 = vpop.f32.mrb[0].mxu0
    %v4351 = vadd.f32 %v4086, %v4350
    %v4352 = vpop.f32.mrb[0].mxu0
    %4353 = vmatprep.mubr.f32.mxu0 0.0
    %4354 = vmatmul.mubr.f32.gmra.mrb[0].mxu0 %v4169
    %v4355 = vpop.f32.mrb[0].mxu0
    %v4356 = vadd.f32 %v4091, %v4355
    %v4357 = vpop.f32.mrb[0].mxu0
    %4358 = vmatprep.mubr.f32.mxu0 0.0
    %4359 = vmatmul.mubr.f32.gmra.mrb[0].mxu0 %v4172
    %v4360 = vpop.f32.mrb[0].mxu0
    %v4361 = vadd.f32 %v4096, %v4360
    %v4362 = vpop.f32.mrb[0].mxu0
    %4363 = vdwg.mxu0
    %v4364 = vmul.f32 %v3770, %v907
    %v4365 = vmul.f32 %v3771, %v911
    %v4366 = vmul.f32 %v3772, %v915
    %v4367 = vmul.f32 %v3773, %v919
    %v4368 = vmul.f32 %v3749, %v923
    %v4369 = vmul.f32 %v3750, %v927
    %v4370 = vmul.f32 %v3751, %v931
    %v4371 = vmul.f32 %v3752, %v935
    %v4372 = vmul.f32 %v3753, %v939
    %v4373 = vmul.f32 %v3754, %v943
    %v4374 = vmul.f32 %v3755, %v947
    %v4375 = vmul.f32 %v3756, %v951
    %v4376 = vmul.f32 %v3757, %v955
    %v4377 = vmul.f32 %v3758, %v959
    %v4378 = vmul.f32 %v3759, %v963
    %v4379 = vmul.f32 %v3760, %v967
    %v4380 = vmul.f32 %v3761, %v971
    %v4381 = vmul.f32 %v3762, %v975
    %v4382 = vmul.f32 %v3763, %v979
    %v4383 = vmul.f32 %v3764, %v983
    %v4384 = vmul.f32 %v3765, %v987
    %v4385 = vmul.f32 %v3766, %v991
    %v4386 = vmul.f32 %v3767, %v995
    %v4387 = vmul.f32 %v3768, %v999
    %v4388 = vmul.f32 %v3769, %v1003
    %s4389 = scalar_lea.vmem %s3, 64
    %v4390 = vld [vmem:[%s4389] sm:$0xff]
    %v4391 = vld [vmem:[%s4389 + $0x8] sm:$0xff]
    %v4392 = vld [vmem:[%s4389 + $0x10] sm:$0xff]
    %v4393 = vld [vmem:[%s4389 + $0x18] sm:$0xff]
    %v4395 = vsel %vm3833, %v4364, 0
    %v4398 = vsel %vm3833, %v4365, 0
    %v4401 = vsel %vm3833, %v4366, 0
    %v4404 = vsel %vm3833, %v4367, 0
    %v4407 = vsel %vm3833, %v4368, 0
    %v4410 = vsel %vm3833, %v4369, 0
    %v4413 = vsel %vm3833, %v4370, 0
    %v4416 = vsel %vm3833, %v4371, 0
    %v4419 = vsel %vm3833, %v4372, 0
    %v4422 = vsel %vm3833, %v4373, 0
    %v4425 = vsel %vm3833, %v4374, 0
    %v4428 = vsel %vm3833, %v4375, 0
    %v4431 = vsel %vm3833, %v4376, 0
    %v4434 = vsel %vm3833, %v4377, 0
    %v4437 = vsel %vm3833, %v4378, 0
    %v4440 = vsel %vm3833, %v4379, 0
    %v4443 = vsel %vm3833, %v4380, 0
    %v4446 = vsel %vm3833, %v4381, 0
    %v4449 = vsel %vm3833, %v4382, 0
    %v4452 = vsel %vm3833, %v4383, 0
    %v4455 = vsel %vm3833, %v4384, 0
    %v4458 = vsel %vm3833, %v4385, 0
    %v4461 = vsel %vm3833, %v4386, 0
    %v4464 = vsel %vm3833, %v4387, 0
    %v4467 = vsel %vm3833, %v4388, 0
    %4469 = vmatprep.subr.mxu0 0.0
    %4470 = vmatpush1.msra.mxu0 %v4390
    %4471 = vmatprep.subr.mxu0 0.0
    %4472 = vmatpush1.msra.mxu0 %v4391
    %4473 = vmatprep.subr.mxu0 0.0
    %4474 = vmatpush1.msra.mxu0 %v4392
    %4475 = vmatprep.subr.mxu0 0.0
    %4476 = vmatpush1.msra.mxu0 %v4393
    %4477 = vmatprep.subr.mxu0 0.0
    %4478 = vmatpush1.msra.mxu0 0.0
    %4479 = vmatprep.subr.mxu0 0.0
    %4480 = vmatpush1.msra.mxu0 0.0
    %4481 = vmatprep.subr.mxu0 0.0
    %4482 = vmatpush1.msra.mxu0 0.0
    %4483 = vmatprep.subr.mxu0 0.0
    %4484 = vmatpush1.msra.mxu0 0.0
    %4485 = vmatprep.subr.mxu0 0.0
    %4486 = vmatpush1.msra.mxu0 0.0
    %4487 = vmatprep.subr.mxu0 0.0
    %4488 = vmatpush1.msra.mxu0 0.0
    %4489 = vmatprep.subr.mxu0 0.0
    %4490 = vmatpush1.msra.mxu0 0.0
    %4491 = vmatprep.subr.mxu0 0.0
    %4492 = vmatpush1.msra.mxu0 0.0
    %4493 = vmatprep.subr.mxu0 0.0
    %4494 = vmatpush1.msra.mxu0 0.0
    %4495 = vmatprep.subr.mxu0 0.0
    %4496 = vmatpush1.msra.mxu0 0.0
    %4497 = vmatprep.subr.mxu0 0.0
    %4498 = vmatpush1.msra.mxu0 0.0
    %4499 = vmatprep.subr.mxu0 0.0
    %4500 = vmatpush1.msra.mxu0 0.0
    %4501 = vmatprep.subr.mxu0 0.0
    %4502 = vmatpush1.msra.mxu0 0.0
    %4503 = vmatprep.subr.mxu0 0.0
    %4504 = vmatpush1.msra.mxu0 0.0
    %4505 = vmatprep.subr.mxu0 0.0
    %4506 = vmatpush1.msra.mxu0 0.0
    %4507 = vmatprep.subr.mxu0 0.0
    %4508 = vmatpush1.msra.mxu0 0.0
    %4509 = vmatprep.subr.mxu0 0.0
    %4510 = vmatpush1.msra.mxu0 0.0
    %4511 = vmatprep.subr.mxu0 0.0
    %4512 = vmatpush1.msra.mxu0 0.0
    %4513 = vmatprep.subr.mxu0 0.0
    %4514 = vmatpush1.msra.mxu0 0.0
    %4515 = vmatprep.subr.mxu0 0.0
    %4516 = vmatpush1.msra.mxu0 0.0
    %4517 = vmatprep.subr.mxu0 0.0
    %4518 = vmatpush1.msra.mxu0 0.0
    %4519 = vmatprep.subr.mxu0 0.0
    %4520 = vmatpush1.msra.mxu0 0.0
    %4521 = vmatprep.subr.mxu0 0.0
    %4522 = vmatpush1.msra.mxu0 0.0
    %4523 = vmatprep.subr.mxu0 0.0
    %4524 = vmatpush1.msra.mxu0 0.0
    %4525 = vmatprep.subr.mxu0 0.0
    %4526 = vmatpush1.msra.mxu0 0.0
    %4527 = vmatprep.subr.mxu0 0.0
    %4528 = vmatpush1.msra.mxu0 0.0
    %4529 = vmatprep.subr.mxu0 0.0
    %4530 = vmatpush1.msra.mxu0 0.0
    %4531 = vmatprep.subr.mxu0 0.0
    %4532 = vmatpush1.msra.mxu0 0.0
    %4533 = vmatprep.mubr.f32.mxu0 0.0
    %4534 = vmatmul.mubr.f32.gmra.mrb[0].mxu0 %v4395
    %v4535 = vpop.f32.mrb[0].mxu0
    %v4536 = vadd.f32 0.0, %v4535
    %v4537 = vpop.f32.mrb[0].mxu0
    %4538 = vmatprep.mubr.f32.mxu0 0.0
    %4539 = vmatmul.mubr.f32.gmra.mrb[0].mxu0 %v4398
    %v4540 = vpop.f32.mrb[0].mxu0
    %v4541 = vadd.f32 0.0, %v4540
    %v4542 = vpop.f32.mrb[0].mxu0
    %4543 = vmatprep.mubr.f32.mxu0 0.0
    %4544 = vmatmul.mubr.f32.gmra.mrb[0].mxu0 %v4401
    %v4545 = vpop.f32.mrb[0].mxu0
    %v4546 = vadd.f32 0.0, %v4545
    %v4547 = vpop.f32.mrb[0].mxu0
    %4548 = vmatprep.mubr.f32.mxu0 0.0
    %4549 = vmatmul.mubr.f32.gmra.mrb[0].mxu0 %v4404
    %v4550 = vpop.f32.mrb[0].mxu0
    %v4551 = vadd.f32 0.0, %v4550
    %v4552 = vpop.f32.mrb[0].mxu0
    %4553 = vmatprep.mubr.f32.mxu0 0.0
    %4554 = vmatmul.mubr.f32.gmra.mrb[0].mxu0 %v4407
    %v4555 = vpop.f32.mrb[0].mxu0
    %v4556 = vadd.f32 0.0, %v4555
    %v4557 = vpop.f32.mrb[0].mxu0
    %4558 = vmatprep.mubr.f32.mxu0 0.0
    %4559 = vmatmul.mubr.f32.gmra.mrb[0].mxu0 %v4410
    %v4560 = vpop.f32.mrb[0].mxu0
    %v4561 = vadd.f32 0.0, %v4560
    %v4562 = vpop.f32.mrb[0].mxu0
    %4563 = vmatprep.mubr.f32.mxu0 0.0
    %4564 = vmatmul.mubr.f32.gmra.mrb[0].mxu0 %v4413
    %v4565 = vpop.f32.mrb[0].mxu0
    %v4566 = vadd.f32 0.0, %v4565
    %v4567 = vpop.f32.mrb[0].mxu0
    %4568 = vmatprep.mubr.f32.mxu0 0.0
    %4569 = vmatmul.mubr.f32.gmra.mrb[0].mxu0 %v4416
    %v4570 = vpop.f32.mrb[0].mxu0
    %v4571 = vadd.f32 0.0, %v4570
    %v4572 = vpop.f32.mrb[0].mxu0
    %4573 = vmatprep.mubr.f32.mxu0 0.0
    %4574 = vmatmul.mubr.f32.gmra.mrb[0].mxu0 %v4419
    %v4575 = vpop.f32.mrb[0].mxu0
    %v4576 = vadd.f32 0.0, %v4575
    %v4577 = vpop.f32.mrb[0].mxu0
    %4578 = vmatprep.mubr.f32.mxu0 0.0
    %4579 = vmatmul.mubr.f32.gmra.mrb[0].mxu0 %v4422
    %v4580 = vpop.f32.mrb[0].mxu0
    %v4581 = vadd.f32 0.0, %v4580
    %v4582 = vpop.f32.mrb[0].mxu0
    %4583 = vmatprep.mubr.f32.mxu0 0.0
    %4584 = vmatmul.mubr.f32.gmra.mrb[0].mxu0 %v4425
    %v4585 = vpop.f32.mrb[0].mxu0
    %v4586 = vadd.f32 0.0, %v4585
    %v4587 = vpop.f32.mrb[0].mxu0
    %4588 = vmatprep.mubr.f32.mxu0 0.0
    %4589 = vmatmul.mubr.f32.gmra.mrb[0].mxu0 %v4428
    %v4590 = vpop.f32.mrb[0].mxu0
    %v4591 = vadd.f32 0.0, %v4590
    %v4592 = vpop.f32.mrb[0].mxu0
    %4593 = vmatprep.mubr.f32.mxu0 0.0
    %4594 = vmatmul.mubr.f32.gmra.mrb[0].mxu0 %v4431
    %v4595 = vpop.f32.mrb[0].mxu0
    %v4596 = vadd.f32 0.0, %v4595
    %v4597 = vpop.f32.mrb[0].mxu0
    %4598 = vmatprep.mubr.f32.mxu0 0.0
    %4599 = vmatmul.mubr.f32.gmra.mrb[0].mxu0 %v4434
    %v4600 = vpop.f32.mrb[0].mxu0
    %v4601 = vadd.f32 0.0, %v4600
    %v4602 = vpop.f32.mrb[0].mxu0
    %4603 = vmatprep.mubr.f32.mxu0 0.0
    %4604 = vmatmul.mubr.f32.gmra.mrb[0].mxu0 %v4437
    %v4605 = vpop.f32.mrb[0].mxu0
    %v4606 = vadd.f32 0.0, %v4605
    %v4607 = vpop.f32.mrb[0].mxu0
    %4608 = vmatprep.mubr.f32.mxu0 0.0
    %4609 = vmatmul.mubr.f32.gmra.mrb[0].mxu0 %v4440
    %v4610 = vpop.f32.mrb[0].mxu0
    %v4611 = vadd.f32 0.0, %v4610
    %v4612 = vpop.f32.mrb[0].mxu0
    %4613 = vmatprep.mubr.f32.mxu0 0.0
    %4614 = vmatmul.mubr.f32.gmra.mrb[0].mxu0 %v4443
    %v4615 = vpop.f32.mrb[0].mxu0
    %v4616 = vadd.f32 0.0, %v4615
    %v4617 = vpop.f32.mrb[0].mxu0
    %4618 = vmatprep.mubr.f32.mxu0 0.0
    %4619 = vmatmul.mubr.f32.gmra.mrb[0].mxu0 %v4446
    %v4620 = vpop.f32.mrb[0].mxu0
    %v4621 = vadd.f32 0.0, %v4620
    %v4622 = vpop.f32.mrb[0].mxu0
    %4623 = vmatprep.mubr.f32.mxu0 0.0
    %4624 = vmatmul.mubr.f32.gmra.mrb[0].mxu0 %v4449
    %v4625 = vpop.f32.mrb[0].mxu0
    %v4626 = vadd.f32 0.0, %v4625
    %v4627 = vpop.f32.mrb[0].mxu0
    %4628 = vmatprep.mubr.f32.mxu0 0.0
    %4629 = vmatmul.mubr.f32.gmra.mrb[0].mxu0 %v4452
    %v4630 = vpop.f32.mrb[0].mxu0
    %v4631 = vadd.f32 0.0, %v4630
    %v4632 = vpop.f32.mrb[0].mxu0
    %4633 = vmatprep.mubr.f32.mxu0 0.0
    %4634 = vmatmul.mubr.f32.gmra.mrb[0].mxu0 %v4455
    %v4635 = vpop.f32.mrb[0].mxu0
    %v4636 = vadd.f32 0.0, %v4635
    %v4637 = vpop.f32.mrb[0].mxu0
    %4638 = vmatprep.mubr.f32.mxu0 0.0
    %4639 = vmatmul.mubr.f32.gmra.mrb[0].mxu0 %v4458
    %v4640 = vpop.f32.mrb[0].mxu0
    %v4641 = vadd.f32 0.0, %v4640
    %v4642 = vpop.f32.mrb[0].mxu0
    %4643 = vmatprep.mubr.f32.mxu0 0.0
    %4644 = vmatmul.mubr.f32.gmra.mrb[0].mxu0 %v4461
    %v4645 = vpop.f32.mrb[0].mxu0
    %v4646 = vadd.f32 0.0, %v4645
    %v4647 = vpop.f32.mrb[0].mxu0
    %4648 = vmatprep.mubr.f32.mxu0 0.0
    %4649 = vmatmul.mubr.f32.gmra.mrb[0].mxu0 %v4464
    %v4650 = vpop.f32.mrb[0].mxu0
    %v4651 = vadd.f32 0.0, %v4650
    %v4652 = vpop.f32.mrb[0].mxu0
    %4653 = vmatprep.mubr.f32.mxu0 0.0
    %4654 = vmatmul.mubr.f32.gmra.mrb[0].mxu0 %v4467
    %v4655 = vpop.f32.mrb[0].mxu0
    %v4656 = vadd.f32 0.0, %v4655
    %v4657 = vpop.f32.mrb[0].mxu0
    %4658 = vdwg.mxu0
    %v4659 = vadd.f32 %v4241, %v4536
    %v4660 = vadd.f32 %v4246, %v4541
    %v4661 = vadd.f32 %v4251, %v4546
    %v4662 = vadd.f32 %v4256, %v4551
    %v4663 = vadd.f32 %v4261, %v4556
    %v4664 = vadd.f32 %v4266, %v4561
    %v4665 = vadd.f32 %v4271, %v4566
    %v4666 = vadd.f32 %v4276, %v4571
    %v4667 = vadd.f32 %v4281, %v4576
    %v4668 = vadd.f32 %v4286, %v4581
    %v4669 = vadd.f32 %v4291, %v4586
    %v4670 = vadd.f32 %v4296, %v4591
    %v4671 = vadd.f32 %v4301, %v4596
    %v4672 = vadd.f32 %v4306, %v4601
    %v4673 = vadd.f32 %v4311, %v4606
    %v4674 = vadd.f32 %v4316, %v4611
    %v4675 = vadd.f32 %v4321, %v4616
    %v4676 = vadd.f32 %v4326, %v4621
    %v4677 = vadd.f32 %v4331, %v4626
    %v4678 = vadd.f32 %v4336, %v4631
    %v4679 = vadd.f32 %v4341, %v4636
    %v4680 = vadd.f32 %v4346, %v4641
    %v4681 = vadd.f32 %v4351, %v4646
    %v4682 = vadd.f32 %v4356, %v4651
    %v4683 = vadd.f32 %v4361, %v4656
    %v4684 = vmul.f32 %v3773, %v1327
    %v4685 = vmul.f32 %v3749, %v1331
    %v4686 = vmul.f32 %v3750, %v1335
    %v4687 = vmul.f32 %v3751, %v1339
    %v4688 = vmul.f32 %v3752, %v1343
    %v4689 = vmul.f32 %v3753, %v1347
    %v4690 = vmul.f32 %v3754, %v1351
    %v4691 = vmul.f32 %v3755, %v1355
    %v4692 = vmul.f32 %v3756, %v1359
    %v4693 = vmul.f32 %v3757, %v1363
    %v4694 = vmul.f32 %v3758, %v1367
    %v4695 = vmul.f32 %v3759, %v1371
    %v4696 = vmul.f32 %v3760, %v1375
    %v4697 = vmul.f32 %v3761, %v1379
    %v4698 = vmul.f32 %v3762, %v1383
    %v4699 = vmul.f32 %v3763, %v1387
    %v4700 = vmul.f32 %v3764, %v1391
    %v4701 = vmul.f32 %v3765, %v1395
    %v4702 = vmul.f32 %v3766, %v1399
    %v4703 = vmul.f32 %v3767, %v1403
    %v4704 = vmul.f32 %v3768, %v1407
    %v4705 = vmul.f32 %v3769, %v1411
    %v4706 = vmul.f32 %v3770, %v1415
    %v4707 = vmul.f32 %v3771, %v1419
    %v4708 = vmul.f32 %v3772, %v1423
    %s4709 = scalar_lea.vmem %s3, 96
    %v4710 = vld [vmem:[%s4709] sm:$0xff]
    %v4711 = vld [vmem:[%s4709 + $0x8] sm:$0xff]
    %v4712 = vld [vmem:[%s4709 + $0x10] sm:$0xff]
    %v4713 = vld [vmem:[%s4709 + $0x18] sm:$0xff]
    %v4715 = vsel %vm3833, %v4684, 0
    %v4718 = vsel %vm3833, %v4685, 0
    %v4721 = vsel %vm3833, %v4686, 0
    %v4724 = vsel %vm3833, %v4687, 0
    %v4727 = vsel %vm3833, %v4688, 0
    %v4730 = vsel %vm3833, %v4689, 0
    %v4733 = vsel %vm3833, %v4690, 0
    %v4736 = vsel %vm3833, %v4691, 0
    %v4739 = vsel %vm3833, %v4692, 0
    %v4742 = vsel %vm3833, %v4693, 0
    %v4745 = vsel %vm3833, %v4694, 0
    %v4748 = vsel %vm3833, %v4695, 0
    %v4751 = vsel %vm3833, %v4696, 0
    %v4754 = vsel %vm3833, %v4697, 0
    %v4757 = vsel %vm3833, %v4698, 0
    %v4760 = vsel %vm3833, %v4699, 0
    %v4763 = vsel %vm3833, %v4700, 0
    %v4766 = vsel %vm3833, %v4701, 0
    %v4769 = vsel %vm3833, %v4702, 0
    %v4772 = vsel %vm3833, %v4703, 0
    %v4775 = vsel %vm3833, %v4704, 0
    %v4778 = vsel %vm3833, %v4705, 0
    %v4781 = vsel %vm3833, %v4706, 0
    %v4784 = vsel %vm3833, %v4707, 0
    %v4787 = vsel %vm3833, %v4708, 0
    %4789 = vmatprep.subr.mxu0 0.0
    %4790 = vmatpush1.msra.mxu0 %v4710
    %4791 = vmatprep.subr.mxu0 0.0
    %4792 = vmatpush1.msra.mxu0 %v4711
    %4793 = vmatprep.subr.mxu0 0.0
    %4794 = vmatpush1.msra.mxu0 %v4712
    %4795 = vmatprep.subr.mxu0 0.0
    %4796 = vmatpush1.msra.mxu0 %v4713
    %4797 = vmatprep.subr.mxu0 0.0
    %4798 = vmatpush1.msra.mxu0 0.0
    %4799 = vmatprep.subr.mxu0 0.0
    %4800 = vmatpush1.msra.mxu0 0.0
    %4801 = vmatprep.subr.mxu0 0.0
    %4802 = vmatpush1.msra.mxu0 0.0
    %4803 = vmatprep.subr.mxu0 0.0
    %4804 = vmatpush1.msra.mxu0 0.0
    %4805 = vmatprep.subr.mxu0 0.0
    %4806 = vmatpush1.msra.mxu0 0.0
    %4807 = vmatprep.subr.mxu0 0.0
    %4808 = vmatpush1.msra.mxu0 0.0
    %4809 = vmatprep.subr.mxu0 0.0
    %4810 = vmatpush1.msra.mxu0 0.0
    %4811 = vmatprep.subr.mxu0 0.0
    %4812 = vmatpush1.msra.mxu0 0.0
    %4813 = vmatprep.subr.mxu0 0.0
    %4814 = vmatpush1.msra.mxu0 0.0
    %4815 = vmatprep.subr.mxu0 0.0
    %4816 = vmatpush1.msra.mxu0 0.0
    %4817 = vmatprep.subr.mxu0 0.0
    %4818 = vmatpush1.msra.mxu0 0.0
    %4819 = vmatprep.subr.mxu0 0.0
    %4820 = vmatpush1.msra.mxu0 0.0
    %4821 = vmatprep.subr.mxu0 0.0
    %4822 = vmatpush1.msra.mxu0 0.0
    %4823 = vmatprep.subr.mxu0 0.0
    %4824 = vmatpush1.msra.mxu0 0.0
    %4825 = vmatprep.subr.mxu0 0.0
    %4826 = vmatpush1.msra.mxu0 0.0
    %4827 = vmatprep.subr.mxu0 0.0
    %4828 = vmatpush1.msra.mxu0 0.0
    %4829 = vmatprep.subr.mxu0 0.0
    %4830 = vmatpush1.msra.mxu0 0.0
    %4831 = vmatprep.subr.mxu0 0.0
    %4832 = vmatpush1.msra.mxu0 0.0
    %4833 = vmatprep.subr.mxu0 0.0
    %4834 = vmatpush1.msra.mxu0 0.0
    %4835 = vmatprep.subr.mxu0 0.0
    %4836 = vmatpush1.msra.mxu0 0.0
    %4837 = vmatprep.subr.mxu0 0.0
    %4838 = vmatpush1.msra.mxu0 0.0
    %4839 = vmatprep.subr.mxu0 0.0
    %4840 = vmatpush1.msra.mxu0 0.0
    %4841 = vmatprep.subr.mxu0 0.0
    %4842 = vmatpush1.msra.mxu0 0.0
    %4843 = vmatprep.subr.mxu0 0.0
    %4844 = vmatpush1.msra.mxu0 0.0
    %4845 = vmatprep.subr.mxu0 0.0
    %4846 = vmatpush1.msra.mxu0 0.0
    %4847 = vmatprep.subr.mxu0 0.0
    %4848 = vmatpush1.msra.mxu0 0.0
    %4849 = vmatprep.subr.mxu0 0.0
    %4850 = vmatpush1.msra.mxu0 0.0
    %4851 = vmatprep.subr.mxu0 0.0
    %4852 = vmatpush1.msra.mxu0 0.0
    %4853 = vmatprep.mubr.f32.mxu0 0.0
    %4854 = vmatmul.mubr.f32.gmra.mrb[0].mxu0 %v4715
    %v4855 = vpop.f32.mrb[0].mxu0
    %v4856 = vadd.f32 0.0, %v4855
    %v4857 = vpop.f32.mrb[0].mxu0
    %4858 = vmatprep.mubr.f32.mxu0 0.0
    %4859 = vmatmul.mubr.f32.gmra.mrb[0].mxu0 %v4718
    %v4860 = vpop.f32.mrb[0].mxu0
    %v4861 = vadd.f32 0.0, %v4860
    %v4862 = vpop.f32.mrb[0].mxu0
    %4863 = vmatprep.mubr.f32.mxu0 0.0
    %4864 = vmatmul.mubr.f32.gmra.mrb[0].mxu0 %v4721
    %v4865 = vpop.f32.mrb[0].mxu0
    %v4866 = vadd.f32 0.0, %v4865
    %v4867 = vpop.f32.mrb[0].mxu0
    %4868 = vmatprep.mubr.f32.mxu0 0.0
    %4869 = vmatmul.mubr.f32.gmra.mrb[0].mxu0 %v4724
    %v4870 = vpop.f32.mrb[0].mxu0
    %v4871 = vadd.f32 0.0, %v4870
    %v4872 = vpop.f32.mrb[0].mxu0
    %4873 = vmatprep.mubr.f32.mxu0 0.0
    %4874 = vmatmul.mubr.f32.gmra.mrb[0].mxu0 %v4727
    %v4875 = vpop.f32.mrb[0].mxu0
    %v4876 = vadd.f32 0.0, %v4875
    %v4877 = vpop.f32.mrb[0].mxu0
    %4878 = vmatprep.mubr.f32.mxu0 0.0
    %4879 = vmatmul.mubr.f32.gmra.mrb[0].mxu0 %v4730
    %v4880 = vpop.f32.mrb[0].mxu0
    %v4881 = vadd.f32 0.0, %v4880
    %v4882 = vpop.f32.mrb[0].mxu0
    %4883 = vmatprep.mubr.f32.mxu0 0.0
    %4884 = vmatmul.mubr.f32.gmra.mrb[0].mxu0 %v4733
    %v4885 = vpop.f32.mrb[0].mxu0
    %v4886 = vadd.f32 0.0, %v4885
    %v4887 = vpop.f32.mrb[0].mxu0
    %4888 = vmatprep.mubr.f32.mxu0 0.0
    %4889 = vmatmul.mubr.f32.gmra.mrb[0].mxu0 %v4736
    %v4890 = vpop.f32.mrb[0].mxu0
    %v4891 = vadd.f32 0.0, %v4890
    %v4892 = vpop.f32.mrb[0].mxu0
    %4893 = vmatprep.mubr.f32.mxu0 0.0
    %4894 = vmatmul.mubr.f32.gmra.mrb[0].mxu0 %v4739
    %v4895 = vpop.f32.mrb[0].mxu0
    %v4896 = vadd.f32 0.0, %v4895
    %v4897 = vpop.f32.mrb[0].mxu0
    %4898 = vmatprep.mubr.f32.mxu0 0.0
    %4899 = vmatmul.mubr.f32.gmra.mrb[0].mxu0 %v4742
    %v4900 = vpop.f32.mrb[0].mxu0
    %v4901 = vadd.f32 0.0, %v4900
    %v4902 = vpop.f32.mrb[0].mxu0
    %4903 = vmatprep.mubr.f32.mxu0 0.0
    %4904 = vmatmul.mubr.f32.gmra.mrb[0].mxu0 %v4745
    %v4905 = vpop.f32.mrb[0].mxu0
    %v4906 = vadd.f32 0.0, %v4905
    %v4907 = vpop.f32.mrb[0].mxu0
    %4908 = vmatprep.mubr.f32.mxu0 0.0
    %4909 = vmatmul.mubr.f32.gmra.mrb[0].mxu0 %v4748
    %v4910 = vpop.f32.mrb[0].mxu0
    %v4911 = vadd.f32 0.0, %v4910
    %v4912 = vpop.f32.mrb[0].mxu0
    %4913 = vmatprep.mubr.f32.mxu0 0.0
    %4914 = vmatmul.mubr.f32.gmra.mrb[0].mxu0 %v4751
    %v4915 = vpop.f32.mrb[0].mxu0
    %v4916 = vadd.f32 0.0, %v4915
    %v4917 = vpop.f32.mrb[0].mxu0
    %4918 = vmatprep.mubr.f32.mxu0 0.0
    %4919 = vmatmul.mubr.f32.gmra.mrb[0].mxu0 %v4754
    %v4920 = vpop.f32.mrb[0].mxu0
    %v4921 = vadd.f32 0.0, %v4920
    %v4922 = vpop.f32.mrb[0].mxu0
    %4923 = vmatprep.mubr.f32.mxu0 0.0
    %4924 = vmatmul.mubr.f32.gmra.mrb[0].mxu0 %v4757
    %v4925 = vpop.f32.mrb[0].mxu0
    %v4926 = vadd.f32 0.0, %v4925
    %v4927 = vpop.f32.mrb[0].mxu0
    %4928 = vmatprep.mubr.f32.mxu0 0.0
    %4929 = vmatmul.mubr.f32.gmra.mrb[0].mxu0 %v4760
    %v4930 = vpop.f32.mrb[0].mxu0
    %v4931 = vadd.f32 0.0, %v4930
    %v4932 = vpop.f32.mrb[0].mxu0
    %4933 = vmatprep.mubr.f32.mxu0 0.0
    %4934 = vmatmul.mubr.f32.gmra.mrb[0].mxu0 %v4763
    %v4935 = vpop.f32.mrb[0].mxu0
    %v4936 = vadd.f32 0.0, %v4935
    %v4937 = vpop.f32.mrb[0].mxu0
    %4938 = vmatprep.mubr.f32.mxu0 0.0
    %4939 = vmatmul.mubr.f32.gmra.mrb[0].mxu0 %v4766
    %v4940 = vpop.f32.mrb[0].mxu0
    %v4941 = vadd.f32 0.0, %v4940
    %v4942 = vpop.f32.mrb[0].mxu0
    %4943 = vmatprep.mubr.f32.mxu0 0.0
    %4944 = vmatmul.mubr.f32.gmra.mrb[0].mxu0 %v4769
    %v4945 = vpop.f32.mrb[0].mxu0
    %v4946 = vadd.f32 0.0, %v4945
    %v4947 = vpop.f32.mrb[0].mxu0
    %4948 = vmatprep.mubr.f32.mxu0 0.0
    %4949 = vmatmul.mubr.f32.gmra.mrb[0].mxu0 %v4772
    %v4950 = vpop.f32.mrb[0].mxu0
    %v4951 = vadd.f32 0.0, %v4950
    %v4952 = vpop.f32.mrb[0].mxu0
    %4953 = vmatprep.mubr.f32.mxu0 0.0
    %4954 = vmatmul.mubr.f32.gmra.mrb[0].mxu0 %v4775
    %v4955 = vpop.f32.mrb[0].mxu0
    %v4956 = vadd.f32 0.0, %v4955
    %v4957 = vpop.f32.mrb[0].mxu0
    %4958 = vmatprep.mubr.f32.mxu0 0.0
    %4959 = vmatmul.mubr.f32.gmra.mrb[0].mxu0 %v4778
    %v4960 = vpop.f32.mrb[0].mxu0
    %v4961 = vadd.f32 0.0, %v4960
    %v4962 = vpop.f32.mrb[0].mxu0
    %4963 = vmatprep.mubr.f32.mxu0 0.0
    %4964 = vmatmul.mubr.f32.gmra.mrb[0].mxu0 %v4781
    %v4965 = vpop.f32.mrb[0].mxu0
    %v4966 = vadd.f32 0.0, %v4965
    %v4967 = vpop.f32.mrb[0].mxu0
    %4968 = vmatprep.mubr.f32.mxu0 0.0
    %4969 = vmatmul.mubr.f32.gmra.mrb[0].mxu0 %v4784
    %v4970 = vpop.f32.mrb[0].mxu0
    %v4971 = vadd.f32 0.0, %v4970
    %v4972 = vpop.f32.mrb[0].mxu0
    %4973 = vmatprep.mubr.f32.mxu0 0.0
    %4974 = vmatmul.mubr.f32.gmra.mrb[0].mxu0 %v4787
    %v4975 = vpop.f32.mrb[0].mxu0
    %v4976 = vadd.f32 0.0, %v4975
    %v4977 = vpop.f32.mrb[0].mxu0
    %4978 = vdwg.mxu0
    %v4979 = vadd.f32 %v4659, %v4856
    %v4980 = vadd.f32 %v4660, %v4861
    %v4981 = vadd.f32 %v4661, %v4866
    %v4982 = vadd.f32 %v4662, %v4871
    %v4983 = vadd.f32 %v4663, %v4876
    %v4984 = vadd.f32 %v4664, %v4881
    %v4985 = vadd.f32 %v4665, %v4886
    %v4986 = vadd.f32 %v4666, %v4891
    %v4987 = vadd.f32 %v4667, %v4896
    %v4988 = vadd.f32 %v4668, %v4901
    %v4989 = vadd.f32 %v4669, %v4906
    %v4990 = vadd.f32 %v4670, %v4911
    %v4991 = vadd.f32 %v4671, %v4916
    %v4992 = vadd.f32 %v4672, %v4921
    %v4993 = vadd.f32 %v4673, %v4926
    %v4994 = vadd.f32 %v4674, %v4931
    %v4995 = vadd.f32 %v4675, %v4936
    %v4996 = vadd.f32 %v4676, %v4941
    %v4997 = vadd.f32 %v4677, %v4946
    %v4998 = vadd.f32 %v4678, %v4951
    %v4999 = vadd.f32 %v4679, %v4956
    %v5000 = vadd.f32 %v4680, %v4961
    %v5001 = vadd.f32 %v4681, %v4966
    %v5002 = vadd.f32 %v4682, %v4971
    %v5003 = vadd.f32 %v4683, %v4976
    %s5004 = scalar_lea.vmem %s3, 128
    %v5005 = vld [vmem:[%s5004] sm:$0xff]
    %v5006 = vld [vmem:[%s5004 + $0x8] sm:$0xff]
    %v5007 = vld [vmem:[%s5004 + $0x10] sm:$0xff]
    %v5008 = vld [vmem:[%s5004 + $0x18] sm:$0xff]
    %v5010 = vsel %vm3833, %v3749, 0
    %v5013 = vsel %vm3833, %v3750, 0
    %v5016 = vsel %vm3833, %v3751, 0
    %v5019 = vsel %vm3833, %v3752, 0
    %v5022 = vsel %vm3833, %v3753, 0
    %v5025 = vsel %vm3833, %v3754, 0
    %v5028 = vsel %vm3833, %v3755, 0
    %v5031 = vsel %vm3833, %v3756, 0
    %v5034 = vsel %vm3833, %v3757, 0
    %v5037 = vsel %vm3833, %v3758, 0
    %v5040 = vsel %vm3833, %v3759, 0
    %v5043 = vsel %vm3833, %v3760, 0
    %v5046 = vsel %vm3833, %v3761, 0
    %v5049 = vsel %vm3833, %v3762, 0
    %v5052 = vsel %vm3833, %v3763, 0
    %v5055 = vsel %vm3833, %v3764, 0
    %v5058 = vsel %vm3833, %v3765, 0
    %v5061 = vsel %vm3833, %v3766, 0
    %v5064 = vsel %vm3833, %v3767, 0
    %v5067 = vsel %vm3833, %v3768, 0
    %v5070 = vsel %vm3833, %v3769, 0
    %v5073 = vsel %vm3833, %v3770, 0
    %v5076 = vsel %vm3833, %v3771, 0
    %v5079 = vsel %vm3833, %v3772, 0
    %v5082 = vsel %vm3833, %v3773, 0
    %5084 = vmatprep.subr.mxu0 0.0
    %5085 = vmatpush1.msra.mxu0 %v5005
    %5086 = vmatprep.subr.mxu0 0.0
    %5087 = vmatpush1.msra.mxu0 %v5006
    %5088 = vmatprep.subr.mxu0 0.0
    %5089 = vmatpush1.msra.mxu0 %v5007
    %5090 = vmatprep.subr.mxu0 0.0
    %5091 = vmatpush1.msra.mxu0 %v5008
    %5092 = vmatprep.subr.mxu0 0.0
    %5093 = vmatpush1.msra.mxu0 0.0
    %5094 = vmatprep.subr.mxu0 0.0
    %5095 = vmatpush1.msra.mxu0 0.0
    %5096 = vmatprep.subr.mxu0 0.0
    %5097 = vmatpush1.msra.mxu0 0.0
    %5098 = vmatprep.subr.mxu0 0.0
    %5099 = vmatpush1.msra.mxu0 0.0
    %5100 = vmatprep.subr.mxu0 0.0
    %5101 = vmatpush1.msra.mxu0 0.0
    %5102 = vmatprep.subr.mxu0 0.0
    %5103 = vmatpush1.msra.mxu0 0.0
    %5104 = vmatprep.subr.mxu0 0.0
    %5105 = vmatpush1.msra.mxu0 0.0
    %5106 = vmatprep.subr.mxu0 0.0
    %5107 = vmatpush1.msra.mxu0 0.0
    %5108 = vmatprep.subr.mxu0 0.0
    %5109 = vmatpush1.msra.mxu0 0.0
    %5110 = vmatprep.subr.mxu0 0.0
    %5111 = vmatpush1.msra.mxu0 0.0
    %5112 = vmatprep.subr.mxu0 0.0
    %5113 = vmatpush1.msra.mxu0 0.0
    %5114 = vmatprep.subr.mxu0 0.0
    %5115 = vmatpush1.msra.mxu0 0.0
    %5116 = vmatprep.subr.mxu0 0.0
    %5117 = vmatpush1.msra.mxu0 0.0
    %5118 = vmatprep.subr.mxu0 0.0
    %5119 = vmatpush1.msra.mxu0 0.0
    %5120 = vmatprep.subr.mxu0 0.0
    %5121 = vmatpush1.msra.mxu0 0.0
    %5122 = vmatprep.subr.mxu0 0.0
    %5123 = vmatpush1.msra.mxu0 0.0
    %5124 = vmatprep.subr.mxu0 0.0
    %5125 = vmatpush1.msra.mxu0 0.0
    %5126 = vmatprep.subr.mxu0 0.0
    %5127 = vmatpush1.msra.mxu0 0.0
    %5128 = vmatprep.subr.mxu0 0.0
    %5129 = vmatpush1.msra.mxu0 0.0
    %5130 = vmatprep.subr.mxu0 0.0
    %5131 = vmatpush1.msra.mxu0 0.0
    %5132 = vmatprep.subr.mxu0 0.0
    %5133 = vmatpush1.msra.mxu0 0.0
    %5134 = vmatprep.subr.mxu0 0.0
    %5135 = vmatpush1.msra.mxu0 0.0
    %5136 = vmatprep.subr.mxu0 0.0
    %5137 = vmatpush1.msra.mxu0 0.0
    %5138 = vmatprep.subr.mxu0 0.0
    %5139 = vmatpush1.msra.mxu0 0.0
    %5140 = vmatprep.subr.mxu0 0.0
    %5141 = vmatpush1.msra.mxu0 0.0
    %5142 = vmatprep.subr.mxu0 0.0
    %5143 = vmatpush1.msra.mxu0 0.0
    %5144 = vmatprep.subr.mxu0 0.0
    %5145 = vmatpush1.msra.mxu0 0.0
    %5146 = vmatprep.subr.mxu0 0.0
    %5147 = vmatpush1.msra.mxu0 0.0
    %5148 = vmatprep.mubr.f32.mxu0 0.0
    %5149 = vmatmul.mubr.f32.gmra.mrb[0].mxu0 %v5010
    %v5150 = vpop.f32.mrb[0].mxu0
    %v5151 = vadd.f32 0.0, %v5150
    %v5152 = vpop.f32.mrb[0].mxu0
    %5153 = vmatprep.mubr.f32.mxu0 0.0
    %5154 = vmatmul.mubr.f32.gmra.mrb[0].mxu0 %v5013
    %v5155 = vpop.f32.mrb[0].mxu0
    %v5156 = vadd.f32 0.0, %v5155
    %v5157 = vpop.f32.mrb[0].mxu0
    %5158 = vmatprep.mubr.f32.mxu0 0.0
    %5159 = vmatmul.mubr.f32.gmra.mrb[0].mxu0 %v5016
    %v5160 = vpop.f32.mrb[0].mxu0
    %v5161 = vadd.f32 0.0, %v5160
    %v5162 = vpop.f32.mrb[0].mxu0
    %5163 = vmatprep.mubr.f32.mxu0 0.0
    %5164 = vmatmul.mubr.f32.gmra.mrb[0].mxu0 %v5019
    %v5165 = vpop.f32.mrb[0].mxu0
    %v5166 = vadd.f32 0.0, %v5165
    %v5167 = vpop.f32.mrb[0].mxu0
    %5168 = vmatprep.mubr.f32.mxu0 0.0
    %5169 = vmatmul.mubr.f32.gmra.mrb[0].mxu0 %v5022
    %v5170 = vpop.f32.mrb[0].mxu0
    %v5171 = vadd.f32 0.0, %v5170
    %v5172 = vpop.f32.mrb[0].mxu0
    %5173 = vmatprep.mubr.f32.mxu0 0.0
    %5174 = vmatmul.mubr.f32.gmra.mrb[0].mxu0 %v5025
    %v5175 = vpop.f32.mrb[0].mxu0
    %v5176 = vadd.f32 0.0, %v5175
    %v5177 = vpop.f32.mrb[0].mxu0
    %5178 = vmatprep.mubr.f32.mxu0 0.0
    %5179 = vmatmul.mubr.f32.gmra.mrb[0].mxu0 %v5028
    %v5180 = vpop.f32.mrb[0].mxu0
    %v5181 = vadd.f32 0.0, %v5180
    %v5182 = vpop.f32.mrb[0].mxu0
    %5183 = vmatprep.mubr.f32.mxu0 0.0
    %5184 = vmatmul.mubr.f32.gmra.mrb[0].mxu0 %v5031
    %v5185 = vpop.f32.mrb[0].mxu0
    %v5186 = vadd.f32 0.0, %v5185
    %v5187 = vpop.f32.mrb[0].mxu0
    %5188 = vmatprep.mubr.f32.mxu0 0.0
    %5189 = vmatmul.mubr.f32.gmra.mrb[0].mxu0 %v5034
    %v5190 = vpop.f32.mrb[0].mxu0
    %v5191 = vadd.f32 0.0, %v5190
    %v5192 = vpop.f32.mrb[0].mxu0
    %5193 = vmatprep.mubr.f32.mxu0 0.0
    %5194 = vmatmul.mubr.f32.gmra.mrb[0].mxu0 %v5037
    %v5195 = vpop.f32.mrb[0].mxu0
    %v5196 = vadd.f32 0.0, %v5195
    %v5197 = vpop.f32.mrb[0].mxu0
    %5198 = vmatprep.mubr.f32.mxu0 0.0
    %5199 = vmatmul.mubr.f32.gmra.mrb[0].mxu0 %v5040
    %v5200 = vpop.f32.mrb[0].mxu0
    %v5201 = vadd.f32 0.0, %v5200
    %v5202 = vpop.f32.mrb[0].mxu0
    %5203 = vmatprep.mubr.f32.mxu0 0.0
    %5204 = vmatmul.mubr.f32.gmra.mrb[0].mxu0 %v5043
    %v5205 = vpop.f32.mrb[0].mxu0
    %v5206 = vadd.f32 0.0, %v5205
    %v5207 = vpop.f32.mrb[0].mxu0
    %5208 = vmatprep.mubr.f32.mxu0 0.0
    %5209 = vmatmul.mubr.f32.gmra.mrb[0].mxu0 %v5046
    %v5210 = vpop.f32.mrb[0].mxu0
    %v5211 = vadd.f32 0.0, %v5210
    %v5212 = vpop.f32.mrb[0].mxu0
    %5213 = vmatprep.mubr.f32.mxu0 0.0
    %5214 = vmatmul.mubr.f32.gmra.mrb[0].mxu0 %v5049
    %v5215 = vpop.f32.mrb[0].mxu0
    %v5216 = vadd.f32 0.0, %v5215
    %v5217 = vpop.f32.mrb[0].mxu0
    %5218 = vmatprep.mubr.f32.mxu0 0.0
    %5219 = vmatmul.mubr.f32.gmra.mrb[0].mxu0 %v5052
    %v5220 = vpop.f32.mrb[0].mxu0
    %v5221 = vadd.f32 0.0, %v5220
    %v5222 = vpop.f32.mrb[0].mxu0
    %5223 = vmatprep.mubr.f32.mxu0 0.0
    %5224 = vmatmul.mubr.f32.gmra.mrb[0].mxu0 %v5055
    %v5225 = vpop.f32.mrb[0].mxu0
    %v5226 = vadd.f32 0.0, %v5225
    %v5227 = vpop.f32.mrb[0].mxu0
    %5228 = vmatprep.mubr.f32.mxu0 0.0
    %5229 = vmatmul.mubr.f32.gmra.mrb[0].mxu0 %v5058
    %v5230 = vpop.f32.mrb[0].mxu0
    %v5231 = vadd.f32 0.0, %v5230
    %v5232 = vpop.f32.mrb[0].mxu0
    %5233 = vmatprep.mubr.f32.mxu0 0.0
    %5234 = vmatmul.mubr.f32.gmra.mrb[0].mxu0 %v5061
    %v5235 = vpop.f32.mrb[0].mxu0
    %v5236 = vadd.f32 0.0, %v5235
    %v5237 = vpop.f32.mrb[0].mxu0
    %5238 = vmatprep.mubr.f32.mxu0 0.0
    %5239 = vmatmul.mubr.f32.gmra.mrb[0].mxu0 %v5064
    %v5240 = vpop.f32.mrb[0].mxu0
    %v5241 = vadd.f32 0.0, %v5240
    %v5242 = vpop.f32.mrb[0].mxu0
    %5243 = vmatprep.mubr.f32.mxu0 0.0
    %5244 = vmatmul.mubr.f32.gmra.mrb[0].mxu0 %v5067
    %v5245 = vpop.f32.mrb[0].mxu0
    %v5246 = vadd.f32 0.0, %v5245
    %v5247 = vpop.f32.mrb[0].mxu0
    %5248 = vmatprep.mubr.f32.mxu0 0.0
    %5249 = vmatmul.mubr.f32.gmra.mrb[0].mxu0 %v5070
    %v5250 = vpop.f32.mrb[0].mxu0
    %v5251 = vadd.f32 0.0, %v5250
    %v5252 = vpop.f32.mrb[0].mxu0
    %5253 = vmatprep.mubr.f32.mxu0 0.0
    %5254 = vmatmul.mubr.f32.gmra.mrb[0].mxu0 %v5073
    %v5255 = vpop.f32.mrb[0].mxu0
    %v5256 = vadd.f32 0.0, %v5255
    %v5257 = vpop.f32.mrb[0].mxu0
    %5258 = vmatprep.mubr.f32.mxu0 0.0
    %5259 = vmatmul.mubr.f32.gmra.mrb[0].mxu0 %v5076
    %v5260 = vpop.f32.mrb[0].mxu0
    %v5261 = vadd.f32 0.0, %v5260
    %v5262 = vpop.f32.mrb[0].mxu0
    %5263 = vmatprep.mubr.f32.mxu0 0.0
    %5264 = vmatmul.mubr.f32.gmra.mrb[0].mxu0 %v5079
    %v5265 = vpop.f32.mrb[0].mxu0
    %v5266 = vadd.f32 0.0, %v5265
    %v5267 = vpop.f32.mrb[0].mxu0
    %5268 = vmatprep.mubr.f32.mxu0 0.0
    %5269 = vmatmul.mubr.f32.gmra.mrb[0].mxu0 %v5082
    %v5270 = vpop.f32.mrb[0].mxu0
    %v5271 = vadd.f32 0.0, %v5270
    %v5272 = vpop.f32.mrb[0].mxu0
    %5273 = vdwg.mxu0
    %v5274 = vadd.f32 %v4979, %v5151
    %v5275 = vadd.f32 %v4980, %v5156
    %v5276 = vadd.f32 %v4981, %v5161
    %v5277 = vadd.f32 %v4982, %v5166
    %v5278 = vadd.f32 %v4983, %v5171
    %v5279 = vadd.f32 %v4984, %v5176
    %v5280 = vadd.f32 %v4985, %v5181
    %v5281 = vadd.f32 %v4986, %v5186
    %v5282 = vadd.f32 %v4987, %v5191
    %v5283 = vadd.f32 %v4988, %v5196
    %v5284 = vadd.f32 %v4989, %v5201
    %v5285 = vadd.f32 %v4990, %v5206
    %v5286 = vadd.f32 %v4991, %v5211
    %v5287 = vadd.f32 %v4992, %v5216
    %v5288 = vadd.f32 %v4993, %v5221
    %v5289 = vadd.f32 %v4994, %v5226
    %v5290 = vadd.f32 %v4995, %v5231
    %v5291 = vadd.f32 %v4996, %v5236
    %v5292 = vadd.f32 %v4997, %v5241
    %v5293 = vadd.f32 %v4998, %v5246
    %v5294 = vadd.f32 %v4999, %v5251
    %v5295 = vadd.f32 %v5000, %v5256
    %v5296 = vadd.f32 %v5001, %v5261
    %v5297 = vadd.f32 %v5002, %v5266
    %v5298 = vadd.f32 %v5003, %v5271
    %v5299 = vmul.f32 %v3750, %v2042
    %v5300 = vmul.f32 %v3751, %v2046
    %v5301 = vmul.f32 %v3752, %v2050
    %v5302 = vmul.f32 %v3753, %v2054
    %v5303 = vmul.f32 %v3754, %v2058
    %v5304 = vmul.f32 %v3755, %v2062
    %v5305 = vmul.f32 %v3756, %v2066
    %v5306 = vmul.f32 %v3757, %v2070
    %v5307 = vmul.f32 %v3758, %v2074
    %v5308 = vmul.f32 %v3759, %v2078
    %v5309 = vmul.f32 %v3760, %v2082
    %v5310 = vmul.f32 %v3761, %v2086
    %v5311 = vmul.f32 %v3762, %v2090
    %v5312 = vmul.f32 %v3763, %v2094
    %v5313 = vmul.f32 %v3764, %v2098
    %v5314 = vmul.f32 %v3765, %v2102
    %v5315 = vmul.f32 %v3766, %v2106
    %v5316 = vmul.f32 %v3767, %v2110
    %v5317 = vmul.f32 %v3768, %v2114
    %v5318 = vmul.f32 %v3769, %v2118
    %v5319 = vmul.f32 %v3770, %v2122
    %v5320 = vmul.f32 %v3771, %v2126
    %v5321 = vmul.f32 %v3772, %v2130
    %v5322 = vmul.f32 %v3773, %v2134
    %v5323 = vmul.f32 %v3749, %v2138
    %s5324 = scalar_lea.vmem %s3, 160
    %v5325 = vld [vmem:[%s5324] sm:$0xff]
    %v5326 = vld [vmem:[%s5324 + $0x8] sm:$0xff]
    %v5327 = vld [vmem:[%s5324 + $0x10] sm:$0xff]
    %v5328 = vld [vmem:[%s5324 + $0x18] sm:$0xff]
    %v5330 = vsel %vm3833, %v5299, 0
    %v5333 = vsel %vm3833, %v5300, 0
    %v5336 = vsel %vm3833, %v5301, 0
    %v5339 = vsel %vm3833, %v5302, 0
    %v5342 = vsel %vm3833, %v5303, 0
    %v5345 = vsel %vm3833, %v5304, 0
    %v5348 = vsel %vm3833, %v5305, 0
    %v5351 = vsel %vm3833, %v5306, 0
    %v5354 = vsel %vm3833, %v5307, 0
    %v5357 = vsel %vm3833, %v5308, 0
    %v5360 = vsel %vm3833, %v5309, 0
    %v5363 = vsel %vm3833, %v5310, 0
    %v5366 = vsel %vm3833, %v5311, 0
    %v5369 = vsel %vm3833, %v5312, 0
    %v5372 = vsel %vm3833, %v5313, 0
    %v5375 = vsel %vm3833, %v5314, 0
    %v5378 = vsel %vm3833, %v5315, 0
    %v5381 = vsel %vm3833, %v5316, 0
    %v5384 = vsel %vm3833, %v5317, 0
    %v5387 = vsel %vm3833, %v5318, 0
    %v5390 = vsel %vm3833, %v5319, 0
    %v5393 = vsel %vm3833, %v5320, 0
    %v5396 = vsel %vm3833, %v5321, 0
    %v5399 = vsel %vm3833, %v5322, 0
    %v5402 = vsel %vm3833, %v5323, 0
    %5404 = vmatprep.subr.mxu0 0.0
    %5405 = vmatpush1.msra.mxu0 %v5325
    %5406 = vmatprep.subr.mxu0 0.0
    %5407 = vmatpush1.msra.mxu0 %v5326
    %5408 = vmatprep.subr.mxu0 0.0
    %5409 = vmatpush1.msra.mxu0 %v5327
    %5410 = vmatprep.subr.mxu0 0.0
    %5411 = vmatpush1.msra.mxu0 %v5328
    %5412 = vmatprep.subr.mxu0 0.0
    %5413 = vmatpush1.msra.mxu0 0.0
    %5414 = vmatprep.subr.mxu0 0.0
    %5415 = vmatpush1.msra.mxu0 0.0
    %5416 = vmatprep.subr.mxu0 0.0
    %5417 = vmatpush1.msra.mxu0 0.0
    %5418 = vmatprep.subr.mxu0 0.0
    %5419 = vmatpush1.msra.mxu0 0.0
    %5420 = vmatprep.subr.mxu0 0.0
    %5421 = vmatpush1.msra.mxu0 0.0
    %5422 = vmatprep.subr.mxu0 0.0
    %5423 = vmatpush1.msra.mxu0 0.0
    %5424 = vmatprep.subr.mxu0 0.0
    %5425 = vmatpush1.msra.mxu0 0.0
    %5426 = vmatprep.subr.mxu0 0.0
    %5427 = vmatpush1.msra.mxu0 0.0
    %5428 = vmatprep.subr.mxu0 0.0
    %5429 = vmatpush1.msra.mxu0 0.0
    %5430 = vmatprep.subr.mxu0 0.0
    %5431 = vmatpush1.msra.mxu0 0.0
    %5432 = vmatprep.subr.mxu0 0.0
    %5433 = vmatpush1.msra.mxu0 0.0
    %5434 = vmatprep.subr.mxu0 0.0
    %5435 = vmatpush1.msra.mxu0 0.0
    %5436 = vmatprep.subr.mxu0 0.0
    %5437 = vmatpush1.msra.mxu0 0.0
    %5438 = vmatprep.subr.mxu0 0.0
    %5439 = vmatpush1.msra.mxu0 0.0
    %5440 = vmatprep.subr.mxu0 0.0
    %5441 = vmatpush1.msra.mxu0 0.0
    %5442 = vmatprep.subr.mxu0 0.0
    %5443 = vmatpush1.msra.mxu0 0.0
    %5444 = vmatprep.subr.mxu0 0.0
    %5445 = vmatpush1.msra.mxu0 0.0
    %5446 = vmatprep.subr.mxu0 0.0
    %5447 = vmatpush1.msra.mxu0 0.0
    %5448 = vmatprep.subr.mxu0 0.0
    %5449 = vmatpush1.msra.mxu0 0.0
    %5450 = vmatprep.subr.mxu0 0.0
    %5451 = vmatpush1.msra.mxu0 0.0
    %5452 = vmatprep.subr.mxu0 0.0
    %5453 = vmatpush1.msra.mxu0 0.0
    %5454 = vmatprep.subr.mxu0 0.0
    %5455 = vmatpush1.msra.mxu0 0.0
    %5456 = vmatprep.subr.mxu0 0.0
    %5457 = vmatpush1.msra.mxu0 0.0
    %5458 = vmatprep.subr.mxu0 0.0
    %5459 = vmatpush1.msra.mxu0 0.0
    %5460 = vmatprep.subr.mxu0 0.0
    %5461 = vmatpush1.msra.mxu0 0.0
    %5462 = vmatprep.subr.mxu0 0.0
    %5463 = vmatpush1.msra.mxu0 0.0
    %5464 = vmatprep.subr.mxu0 0.0
    %5465 = vmatpush1.msra.mxu0 0.0
    %5466 = vmatprep.subr.mxu0 0.0
    %5467 = vmatpush1.msra.mxu0 0.0
    %5468 = vmatprep.mubr.f32.mxu0 0.0
    %5469 = vmatmul.mubr.f32.gmra.mrb[0].mxu0 %v5330
    %v5470 = vpop.f32.mrb[0].mxu0
    %v5471 = vadd.f32 0.0, %v5470
    %v5472 = vpop.f32.mrb[0].mxu0
    %5473 = vmatprep.mubr.f32.mxu0 0.0
    %5474 = vmatmul.mubr.f32.gmra.mrb[0].mxu0 %v5333
    %v5475 = vpop.f32.mrb[0].mxu0
    %v5476 = vadd.f32 0.0, %v5475
    %v5477 = vpop.f32.mrb[0].mxu0
    %5478 = vmatprep.mubr.f32.mxu0 0.0
    %5479 = vmatmul.mubr.f32.gmra.mrb[0].mxu0 %v5336
    %v5480 = vpop.f32.mrb[0].mxu0
    %v5481 = vadd.f32 0.0, %v5480
    %v5482 = vpop.f32.mrb[0].mxu0
    %5483 = vmatprep.mubr.f32.mxu0 0.0
    %5484 = vmatmul.mubr.f32.gmra.mrb[0].mxu0 %v5339
    %v5485 = vpop.f32.mrb[0].mxu0
    %v5486 = vadd.f32 0.0, %v5485
    %v5487 = vpop.f32.mrb[0].mxu0
    %5488 = vmatprep.mubr.f32.mxu0 0.0
    %5489 = vmatmul.mubr.f32.gmra.mrb[0].mxu0 %v5342
    %v5490 = vpop.f32.mrb[0].mxu0
    %v5491 = vadd.f32 0.0, %v5490
    %v5492 = vpop.f32.mrb[0].mxu0
    %5493 = vmatprep.mubr.f32.mxu0 0.0
    %5494 = vmatmul.mubr.f32.gmra.mrb[0].mxu0 %v5345
    %v5495 = vpop.f32.mrb[0].mxu0
    %v5496 = vadd.f32 0.0, %v5495
    %v5497 = vpop.f32.mrb[0].mxu0
    %5498 = vmatprep.mubr.f32.mxu0 0.0
    %5499 = vmatmul.mubr.f32.gmra.mrb[0].mxu0 %v5348
    %v5500 = vpop.f32.mrb[0].mxu0
    %v5501 = vadd.f32 0.0, %v5500
    %v5502 = vpop.f32.mrb[0].mxu0
    %5503 = vmatprep.mubr.f32.mxu0 0.0
    %5504 = vmatmul.mubr.f32.gmra.mrb[0].mxu0 %v5351
    %v5505 = vpop.f32.mrb[0].mxu0
    %v5506 = vadd.f32 0.0, %v5505
    %v5507 = vpop.f32.mrb[0].mxu0
    %5508 = vmatprep.mubr.f32.mxu0 0.0
    %5509 = vmatmul.mubr.f32.gmra.mrb[0].mxu0 %v5354
    %v5510 = vpop.f32.mrb[0].mxu0
    %v5511 = vadd.f32 0.0, %v5510
    %v5512 = vpop.f32.mrb[0].mxu0
    %5513 = vmatprep.mubr.f32.mxu0 0.0
    %5514 = vmatmul.mubr.f32.gmra.mrb[0].mxu0 %v5357
    %v5515 = vpop.f32.mrb[0].mxu0
    %v5516 = vadd.f32 0.0, %v5515
    %v5517 = vpop.f32.mrb[0].mxu0
    %5518 = vmatprep.mubr.f32.mxu0 0.0
    %5519 = vmatmul.mubr.f32.gmra.mrb[0].mxu0 %v5360
    %v5520 = vpop.f32.mrb[0].mxu0
    %v5521 = vadd.f32 0.0, %v5520
    %v5522 = vpop.f32.mrb[0].mxu0
    %5523 = vmatprep.mubr.f32.mxu0 0.0
    %5524 = vmatmul.mubr.f32.gmra.mrb[0].mxu0 %v5363
    %v5525 = vpop.f32.mrb[0].mxu0
    %v5526 = vadd.f32 0.0, %v5525
    %v5527 = vpop.f32.mrb[0].mxu0
    %5528 = vmatprep.mubr.f32.mxu0 0.0
    %5529 = vmatmul.mubr.f32.gmra.mrb[0].mxu0 %v5366
    %v5530 = vpop.f32.mrb[0].mxu0
    %v5531 = vadd.f32 0.0, %v5530
    %v5532 = vpop.f32.mrb[0].mxu0
    %5533 = vmatprep.mubr.f32.mxu0 0.0
    %5534 = vmatmul.mubr.f32.gmra.mrb[0].mxu0 %v5369
    %v5535 = vpop.f32.mrb[0].mxu0
    %v5536 = vadd.f32 0.0, %v5535
    %v5537 = vpop.f32.mrb[0].mxu0
    %5538 = vmatprep.mubr.f32.mxu0 0.0
    %5539 = vmatmul.mubr.f32.gmra.mrb[0].mxu0 %v5372
    %v5540 = vpop.f32.mrb[0].mxu0
    %v5541 = vadd.f32 0.0, %v5540
    %v5542 = vpop.f32.mrb[0].mxu0
    %5543 = vmatprep.mubr.f32.mxu0 0.0
    %5544 = vmatmul.mubr.f32.gmra.mrb[0].mxu0 %v5375
    %v5545 = vpop.f32.mrb[0].mxu0
    %v5546 = vadd.f32 0.0, %v5545
    %v5547 = vpop.f32.mrb[0].mxu0
    %5548 = vmatprep.mubr.f32.mxu0 0.0
    %5549 = vmatmul.mubr.f32.gmra.mrb[0].mxu0 %v5378
    %v5550 = vpop.f32.mrb[0].mxu0
    %v5551 = vadd.f32 0.0, %v5550
    %v5552 = vpop.f32.mrb[0].mxu0
    %5553 = vmatprep.mubr.f32.mxu0 0.0
    %5554 = vmatmul.mubr.f32.gmra.mrb[0].mxu0 %v5381
    %v5555 = vpop.f32.mrb[0].mxu0
    %v5556 = vadd.f32 0.0, %v5555
    %v5557 = vpop.f32.mrb[0].mxu0
    %5558 = vmatprep.mubr.f32.mxu0 0.0
    %5559 = vmatmul.mubr.f32.gmra.mrb[0].mxu0 %v5384
    %v5560 = vpop.f32.mrb[0].mxu0
    %v5561 = vadd.f32 0.0, %v5560
    %v5562 = vpop.f32.mrb[0].mxu0
    %5563 = vmatprep.mubr.f32.mxu0 0.0
    %5564 = vmatmul.mubr.f32.gmra.mrb[0].mxu0 %v5387
    %v5565 = vpop.f32.mrb[0].mxu0
    %v5566 = vadd.f32 0.0, %v5565
    %v5567 = vpop.f32.mrb[0].mxu0
    %5568 = vmatprep.mubr.f32.mxu0 0.0
    %5569 = vmatmul.mubr.f32.gmra.mrb[0].mxu0 %v5390
    %v5570 = vpop.f32.mrb[0].mxu0
    %v5571 = vadd.f32 0.0, %v5570
    %v5572 = vpop.f32.mrb[0].mxu0
    %5573 = vmatprep.mubr.f32.mxu0 0.0
    %5574 = vmatmul.mubr.f32.gmra.mrb[0].mxu0 %v5393
    %v5575 = vpop.f32.mrb[0].mxu0
    %v5576 = vadd.f32 0.0, %v5575
    %v5577 = vpop.f32.mrb[0].mxu0
    %5578 = vmatprep.mubr.f32.mxu0 0.0
    %5579 = vmatmul.mubr.f32.gmra.mrb[0].mxu0 %v5396
    %v5580 = vpop.f32.mrb[0].mxu0
    %v5581 = vadd.f32 0.0, %v5580
    %v5582 = vpop.f32.mrb[0].mxu0
    %5583 = vmatprep.mubr.f32.mxu0 0.0
    %5584 = vmatmul.mubr.f32.gmra.mrb[0].mxu0 %v5399
    %v5585 = vpop.f32.mrb[0].mxu0
    %v5586 = vadd.f32 0.0, %v5585
    %v5587 = vpop.f32.mrb[0].mxu0
    %5588 = vmatprep.mubr.f32.mxu0 0.0
    %5589 = vmatmul.mubr.f32.gmra.mrb[0].mxu0 %v5402
    %v5590 = vpop.f32.mrb[0].mxu0
    %v5591 = vadd.f32 0.0, %v5590
    %v5592 = vpop.f32.mrb[0].mxu0
    %5593 = vdwg.mxu0
    %v5594 = vadd.f32 %v5274, %v5471
    %v5595 = vadd.f32 %v5275, %v5476
    %v5596 = vadd.f32 %v5276, %v5481
    %v5597 = vadd.f32 %v5277, %v5486
    %v5598 = vadd.f32 %v5278, %v5491
    %v5599 = vadd.f32 %v5279, %v5496
    %v5600 = vadd.f32 %v5280, %v5501
    %v5601 = vadd.f32 %v5281, %v5506
    %v5602 = vadd.f32 %v5282, %v5511
    %v5603 = vadd.f32 %v5283, %v5516
    %v5604 = vadd.f32 %v5284, %v5521
    %v5605 = vadd.f32 %v5285, %v5526
    %v5606 = vadd.f32 %v5286, %v5531
    %v5607 = vadd.f32 %v5287, %v5536
    %v5608 = vadd.f32 %v5288, %v5541
    %v5609 = vadd.f32 %v5289, %v5546
    %v5610 = vadd.f32 %v5290, %v5551
    %v5611 = vadd.f32 %v5291, %v5556
    %v5612 = vadd.f32 %v5292, %v5561
    %v5613 = vadd.f32 %v5293, %v5566
    %v5614 = vadd.f32 %v5294, %v5571
    %v5615 = vadd.f32 %v5295, %v5576
    %v5616 = vadd.f32 %v5296, %v5581
    %v5617 = vadd.f32 %v5297, %v5586
    %v5618 = vadd.f32 %v5298, %v5591
    %v5619 = vmul.f32 %v3753, %v2462
    %v5620 = vmul.f32 %v3754, %v2466
    %v5621 = vmul.f32 %v3755, %v2470
    %v5622 = vmul.f32 %v3756, %v2474
    %v5623 = vmul.f32 %v3757, %v2478
    %v5624 = vmul.f32 %v3758, %v2482
    %v5625 = vmul.f32 %v3759, %v2486
    %v5626 = vmul.f32 %v3760, %v2490
    %v5627 = vmul.f32 %v3761, %v2494
    %v5628 = vmul.f32 %v3762, %v2498
    %v5629 = vmul.f32 %v3763, %v2502
    %v5630 = vmul.f32 %v3764, %v2506
    %v5631 = vmul.f32 %v3765, %v2510
    %v5632 = vmul.f32 %v3766, %v2514
    %v5633 = vmul.f32 %v3767, %v2518
    %v5634 = vmul.f32 %v3768, %v2522
    %v5635 = vmul.f32 %v3769, %v2526
    %v5636 = vmul.f32 %v3770, %v2530
    %v5637 = vmul.f32 %v3771, %v2534
    %v5638 = vmul.f32 %v3772, %v2538
    %v5639 = vmul.f32 %v3773, %v2542
    %v5640 = vmul.f32 %v3749, %v2546
    %v5641 = vmul.f32 %v3750, %v2550
    %v5642 = vmul.f32 %v3751, %v2554
    %v5643 = vmul.f32 %v3752, %v2558
    %s5644 = scalar_lea.vmem %s3, 192
    %v5645 = vld [vmem:[%s5644] sm:$0xff]
    %v5646 = vld [vmem:[%s5644 + $0x8] sm:$0xff]
    %v5647 = vld [vmem:[%s5644 + $0x10] sm:$0xff]
    %v5648 = vld [vmem:[%s5644 + $0x18] sm:$0xff]
    %v5650 = vsel %vm3833, %v5619, 0
    %v5653 = vsel %vm3833, %v5620, 0
    %v5656 = vsel %vm3833, %v5621, 0
    %v5659 = vsel %vm3833, %v5622, 0
    %v5662 = vsel %vm3833, %v5623, 0
    %v5665 = vsel %vm3833, %v5624, 0
    %v5668 = vsel %vm3833, %v5625, 0
    %v5671 = vsel %vm3833, %v5626, 0
    %v5674 = vsel %vm3833, %v5627, 0
    %v5677 = vsel %vm3833, %v5628, 0
    %v5680 = vsel %vm3833, %v5629, 0
    %v5683 = vsel %vm3833, %v5630, 0
    %v5686 = vsel %vm3833, %v5631, 0
    %v5689 = vsel %vm3833, %v5632, 0
    %v5692 = vsel %vm3833, %v5633, 0
    %v5695 = vsel %vm3833, %v5634, 0
    %v5698 = vsel %vm3833, %v5635, 0
    %v5701 = vsel %vm3833, %v5636, 0
    %v5704 = vsel %vm3833, %v5637, 0
    %v5707 = vsel %vm3833, %v5638, 0
    %v5710 = vsel %vm3833, %v5639, 0
    %v5713 = vsel %vm3833, %v5640, 0
    %v5716 = vsel %vm3833, %v5641, 0
    %v5719 = vsel %vm3833, %v5642, 0
    %v5722 = vsel %vm3833, %v5643, 0
    %5724 = vmatprep.subr.mxu0 0.0
    %5725 = vmatpush1.msra.mxu0 %v5645
    %5726 = vmatprep.subr.mxu0 0.0
    %5727 = vmatpush1.msra.mxu0 %v5646
    %5728 = vmatprep.subr.mxu0 0.0
    %5729 = vmatpush1.msra.mxu0 %v5647
    %5730 = vmatprep.subr.mxu0 0.0
    %5731 = vmatpush1.msra.mxu0 %v5648
    %5732 = vmatprep.subr.mxu0 0.0
    %5733 = vmatpush1.msra.mxu0 0.0
    %5734 = vmatprep.subr.mxu0 0.0
    %5735 = vmatpush1.msra.mxu0 0.0
    %5736 = vmatprep.subr.mxu0 0.0
    %5737 = vmatpush1.msra.mxu0 0.0
    %5738 = vmatprep.subr.mxu0 0.0
    %5739 = vmatpush1.msra.mxu0 0.0
    %5740 = vmatprep.subr.mxu0 0.0
    %5741 = vmatpush1.msra.mxu0 0.0
    %5742 = vmatprep.subr.mxu0 0.0
    %5743 = vmatpush1.msra.mxu0 0.0
    %5744 = vmatprep.subr.mxu0 0.0
    %5745 = vmatpush1.msra.mxu0 0.0
    %5746 = vmatprep.subr.mxu0 0.0
    %5747 = vmatpush1.msra.mxu0 0.0
    %5748 = vmatprep.subr.mxu0 0.0
    %5749 = vmatpush1.msra.mxu0 0.0
    %5750 = vmatprep.subr.mxu0 0.0
    %5751 = vmatpush1.msra.mxu0 0.0
    %5752 = vmatprep.subr.mxu0 0.0
    %5753 = vmatpush1.msra.mxu0 0.0
    %5754 = vmatprep.subr.mxu0 0.0
    %5755 = vmatpush1.msra.mxu0 0.0
    %5756 = vmatprep.subr.mxu0 0.0
    %5757 = vmatpush1.msra.mxu0 0.0
    %5758 = vmatprep.subr.mxu0 0.0
    %5759 = vmatpush1.msra.mxu0 0.0
    %5760 = vmatprep.subr.mxu0 0.0
    %5761 = vmatpush1.msra.mxu0 0.0
    %5762 = vmatprep.subr.mxu0 0.0
    %5763 = vmatpush1.msra.mxu0 0.0
    %5764 = vmatprep.subr.mxu0 0.0
    %5765 = vmatpush1.msra.mxu0 0.0
    %5766 = vmatprep.subr.mxu0 0.0
    %5767 = vmatpush1.msra.mxu0 0.0
    %5768 = vmatprep.subr.mxu0 0.0
    %5769 = vmatpush1.msra.mxu0 0.0
    %5770 = vmatprep.subr.mxu0 0.0
    %5771 = vmatpush1.msra.mxu0 0.0
    %5772 = vmatprep.subr.mxu0 0.0
    %5773 = vmatpush1.msra.mxu0 0.0
    %5774 = vmatprep.subr.mxu0 0.0
    %5775 = vmatpush1.msra.mxu0 0.0
    %5776 = vmatprep.subr.mxu0 0.0
    %5777 = vmatpush1.msra.mxu0 0.0
    %5778 = vmatprep.subr.mxu0 0.0
    %5779 = vmatpush1.msra.mxu0 0.0
    %5780 = vmatprep.subr.mxu0 0.0
    %5781 = vmatpush1.msra.mxu0 0.0
    %5782 = vmatprep.subr.mxu0 0.0
    %5783 = vmatpush1.msra.mxu0 0.0
    %5784 = vmatprep.subr.mxu0 0.0
    %5785 = vmatpush1.msra.mxu0 0.0
    %5786 = vmatprep.subr.mxu0 0.0
    %5787 = vmatpush1.msra.mxu0 0.0
    %5788 = vmatprep.mubr.f32.mxu0 0.0
    %5789 = vmatmul.mubr.f32.gmra.mrb[0].mxu0 %v5650
    %v5790 = vpop.f32.mrb[0].mxu0
    %v5791 = vadd.f32 0.0, %v5790
    %v5792 = vpop.f32.mrb[0].mxu0
    %5793 = vmatprep.mubr.f32.mxu0 0.0
    %5794 = vmatmul.mubr.f32.gmra.mrb[0].mxu0 %v5653
    %v5795 = vpop.f32.mrb[0].mxu0
    %v5796 = vadd.f32 0.0, %v5795
    %v5797 = vpop.f32.mrb[0].mxu0
    %5798 = vmatprep.mubr.f32.mxu0 0.0
    %5799 = vmatmul.mubr.f32.gmra.mrb[0].mxu0 %v5656
    %v5800 = vpop.f32.mrb[0].mxu0
    %v5801 = vadd.f32 0.0, %v5800
    %v5802 = vpop.f32.mrb[0].mxu0
    %5803 = vmatprep.mubr.f32.mxu0 0.0
    %5804 = vmatmul.mubr.f32.gmra.mrb[0].mxu0 %v5659
    %v5805 = vpop.f32.mrb[0].mxu0
    %v5806 = vadd.f32 0.0, %v5805
    %v5807 = vpop.f32.mrb[0].mxu0
    %5808 = vmatprep.mubr.f32.mxu0 0.0
    %5809 = vmatmul.mubr.f32.gmra.mrb[0].mxu0 %v5662
    %v5810 = vpop.f32.mrb[0].mxu0
    %v5811 = vadd.f32 0.0, %v5810
    %v5812 = vpop.f32.mrb[0].mxu0
    %5813 = vmatprep.mubr.f32.mxu0 0.0
    %5814 = vmatmul.mubr.f32.gmra.mrb[0].mxu0 %v5665
    %v5815 = vpop.f32.mrb[0].mxu0
    %v5816 = vadd.f32 0.0, %v5815
    %v5817 = vpop.f32.mrb[0].mxu0
    %5818 = vmatprep.mubr.f32.mxu0 0.0
    %5819 = vmatmul.mubr.f32.gmra.mrb[0].mxu0 %v5668
    %v5820 = vpop.f32.mrb[0].mxu0
    %v5821 = vadd.f32 0.0, %v5820
    %v5822 = vpop.f32.mrb[0].mxu0
    %5823 = vmatprep.mubr.f32.mxu0 0.0
    %5824 = vmatmul.mubr.f32.gmra.mrb[0].mxu0 %v5671
    %v5825 = vpop.f32.mrb[0].mxu0
    %v5826 = vadd.f32 0.0, %v5825
    %v5827 = vpop.f32.mrb[0].mxu0
    %5828 = vmatprep.mubr.f32.mxu0 0.0
    %5829 = vmatmul.mubr.f32.gmra.mrb[0].mxu0 %v5674
    %v5830 = vpop.f32.mrb[0].mxu0
    %v5831 = vadd.f32 0.0, %v5830
    %v5832 = vpop.f32.mrb[0].mxu0
    %5833 = vmatprep.mubr.f32.mxu0 0.0
    %5834 = vmatmul.mubr.f32.gmra.mrb[0].mxu0 %v5677
    %v5835 = vpop.f32.mrb[0].mxu0
    %v5836 = vadd.f32 0.0, %v5835
    %v5837 = vpop.f32.mrb[0].mxu0
    %5838 = vmatprep.mubr.f32.mxu0 0.0
    %5839 = vmatmul.mubr.f32.gmra.mrb[0].mxu0 %v5680
    %v5840 = vpop.f32.mrb[0].mxu0
    %v5841 = vadd.f32 0.0, %v5840
    %v5842 = vpop.f32.mrb[0].mxu0
    %5843 = vmatprep.mubr.f32.mxu0 0.0
    %5844 = vmatmul.mubr.f32.gmra.mrb[0].mxu0 %v5683
    %v5845 = vpop.f32.mrb[0].mxu0
    %v5846 = vadd.f32 0.0, %v5845
    %v5847 = vpop.f32.mrb[0].mxu0
    %5848 = vmatprep.mubr.f32.mxu0 0.0
    %5849 = vmatmul.mubr.f32.gmra.mrb[0].mxu0 %v5686
    %v5850 = vpop.f32.mrb[0].mxu0
    %v5851 = vadd.f32 0.0, %v5850
    %v5852 = vpop.f32.mrb[0].mxu0
    %5853 = vmatprep.mubr.f32.mxu0 0.0
    %5854 = vmatmul.mubr.f32.gmra.mrb[0].mxu0 %v5689
    %v5855 = vpop.f32.mrb[0].mxu0
    %v5856 = vadd.f32 0.0, %v5855
    %v5857 = vpop.f32.mrb[0].mxu0
    %5858 = vmatprep.mubr.f32.mxu0 0.0
    %5859 = vmatmul.mubr.f32.gmra.mrb[0].mxu0 %v5692
    %v5860 = vpop.f32.mrb[0].mxu0
    %v5861 = vadd.f32 0.0, %v5860
    %v5862 = vpop.f32.mrb[0].mxu0
    %5863 = vmatprep.mubr.f32.mxu0 0.0
    %5864 = vmatmul.mubr.f32.gmra.mrb[0].mxu0 %v5695
    %v5865 = vpop.f32.mrb[0].mxu0
    %v5866 = vadd.f32 0.0, %v5865
    %v5867 = vpop.f32.mrb[0].mxu0
    %5868 = vmatprep.mubr.f32.mxu0 0.0
    %5869 = vmatmul.mubr.f32.gmra.mrb[0].mxu0 %v5698
    %v5870 = vpop.f32.mrb[0].mxu0
    %v5871 = vadd.f32 0.0, %v5870
    %v5872 = vpop.f32.mrb[0].mxu0
    %5873 = vmatprep.mubr.f32.mxu0 0.0
    %5874 = vmatmul.mubr.f32.gmra.mrb[0].mxu0 %v5701
    %v5875 = vpop.f32.mrb[0].mxu0
    %v5876 = vadd.f32 0.0, %v5875
    %v5877 = vpop.f32.mrb[0].mxu0
    %5878 = vmatprep.mubr.f32.mxu0 0.0
    %5879 = vmatmul.mubr.f32.gmra.mrb[0].mxu0 %v5704
    %v5880 = vpop.f32.mrb[0].mxu0
    %v5881 = vadd.f32 0.0, %v5880
    %v5882 = vpop.f32.mrb[0].mxu0
    %5883 = vmatprep.mubr.f32.mxu0 0.0
    %5884 = vmatmul.mubr.f32.gmra.mrb[0].mxu0 %v5707
    %v5885 = vpop.f32.mrb[0].mxu0
    %v5886 = vadd.f32 0.0, %v5885
    %v5887 = vpop.f32.mrb[0].mxu0
    %5888 = vmatprep.mubr.f32.mxu0 0.0
    %5889 = vmatmul.mubr.f32.gmra.mrb[0].mxu0 %v5710
    %v5890 = vpop.f32.mrb[0].mxu0
    %v5891 = vadd.f32 0.0, %v5890
    %v5892 = vpop.f32.mrb[0].mxu0
    %5893 = vmatprep.mubr.f32.mxu0 0.0
    %5894 = vmatmul.mubr.f32.gmra.mrb[0].mxu0 %v5713
    %v5895 = vpop.f32.mrb[0].mxu0
    %v5896 = vadd.f32 0.0, %v5895
    %v5897 = vpop.f32.mrb[0].mxu0
    %5898 = vmatprep.mubr.f32.mxu0 0.0
    %5899 = vmatmul.mubr.f32.gmra.mrb[0].mxu0 %v5716
    %v5900 = vpop.f32.mrb[0].mxu0
    %v5901 = vadd.f32 0.0, %v5900
    %v5902 = vpop.f32.mrb[0].mxu0
    %5903 = vmatprep.mubr.f32.mxu0 0.0
    %5904 = vmatmul.mubr.f32.gmra.mrb[0].mxu0 %v5719
    %v5905 = vpop.f32.mrb[0].mxu0
    %v5906 = vadd.f32 0.0, %v5905
    %v5907 = vpop.f32.mrb[0].mxu0
    %5908 = vmatprep.mubr.f32.mxu0 0.0
    %5909 = vmatmul.mubr.f32.gmra.mrb[0].mxu0 %v5722
    %v5910 = vpop.f32.mrb[0].mxu0
    %v5911 = vadd.f32 0.0, %v5910
    %v5912 = vpop.f32.mrb[0].mxu0
    %5913 = vdwg.mxu0
    %v5914 = vadd.f32 %v5594, %v5791
    %v5915 = vadd.f32 %v5595, %v5796
    %v5916 = vadd.f32 %v5596, %v5801
    %v5917 = vadd.f32 %v5597, %v5806
    %v5918 = vadd.f32 %v5598, %v5811
    %v5919 = vadd.f32 %v5599, %v5816
    %v5920 = vadd.f32 %v5600, %v5821
    %v5921 = vadd.f32 %v5601, %v5826
    %v5922 = vadd.f32 %v5602, %v5831
    %v5923 = vadd.f32 %v5603, %v5836
    %v5924 = vadd.f32 %v5604, %v5841
    %v5925 = vadd.f32 %v5605, %v5846
    %v5926 = vadd.f32 %v5606, %v5851
    %v5927 = vadd.f32 %v5607, %v5856
    %v5928 = vadd.f32 %v5608, %v5861
    %v5929 = vadd.f32 %v5609, %v5866
    %v5930 = vadd.f32 %v5610, %v5871
    %v5931 = vadd.f32 %v5611, %v5876
    %v5932 = vadd.f32 %v5612, %v5881
    %v5933 = vadd.f32 %v5613, %v5886
    %v5934 = vadd.f32 %v5614, %v5891
    %v5935 = vadd.f32 %v5615, %v5896
    %v5936 = vadd.f32 %v5616, %v5901
    %v5937 = vadd.f32 %v5617, %v5906
    %v5938 = vadd.f32 %v5618, %v5911
    %v5939 = vmul.f32 %v3754, %v2882
    %v5940 = vmul.f32 %v3755, %v2886
    %v5941 = vmul.f32 %v3756, %v2890
    %v5942 = vmul.f32 %v3757, %v2894
    %v5943 = vmul.f32 %v3758, %v2898
    %v5944 = vmul.f32 %v3759, %v2902
    %v5945 = vmul.f32 %v3760, %v2906
    %v5946 = vmul.f32 %v3761, %v2910
    %v5947 = vmul.f32 %v3762, %v2914
    %v5948 = vmul.f32 %v3763, %v2918
    %v5949 = vmul.f32 %v3764, %v2922
    %v5950 = vmul.f32 %v3765, %v2926
    %v5951 = vmul.f32 %v3766, %v2930
    %v5952 = vmul.f32 %v3767, %v2934
    %v5953 = vmul.f32 %v3768, %v2938
    %v5954 = vmul.f32 %v3769, %v2942
    %v5955 = vmul.f32 %v3770, %v2946
    %v5956 = vmul.f32 %v3771, %v2950
    %v5957 = vmul.f32 %v3772, %v2954
    %v5958 = vmul.f32 %v3773, %v2958
    %v5959 = vmul.f32 %v3749, %v2962
    %v5960 = vmul.f32 %v3750, %v2966
    %v5961 = vmul.f32 %v3751, %v2970
    %v5962 = vmul.f32 %v3752, %v2974
    %v5963 = vmul.f32 %v3753, %v2978
    %s5964 = scalar_lea.vmem %s3, 224
    %v5965 = vld [vmem:[%s5964] sm:$0xff]
    %v5966 = vld [vmem:[%s5964 + $0x8] sm:$0xff]
    %v5967 = vld [vmem:[%s5964 + $0x10] sm:$0xff]
    %v5968 = vld [vmem:[%s5964 + $0x18] sm:$0xff]
    %v5970 = vsel %vm3833, %v5939, 0
    %v5973 = vsel %vm3833, %v5940, 0
    %v5976 = vsel %vm3833, %v5941, 0
    %v5979 = vsel %vm3833, %v5942, 0
    %v5982 = vsel %vm3833, %v5943, 0
    %v5985 = vsel %vm3833, %v5944, 0
    %v5988 = vsel %vm3833, %v5945, 0
    %v5991 = vsel %vm3833, %v5946, 0
    %v5994 = vsel %vm3833, %v5947, 0
    %v5997 = vsel %vm3833, %v5948, 0
    %v6000 = vsel %vm3833, %v5949, 0
    %v6003 = vsel %vm3833, %v5950, 0
    %v6006 = vsel %vm3833, %v5951, 0
    %v6009 = vsel %vm3833, %v5952, 0
    %v6012 = vsel %vm3833, %v5953, 0
    %v6015 = vsel %vm3833, %v5954, 0
    %v6018 = vsel %vm3833, %v5955, 0
    %v6021 = vsel %vm3833, %v5956, 0
    %v6024 = vsel %vm3833, %v5957, 0
    %v6027 = vsel %vm3833, %v5958, 0
    %v6030 = vsel %vm3833, %v5959, 0
    %v6033 = vsel %vm3833, %v5960, 0
    %v6036 = vsel %vm3833, %v5961, 0
    %v6039 = vsel %vm3833, %v5962, 0
    %v6042 = vsel %vm3833, %v5963, 0
    %6044 = vmatprep.subr.mxu0 0.0
    %6045 = vmatpush1.msra.mxu0 %v5965
    %6046 = vmatprep.subr.mxu0 0.0
    %6047 = vmatpush1.msra.mxu0 %v5966
    %6048 = vmatprep.subr.mxu0 0.0
    %6049 = vmatpush1.msra.mxu0 %v5967
    %6050 = vmatprep.subr.mxu0 0.0
    %6051 = vmatpush1.msra.mxu0 %v5968
    %6052 = vmatprep.subr.mxu0 0.0
    %6053 = vmatpush1.msra.mxu0 0.0
    %6054 = vmatprep.subr.mxu0 0.0
    %6055 = vmatpush1.msra.mxu0 0.0
    %6056 = vmatprep.subr.mxu0 0.0
    %6057 = vmatpush1.msra.mxu0 0.0
    %6058 = vmatprep.subr.mxu0 0.0
    %6059 = vmatpush1.msra.mxu0 0.0
    %6060 = vmatprep.subr.mxu0 0.0
    %6061 = vmatpush1.msra.mxu0 0.0
    %6062 = vmatprep.subr.mxu0 0.0
    %6063 = vmatpush1.msra.mxu0 0.0
    %6064 = vmatprep.subr.mxu0 0.0
    %6065 = vmatpush1.msra.mxu0 0.0
    %6066 = vmatprep.subr.mxu0 0.0
    %6067 = vmatpush1.msra.mxu0 0.0
    %6068 = vmatprep.subr.mxu0 0.0
    %6069 = vmatpush1.msra.mxu0 0.0
    %6070 = vmatprep.subr.mxu0 0.0
    %6071 = vmatpush1.msra.mxu0 0.0
    %6072 = vmatprep.subr.mxu0 0.0
    %6073 = vmatpush1.msra.mxu0 0.0
    %6074 = vmatprep.subr.mxu0 0.0
    %6075 = vmatpush1.msra.mxu0 0.0
    %6076 = vmatprep.subr.mxu0 0.0
    %6077 = vmatpush1.msra.mxu0 0.0
    %6078 = vmatprep.subr.mxu0 0.0
    %6079 = vmatpush1.msra.mxu0 0.0
    %6080 = vmatprep.subr.mxu0 0.0
    %6081 = vmatpush1.msra.mxu0 0.0
    %6082 = vmatprep.subr.mxu0 0.0
    %6083 = vmatpush1.msra.mxu0 0.0
    %6084 = vmatprep.subr.mxu0 0.0
    %6085 = vmatpush1.msra.mxu0 0.0
    %6086 = vmatprep.subr.mxu0 0.0
    %6087 = vmatpush1.msra.mxu0 0.0
    %6088 = vmatprep.subr.mxu0 0.0
    %6089 = vmatpush1.msra.mxu0 0.0
    %6090 = vmatprep.subr.mxu0 0.0
    %6091 = vmatpush1.msra.mxu0 0.0
    %6092 = vmatprep.subr.mxu0 0.0
    %6093 = vmatpush1.msra.mxu0 0.0
    %6094 = vmatprep.subr.mxu0 0.0
    %6095 = vmatpush1.msra.mxu0 0.0
    %6096 = vmatprep.subr.mxu0 0.0
    %6097 = vmatpush1.msra.mxu0 0.0
    %6098 = vmatprep.subr.mxu0 0.0
    %6099 = vmatpush1.msra.mxu0 0.0
    %6100 = vmatprep.subr.mxu0 0.0
    %6101 = vmatpush1.msra.mxu0 0.0
    %6102 = vmatprep.subr.mxu0 0.0
    %6103 = vmatpush1.msra.mxu0 0.0
    %6104 = vmatprep.subr.mxu0 0.0
    %6105 = vmatpush1.msra.mxu0 0.0
    %6106 = vmatprep.subr.mxu0 0.0
    %6107 = vmatpush1.msra.mxu0 0.0
    %6108 = vmatprep.mubr.f32.mxu0 0.0
    %6109 = vmatmul.mubr.f32.gmra.mrb[0].mxu0 %v5970
    %v6110 = vpop.f32.mrb[0].mxu0
    %v6111 = vadd.f32 0.0, %v6110
    %v6112 = vpop.f32.mrb[0].mxu0
    %6113 = vmatprep.mubr.f32.mxu0 0.0
    %6114 = vmatmul.mubr.f32.gmra.mrb[0].mxu0 %v5973
    %v6115 = vpop.f32.mrb[0].mxu0
    %v6116 = vadd.f32 0.0, %v6115
    %v6117 = vpop.f32.mrb[0].mxu0
    %6118 = vmatprep.mubr.f32.mxu0 0.0
    %6119 = vmatmul.mubr.f32.gmra.mrb[0].mxu0 %v5976
    %v6120 = vpop.f32.mrb[0].mxu0
    %v6121 = vadd.f32 0.0, %v6120
    %v6122 = vpop.f32.mrb[0].mxu0
    %6123 = vmatprep.mubr.f32.mxu0 0.0
    %6124 = vmatmul.mubr.f32.gmra.mrb[0].mxu0 %v5979
    %v6125 = vpop.f32.mrb[0].mxu0
    %v6126 = vadd.f32 0.0, %v6125
    %v6127 = vpop.f32.mrb[0].mxu0
    %6128 = vmatprep.mubr.f32.mxu0 0.0
    %6129 = vmatmul.mubr.f32.gmra.mrb[0].mxu0 %v5982
    %v6130 = vpop.f32.mrb[0].mxu0
    %v6131 = vadd.f32 0.0, %v6130
    %v6132 = vpop.f32.mrb[0].mxu0
    %6133 = vmatprep.mubr.f32.mxu0 0.0
    %6134 = vmatmul.mubr.f32.gmra.mrb[0].mxu0 %v5985
    %v6135 = vpop.f32.mrb[0].mxu0
    %v6136 = vadd.f32 0.0, %v6135
    %v6137 = vpop.f32.mrb[0].mxu0
    %6138 = vmatprep.mubr.f32.mxu0 0.0
    %6139 = vmatmul.mubr.f32.gmra.mrb[0].mxu0 %v5988
    %v6140 = vpop.f32.mrb[0].mxu0
    %v6141 = vadd.f32 0.0, %v6140
    %v6142 = vpop.f32.mrb[0].mxu0
    %6143 = vmatprep.mubr.f32.mxu0 0.0
    %6144 = vmatmul.mubr.f32.gmra.mrb[0].mxu0 %v5991
    %v6145 = vpop.f32.mrb[0].mxu0
    %v6146 = vadd.f32 0.0, %v6145
    %v6147 = vpop.f32.mrb[0].mxu0
    %6148 = vmatprep.mubr.f32.mxu0 0.0
    %6149 = vmatmul.mubr.f32.gmra.mrb[0].mxu0 %v5994
    %v6150 = vpop.f32.mrb[0].mxu0
    %v6151 = vadd.f32 0.0, %v6150
    %v6152 = vpop.f32.mrb[0].mxu0
    %6153 = vmatprep.mubr.f32.mxu0 0.0
    %6154 = vmatmul.mubr.f32.gmra.mrb[0].mxu0 %v5997
    %v6155 = vpop.f32.mrb[0].mxu0
    %v6156 = vadd.f32 0.0, %v6155
    %v6157 = vpop.f32.mrb[0].mxu0
    %6158 = vmatprep.mubr.f32.mxu0 0.0
    %6159 = vmatmul.mubr.f32.gmra.mrb[0].mxu0 %v6000
    %v6160 = vpop.f32.mrb[0].mxu0
    %v6161 = vadd.f32 0.0, %v6160
    %v6162 = vpop.f32.mrb[0].mxu0
    %6163 = vmatprep.mubr.f32.mxu0 0.0
    %6164 = vmatmul.mubr.f32.gmra.mrb[0].mxu0 %v6003
    %v6165 = vpop.f32.mrb[0].mxu0
    %v6166 = vadd.f32 0.0, %v6165
    %v6167 = vpop.f32.mrb[0].mxu0
    %6168 = vmatprep.mubr.f32.mxu0 0.0
    %6169 = vmatmul.mubr.f32.gmra.mrb[0].mxu0 %v6006
    %v6170 = vpop.f32.mrb[0].mxu0
    %v6171 = vadd.f32 0.0, %v6170
    %v6172 = vpop.f32.mrb[0].mxu0
    %6173 = vmatprep.mubr.f32.mxu0 0.0
    %6174 = vmatmul.mubr.f32.gmra.mrb[0].mxu0 %v6009
    %v6175 = vpop.f32.mrb[0].mxu0
    %v6176 = vadd.f32 0.0, %v6175
    %v6177 = vpop.f32.mrb[0].mxu0
    %6178 = vmatprep.mubr.f32.mxu0 0.0
    %6179 = vmatmul.mubr.f32.gmra.mrb[0].mxu0 %v6012
    %v6180 = vpop.f32.mrb[0].mxu0
    %v6181 = vadd.f32 0.0, %v6180
    %v6182 = vpop.f32.mrb[0].mxu0
    %6183 = vmatprep.mubr.f32.mxu0 0.0
    %6184 = vmatmul.mubr.f32.gmra.mrb[0].mxu0 %v6015
    %v6185 = vpop.f32.mrb[0].mxu0
    %v6186 = vadd.f32 0.0, %v6185
    %v6187 = vpop.f32.mrb[0].mxu0
    %6188 = vmatprep.mubr.f32.mxu0 0.0
    %6189 = vmatmul.mubr.f32.gmra.mrb[0].mxu0 %v6018
    %v6190 = vpop.f32.mrb[0].mxu0
    %v6191 = vadd.f32 0.0, %v6190
    %v6192 = vpop.f32.mrb[0].mxu0
    %6193 = vmatprep.mubr.f32.mxu0 0.0
    %6194 = vmatmul.mubr.f32.gmra.mrb[0].mxu0 %v6021
    %v6195 = vpop.f32.mrb[0].mxu0
    %v6196 = vadd.f32 0.0, %v6195
    %v6197 = vpop.f32.mrb[0].mxu0
    %6198 = vmatprep.mubr.f32.mxu0 0.0
    %6199 = vmatmul.mubr.f32.gmra.mrb[0].mxu0 %v6024
    %v6200 = vpop.f32.mrb[0].mxu0
    %v6201 = vadd.f32 0.0, %v6200
    %v6202 = vpop.f32.mrb[0].mxu0
    %6203 = vmatprep.mubr.f32.mxu0 0.0
    %6204 = vmatmul.mubr.f32.gmra.mrb[0].mxu0 %v6027
    %v6205 = vpop.f32.mrb[0].mxu0
    %v6206 = vadd.f32 0.0, %v6205
    %v6207 = vpop.f32.mrb[0].mxu0
    %6208 = vmatprep.mubr.f32.mxu0 0.0
    %6209 = vmatmul.mubr.f32.gmra.mrb[0].mxu0 %v6030
    %v6210 = vpop.f32.mrb[0].mxu0
    %v6211 = vadd.f32 0.0, %v6210
    %v6212 = vpop.f32.mrb[0].mxu0
    %6213 = vmatprep.mubr.f32.mxu0 0.0
    %6214 = vmatmul.mubr.f32.gmra.mrb[0].mxu0 %v6033
    %v6215 = vpop.f32.mrb[0].mxu0
    %v6216 = vadd.f32 0.0, %v6215
    %v6217 = vpop.f32.mrb[0].mxu0
    %6218 = vmatprep.mubr.f32.mxu0 0.0
    %6219 = vmatmul.mubr.f32.gmra.mrb[0].mxu0 %v6036
    %v6220 = vpop.f32.mrb[0].mxu0
    %v6221 = vadd.f32 0.0, %v6220
    %v6222 = vpop.f32.mrb[0].mxu0
    %6223 = vmatprep.mubr.f32.mxu0 0.0
    %6224 = vmatmul.mubr.f32.gmra.mrb[0].mxu0 %v6039
    %v6225 = vpop.f32.mrb[0].mxu0
    %v6226 = vadd.f32 0.0, %v6225
    %v6227 = vpop.f32.mrb[0].mxu0
    %6228 = vmatprep.mubr.f32.mxu0 0.0
    %6229 = vmatmul.mubr.f32.gmra.mrb[0].mxu0 %v6042
    %v6230 = vpop.f32.mrb[0].mxu0
    %v6231 = vadd.f32 0.0, %v6230
    %v6232 = vpop.f32.mrb[0].mxu0
    %6233 = vdwg.mxu0
    %v6234 = vadd.f32 %v5914, %v6111
    %v6235 = vadd.f32 %v5915, %v6116
    %v6236 = vadd.f32 %v5916, %v6121
    %v6237 = vadd.f32 %v5917, %v6126
    %v6238 = vadd.f32 %v5918, %v6131
    %v6239 = vadd.f32 %v5919, %v6136
    %v6240 = vadd.f32 %v5920, %v6141
    %v6241 = vadd.f32 %v5921, %v6146
    %v6242 = vadd.f32 %v5922, %v6151
    %v6243 = vadd.f32 %v5923, %v6156
    %v6244 = vadd.f32 %v5924, %v6161
    %v6245 = vadd.f32 %v5925, %v6166
    %v6246 = vadd.f32 %v5926, %v6171
    %v6247 = vadd.f32 %v5927, %v6176
    %v6248 = vadd.f32 %v5928, %v6181
    %v6249 = vadd.f32 %v5929, %v6186
    %v6250 = vadd.f32 %v5930, %v6191
    %v6251 = vadd.f32 %v5931, %v6196
    %v6252 = vadd.f32 %v5932, %v6201
    %v6253 = vadd.f32 %v5933, %v6206
    %v6254 = vadd.f32 %v5934, %v6211
    %v6255 = vadd.f32 %v5935, %v6216
    %v6256 = vadd.f32 %v5936, %v6221
    %v6257 = vadd.f32 %v5937, %v6226
    %v6258 = vadd.f32 %v5938, %v6231
    %v6259 = vmul.f32 %v3755, %v3302
    %v6260 = vmul.f32 %v3756, %v3306
    %v6261 = vmul.f32 %v3757, %v3310
    %v6262 = vmul.f32 %v3758, %v3314
    %v6263 = vmul.f32 %v3759, %v3318
    %v6264 = vmul.f32 %v3760, %v3322
    %v6265 = vmul.f32 %v3761, %v3326
    %v6266 = vmul.f32 %v3762, %v3330
    %v6267 = vmul.f32 %v3763, %v3334
    %v6268 = vmul.f32 %v3764, %v3338
    %v6269 = vmul.f32 %v3765, %v3342
    %v6270 = vmul.f32 %v3766, %v3346
    %v6271 = vmul.f32 %v3767, %v3350
    %v6272 = vmul.f32 %v3768, %v3354
    %v6273 = vmul.f32 %v3769, %v3358
    %v6274 = vmul.f32 %v3770, %v3362
    %v6275 = vmul.f32 %v3771, %v3366
    %v6276 = vmul.f32 %v3772, %v3370
    %v6277 = vmul.f32 %v3773, %v3374
    %v6278 = vmul.f32 %v3749, %v3378
    %v6279 = vmul.f32 %v3750, %v3382
    %v6280 = vmul.f32 %v3751, %v3386
    %v6281 = vmul.f32 %v3752, %v3390
    %v6282 = vmul.f32 %v3753, %v3394
    %v6283 = vmul.f32 %v3754, %v3398
    %s6284 = scalar_lea.vmem %s3, 256
    %v6285 = vld [vmem:[%s6284] sm:$0xff]
    %v6286 = vld [vmem:[%s6284 + $0x8] sm:$0xff]
    %v6287 = vld [vmem:[%s6284 + $0x10] sm:$0xff]
    %v6288 = vld [vmem:[%s6284 + $0x18] sm:$0xff]
    %v6290 = vsel %vm3833, %v6259, 0
    %v6293 = vsel %vm3833, %v6260, 0
    %v6296 = vsel %vm3833, %v6261, 0
    %v6299 = vsel %vm3833, %v6262, 0
    %v6302 = vsel %vm3833, %v6263, 0
    %v6305 = vsel %vm3833, %v6264, 0
    %v6308 = vsel %vm3833, %v6265, 0
    %v6311 = vsel %vm3833, %v6266, 0
    %v6314 = vsel %vm3833, %v6267, 0
    %v6317 = vsel %vm3833, %v6268, 0
    %v6320 = vsel %vm3833, %v6269, 0
    %v6323 = vsel %vm3833, %v6270, 0
    %v6326 = vsel %vm3833, %v6271, 0
    %v6329 = vsel %vm3833, %v6272, 0
    %v6332 = vsel %vm3833, %v6273, 0
    %v6335 = vsel %vm3833, %v6274, 0
    %v6338 = vsel %vm3833, %v6275, 0
    %v6341 = vsel %vm3833, %v6276, 0
    %v6344 = vsel %vm3833, %v6277, 0
    %v6347 = vsel %vm3833, %v6278, 0
    %v6350 = vsel %vm3833, %v6279, 0
    %v6353 = vsel %vm3833, %v6280, 0
    %v6356 = vsel %vm3833, %v6281, 0
    %v6359 = vsel %vm3833, %v6282, 0
    %v6362 = vsel %vm3833, %v6283, 0
    %6364 = vmatprep.subr.mxu0 0.0
    %6365 = vmatpush1.msra.mxu0 %v6285
    %6366 = vmatprep.subr.mxu0 0.0
    %6367 = vmatpush1.msra.mxu0 %v6286
    %6368 = vmatprep.subr.mxu0 0.0
    %6369 = vmatpush1.msra.mxu0 %v6287
    %6370 = vmatprep.subr.mxu0 0.0
    %6371 = vmatpush1.msra.mxu0 %v6288
    %6372 = vmatprep.subr.mxu0 0.0
    %6373 = vmatpush1.msra.mxu0 0.0
    %6374 = vmatprep.subr.mxu0 0.0
    %6375 = vmatpush1.msra.mxu0 0.0
    %6376 = vmatprep.subr.mxu0 0.0
    %6377 = vmatpush1.msra.mxu0 0.0
    %6378 = vmatprep.subr.mxu0 0.0
    %6379 = vmatpush1.msra.mxu0 0.0
    %6380 = vmatprep.subr.mxu0 0.0
    %6381 = vmatpush1.msra.mxu0 0.0
    %6382 = vmatprep.subr.mxu0 0.0
    %6383 = vmatpush1.msra.mxu0 0.0
    %6384 = vmatprep.subr.mxu0 0.0
    %6385 = vmatpush1.msra.mxu0 0.0
    %6386 = vmatprep.subr.mxu0 0.0
    %6387 = vmatpush1.msra.mxu0 0.0
    %6388 = vmatprep.subr.mxu0 0.0
    %6389 = vmatpush1.msra.mxu0 0.0
    %6390 = vmatprep.subr.mxu0 0.0
    %6391 = vmatpush1.msra.mxu0 0.0
    %6392 = vmatprep.subr.mxu0 0.0
    %6393 = vmatpush1.msra.mxu0 0.0
    %6394 = vmatprep.subr.mxu0 0.0
    %6395 = vmatpush1.msra.mxu0 0.0
    %6396 = vmatprep.subr.mxu0 0.0
    %6397 = vmatpush1.msra.mxu0 0.0
    %6398 = vmatprep.subr.mxu0 0.0
    %6399 = vmatpush1.msra.mxu0 0.0
    %6400 = vmatprep.subr.mxu0 0.0
    %6401 = vmatpush1.msra.mxu0 0.0
    %6402 = vmatprep.subr.mxu0 0.0
    %6403 = vmatpush1.msra.mxu0 0.0
    %6404 = vmatprep.subr.mxu0 0.0
    %6405 = vmatpush1.msra.mxu0 0.0
    %6406 = vmatprep.subr.mxu0 0.0
    %6407 = vmatpush1.msra.mxu0 0.0
    %6408 = vmatprep.subr.mxu0 0.0
    %6409 = vmatpush1.msra.mxu0 0.0
    %6410 = vmatprep.subr.mxu0 0.0
    %6411 = vmatpush1.msra.mxu0 0.0
    %6412 = vmatprep.subr.mxu0 0.0
    %6413 = vmatpush1.msra.mxu0 0.0
    %6414 = vmatprep.subr.mxu0 0.0
    %6415 = vmatpush1.msra.mxu0 0.0
    %6416 = vmatprep.subr.mxu0 0.0
    %6417 = vmatpush1.msra.mxu0 0.0
    %6418 = vmatprep.subr.mxu0 0.0
    %6419 = vmatpush1.msra.mxu0 0.0
    %6420 = vmatprep.subr.mxu0 0.0
    %6421 = vmatpush1.msra.mxu0 0.0
    %6422 = vmatprep.subr.mxu0 0.0
    %6423 = vmatpush1.msra.mxu0 0.0
    %6424 = vmatprep.subr.mxu0 0.0
    %6425 = vmatpush1.msra.mxu0 0.0
    %6426 = vmatprep.subr.mxu0 0.0
    %6427 = vmatpush1.msra.mxu0 0.0
    %6428 = vmatprep.mubr.f32.mxu0 0.0
    %6429 = vmatmul.mubr.f32.gmra.mrb[0].mxu0 %v6290
    %v6430 = vpop.f32.mrb[0].mxu0
    %v6431 = vadd.f32 0.0, %v6430
    %v6432 = vpop.f32.mrb[0].mxu0
    %6433 = vmatprep.mubr.f32.mxu0 0.0
    %6434 = vmatmul.mubr.f32.gmra.mrb[0].mxu0 %v6293
    %v6435 = vpop.f32.mrb[0].mxu0
    %v6436 = vadd.f32 0.0, %v6435
    %v6437 = vpop.f32.mrb[0].mxu0
    %6438 = vmatprep.mubr.f32.mxu0 0.0
    %6439 = vmatmul.mubr.f32.gmra.mrb[0].mxu0 %v6296
    %v6440 = vpop.f32.mrb[0].mxu0
    %v6441 = vadd.f32 0.0, %v6440
    %v6442 = vpop.f32.mrb[0].mxu0
    %6443 = vmatprep.mubr.f32.mxu0 0.0
    %6444 = vmatmul.mubr.f32.gmra.mrb[0].mxu0 %v6299
    %v6445 = vpop.f32.mrb[0].mxu0
    %v6446 = vadd.f32 0.0, %v6445
    %v6447 = vpop.f32.mrb[0].mxu0
    %6448 = vmatprep.mubr.f32.mxu0 0.0
    %6449 = vmatmul.mubr.f32.gmra.mrb[0].mxu0 %v6302
    %v6450 = vpop.f32.mrb[0].mxu0
    %v6451 = vadd.f32 0.0, %v6450
    %v6452 = vpop.f32.mrb[0].mxu0
    %6453 = vmatprep.mubr.f32.mxu0 0.0
    %6454 = vmatmul.mubr.f32.gmra.mrb[0].mxu0 %v6305
    %v6455 = vpop.f32.mrb[0].mxu0
    %v6456 = vadd.f32 0.0, %v6455
    %v6457 = vpop.f32.mrb[0].mxu0
    %6458 = vmatprep.mubr.f32.mxu0 0.0
    %6459 = vmatmul.mubr.f32.gmra.mrb[0].mxu0 %v6308
    %v6460 = vpop.f32.mrb[0].mxu0
    %v6461 = vadd.f32 0.0, %v6460
    %v6462 = vpop.f32.mrb[0].mxu0
    %6463 = vmatprep.mubr.f32.mxu0 0.0
    %6464 = vmatmul.mubr.f32.gmra.mrb[0].mxu0 %v6311
    %v6465 = vpop.f32.mrb[0].mxu0
    %v6466 = vadd.f32 0.0, %v6465
    %v6467 = vpop.f32.mrb[0].mxu0
    %6468 = vmatprep.mubr.f32.mxu0 0.0
    %6469 = vmatmul.mubr.f32.gmra.mrb[0].mxu0 %v6314
    %v6470 = vpop.f32.mrb[0].mxu0
    %v6471 = vadd.f32 0.0, %v6470
    %v6472 = vpop.f32.mrb[0].mxu0
    %6473 = vmatprep.mubr.f32.mxu0 0.0
    %6474 = vmatmul.mubr.f32.gmra.mrb[0].mxu0 %v6317
    %v6475 = vpop.f32.mrb[0].mxu0
    %v6476 = vadd.f32 0.0, %v6475
    %v6477 = vpop.f32.mrb[0].mxu0
    %6478 = vmatprep.mubr.f32.mxu0 0.0
    %6479 = vmatmul.mubr.f32.gmra.mrb[0].mxu0 %v6320
    %v6480 = vpop.f32.mrb[0].mxu0
    %v6481 = vadd.f32 0.0, %v6480
    %v6482 = vpop.f32.mrb[0].mxu0
    %6483 = vmatprep.mubr.f32.mxu0 0.0
    %6484 = vmatmul.mubr.f32.gmra.mrb[0].mxu0 %v6323
    %v6485 = vpop.f32.mrb[0].mxu0
    %v6486 = vadd.f32 0.0, %v6485
    %v6487 = vpop.f32.mrb[0].mxu0
    %6488 = vmatprep.mubr.f32.mxu0 0.0
    %6489 = vmatmul.mubr.f32.gmra.mrb[0].mxu0 %v6326
    %v6490 = vpop.f32.mrb[0].mxu0
    %v6491 = vadd.f32 0.0, %v6490
    %v6492 = vpop.f32.mrb[0].mxu0
    %6493 = vmatprep.mubr.f32.mxu0 0.0
    %6494 = vmatmul.mubr.f32.gmra.mrb[0].mxu0 %v6329
    %v6495 = vpop.f32.mrb[0].mxu0
    %v6496 = vadd.f32 0.0, %v6495
    %v6497 = vpop.f32.mrb[0].mxu0
    %6498 = vmatprep.mubr.f32.mxu0 0.0
    %6499 = vmatmul.mubr.f32.gmra.mrb[0].mxu0 %v6332
    %v6500 = vpop.f32.mrb[0].mxu0
    %v6501 = vadd.f32 0.0, %v6500
    %v6502 = vpop.f32.mrb[0].mxu0
    %6503 = vmatprep.mubr.f32.mxu0 0.0
    %6504 = vmatmul.mubr.f32.gmra.mrb[0].mxu0 %v6335
    %v6505 = vpop.f32.mrb[0].mxu0
    %v6506 = vadd.f32 0.0, %v6505
    %v6507 = vpop.f32.mrb[0].mxu0
    %6508 = vmatprep.mubr.f32.mxu0 0.0
    %6509 = vmatmul.mubr.f32.gmra.mrb[0].mxu0 %v6338
    %v6510 = vpop.f32.mrb[0].mxu0
    %v6511 = vadd.f32 0.0, %v6510
    %v6512 = vpop.f32.mrb[0].mxu0
    %6513 = vmatprep.mubr.f32.mxu0 0.0
    %6514 = vmatmul.mubr.f32.gmra.mrb[0].mxu0 %v6341
    %v6515 = vpop.f32.mrb[0].mxu0
    %v6516 = vadd.f32 0.0, %v6515
    %v6517 = vpop.f32.mrb[0].mxu0
    %6518 = vmatprep.mubr.f32.mxu0 0.0
    %6519 = vmatmul.mubr.f32.gmra.mrb[0].mxu0 %v6344
    %v6520 = vpop.f32.mrb[0].mxu0
    %v6521 = vadd.f32 0.0, %v6520
    %v6522 = vpop.f32.mrb[0].mxu0
    %6523 = vmatprep.mubr.f32.mxu0 0.0
    %6524 = vmatmul.mubr.f32.gmra.mrb[0].mxu0 %v6347
    %v6525 = vpop.f32.mrb[0].mxu0
    %v6526 = vadd.f32 0.0, %v6525
    %v6527 = vpop.f32.mrb[0].mxu0
    %6528 = vmatprep.mubr.f32.mxu0 0.0
    %6529 = vmatmul.mubr.f32.gmra.mrb[0].mxu0 %v6350
    %v6530 = vpop.f32.mrb[0].mxu0
    %v6531 = vadd.f32 0.0, %v6530
    %v6532 = vpop.f32.mrb[0].mxu0
    %6533 = vmatprep.mubr.f32.mxu0 0.0
    %6534 = vmatmul.mubr.f32.gmra.mrb[0].mxu0 %v6353
    %v6535 = vpop.f32.mrb[0].mxu0
    %v6536 = vadd.f32 0.0, %v6535
    %v6537 = vpop.f32.mrb[0].mxu0
    %6538 = vmatprep.mubr.f32.mxu0 0.0
    %6539 = vmatmul.mubr.f32.gmra.mrb[0].mxu0 %v6356
    %v6540 = vpop.f32.mrb[0].mxu0
    %v6541 = vadd.f32 0.0, %v6540
    %v6542 = vpop.f32.mrb[0].mxu0
    %6543 = vmatprep.mubr.f32.mxu0 0.0
    %6544 = vmatmul.mubr.f32.gmra.mrb[0].mxu0 %v6359
    %v6545 = vpop.f32.mrb[0].mxu0
    %v6546 = vadd.f32 0.0, %v6545
    %v6547 = vpop.f32.mrb[0].mxu0
    %6548 = vmatprep.mubr.f32.mxu0 0.0
    %6549 = vmatmul.mubr.f32.gmra.mrb[0].mxu0 %v6362
    %v6550 = vpop.f32.mrb[0].mxu0
    %v6551 = vadd.f32 0.0, %v6550
    %v6552 = vpop.f32.mrb[0].mxu0
    %6553 = vdwg.mxu0
    %v6554 = vadd.f32 %v6234, %v6431
    %v6555 = vadd.f32 %v6235, %v6436
    %v6556 = vadd.f32 %v6236, %v6441
    %v6557 = vadd.f32 %v6237, %v6446
    %v6558 = vadd.f32 %v6238, %v6451
    %v6559 = vadd.f32 %v6239, %v6456
    %v6560 = vadd.f32 %v6240, %v6461
    %v6561 = vadd.f32 %v6241, %v6466
    %v6562 = vadd.f32 %v6242, %v6471
    %v6563 = vadd.f32 %v6243, %v6476
    %v6564 = vadd.f32 %v6244, %v6481
    %v6565 = vadd.f32 %v6245, %v6486
    %v6566 = vadd.f32 %v6246, %v6491
    %v6567 = vadd.f32 %v6247, %v6496
    %v6568 = vadd.f32 %v6248, %v6501
    %v6569 = vadd.f32 %v6249, %v6506
    %v6570 = vadd.f32 %v6250, %v6511
    %v6571 = vadd.f32 %v6251, %v6516
    %v6572 = vadd.f32 %v6252, %v6521
    %v6573 = vadd.f32 %v6253, %v6526
    %v6574 = vadd.f32 %v6254, %v6531
    %v6575 = vadd.f32 %v6255, %v6536
    %v6576 = vadd.f32 %v6256, %v6541
    %v6577 = vadd.f32 %v6257, %v6546
    %v6578 = vadd.f32 %v6258, %v6551
    %v6579 = vlaneseq
    %v6580 = vshrl.u32 %v6579, 7
    %v6581 = vsub.s32 1, %v6580
    %v6582 = vrot.slane %v88, %v6581
    %v6583 = vadd.f32 %v6554, %v6582
    %v6584 = vadd.f32 %v6555, %v6582
    %v6585 = vadd.f32 %v6556, %v6582
    %v6586 = vadd.f32 %v6557, %v6582
    %v6587 = vadd.f32 %v6558, %v6582
    %v6588 = vadd.f32 %v6559, %v6582
    %v6589 = vadd.f32 %v6560, %v6582
    %v6590 = vadd.f32 %v6561, %v6582
    %v6591 = vadd.f32 %v6562, %v6582
    %v6592 = vadd.f32 %v6563, %v6582
    %v6593 = vadd.f32 %v6564, %v6582
    %v6594 = vadd.f32 %v6565, %v6582
    %v6595 = vadd.f32 %v6566, %v6582
    %v6596 = vadd.f32 %v6567, %v6582
    %v6597 = vadd.f32 %v6568, %v6582
    %v6598 = vadd.f32 %v6569, %v6582
    %v6599 = vadd.f32 %v6570, %v6582
    %v6600 = vadd.f32 %v6571, %v6582
    %v6601 = vadd.f32 %v6572, %v6582
    %v6602 = vadd.f32 %v6573, %v6582
    %v6603 = vadd.f32 %v6574, %v6582
    %v6604 = vadd.f32 %v6575, %v6582
    %v6605 = vadd.f32 %v6576, %v6582
    %v6606 = vadd.f32 %v6577, %v6582
    %v6607 = vadd.f32 %v6578, %v6582
    %v6608 = vmax.f32 %v6583, 0.0
    %v6609 = vmax.f32 %v6584, 0.0
    %v6610 = vmax.f32 %v6585, 0.0
    %v6611 = vmax.f32 %v6586, 0.0
    %v6612 = vmax.f32 %v6587, 0.0
    %v6613 = vmax.f32 %v6588, 0.0
    %v6614 = vmax.f32 %v6589, 0.0
    %v6615 = vmax.f32 %v6590, 0.0
    %v6616 = vmax.f32 %v6591, 0.0
    %v6617 = vmax.f32 %v6592, 0.0
    %v6618 = vmax.f32 %v6593, 0.0
    %v6619 = vmax.f32 %v6594, 0.0
    %v6620 = vmax.f32 %v6595, 0.0
    %v6621 = vmax.f32 %v6596, 0.0
    %v6622 = vmax.f32 %v6597, 0.0
    %v6623 = vmax.f32 %v6598, 0.0
    %v6624 = vmax.f32 %v6599, 0.0
    %v6625 = vmax.f32 %v6600, 0.0
    %v6626 = vmax.f32 %v6601, 0.0
    %v6627 = vmax.f32 %v6602, 0.0
    %v6628 = vmax.f32 %v6603, 0.0
    %v6629 = vmax.f32 %v6604, 0.0
    %v6630 = vmax.f32 %v6605, 0.0
    %v6631 = vmax.f32 %v6606, 0.0
    %v6632 = vmax.f32 %v6607, 0.0
    %v6633 = vld [vmem:[#allocation2] sm:$0xff]
    %v6634 = vld [vmem:[#allocation2 + $0x8] sm:$0xff]
    %v6635 = vld [vmem:[#allocation2 + $0x10] sm:$0xff]
    %v6636 = vld [vmem:[#allocation2 + $0x18] sm:$0xff]
    %v6637 = vld [vmem:[#allocation2 + $0x20] sm:$0xff]
    %v6638 = vld [vmem:[#allocation2 + $0x28] sm:$0xff]
    %v6639 = vld [vmem:[#allocation2 + $0x30] sm:$0xff]
    %v6640 = vld [vmem:[#allocation2 + $0x38] sm:$0xff]
    %v6641 = vld [vmem:[#allocation2 + $0x40] sm:$0xff]
    %v6642 = vld [vmem:[#allocation2 + $0x48] sm:$0xff]
    %v6643 = vld [vmem:[#allocation2 + $0x50] sm:$0xff]
    %v6644 = vld [vmem:[#allocation2 + $0x58] sm:$0xff]
    %v6645 = vld [vmem:[#allocation2 + $0x60] sm:$0xff]
    %v6646 = vld [vmem:[#allocation2 + $0x68] sm:$0xff]
    %v6647 = vld [vmem:[#allocation2 + $0x70] sm:$0xff]
    %v6648 = vld [vmem:[#allocation2 + $0x78] sm:$0xff]
    %v6649 = vld [vmem:[#allocation2 + $0x80] sm:$0xff]
    %v6650 = vld [vmem:[#allocation2 + $0x88] sm:$0xff]
    %v6651 = vld [vmem:[#allocation2 + $0x90] sm:$0xff]
    %v6652 = vld [vmem:[#allocation2 + $0x98] sm:$0xff]
    %v6653 = vld [vmem:[#allocation2 + $0xa0] sm:$0xff]
    %v6654 = vld [vmem:[#allocation2 + $0xa8] sm:$0xff]
    %v6655 = vld [vmem:[#allocation2 + $0xb0] sm:$0xff]
    %v6656 = vld [vmem:[#allocation2 + $0xb8] sm:$0xff]
    %v6657 = vld [vmem:[#allocation2 + $0xc0] sm:$0xff]
    %v6658 = vld [vmem:[#allocation2 + $0xc8] sm:$0xff]
    %v6659 = vld [vmem:[#allocation2 + $0xd0] sm:$0xff]
    %v6660 = vld [vmem:[#allocation2 + $0xd8] sm:$0xff]
    %v6661 = vld [vmem:[#allocation2 + $0xe0] sm:$0xff]
    %v6662 = vld [vmem:[#allocation2 + $0xe8] sm:$0xff]
    %v6663 = vld [vmem:[#allocation2 + $0xf0] sm:$0xff]
    %v6664 = vld [vmem:[#allocation2 + $0xf8] sm:$0xff]
    %v6665 = vld [vmem:[#allocation2 + $0x100] sm:$0xff]
    %v6666 = vld [vmem:[#allocation2 + $0x108] sm:$0xff]
    %v6667 = vld [vmem:[#allocation2 + $0x110] sm:$0xff]
    %v6668 = vld [vmem:[#allocation2 + $0x118] sm:$0xff]
    %v6669 = vld [vmem:[#allocation2 + $0x120] sm:$0xff]
    %v6670 = vld [vmem:[#allocation2 + $0x128] sm:$0xff]
    %v6671 = vld [vmem:[#allocation2 + $0x130] sm:$0xff]
    %v6672 = vld [vmem:[#allocation2 + $0x138] sm:$0xff]
    %v6673 = vld [vmem:[#allocation2 + $0x140] sm:$0xff]
    %v6674 = vld [vmem:[#allocation2 + $0x148] sm:$0xff]
    %v6675 = vld [vmem:[#allocation2 + $0x150] sm:$0xff]
    %v6676 = vld [vmem:[#allocation2 + $0x158] sm:$0xff]
    %v6677 = vld [vmem:[#allocation2 + $0x160] sm:$0xff]
    %v6678 = vld [vmem:[#allocation2 + $0x168] sm:$0xff]
    %v6679 = vld [vmem:[#allocation2 + $0x170] sm:$0xff]
    %v6680 = vld [vmem:[#allocation2 + $0x178] sm:$0xff]
    %v6681 = vld [vmem:[#allocation2 + $0x180] sm:$0xff]
    %v6682 = vld [vmem:[#allocation2 + $0x188] sm:$0xff]
    %v6683 = vld [vmem:[#allocation2 + $0x190] sm:$0xff]
    %v6684 = vld [vmem:[#allocation2 + $0x198] sm:$0xff]
    %v6685 = vld [vmem:[#allocation2 + $0x1a0] sm:$0xff]
    %v6686 = vld [vmem:[#allocation2 + $0x1a8] sm:$0xff]
    %v6687 = vld [vmem:[#allocation2 + $0x1b0] sm:$0xff]
    %v6688 = vld [vmem:[#allocation2 + $0x1b8] sm:$0xff]
    %v6689 = vld [vmem:[#allocation2 + $0x1c0] sm:$0xff]
    %v6690 = vld [vmem:[#allocation2 + $0x1c8] sm:$0xff]
    %v6691 = vld [vmem:[#allocation2 + $0x1d0] sm:$0xff]
    %v6692 = vld [vmem:[#allocation2 + $0x1d8] sm:$0xff]
    %v6693 = vld [vmem:[#allocation2 + $0x1e0] sm:$0xff]
    %v6694 = vld [vmem:[#allocation2 + $0x1e8] sm:$0xff]
    %v6695 = vld [vmem:[#allocation2 + $0x1f0] sm:$0xff]
    %v6696 = vld [vmem:[#allocation2 + $0x1f8] sm:$0xff]
    %v6697 = vld [vmem:[#allocation2 + $0x200] sm:$0xff]
    %v6698 = vld [vmem:[#allocation2 + $0x208] sm:$0xff]
    %v6699 = vld [vmem:[#allocation2 + $0x210] sm:$0xff]
    %v6700 = vld [vmem:[#allocation2 + $0x218] sm:$0xff]
    %v6701 = vld [vmem:[#allocation2 + $0x220] sm:$0xff]
    %v6702 = vld [vmem:[#allocation2 + $0x228] sm:$0xff]
    %v6703 = vld [vmem:[#allocation2 + $0x230] sm:$0xff]
    %v6704 = vld [vmem:[#allocation2 + $0x238] sm:$0xff]
    %v6705 = vld [vmem:[#allocation2 + $0x240] sm:$0xff]
    %v6706 = vld [vmem:[#allocation2 + $0x248] sm:$0xff]
    %v6707 = vld [vmem:[#allocation2 + $0x250] sm:$0xff]
    %v6708 = vld [vmem:[#allocation2 + $0x258] sm:$0xff]
    %v6709 = vld [vmem:[#allocation2 + $0x260] sm:$0xff]
    %v6710 = vld [vmem:[#allocation2 + $0x268] sm:$0xff]
    %v6711 = vld [vmem:[#allocation2 + $0x270] sm:$0xff]
    %v6712 = vld [vmem:[#allocation2 + $0x278] sm:$0xff]
    %v6713 = vld [vmem:[#allocation2 + $0x280] sm:$0xff]
    %v6714 = vld [vmem:[#allocation2 + $0x288] sm:$0xff]
    %v6715 = vld [vmem:[#allocation2 + $0x290] sm:$0xff]
    %v6716 = vld [vmem:[#allocation2 + $0x298] sm:$0xff]
    %v6717 = vld [vmem:[#allocation2 + $0x2a0] sm:$0xff]
    %v6718 = vld [vmem:[#allocation2 + $0x2a8] sm:$0xff]
    %v6719 = vld [vmem:[#allocation2 + $0x2b0] sm:$0xff]
    %v6720 = vld [vmem:[#allocation2 + $0x2b8] sm:$0xff]
    %v6721 = vld [vmem:[#allocation2 + $0x2c0] sm:$0xff]
    %v6722 = vld [vmem:[#allocation2 + $0x2c8] sm:$0xff]
    %v6723 = vld [vmem:[#allocation2 + $0x2d0] sm:$0xff]
    %v6724 = vld [vmem:[#allocation2 + $0x2d8] sm:$0xff]
    %v6725 = vld [vmem:[#allocation2 + $0x2e0] sm:$0xff]
    %v6726 = vld [vmem:[#allocation2 + $0x2e8] sm:$0xff]
    %v6727 = vld [vmem:[#allocation2 + $0x2f0] sm:$0xff]
    %v6728 = vld [vmem:[#allocation2 + $0x2f8] sm:$0xff]
    %v6729 = vld [vmem:[#allocation2 + $0x300] sm:$0xff]
    %v6730 = vld [vmem:[#allocation2 + $0x308] sm:$0xff]
    %v6731 = vld [vmem:[#allocation2 + $0x310] sm:$0xff]
    %v6732 = vld [vmem:[#allocation2 + $0x318] sm:$0xff]
    %v6733 = vld [vmem:[#allocation2 + $0x320] sm:$0xff]
    %v6734 = vld [vmem:[#allocation2 + $0x328] sm:$0xff]
    %v6735 = vld [vmem:[#allocation2 + $0x330] sm:$0xff]
    %v6736 = vld [vmem:[#allocation2 + $0x338] sm:$0xff]
    %v6737 = vld [vmem:[#allocation2 + $0x340] sm:$0xff]
    %v6738 = vld [vmem:[#allocation2 + $0x348] sm:$0xff]
    %v6739 = vld [vmem:[#allocation2 + $0x350] sm:$0xff]
    %v6740 = vld [vmem:[#allocation2 + $0x358] sm:$0xff]
    %v6741 = vld [vmem:[#allocation2 + $0x360] sm:$0xff]
    %v6742 = vld [vmem:[#allocation2 + $0x368] sm:$0xff]
    %v6743 = vld [vmem:[#allocation2 + $0x370] sm:$0xff]
    %v6744 = vld [vmem:[#allocation2 + $0x378] sm:$0xff]
    %v6745 = vld [vmem:[#allocation2 + $0x380] sm:$0xff]
    %v6746 = vld [vmem:[#allocation2 + $0x388] sm:$0xff]
    %v6747 = vld [vmem:[#allocation2 + $0x390] sm:$0xff]
    %v6748 = vld [vmem:[#allocation2 + $0x398] sm:$0xff]
    %v6749 = vld [vmem:[#allocation2 + $0x3a0] sm:$0xff]
    %v6750 = vld [vmem:[#allocation2 + $0x3a8] sm:$0xff]
    %v6751 = vld [vmem:[#allocation2 + $0x3b0] sm:$0xff]
    %v6752 = vld [vmem:[#allocation2 + $0x3b8] sm:$0xff]
    %v6753 = vld [vmem:[#allocation2 + $0x3c0] sm:$0xff]
    %v6754 = vld [vmem:[#allocation2 + $0x3c8] sm:$0xff]
    %v6755 = vld [vmem:[#allocation2 + $0x3d0] sm:$0xff]
    %v6756 = vld [vmem:[#allocation2 + $0x3d8] sm:$0xff]
    %v6757 = vld [vmem:[#allocation2 + $0x3e0] sm:$0xff]
    %v6758 = vld [vmem:[#allocation2 + $0x3e8] sm:$0xff]
    %v6759 = vld [vmem:[#allocation2 + $0x3f0] sm:$0xff]
    %v6760 = vld [vmem:[#allocation2 + $0x3f8] sm:$0xff]
    %v6761 = vld [vmem:[#allocation2 + $0x400] sm:$0xff]
    %v6762 = vld [vmem:[#allocation2 + $0x408] sm:$0xff]
    %v6763 = vld [vmem:[#allocation2 + $0x410] sm:$0xff]
    %v6764 = vld [vmem:[#allocation2 + $0x418] sm:$0xff]
    %v6765 = vld [vmem:[#allocation2 + $0x420] sm:$0xff]
    %v6766 = vld [vmem:[#allocation2 + $0x428] sm:$0xff]
    %v6767 = vld [vmem:[#allocation2 + $0x430] sm:$0xff]
    %v6768 = vld [vmem:[#allocation2 + $0x438] sm:$0xff]
    %v6769 = vld [vmem:[#allocation2 + $0x440] sm:$0xff]
    %v6770 = vld [vmem:[#allocation2 + $0x448] sm:$0xff]
    %v6771 = vld [vmem:[#allocation2 + $0x450] sm:$0xff]
    %v6772 = vld [vmem:[#allocation2 + $0x458] sm:$0xff]
    %v6773 = vld [vmem:[#allocation2 + $0x460] sm:$0xff]
    %v6774 = vld [vmem:[#allocation2 + $0x468] sm:$0xff]
    %v6775 = vld [vmem:[#allocation2 + $0x470] sm:$0xff]
    %v6776 = vld [vmem:[#allocation2 + $0x478] sm:$0xff]
    %v6777 = vld [vmem:[#allocation2 + $0x480] sm:$0xff]
    %v6778 = vld [vmem:[#allocation2 + $0x488] sm:$0xff]
    %v6779 = vld [vmem:[#allocation2 + $0x490] sm:$0xff]
    %v6780 = vld [vmem:[#allocation2 + $0x498] sm:$0xff]
    %v6781 = vld [vmem:[#allocation2 + $0x4a0] sm:$0xff]
    %v6782 = vld [vmem:[#allocation2 + $0x4a8] sm:$0xff]
    %v6783 = vld [vmem:[#allocation2 + $0x4b0] sm:$0xff]
    %v6784 = vld [vmem:[#allocation2 + $0x4b8] sm:$0xff]
    %v6785 = vld [vmem:[#allocation2 + $0x4c0] sm:$0xff]
    %v6786 = vld [vmem:[#allocation2 + $0x4c8] sm:$0xff]
    %v6787 = vld [vmem:[#allocation2 + $0x4d0] sm:$0xff]
    %v6788 = vld [vmem:[#allocation2 + $0x4d8] sm:$0xff]
    %v6789 = vld [vmem:[#allocation2 + $0x4e0] sm:$0xff]
    %v6790 = vld [vmem:[#allocation2 + $0x4e8] sm:$0xff]
    %v6791 = vld [vmem:[#allocation2 + $0x4f0] sm:$0xff]
    %v6792 = vld [vmem:[#allocation2 + $0x4f8] sm:$0xff]
    %v6793 = vld [vmem:[#allocation2 + $0x500] sm:$0xff]
    %v6794 = vld [vmem:[#allocation2 + $0x508] sm:$0xff]
    %v6795 = vld [vmem:[#allocation2 + $0x510] sm:$0xff]
    %v6796 = vld [vmem:[#allocation2 + $0x518] sm:$0xff]
    %v6797 = vld [vmem:[#allocation2 + $0x520] sm:$0xff]
    %v6798 = vld [vmem:[#allocation2 + $0x528] sm:$0xff]
    %v6799 = vld [vmem:[#allocation2 + $0x530] sm:$0xff]
    %v6800 = vld [vmem:[#allocation2 + $0x538] sm:$0xff]
    %v6801 = vld [vmem:[#allocation2 + $0x540] sm:$0xff]
    %v6802 = vld [vmem:[#allocation2 + $0x548] sm:$0xff]
    %v6803 = vld [vmem:[#allocation2 + $0x550] sm:$0xff]
    %v6804 = vld [vmem:[#allocation2 + $0x558] sm:$0xff]
    %v6805 = vld [vmem:[#allocation2 + $0x560] sm:$0xff]
    %v6806 = vld [vmem:[#allocation2 + $0x568] sm:$0xff]
    %v6807 = vld [vmem:[#allocation2 + $0x570] sm:$0xff]
    %v6808 = vld [vmem:[#allocation2 + $0x578] sm:$0xff]
    %v6809 = vld [vmem:[#allocation2 + $0x580] sm:$0xff]
    %v6810 = vld [vmem:[#allocation2 + $0x588] sm:$0xff]
    %v6811 = vld [vmem:[#allocation2 + $0x590] sm:$0xff]
    %v6812 = vld [vmem:[#allocation2 + $0x598] sm:$0xff]
    %v6813 = vld [vmem:[#allocation2 + $0x5a0] sm:$0xff]
    %v6814 = vld [vmem:[#allocation2 + $0x5a8] sm:$0xff]
    %v6815 = vld [vmem:[#allocation2 + $0x5b0] sm:$0xff]
    %v6816 = vld [vmem:[#allocation2 + $0x5b8] sm:$0xff]
    %v6817 = vld [vmem:[#allocation2 + $0x5c0] sm:$0xff]
    %v6818 = vld [vmem:[#allocation2 + $0x5c8] sm:$0xff]
    %v6819 = vld [vmem:[#allocation2 + $0x5d0] sm:$0xff]
    %v6820 = vld [vmem:[#allocation2 + $0x5d8] sm:$0xff]
    %v6821 = vld [vmem:[#allocation2 + $0x5e0] sm:$0xff]
    %v6822 = vld [vmem:[#allocation2 + $0x5e8] sm:$0xff]
    %v6823 = vld [vmem:[#allocation2 + $0x5f0] sm:$0xff]
    %v6824 = vld [vmem:[#allocation2 + $0x5f8] sm:$0xff]
    %v6825 = vld [vmem:[#allocation2 + $0x600] sm:$0xff]
    %v6826 = vld [vmem:[#allocation2 + $0x608] sm:$0xff]
    %v6827 = vld [vmem:[#allocation2 + $0x610] sm:$0xff]
    %v6828 = vld [vmem:[#allocation2 + $0x618] sm:$0xff]
    %v6829 = vld [vmem:[#allocation2 + $0x620] sm:$0xff]
    %v6830 = vld [vmem:[#allocation2 + $0x628] sm:$0xff]
    %v6831 = vld [vmem:[#allocation2 + $0x630] sm:$0xff]
    %v6832 = vld [vmem:[#allocation2 + $0x638] sm:$0xff]
    %vm6833 = vcmask 523264
    %v6835 = vsel %vm6833, %v6608, 0
    %6837 = vmatprep.subr.mxu0 0.0
    %6838 = vmatpush1.msra.mxu0 %v6633
    %6839 = vmatprep.subr.mxu0 0.0
    %6840 = vmatpush1.msra.mxu0 %v6634
    %6841 = vmatprep.subr.mxu0 0.0
    %6842 = vmatpush1.msra.mxu0 %v6635
    %6843 = vmatprep.subr.mxu0 0.0
    %6844 = vmatpush1.msra.mxu0 %v6636
    %6845 = vmatprep.subr.mxu0 0.0
    %6846 = vmatpush1.msra.mxu0 %v6637
    %6847 = vmatprep.subr.mxu0 0.0
    %6848 = vmatpush1.msra.mxu0 %v6638
    %6849 = vmatprep.subr.mxu0 0.0
    %6850 = vmatpush1.msra.mxu0 %v6639
    %6851 = vmatprep.subr.mxu0 0.0
    %6852 = vmatpush1.msra.mxu0 %v6640
    %6853 = vmatprep.subr.mxu0 0.0
    %6854 = vmatpush1.msra.mxu0 0.0
    %6855 = vmatprep.subr.mxu0 0.0
    %6856 = vmatpush1.msra.mxu0 0.0
    %6857 = vmatprep.subr.mxu0 0.0
    %6858 = vmatpush1.msra.mxu0 0.0
    %6859 = vmatprep.subr.mxu0 0.0
    %6860 = vmatpush1.msra.mxu0 0.0
    %6861 = vmatprep.subr.mxu0 0.0
    %6862 = vmatpush1.msra.mxu0 0.0
    %6863 = vmatprep.subr.mxu0 0.0
    %6864 = vmatpush1.msra.mxu0 0.0
    %6865 = vmatprep.subr.mxu0 0.0
    %6866 = vmatpush1.msra.mxu0 0.0
    %6867 = vmatprep.subr.mxu0 0.0
    %6868 = vmatpush1.msra.mxu0 0.0
    %6869 = vmatprep.subr.mxu0 0.0
    %6870 = vmatpush1.msra.mxu0 0.0
    %6871 = vmatprep.subr.mxu0 0.0
    %6872 = vmatpush1.msra.mxu0 0.0
    %6873 = vmatprep.subr.mxu0 0.0
    %6874 = vmatpush1.msra.mxu0 0.0
    %6875 = vmatprep.subr.mxu0 0.0
    %6876 = vmatpush1.msra.mxu0 0.0
    %6877 = vmatprep.subr.mxu0 0.0
    %6878 = vmatpush1.msra.mxu0 0.0
    %6879 = vmatprep.subr.mxu0 0.0
    %6880 = vmatpush1.msra.mxu0 0.0
    %6881 = vmatprep.subr.mxu0 0.0
    %6882 = vmatpush1.msra.mxu0 0.0
    %6883 = vmatprep.subr.mxu0 0.0
    %6884 = vmatpush1.msra.mxu0 0.0
    %6885 = vmatprep.subr.mxu0 0.0
    %6886 = vmatpush1.msra.mxu0 0.0
    %6887 = vmatprep.subr.mxu0 0.0
    %6888 = vmatpush1.msra.mxu0 0.0
    %6889 = vmatprep.subr.mxu0 0.0
    %6890 = vmatpush1.msra.mxu0 0.0
    %6891 = vmatprep.subr.mxu0 0.0
    %6892 = vmatpush1.msra.mxu0 0.0
    %6893 = vmatprep.subr.mxu0 0.0
    %6894 = vmatpush1.msra.mxu0 0.0
    %6895 = vmatprep.subr.mxu0 0.0
    %6896 = vmatpush1.msra.mxu0 0.0
    %6897 = vmatprep.subr.mxu0 0.0
    %6898 = vmatpush1.msra.mxu0 0.0
    %6899 = vmatprep.subr.mxu0 0.0
    %6900 = vmatpush1.msra.mxu0 0.0
    %6901 = vmatprep.mubr.f32.mxu0 0.0
    %6902 = vmatmul.mubr.f32.gmra.mrb[0].mxu0 %v6835
    %v6903 = vpop.f32.mrb[0].mxu0
    %v6904 = vadd.f32 0.0, %v6903
    %v6905 = vpop.f32.mrb[0].mxu0
    %6906 = vdwg.mxu0
    %v6908 = vsel %vm6833, %v6609, 0
    %6910 = vmatprep.subr.mxu0 0.0
    %6911 = vmatpush1.msra.mxu0 %v6641
    %6912 = vmatprep.subr.mxu0 0.0
    %6913 = vmatpush1.msra.mxu0 %v6642
    %6914 = vmatprep.subr.mxu0 0.0
    %6915 = vmatpush1.msra.mxu0 %v6643
    %6916 = vmatprep.subr.mxu0 0.0
    %6917 = vmatpush1.msra.mxu0 %v6644
    %6918 = vmatprep.subr.mxu0 0.0
    %6919 = vmatpush1.msra.mxu0 %v6645
    %6920 = vmatprep.subr.mxu0 0.0
    %6921 = vmatpush1.msra.mxu0 %v6646
    %6922 = vmatprep.subr.mxu0 0.0
    %6923 = vmatpush1.msra.mxu0 %v6647
    %6924 = vmatprep.subr.mxu0 0.0
    %6925 = vmatpush1.msra.mxu0 %v6648
    %6926 = vmatprep.subr.mxu0 0.0
    %6927 = vmatpush1.msra.mxu0 0.0
    %6928 = vmatprep.subr.mxu0 0.0
    %6929 = vmatpush1.msra.mxu0 0.0
    %6930 = vmatprep.subr.mxu0 0.0
    %6931 = vmatpush1.msra.mxu0 0.0
    %6932 = vmatprep.subr.mxu0 0.0
    %6933 = vmatpush1.msra.mxu0 0.0
    %6934 = vmatprep.subr.mxu0 0.0
    %6935 = vmatpush1.msra.mxu0 0.0
    %6936 = vmatprep.subr.mxu0 0.0
    %6937 = vmatpush1.msra.mxu0 0.0
    %6938 = vmatprep.subr.mxu0 0.0
    %6939 = vmatpush1.msra.mxu0 0.0
    %6940 = vmatprep.subr.mxu0 0.0
    %6941 = vmatpush1.msra.mxu0 0.0
    %6942 = vmatprep.subr.mxu0 0.0
    %6943 = vmatpush1.msra.mxu0 0.0
    %6944 = vmatprep.subr.mxu0 0.0
    %6945 = vmatpush1.msra.mxu0 0.0
    %6946 = vmatprep.subr.mxu0 0.0
    %6947 = vmatpush1.msra.mxu0 0.0
    %6948 = vmatprep.subr.mxu0 0.0
    %6949 = vmatpush1.msra.mxu0 0.0
    %6950 = vmatprep.subr.mxu0 0.0
    %6951 = vmatpush1.msra.mxu0 0.0
    %6952 = vmatprep.subr.mxu0 0.0
    %6953 = vmatpush1.msra.mxu0 0.0
    %6954 = vmatprep.subr.mxu0 0.0
    %6955 = vmatpush1.msra.mxu0 0.0
    %6956 = vmatprep.subr.mxu0 0.0
    %6957 = vmatpush1.msra.mxu0 0.0
    %6958 = vmatprep.subr.mxu0 0.0
    %6959 = vmatpush1.msra.mxu0 0.0
    %6960 = vmatprep.subr.mxu0 0.0
    %6961 = vmatpush1.msra.mxu0 0.0
    %6962 = vmatprep.subr.mxu0 0.0
    %6963 = vmatpush1.msra.mxu0 0.0
    %6964 = vmatprep.subr.mxu0 0.0
    %6965 = vmatpush1.msra.mxu0 0.0
    %6966 = vmatprep.subr.mxu0 0.0
    %6967 = vmatpush1.msra.mxu0 0.0
    %6968 = vmatprep.subr.mxu0 0.0
    %6969 = vmatpush1.msra.mxu0 0.0
    %6970 = vmatprep.subr.mxu0 0.0
    %6971 = vmatpush1.msra.mxu0 0.0
    %6972 = vmatprep.subr.mxu0 0.0
    %6973 = vmatpush1.msra.mxu0 0.0
    %6974 = vmatprep.mubr.f32.mxu0 0.0
    %6975 = vmatmul.mubr.f32.gmra.mrb[0].mxu0 %v6908
    %v6976 = vpop.f32.mrb[0].mxu0
    %v6977 = vadd.f32 0.0, %v6976
    %v6978 = vpop.f32.mrb[0].mxu0
    %6979 = vdwg.mxu0
    %v6981 = vsel %vm6833, %v6610, 0
    %6983 = vmatprep.subr.mxu0 0.0
    %6984 = vmatpush1.msra.mxu0 %v6649
    %6985 = vmatprep.subr.mxu0 0.0
    %6986 = vmatpush1.msra.mxu0 %v6650
    %6987 = vmatprep.subr.mxu0 0.0
    %6988 = vmatpush1.msra.mxu0 %v6651
    %6989 = vmatprep.subr.mxu0 0.0
    %6990 = vmatpush1.msra.mxu0 %v6652
    %6991 = vmatprep.subr.mxu0 0.0
    %6992 = vmatpush1.msra.mxu0 %v6653
    %6993 = vmatprep.subr.mxu0 0.0
    %6994 = vmatpush1.msra.mxu0 %v6654
    %6995 = vmatprep.subr.mxu0 0.0
    %6996 = vmatpush1.msra.mxu0 %v6655
    %6997 = vmatprep.subr.mxu0 0.0
    %6998 = vmatpush1.msra.mxu0 %v6656
    %6999 = vmatprep.subr.mxu0 0.0
    %7000 = vmatpush1.msra.mxu0 0.0
    %7001 = vmatprep.subr.mxu0 0.0
    %7002 = vmatpush1.msra.mxu0 0.0
    %7003 = vmatprep.subr.mxu0 0.0
    %7004 = vmatpush1.msra.mxu0 0.0
    %7005 = vmatprep.subr.mxu0 0.0
    %7006 = vmatpush1.msra.mxu0 0.0
    %7007 = vmatprep.subr.mxu0 0.0
    %7008 = vmatpush1.msra.mxu0 0.0
    %7009 = vmatprep.subr.mxu0 0.0
    %7010 = vmatpush1.msra.mxu0 0.0
    %7011 = vmatprep.subr.mxu0 0.0
    %7012 = vmatpush1.msra.mxu0 0.0
    %7013 = vmatprep.subr.mxu0 0.0
    %7014 = vmatpush1.msra.mxu0 0.0
    %7015 = vmatprep.subr.mxu0 0.0
    %7016 = vmatpush1.msra.mxu0 0.0
    %7017 = vmatprep.subr.mxu0 0.0
    %7018 = vmatpush1.msra.mxu0 0.0
    %7019 = vmatprep.subr.mxu0 0.0
    %7020 = vmatpush1.msra.mxu0 0.0
    %7021 = vmatprep.subr.mxu0 0.0
    %7022 = vmatpush1.msra.mxu0 0.0
    %7023 = vmatprep.subr.mxu0 0.0
    %7024 = vmatpush1.msra.mxu0 0.0
    %7025 = vmatprep.subr.mxu0 0.0
    %7026 = vmatpush1.msra.mxu0 0.0
    %7027 = vmatprep.subr.mxu0 0.0
    %7028 = vmatpush1.msra.mxu0 0.0
    %7029 = vmatprep.subr.mxu0 0.0
    %7030 = vmatpush1.msra.mxu0 0.0
    %7031 = vmatprep.subr.mxu0 0.0
    %7032 = vmatpush1.msra.mxu0 0.0
    %7033 = vmatprep.subr.mxu0 0.0
    %7034 = vmatpush1.msra.mxu0 0.0
    %7035 = vmatprep.subr.mxu0 0.0
    %7036 = vmatpush1.msra.mxu0 0.0
    %7037 = vmatprep.subr.mxu0 0.0
    %7038 = vmatpush1.msra.mxu0 0.0
    %7039 = vmatprep.subr.mxu0 0.0
    %7040 = vmatpush1.msra.mxu0 0.0
    %7041 = vmatprep.subr.mxu0 0.0
    %7042 = vmatpush1.msra.mxu0 0.0
    %7043 = vmatprep.subr.mxu0 0.0
    %7044 = vmatpush1.msra.mxu0 0.0
    %7045 = vmatprep.subr.mxu0 0.0
    %7046 = vmatpush1.msra.mxu0 0.0
    %7047 = vmatprep.mubr.f32.mxu0 0.0
    %7048 = vmatmul.mubr.f32.gmra.mrb[0].mxu0 %v6981
    %v7049 = vpop.f32.mrb[0].mxu0
    %v7050 = vadd.f32 0.0, %v7049
    %v7051 = vpop.f32.mrb[0].mxu0
    %7052 = vdwg.mxu0
    %v7054 = vsel %vm6833, %v6611, 0
    %7056 = vmatprep.subr.mxu0 0.0
    %7057 = vmatpush1.msra.mxu0 %v6657
    %7058 = vmatprep.subr.mxu0 0.0
    %7059 = vmatpush1.msra.mxu0 %v6658
    %7060 = vmatprep.subr.mxu0 0.0
    %7061 = vmatpush1.msra.mxu0 %v6659
    %7062 = vmatprep.subr.mxu0 0.0
    %7063 = vmatpush1.msra.mxu0 %v6660
    %7064 = vmatprep.subr.mxu0 0.0
    %7065 = vmatpush1.msra.mxu0 %v6661
    %7066 = vmatprep.subr.mxu0 0.0
    %7067 = vmatpush1.msra.mxu0 %v6662
    %7068 = vmatprep.subr.mxu0 0.0
    %7069 = vmatpush1.msra.mxu0 %v6663
    %7070 = vmatprep.subr.mxu0 0.0
    %7071 = vmatpush1.msra.mxu0 %v6664
    %7072 = vmatprep.subr.mxu0 0.0
    %7073 = vmatpush1.msra.mxu0 0.0
    %7074 = vmatprep.subr.mxu0 0.0
    %7075 = vmatpush1.msra.mxu0 0.0
    %7076 = vmatprep.subr.mxu0 0.0
    %7077 = vmatpush1.msra.mxu0 0.0
    %7078 = vmatprep.subr.mxu0 0.0
    %7079 = vmatpush1.msra.mxu0 0.0
    %7080 = vmatprep.subr.mxu0 0.0
    %7081 = vmatpush1.msra.mxu0 0.0
    %7082 = vmatprep.subr.mxu0 0.0
    %7083 = vmatpush1.msra.mxu0 0.0
    %7084 = vmatprep.subr.mxu0 0.0
    %7085 = vmatpush1.msra.mxu0 0.0
    %7086 = vmatprep.subr.mxu0 0.0
    %7087 = vmatpush1.msra.mxu0 0.0
    %7088 = vmatprep.subr.mxu0 0.0
    %7089 = vmatpush1.msra.mxu0 0.0
    %7090 = vmatprep.subr.mxu0 0.0
    %7091 = vmatpush1.msra.mxu0 0.0
    %7092 = vmatprep.subr.mxu0 0.0
    %7093 = vmatpush1.msra.mxu0 0.0
    %7094 = vmatprep.subr.mxu0 0.0
    %7095 = vmatpush1.msra.mxu0 0.0
    %7096 = vmatprep.subr.mxu0 0.0
    %7097 = vmatpush1.msra.mxu0 0.0
    %7098 = vmatprep.subr.mxu0 0.0
    %7099 = vmatpush1.msra.mxu0 0.0
    %7100 = vmatprep.subr.mxu0 0.0
    %7101 = vmatpush1.msra.mxu0 0.0
    %7102 = vmatprep.subr.mxu0 0.0
    %7103 = vmatpush1.msra.mxu0 0.0
    %7104 = vmatprep.subr.mxu0 0.0
    %7105 = vmatpush1.msra.mxu0 0.0
    %7106 = vmatprep.subr.mxu0 0.0
    %7107 = vmatpush1.msra.mxu0 0.0
    %7108 = vmatprep.subr.mxu0 0.0
    %7109 = vmatpush1.msra.mxu0 0.0
    %7110 = vmatprep.subr.mxu0 0.0
    %7111 = vmatpush1.msra.mxu0 0.0
    %7112 = vmatprep.subr.mxu0 0.0
    %7113 = vmatpush1.msra.mxu0 0.0
    %7114 = vmatprep.subr.mxu0 0.0
    %7115 = vmatpush1.msra.mxu0 0.0
    %7116 = vmatprep.subr.mxu0 0.0
    %7117 = vmatpush1.msra.mxu0 0.0
    %7118 = vmatprep.subr.mxu0 0.0
    %7119 = vmatpush1.msra.mxu0 0.0
    %7120 = vmatprep.mubr.f32.mxu0 0.0
    %7121 = vmatmul.mubr.f32.gmra.mrb[0].mxu0 %v7054
    %v7122 = vpop.f32.mrb[0].mxu0
    %v7123 = vadd.f32 0.0, %v7122
    %v7124 = vpop.f32.mrb[0].mxu0
    %7125 = vdwg.mxu0
    %v7127 = vsel %vm6833, %v6612, 0
    %7129 = vmatprep.subr.mxu0 0.0
    %7130 = vmatpush1.msra.mxu0 %v6665
    %7131 = vmatprep.subr.mxu0 0.0
    %7132 = vmatpush1.msra.mxu0 %v6666
    %7133 = vmatprep.subr.mxu0 0.0
    %7134 = vmatpush1.msra.mxu0 %v6667
    %7135 = vmatprep.subr.mxu0 0.0
    %7136 = vmatpush1.msra.mxu0 %v6668
    %7137 = vmatprep.subr.mxu0 0.0
    %7138 = vmatpush1.msra.mxu0 %v6669
    %7139 = vmatprep.subr.mxu0 0.0
    %7140 = vmatpush1.msra.mxu0 %v6670
    %7141 = vmatprep.subr.mxu0 0.0
    %7142 = vmatpush1.msra.mxu0 %v6671
    %7143 = vmatprep.subr.mxu0 0.0
    %7144 = vmatpush1.msra.mxu0 %v6672
    %7145 = vmatprep.subr.mxu0 0.0
    %7146 = vmatpush1.msra.mxu0 0.0
    %7147 = vmatprep.subr.mxu0 0.0
    %7148 = vmatpush1.msra.mxu0 0.0
    %7149 = vmatprep.subr.mxu0 0.0
    %7150 = vmatpush1.msra.mxu0 0.0
    %7151 = vmatprep.subr.mxu0 0.0
    %7152 = vmatpush1.msra.mxu0 0.0
    %7153 = vmatprep.subr.mxu0 0.0
    %7154 = vmatpush1.msra.mxu0 0.0
    %7155 = vmatprep.subr.mxu0 0.0
    %7156 = vmatpush1.msra.mxu0 0.0
    %7157 = vmatprep.subr.mxu0 0.0
    %7158 = vmatpush1.msra.mxu0 0.0
    %7159 = vmatprep.subr.mxu0 0.0
    %7160 = vmatpush1.msra.mxu0 0.0
    %7161 = vmatprep.subr.mxu0 0.0
    %7162 = vmatpush1.msra.mxu0 0.0
    %7163 = vmatprep.subr.mxu0 0.0
    %7164 = vmatpush1.msra.mxu0 0.0
    %7165 = vmatprep.subr.mxu0 0.0
    %7166 = vmatpush1.msra.mxu0 0.0
    %7167 = vmatprep.subr.mxu0 0.0
    %7168 = vmatpush1.msra.mxu0 0.0
    %7169 = vmatprep.subr.mxu0 0.0
    %7170 = vmatpush1.msra.mxu0 0.0
    %7171 = vmatprep.subr.mxu0 0.0
    %7172 = vmatpush1.msra.mxu0 0.0
    %7173 = vmatprep.subr.mxu0 0.0
    %7174 = vmatpush1.msra.mxu0 0.0
    %7175 = vmatprep.subr.mxu0 0.0
    %7176 = vmatpush1.msra.mxu0 0.0
    %7177 = vmatprep.subr.mxu0 0.0
    %7178 = vmatpush1.msra.mxu0 0.0
    %7179 = vmatprep.subr.mxu0 0.0
    %7180 = vmatpush1.msra.mxu0 0.0
    %7181 = vmatprep.subr.mxu0 0.0
    %7182 = vmatpush1.msra.mxu0 0.0
    %7183 = vmatprep.subr.mxu0 0.0
    %7184 = vmatpush1.msra.mxu0 0.0
    %7185 = vmatprep.subr.mxu0 0.0
    %7186 = vmatpush1.msra.mxu0 0.0
    %7187 = vmatprep.subr.mxu0 0.0
    %7188 = vmatpush1.msra.mxu0 0.0
    %7189 = vmatprep.subr.mxu0 0.0
    %7190 = vmatpush1.msra.mxu0 0.0
    %7191 = vmatprep.subr.mxu0 0.0
    %7192 = vmatpush1.msra.mxu0 0.0
    %7193 = vmatprep.mubr.f32.mxu0 0.0
    %7194 = vmatmul.mubr.f32.gmra.mrb[0].mxu0 %v7127
    %v7195 = vpop.f32.mrb[0].mxu0
    %v7196 = vadd.f32 0.0, %v7195
    %v7197 = vpop.f32.mrb[0].mxu0
    %7198 = vdwg.mxu0
    %v7200 = vsel %vm6833, %v6613, 0
    %7202 = vmatprep.subr.mxu0 0.0
    %7203 = vmatpush1.msra.mxu0 %v6673
    %7204 = vmatprep.subr.mxu0 0.0
    %7205 = vmatpush1.msra.mxu0 %v6674
    %7206 = vmatprep.subr.mxu0 0.0
    %7207 = vmatpush1.msra.mxu0 %v6675
    %7208 = vmatprep.subr.mxu0 0.0
    %7209 = vmatpush1.msra.mxu0 %v6676
    %7210 = vmatprep.subr.mxu0 0.0
    %7211 = vmatpush1.msra.mxu0 %v6677
    %7212 = vmatprep.subr.mxu0 0.0
    %7213 = vmatpush1.msra.mxu0 %v6678
    %7214 = vmatprep.subr.mxu0 0.0
    %7215 = vmatpush1.msra.mxu0 %v6679
    %7216 = vmatprep.subr.mxu0 0.0
    %7217 = vmatpush1.msra.mxu0 %v6680
    %7218 = vmatprep.subr.mxu0 0.0
    %7219 = vmatpush1.msra.mxu0 0.0
    %7220 = vmatprep.subr.mxu0 0.0
    %7221 = vmatpush1.msra.mxu0 0.0
    %7222 = vmatprep.subr.mxu0 0.0
    %7223 = vmatpush1.msra.mxu0 0.0
    %7224 = vmatprep.subr.mxu0 0.0
    %7225 = vmatpush1.msra.mxu0 0.0
    %7226 = vmatprep.subr.mxu0 0.0
    %7227 = vmatpush1.msra.mxu0 0.0
    %7228 = vmatprep.subr.mxu0 0.0
    %7229 = vmatpush1.msra.mxu0 0.0
    %7230 = vmatprep.subr.mxu0 0.0
    %7231 = vmatpush1.msra.mxu0 0.0
    %7232 = vmatprep.subr.mxu0 0.0
    %7233 = vmatpush1.msra.mxu0 0.0
    %7234 = vmatprep.subr.mxu0 0.0
    %7235 = vmatpush1.msra.mxu0 0.0
    %7236 = vmatprep.subr.mxu0 0.0
    %7237 = vmatpush1.msra.mxu0 0.0
    %7238 = vmatprep.subr.mxu0 0.0
    %7239 = vmatpush1.msra.mxu0 0.0
    %7240 = vmatprep.subr.mxu0 0.0
    %7241 = vmatpush1.msra.mxu0 0.0
    %7242 = vmatprep.subr.mxu0 0.0
    %7243 = vmatpush1.msra.mxu0 0.0
    %7244 = vmatprep.subr.mxu0 0.0
    %7245 = vmatpush1.msra.mxu0 0.0
    %7246 = vmatprep.subr.mxu0 0.0
    %7247 = vmatpush1.msra.mxu0 0.0
    %7248 = vmatprep.subr.mxu0 0.0
    %7249 = vmatpush1.msra.mxu0 0.0
    %7250 = vmatprep.subr.mxu0 0.0
    %7251 = vmatpush1.msra.mxu0 0.0
    %7252 = vmatprep.subr.mxu0 0.0
    %7253 = vmatpush1.msra.mxu0 0.0
    %7254 = vmatprep.subr.mxu0 0.0
    %7255 = vmatpush1.msra.mxu0 0.0
    %7256 = vmatprep.subr.mxu0 0.0
    %7257 = vmatpush1.msra.mxu0 0.0
    %7258 = vmatprep.subr.mxu0 0.0
    %7259 = vmatpush1.msra.mxu0 0.0
    %7260 = vmatprep.subr.mxu0 0.0
    %7261 = vmatpush1.msra.mxu0 0.0
    %7262 = vmatprep.subr.mxu0 0.0
    %7263 = vmatpush1.msra.mxu0 0.0
    %7264 = vmatprep.subr.mxu0 0.0
    %7265 = vmatpush1.msra.mxu0 0.0
    %7266 = vmatprep.mubr.f32.mxu0 0.0
    %7267 = vmatmul.mubr.f32.gmra.mrb[0].mxu0 %v7200
    %v7268 = vpop.f32.mrb[0].mxu0
    %v7269 = vadd.f32 0.0, %v7268
    %v7270 = vpop.f32.mrb[0].mxu0
    %7271 = vdwg.mxu0
    %v7273 = vsel %vm6833, %v6614, 0
    %7275 = vmatprep.subr.mxu0 0.0
    %7276 = vmatpush1.msra.mxu0 %v6681
    %7277 = vmatprep.subr.mxu0 0.0
    %7278 = vmatpush1.msra.mxu0 %v6682
    %7279 = vmatprep.subr.mxu0 0.0
    %7280 = vmatpush1.msra.mxu0 %v6683
    %7281 = vmatprep.subr.mxu0 0.0
    %7282 = vmatpush1.msra.mxu0 %v6684
    %7283 = vmatprep.subr.mxu0 0.0
    %7284 = vmatpush1.msra.mxu0 %v6685
    %7285 = vmatprep.subr.mxu0 0.0
    %7286 = vmatpush1.msra.mxu0 %v6686
    %7287 = vmatprep.subr.mxu0 0.0
    %7288 = vmatpush1.msra.mxu0 %v6687
    %7289 = vmatprep.subr.mxu0 0.0
    %7290 = vmatpush1.msra.mxu0 %v6688
    %7291 = vmatprep.subr.mxu0 0.0
    %7292 = vmatpush1.msra.mxu0 0.0
    %7293 = vmatprep.subr.mxu0 0.0
    %7294 = vmatpush1.msra.mxu0 0.0
    %7295 = vmatprep.subr.mxu0 0.0
    %7296 = vmatpush1.msra.mxu0 0.0
    %7297 = vmatprep.subr.mxu0 0.0
    %7298 = vmatpush1.msra.mxu0 0.0
    %7299 = vmatprep.subr.mxu0 0.0
    %7300 = vmatpush1.msra.mxu0 0.0
    %7301 = vmatprep.subr.mxu0 0.0
    %7302 = vmatpush1.msra.mxu0 0.0
    %7303 = vmatprep.subr.mxu0 0.0
    %7304 = vmatpush1.msra.mxu0 0.0
    %7305 = vmatprep.subr.mxu0 0.0
    %7306 = vmatpush1.msra.mxu0 0.0
    %7307 = vmatprep.subr.mxu0 0.0
    %7308 = vmatpush1.msra.mxu0 0.0
    %7309 = vmatprep.subr.mxu0 0.0
    %7310 = vmatpush1.msra.mxu0 0.0
    %7311 = vmatprep.subr.mxu0 0.0
    %7312 = vmatpush1.msra.mxu0 0.0
    %7313 = vmatprep.subr.mxu0 0.0
    %7314 = vmatpush1.msra.mxu0 0.0
    %7315 = vmatprep.subr.mxu0 0.0
    %7316 = vmatpush1.msra.mxu0 0.0
    %7317 = vmatprep.subr.mxu0 0.0
    %7318 = vmatpush1.msra.mxu0 0.0
    %7319 = vmatprep.subr.mxu0 0.0
    %7320 = vmatpush1.msra.mxu0 0.0
    %7321 = vmatprep.subr.mxu0 0.0
    %7322 = vmatpush1.msra.mxu0 0.0
    %7323 = vmatprep.subr.mxu0 0.0
    %7324 = vmatpush1.msra.mxu0 0.0
    %7325 = vmatprep.subr.mxu0 0.0
    %7326 = vmatpush1.msra.mxu0 0.0
    %7327 = vmatprep.subr.mxu0 0.0
    %7328 = vmatpush1.msra.mxu0 0.0
    %7329 = vmatprep.subr.mxu0 0.0
    %7330 = vmatpush1.msra.mxu0 0.0
    %7331 = vmatprep.subr.mxu0 0.0
    %7332 = vmatpush1.msra.mxu0 0.0
    %7333 = vmatprep.subr.mxu0 0.0
    %7334 = vmatpush1.msra.mxu0 0.0
    %7335 = vmatprep.subr.mxu0 0.0
    %7336 = vmatpush1.msra.mxu0 0.0
    %7337 = vmatprep.subr.mxu0 0.0
    %7338 = vmatpush1.msra.mxu0 0.0
    %7339 = vmatprep.mubr.f32.mxu0 0.0
    %7340 = vmatmul.mubr.f32.gmra.mrb[0].mxu0 %v7273
    %v7341 = vpop.f32.mrb[0].mxu0
    %v7342 = vadd.f32 0.0, %v7341
    %v7343 = vpop.f32.mrb[0].mxu0
    %7344 = vdwg.mxu0
    %v7346 = vsel %vm6833, %v6615, 0
    %7348 = vmatprep.subr.mxu0 0.0
    %7349 = vmatpush1.msra.mxu0 %v6689
    %7350 = vmatprep.subr.mxu0 0.0
    %7351 = vmatpush1.msra.mxu0 %v6690
    %7352 = vmatprep.subr.mxu0 0.0
    %7353 = vmatpush1.msra.mxu0 %v6691
    %7354 = vmatprep.subr.mxu0 0.0
    %7355 = vmatpush1.msra.mxu0 %v6692
    %7356 = vmatprep.subr.mxu0 0.0
    %7357 = vmatpush1.msra.mxu0 %v6693
    %7358 = vmatprep.subr.mxu0 0.0
    %7359 = vmatpush1.msra.mxu0 %v6694
    %7360 = vmatprep.subr.mxu0 0.0
    %7361 = vmatpush1.msra.mxu0 %v6695
    %7362 = vmatprep.subr.mxu0 0.0
    %7363 = vmatpush1.msra.mxu0 %v6696
    %7364 = vmatprep.subr.mxu0 0.0
    %7365 = vmatpush1.msra.mxu0 0.0
    %7366 = vmatprep.subr.mxu0 0.0
    %7367 = vmatpush1.msra.mxu0 0.0
    %7368 = vmatprep.subr.mxu0 0.0
    %7369 = vmatpush1.msra.mxu0 0.0
    %7370 = vmatprep.subr.mxu0 0.0
    %7371 = vmatpush1.msra.mxu0 0.0
    %7372 = vmatprep.subr.mxu0 0.0
    %7373 = vmatpush1.msra.mxu0 0.0
    %7374 = vmatprep.subr.mxu0 0.0
    %7375 = vmatpush1.msra.mxu0 0.0
    %7376 = vmatprep.subr.mxu0 0.0
    %7377 = vmatpush1.msra.mxu0 0.0
    %7378 = vmatprep.subr.mxu0 0.0
    %7379 = vmatpush1.msra.mxu0 0.0
    %7380 = vmatprep.subr.mxu0 0.0
    %7381 = vmatpush1.msra.mxu0 0.0
    %7382 = vmatprep.subr.mxu0 0.0
    %7383 = vmatpush1.msra.mxu0 0.0
    %7384 = vmatprep.subr.mxu0 0.0
    %7385 = vmatpush1.msra.mxu0 0.0
    %7386 = vmatprep.subr.mxu0 0.0
    %7387 = vmatpush1.msra.mxu0 0.0
    %7388 = vmatprep.subr.mxu0 0.0
    %7389 = vmatpush1.msra.mxu0 0.0
    %7390 = vmatprep.subr.mxu0 0.0
    %7391 = vmatpush1.msra.mxu0 0.0
    %7392 = vmatprep.subr.mxu0 0.0
    %7393 = vmatpush1.msra.mxu0 0.0
    %7394 = vmatprep.subr.mxu0 0.0
    %7395 = vmatpush1.msra.mxu0 0.0
    %7396 = vmatprep.subr.mxu0 0.0
    %7397 = vmatpush1.msra.mxu0 0.0
    %7398 = vmatprep.subr.mxu0 0.0
    %7399 = vmatpush1.msra.mxu0 0.0
    %7400 = vmatprep.subr.mxu0 0.0
    %7401 = vmatpush1.msra.mxu0 0.0
    %7402 = vmatprep.subr.mxu0 0.0
    %7403 = vmatpush1.msra.mxu0 0.0
    %7404 = vmatprep.subr.mxu0 0.0
    %7405 = vmatpush1.msra.mxu0 0.0
    %7406 = vmatprep.subr.mxu0 0.0
    %7407 = vmatpush1.msra.mxu0 0.0
    %7408 = vmatprep.subr.mxu0 0.0
    %7409 = vmatpush1.msra.mxu0 0.0
    %7410 = vmatprep.subr.mxu0 0.0
    %7411 = vmatpush1.msra.mxu0 0.0
    %7412 = vmatprep.mubr.f32.mxu0 0.0
    %7413 = vmatmul.mubr.f32.gmra.mrb[0].mxu0 %v7346
    %v7414 = vpop.f32.mrb[0].mxu0
    %v7415 = vadd.f32 0.0, %v7414
    %v7416 = vpop.f32.mrb[0].mxu0
    %7417 = vdwg.mxu0
    %v7419 = vsel %vm6833, %v6616, 0
    %7421 = vmatprep.subr.mxu0 0.0
    %7422 = vmatpush1.msra.mxu0 %v6697
    %7423 = vmatprep.subr.mxu0 0.0
    %7424 = vmatpush1.msra.mxu0 %v6698
    %7425 = vmatprep.subr.mxu0 0.0
    %7426 = vmatpush1.msra.mxu0 %v6699
    %7427 = vmatprep.subr.mxu0 0.0
    %7428 = vmatpush1.msra.mxu0 %v6700
    %7429 = vmatprep.subr.mxu0 0.0
    %7430 = vmatpush1.msra.mxu0 %v6701
    %7431 = vmatprep.subr.mxu0 0.0
    %7432 = vmatpush1.msra.mxu0 %v6702
    %7433 = vmatprep.subr.mxu0 0.0
    %7434 = vmatpush1.msra.mxu0 %v6703
    %7435 = vmatprep.subr.mxu0 0.0
    %7436 = vmatpush1.msra.mxu0 %v6704
    %7437 = vmatprep.subr.mxu0 0.0
    %7438 = vmatpush1.msra.mxu0 0.0
    %7439 = vmatprep.subr.mxu0 0.0
    %7440 = vmatpush1.msra.mxu0 0.0
    %7441 = vmatprep.subr.mxu0 0.0
    %7442 = vmatpush1.msra.mxu0 0.0
    %7443 = vmatprep.subr.mxu0 0.0
    %7444 = vmatpush1.msra.mxu0 0.0
    %7445 = vmatprep.subr.mxu0 0.0
    %7446 = vmatpush1.msra.mxu0 0.0
    %7447 = vmatprep.subr.mxu0 0.0
    %7448 = vmatpush1.msra.mxu0 0.0
    %7449 = vmatprep.subr.mxu0 0.0
    %7450 = vmatpush1.msra.mxu0 0.0
    %7451 = vmatprep.subr.mxu0 0.0
    %7452 = vmatpush1.msra.mxu0 0.0
    %7453 = vmatprep.subr.mxu0 0.0
    %7454 = vmatpush1.msra.mxu0 0.0
    %7455 = vmatprep.subr.mxu0 0.0
    %7456 = vmatpush1.msra.mxu0 0.0
    %7457 = vmatprep.subr.mxu0 0.0
    %7458 = vmatpush1.msra.mxu0 0.0
    %7459 = vmatprep.subr.mxu0 0.0
    %7460 = vmatpush1.msra.mxu0 0.0
    %7461 = vmatprep.subr.mxu0 0.0
    %7462 = vmatpush1.msra.mxu0 0.0
    %7463 = vmatprep.subr.mxu0 0.0
    %7464 = vmatpush1.msra.mxu0 0.0
    %7465 = vmatprep.subr.mxu0 0.0
    %7466 = vmatpush1.msra.mxu0 0.0
    %7467 = vmatprep.subr.mxu0 0.0
    %7468 = vmatpush1.msra.mxu0 0.0
    %7469 = vmatprep.subr.mxu0 0.0
    %7470 = vmatpush1.msra.mxu0 0.0
    %7471 = vmatprep.subr.mxu0 0.0
    %7472 = vmatpush1.msra.mxu0 0.0
    %7473 = vmatprep.subr.mxu0 0.0
    %7474 = vmatpush1.msra.mxu0 0.0
    %7475 = vmatprep.subr.mxu0 0.0
    %7476 = vmatpush1.msra.mxu0 0.0
    %7477 = vmatprep.subr.mxu0 0.0
    %7478 = vmatpush1.msra.mxu0 0.0
    %7479 = vmatprep.subr.mxu0 0.0
    %7480 = vmatpush1.msra.mxu0 0.0
    %7481 = vmatprep.subr.mxu0 0.0
    %7482 = vmatpush1.msra.mxu0 0.0
    %7483 = vmatprep.subr.mxu0 0.0
    %7484 = vmatpush1.msra.mxu0 0.0
    %7485 = vmatprep.mubr.f32.mxu0 0.0
    %7486 = vmatmul.mubr.f32.gmra.mrb[0].mxu0 %v7419
    %v7487 = vpop.f32.mrb[0].mxu0
    %v7488 = vadd.f32 0.0, %v7487
    %v7489 = vpop.f32.mrb[0].mxu0
    %7490 = vdwg.mxu0
    %v7492 = vsel %vm6833, %v6617, 0
    %7494 = vmatprep.subr.mxu0 0.0
    %7495 = vmatpush1.msra.mxu0 %v6705
    %7496 = vmatprep.subr.mxu0 0.0
    %7497 = vmatpush1.msra.mxu0 %v6706
    %7498 = vmatprep.subr.mxu0 0.0
    %7499 = vmatpush1.msra.mxu0 %v6707
    %7500 = vmatprep.subr.mxu0 0.0
    %7501 = vmatpush1.msra.mxu0 %v6708
    %7502 = vmatprep.subr.mxu0 0.0
    %7503 = vmatpush1.msra.mxu0 %v6709
    %7504 = vmatprep.subr.mxu0 0.0
    %7505 = vmatpush1.msra.mxu0 %v6710
    %7506 = vmatprep.subr.mxu0 0.0
    %7507 = vmatpush1.msra.mxu0 %v6711
    %7508 = vmatprep.subr.mxu0 0.0
    %7509 = vmatpush1.msra.mxu0 %v6712
    %7510 = vmatprep.subr.mxu0 0.0
    %7511 = vmatpush1.msra.mxu0 0.0
    %7512 = vmatprep.subr.mxu0 0.0
    %7513 = vmatpush1.msra.mxu0 0.0
    %7514 = vmatprep.subr.mxu0 0.0
    %7515 = vmatpush1.msra.mxu0 0.0
    %7516 = vmatprep.subr.mxu0 0.0
    %7517 = vmatpush1.msra.mxu0 0.0
    %7518 = vmatprep.subr.mxu0 0.0
    %7519 = vmatpush1.msra.mxu0 0.0
    %7520 = vmatprep.subr.mxu0 0.0
    %7521 = vmatpush1.msra.mxu0 0.0
    %7522 = vmatprep.subr.mxu0 0.0
    %7523 = vmatpush1.msra.mxu0 0.0
    %7524 = vmatprep.subr.mxu0 0.0
    %7525 = vmatpush1.msra.mxu0 0.0
    %7526 = vmatprep.subr.mxu0 0.0
    %7527 = vmatpush1.msra.mxu0 0.0
    %7528 = vmatprep.subr.mxu0 0.0
    %7529 = vmatpush1.msra.mxu0 0.0
    %7530 = vmatprep.subr.mxu0 0.0
    %7531 = vmatpush1.msra.mxu0 0.0
    %7532 = vmatprep.subr.mxu0 0.0
    %7533 = vmatpush1.msra.mxu0 0.0
    %7534 = vmatprep.subr.mxu0 0.0
    %7535 = vmatpush1.msra.mxu0 0.0
    %7536 = vmatprep.subr.mxu0 0.0
    %7537 = vmatpush1.msra.mxu0 0.0
    %7538 = vmatprep.subr.mxu0 0.0
    %7539 = vmatpush1.msra.mxu0 0.0
    %7540 = vmatprep.subr.mxu0 0.0
    %7541 = vmatpush1.msra.mxu0 0.0
    %7542 = vmatprep.subr.mxu0 0.0
    %7543 = vmatpush1.msra.mxu0 0.0
    %7544 = vmatprep.subr.mxu0 0.0
    %7545 = vmatpush1.msra.mxu0 0.0
    %7546 = vmatprep.subr.mxu0 0.0
    %7547 = vmatpush1.msra.mxu0 0.0
    %7548 = vmatprep.subr.mxu0 0.0
    %7549 = vmatpush1.msra.mxu0 0.0
    %7550 = vmatprep.subr.mxu0 0.0
    %7551 = vmatpush1.msra.mxu0 0.0
    %7552 = vmatprep.subr.mxu0 0.0
    %7553 = vmatpush1.msra.mxu0 0.0
    %7554 = vmatprep.subr.mxu0 0.0
    %7555 = vmatpush1.msra.mxu0 0.0
    %7556 = vmatprep.subr.mxu0 0.0
    %7557 = vmatpush1.msra.mxu0 0.0
    %7558 = vmatprep.mubr.f32.mxu0 0.0
    %7559 = vmatmul.mubr.f32.gmra.mrb[0].mxu0 %v7492
    %v7560 = vpop.f32.mrb[0].mxu0
    %v7561 = vadd.f32 0.0, %v7560
    %v7562 = vpop.f32.mrb[0].mxu0
    %7563 = vdwg.mxu0
    %v7565 = vsel %vm6833, %v6618, 0
    %7567 = vmatprep.subr.mxu0 0.0
    %7568 = vmatpush1.msra.mxu0 %v6713
    %7569 = vmatprep.subr.mxu0 0.0
    %7570 = vmatpush1.msra.mxu0 %v6714
    %7571 = vmatprep.subr.mxu0 0.0
    %7572 = vmatpush1.msra.mxu0 %v6715
    %7573 = vmatprep.subr.mxu0 0.0
    %7574 = vmatpush1.msra.mxu0 %v6716
    %7575 = vmatprep.subr.mxu0 0.0
    %7576 = vmatpush1.msra.mxu0 %v6717
    %7577 = vmatprep.subr.mxu0 0.0
    %7578 = vmatpush1.msra.mxu0 %v6718
    %7579 = vmatprep.subr.mxu0 0.0
    %7580 = vmatpush1.msra.mxu0 %v6719
    %7581 = vmatprep.subr.mxu0 0.0
    %7582 = vmatpush1.msra.mxu0 %v6720
    %7583 = vmatprep.subr.mxu0 0.0
    %7584 = vmatpush1.msra.mxu0 0.0
    %7585 = vmatprep.subr.mxu0 0.0
    %7586 = vmatpush1.msra.mxu0 0.0
    %7587 = vmatprep.subr.mxu0 0.0
    %7588 = vmatpush1.msra.mxu0 0.0
    %7589 = vmatprep.subr.mxu0 0.0
    %7590 = vmatpush1.msra.mxu0 0.0
    %7591 = vmatprep.subr.mxu0 0.0
    %7592 = vmatpush1.msra.mxu0 0.0
    %7593 = vmatprep.subr.mxu0 0.0
    %7594 = vmatpush1.msra.mxu0 0.0
    %7595 = vmatprep.subr.mxu0 0.0
    %7596 = vmatpush1.msra.mxu0 0.0
    %7597 = vmatprep.subr.mxu0 0.0
    %7598 = vmatpush1.msra.mxu0 0.0
    %7599 = vmatprep.subr.mxu0 0.0
    %7600 = vmatpush1.msra.mxu0 0.0
    %7601 = vmatprep.subr.mxu0 0.0
    %7602 = vmatpush1.msra.mxu0 0.0
    %7603 = vmatprep.subr.mxu0 0.0
    %7604 = vmatpush1.msra.mxu0 0.0
    %7605 = vmatprep.subr.mxu0 0.0
    %7606 = vmatpush1.msra.mxu0 0.0
    %7607 = vmatprep.subr.mxu0 0.0
    %7608 = vmatpush1.msra.mxu0 0.0
    %7609 = vmatprep.subr.mxu0 0.0
    %7610 = vmatpush1.msra.mxu0 0.0
    %7611 = vmatprep.subr.mxu0 0.0
    %7612 = vmatpush1.msra.mxu0 0.0
    %7613 = vmatprep.subr.mxu0 0.0
    %7614 = vmatpush1.msra.mxu0 0.0
    %7615 = vmatprep.subr.mxu0 0.0
    %7616 = vmatpush1.msra.mxu0 0.0
    %7617 = vmatprep.subr.mxu0 0.0
    %7618 = vmatpush1.msra.mxu0 0.0
    %7619 = vmatprep.subr.mxu0 0.0
    %7620 = vmatpush1.msra.mxu0 0.0
    %7621 = vmatprep.subr.mxu0 0.0
    %7622 = vmatpush1.msra.mxu0 0.0
    %7623 = vmatprep.subr.mxu0 0.0
    %7624 = vmatpush1.msra.mxu0 0.0
    %7625 = vmatprep.subr.mxu0 0.0
    %7626 = vmatpush1.msra.mxu0 0.0
    %7627 = vmatprep.subr.mxu0 0.0
    %7628 = vmatpush1.msra.mxu0 0.0
    %7629 = vmatprep.subr.mxu0 0.0
    %7630 = vmatpush1.msra.mxu0 0.0
    %7631 = vmatprep.mubr.f32.mxu0 0.0
    %7632 = vmatmul.mubr.f32.gmra.mrb[0].mxu0 %v7565
    %v7633 = vpop.f32.mrb[0].mxu0
    %v7634 = vadd.f32 0.0, %v7633
    %v7635 = vpop.f32.mrb[0].mxu0
    %7636 = vdwg.mxu0
    %v7638 = vsel %vm6833, %v6619, 0
    %7640 = vmatprep.subr.mxu0 0.0
    %7641 = vmatpush1.msra.mxu0 %v6721
    %7642 = vmatprep.subr.mxu0 0.0
    %7643 = vmatpush1.msra.mxu0 %v6722
    %7644 = vmatprep.subr.mxu0 0.0
    %7645 = vmatpush1.msra.mxu0 %v6723
    %7646 = vmatprep.subr.mxu0 0.0
    %7647 = vmatpush1.msra.mxu0 %v6724
    %7648 = vmatprep.subr.mxu0 0.0
    %7649 = vmatpush1.msra.mxu0 %v6725
    %7650 = vmatprep.subr.mxu0 0.0
    %7651 = vmatpush1.msra.mxu0 %v6726
    %7652 = vmatprep.subr.mxu0 0.0
    %7653 = vmatpush1.msra.mxu0 %v6727
    %7654 = vmatprep.subr.mxu0 0.0
    %7655 = vmatpush1.msra.mxu0 %v6728
    %7656 = vmatprep.subr.mxu0 0.0
    %7657 = vmatpush1.msra.mxu0 0.0
    %7658 = vmatprep.subr.mxu0 0.0
    %7659 = vmatpush1.msra.mxu0 0.0
    %7660 = vmatprep.subr.mxu0 0.0
    %7661 = vmatpush1.msra.mxu0 0.0
    %7662 = vmatprep.subr.mxu0 0.0
    %7663 = vmatpush1.msra.mxu0 0.0
    %7664 = vmatprep.subr.mxu0 0.0
    %7665 = vmatpush1.msra.mxu0 0.0
    %7666 = vmatprep.subr.mxu0 0.0
    %7667 = vmatpush1.msra.mxu0 0.0
    %7668 = vmatprep.subr.mxu0 0.0
    %7669 = vmatpush1.msra.mxu0 0.0
    %7670 = vmatprep.subr.mxu0 0.0
    %7671 = vmatpush1.msra.mxu0 0.0
    %7672 = vmatprep.subr.mxu0 0.0
    %7673 = vmatpush1.msra.mxu0 0.0
    %7674 = vmatprep.subr.mxu0 0.0
    %7675 = vmatpush1.msra.mxu0 0.0
    %7676 = vmatprep.subr.mxu0 0.0
    %7677 = vmatpush1.msra.mxu0 0.0
    %7678 = vmatprep.subr.mxu0 0.0
    %7679 = vmatpush1.msra.mxu0 0.0
    %7680 = vmatprep.subr.mxu0 0.0
    %7681 = vmatpush1.msra.mxu0 0.0
    %7682 = vmatprep.subr.mxu0 0.0
    %7683 = vmatpush1.msra.mxu0 0.0
    %7684 = vmatprep.subr.mxu0 0.0
    %7685 = vmatpush1.msra.mxu0 0.0
    %7686 = vmatprep.subr.mxu0 0.0
    %7687 = vmatpush1.msra.mxu0 0.0
    %7688 = vmatprep.subr.mxu0 0.0
    %7689 = vmatpush1.msra.mxu0 0.0
    %7690 = vmatprep.subr.mxu0 0.0
    %7691 = vmatpush1.msra.mxu0 0.0
    %7692 = vmatprep.subr.mxu0 0.0
    %7693 = vmatpush1.msra.mxu0 0.0
    %7694 = vmatprep.subr.mxu0 0.0
    %7695 = vmatpush1.msra.mxu0 0.0
    %7696 = vmatprep.subr.mxu0 0.0
    %7697 = vmatpush1.msra.mxu0 0.0
    %7698 = vmatprep.subr.mxu0 0.0
    %7699 = vmatpush1.msra.mxu0 0.0
    %7700 = vmatprep.subr.mxu0 0.0
    %7701 = vmatpush1.msra.mxu0 0.0
    %7702 = vmatprep.subr.mxu0 0.0
    %7703 = vmatpush1.msra.mxu0 0.0
    %7704 = vmatprep.mubr.f32.mxu0 0.0
    %7705 = vmatmul.mubr.f32.gmra.mrb[0].mxu0 %v7638
    %v7706 = vpop.f32.mrb[0].mxu0
    %v7707 = vadd.f32 0.0, %v7706
    %v7708 = vpop.f32.mrb[0].mxu0
    %7709 = vdwg.mxu0
    %v7711 = vsel %vm6833, %v6620, 0
    %7713 = vmatprep.subr.mxu0 0.0
    %7714 = vmatpush1.msra.mxu0 %v6729
    %7715 = vmatprep.subr.mxu0 0.0
    %7716 = vmatpush1.msra.mxu0 %v6730
    %7717 = vmatprep.subr.mxu0 0.0
    %7718 = vmatpush1.msra.mxu0 %v6731
    %7719 = vmatprep.subr.mxu0 0.0
    %7720 = vmatpush1.msra.mxu0 %v6732
    %7721 = vmatprep.subr.mxu0 0.0
    %7722 = vmatpush1.msra.mxu0 %v6733
    %7723 = vmatprep.subr.mxu0 0.0
    %7724 = vmatpush1.msra.mxu0 %v6734
    %7725 = vmatprep.subr.mxu0 0.0
    %7726 = vmatpush1.msra.mxu0 %v6735
    %7727 = vmatprep.subr.mxu0 0.0
    %7728 = vmatpush1.msra.mxu0 %v6736
    %7729 = vmatprep.subr.mxu0 0.0
    %7730 = vmatpush1.msra.mxu0 0.0
    %7731 = vmatprep.subr.mxu0 0.0
    %7732 = vmatpush1.msra.mxu0 0.0
    %7733 = vmatprep.subr.mxu0 0.0
    %7734 = vmatpush1.msra.mxu0 0.0
    %7735 = vmatprep.subr.mxu0 0.0
    %7736 = vmatpush1.msra.mxu0 0.0
    %7737 = vmatprep.subr.mxu0 0.0
    %7738 = vmatpush1.msra.mxu0 0.0
    %7739 = vmatprep.subr.mxu0 0.0
    %7740 = vmatpush1.msra.mxu0 0.0
    %7741 = vmatprep.subr.mxu0 0.0
    %7742 = vmatpush1.msra.mxu0 0.0
    %7743 = vmatprep.subr.mxu0 0.0
    %7744 = vmatpush1.msra.mxu0 0.0
    %7745 = vmatprep.subr.mxu0 0.0
    %7746 = vmatpush1.msra.mxu0 0.0
    %7747 = vmatprep.subr.mxu0 0.0
    %7748 = vmatpush1.msra.mxu0 0.0
    %7749 = vmatprep.subr.mxu0 0.0
    %7750 = vmatpush1.msra.mxu0 0.0
    %7751 = vmatprep.subr.mxu0 0.0
    %7752 = vmatpush1.msra.mxu0 0.0
    %7753 = vmatprep.subr.mxu0 0.0
    %7754 = vmatpush1.msra.mxu0 0.0
    %7755 = vmatprep.subr.mxu0 0.0
    %7756 = vmatpush1.msra.mxu0 0.0
    %7757 = vmatprep.subr.mxu0 0.0
    %7758 = vmatpush1.msra.mxu0 0.0
    %7759 = vmatprep.subr.mxu0 0.0
    %7760 = vmatpush1.msra.mxu0 0.0
    %7761 = vmatprep.subr.mxu0 0.0
    %7762 = vmatpush1.msra.mxu0 0.0
    %7763 = vmatprep.subr.mxu0 0.0
    %7764 = vmatpush1.msra.mxu0 0.0
    %7765 = vmatprep.subr.mxu0 0.0
    %7766 = vmatpush1.msra.mxu0 0.0
    %7767 = vmatprep.subr.mxu0 0.0
    %7768 = vmatpush1.msra.mxu0 0.0
    %7769 = vmatprep.subr.mxu0 0.0
    %7770 = vmatpush1.msra.mxu0 0.0
    %7771 = vmatprep.subr.mxu0 0.0
    %7772 = vmatpush1.msra.mxu0 0.0
    %7773 = vmatprep.subr.mxu0 0.0
    %7774 = vmatpush1.msra.mxu0 0.0
    %7775 = vmatprep.subr.mxu0 0.0
    %7776 = vmatpush1.msra.mxu0 0.0
    %7777 = vmatprep.mubr.f32.mxu0 0.0
    %7778 = vmatmul.mubr.f32.gmra.mrb[0].mxu0 %v7711
    %v7779 = vpop.f32.mrb[0].mxu0
    %v7780 = vadd.f32 0.0, %v7779
    %v7781 = vpop.f32.mrb[0].mxu0
    %7782 = vdwg.mxu0
    %v7784 = vsel %vm6833, %v6621, 0
    %7786 = vmatprep.subr.mxu0 0.0
    %7787 = vmatpush1.msra.mxu0 %v6737
    %7788 = vmatprep.subr.mxu0 0.0
    %7789 = vmatpush1.msra.mxu0 %v6738
    %7790 = vmatprep.subr.mxu0 0.0
    %7791 = vmatpush1.msra.mxu0 %v6739
    %7792 = vmatprep.subr.mxu0 0.0
    %7793 = vmatpush1.msra.mxu0 %v6740
    %7794 = vmatprep.subr.mxu0 0.0
    %7795 = vmatpush1.msra.mxu0 %v6741
    %7796 = vmatprep.subr.mxu0 0.0
    %7797 = vmatpush1.msra.mxu0 %v6742
    %7798 = vmatprep.subr.mxu0 0.0
    %7799 = vmatpush1.msra.mxu0 %v6743
    %7800 = vmatprep.subr.mxu0 0.0
    %7801 = vmatpush1.msra.mxu0 %v6744
    %7802 = vmatprep.subr.mxu0 0.0
    %7803 = vmatpush1.msra.mxu0 0.0
    %7804 = vmatprep.subr.mxu0 0.0
    %7805 = vmatpush1.msra.mxu0 0.0
    %7806 = vmatprep.subr.mxu0 0.0
    %7807 = vmatpush1.msra.mxu0 0.0
    %7808 = vmatprep.subr.mxu0 0.0
    %7809 = vmatpush1.msra.mxu0 0.0
    %7810 = vmatprep.subr.mxu0 0.0
    %7811 = vmatpush1.msra.mxu0 0.0
    %7812 = vmatprep.subr.mxu0 0.0
    %7813 = vmatpush1.msra.mxu0 0.0
    %7814 = vmatprep.subr.mxu0 0.0
    %7815 = vmatpush1.msra.mxu0 0.0
    %7816 = vmatprep.subr.mxu0 0.0
    %7817 = vmatpush1.msra.mxu0 0.0
    %7818 = vmatprep.subr.mxu0 0.0
    %7819 = vmatpush1.msra.mxu0 0.0
    %7820 = vmatprep.subr.mxu0 0.0
    %7821 = vmatpush1.msra.mxu0 0.0
    %7822 = vmatprep.subr.mxu0 0.0
    %7823 = vmatpush1.msra.mxu0 0.0
    %7824 = vmatprep.subr.mxu0 0.0
    %7825 = vmatpush1.msra.mxu0 0.0
    %7826 = vmatprep.subr.mxu0 0.0
    %7827 = vmatpush1.msra.mxu0 0.0
    %7828 = vmatprep.subr.mxu0 0.0
    %7829 = vmatpush1.msra.mxu0 0.0
    %7830 = vmatprep.subr.mxu0 0.0
    %7831 = vmatpush1.msra.mxu0 0.0
    %7832 = vmatprep.subr.mxu0 0.0
    %7833 = vmatpush1.msra.mxu0 0.0
    %7834 = vmatprep.subr.mxu0 0.0
    %7835 = vmatpush1.msra.mxu0 0.0
    %7836 = vmatprep.subr.mxu0 0.0
    %7837 = vmatpush1.msra.mxu0 0.0
    %7838 = vmatprep.subr.mxu0 0.0
    %7839 = vmatpush1.msra.mxu0 0.0
    %7840 = vmatprep.subr.mxu0 0.0
    %7841 = vmatpush1.msra.mxu0 0.0
    %7842 = vmatprep.subr.mxu0 0.0
    %7843 = vmatpush1.msra.mxu0 0.0
    %7844 = vmatprep.subr.mxu0 0.0
    %7845 = vmatpush1.msra.mxu0 0.0
    %7846 = vmatprep.subr.mxu0 0.0
    %7847 = vmatpush1.msra.mxu0 0.0
    %7848 = vmatprep.subr.mxu0 0.0
    %7849 = vmatpush1.msra.mxu0 0.0
    %7850 = vmatprep.mubr.f32.mxu0 0.0
    %7851 = vmatmul.mubr.f32.gmra.mrb[0].mxu0 %v7784
    %v7852 = vpop.f32.mrb[0].mxu0
    %v7853 = vadd.f32 0.0, %v7852
    %v7854 = vpop.f32.mrb[0].mxu0
    %7855 = vdwg.mxu0
    %v7857 = vsel %vm6833, %v6622, 0
    %7859 = vmatprep.subr.mxu0 0.0
    %7860 = vmatpush1.msra.mxu0 %v6745
    %7861 = vmatprep.subr.mxu0 0.0
    %7862 = vmatpush1.msra.mxu0 %v6746
    %7863 = vmatprep.subr.mxu0 0.0
    %7864 = vmatpush1.msra.mxu0 %v6747
    %7865 = vmatprep.subr.mxu0 0.0
    %7866 = vmatpush1.msra.mxu0 %v6748
    %7867 = vmatprep.subr.mxu0 0.0
    %7868 = vmatpush1.msra.mxu0 %v6749
    %7869 = vmatprep.subr.mxu0 0.0
    %7870 = vmatpush1.msra.mxu0 %v6750
    %7871 = vmatprep.subr.mxu0 0.0
    %7872 = vmatpush1.msra.mxu0 %v6751
    %7873 = vmatprep.subr.mxu0 0.0
    %7874 = vmatpush1.msra.mxu0 %v6752
    %7875 = vmatprep.subr.mxu0 0.0
    %7876 = vmatpush1.msra.mxu0 0.0
    %7877 = vmatprep.subr.mxu0 0.0
    %7878 = vmatpush1.msra.mxu0 0.0
    %7879 = vmatprep.subr.mxu0 0.0
    %7880 = vmatpush1.msra.mxu0 0.0
    %7881 = vmatprep.subr.mxu0 0.0
    %7882 = vmatpush1.msra.mxu0 0.0
    %7883 = vmatprep.subr.mxu0 0.0
    %7884 = vmatpush1.msra.mxu0 0.0
    %7885 = vmatprep.subr.mxu0 0.0
    %7886 = vmatpush1.msra.mxu0 0.0
    %7887 = vmatprep.subr.mxu0 0.0
    %7888 = vmatpush1.msra.mxu0 0.0
    %7889 = vmatprep.subr.mxu0 0.0
    %7890 = vmatpush1.msra.mxu0 0.0
    %7891 = vmatprep.subr.mxu0 0.0
    %7892 = vmatpush1.msra.mxu0 0.0
    %7893 = vmatprep.subr.mxu0 0.0
    %7894 = vmatpush1.msra.mxu0 0.0
    %7895 = vmatprep.subr.mxu0 0.0
    %7896 = vmatpush1.msra.mxu0 0.0
    %7897 = vmatprep.subr.mxu0 0.0
    %7898 = vmatpush1.msra.mxu0 0.0
    %7899 = vmatprep.subr.mxu0 0.0
    %7900 = vmatpush1.msra.mxu0 0.0
    %7901 = vmatprep.subr.mxu0 0.0
    %7902 = vmatpush1.msra.mxu0 0.0
    %7903 = vmatprep.subr.mxu0 0.0
    %7904 = vmatpush1.msra.mxu0 0.0
    %7905 = vmatprep.subr.mxu0 0.0
    %7906 = vmatpush1.msra.mxu0 0.0
    %7907 = vmatprep.subr.mxu0 0.0
    %7908 = vmatpush1.msra.mxu0 0.0
    %7909 = vmatprep.subr.mxu0 0.0
    %7910 = vmatpush1.msra.mxu0 0.0
    %7911 = vmatprep.subr.mxu0 0.0
    %7912 = vmatpush1.msra.mxu0 0.0
    %7913 = vmatprep.subr.mxu0 0.0
    %7914 = vmatpush1.msra.mxu0 0.0
    %7915 = vmatprep.subr.mxu0 0.0
    %7916 = vmatpush1.msra.mxu0 0.0
    %7917 = vmatprep.subr.mxu0 0.0
    %7918 = vmatpush1.msra.mxu0 0.0
    %7919 = vmatprep.subr.mxu0 0.0
    %7920 = vmatpush1.msra.mxu0 0.0
    %7921 = vmatprep.subr.mxu0 0.0
    %7922 = vmatpush1.msra.mxu0 0.0
    %7923 = vmatprep.mubr.f32.mxu0 0.0
    %7924 = vmatmul.mubr.f32.gmra.mrb[0].mxu0 %v7857
    %v7925 = vpop.f32.mrb[0].mxu0
    %v7926 = vadd.f32 0.0, %v7925
    %v7927 = vpop.f32.mrb[0].mxu0
    %7928 = vdwg.mxu0
    %v7930 = vsel %vm6833, %v6623, 0
    %7932 = vmatprep.subr.mxu0 0.0
    %7933 = vmatpush1.msra.mxu0 %v6753
    %7934 = vmatprep.subr.mxu0 0.0
    %7935 = vmatpush1.msra.mxu0 %v6754
    %7936 = vmatprep.subr.mxu0 0.0
    %7937 = vmatpush1.msra.mxu0 %v6755
    %7938 = vmatprep.subr.mxu0 0.0
    %7939 = vmatpush1.msra.mxu0 %v6756
    %7940 = vmatprep.subr.mxu0 0.0
    %7941 = vmatpush1.msra.mxu0 %v6757
    %7942 = vmatprep.subr.mxu0 0.0
    %7943 = vmatpush1.msra.mxu0 %v6758
    %7944 = vmatprep.subr.mxu0 0.0
    %7945 = vmatpush1.msra.mxu0 %v6759
    %7946 = vmatprep.subr.mxu0 0.0
    %7947 = vmatpush1.msra.mxu0 %v6760
    %7948 = vmatprep.subr.mxu0 0.0
    %7949 = vmatpush1.msra.mxu0 0.0
    %7950 = vmatprep.subr.mxu0 0.0
    %7951 = vmatpush1.msra.mxu0 0.0
    %7952 = vmatprep.subr.mxu0 0.0
    %7953 = vmatpush1.msra.mxu0 0.0
    %7954 = vmatprep.subr.mxu0 0.0
    %7955 = vmatpush1.msra.mxu0 0.0
    %7956 = vmatprep.subr.mxu0 0.0
    %7957 = vmatpush1.msra.mxu0 0.0
    %7958 = vmatprep.subr.mxu0 0.0
    %7959 = vmatpush1.msra.mxu0 0.0
    %7960 = vmatprep.subr.mxu0 0.0
    %7961 = vmatpush1.msra.mxu0 0.0
    %7962 = vmatprep.subr.mxu0 0.0
    %7963 = vmatpush1.msra.mxu0 0.0
    %7964 = vmatprep.subr.mxu0 0.0
    %7965 = vmatpush1.msra.mxu0 0.0
    %7966 = vmatprep.subr.mxu0 0.0
    %7967 = vmatpush1.msra.mxu0 0.0
    %7968 = vmatprep.subr.mxu0 0.0
    %7969 = vmatpush1.msra.mxu0 0.0
    %7970 = vmatprep.subr.mxu0 0.0
    %7971 = vmatpush1.msra.mxu0 0.0
    %7972 = vmatprep.subr.mxu0 0.0
    %7973 = vmatpush1.msra.mxu0 0.0
    %7974 = vmatprep.subr.mxu0 0.0
    %7975 = vmatpush1.msra.mxu0 0.0
    %7976 = vmatprep.subr.mxu0 0.0
    %7977 = vmatpush1.msra.mxu0 0.0
    %7978 = vmatprep.subr.mxu0 0.0
    %7979 = vmatpush1.msra.mxu0 0.0
    %7980 = vmatprep.subr.mxu0 0.0
    %7981 = vmatpush1.msra.mxu0 0.0
    %7982 = vmatprep.subr.mxu0 0.0
    %7983 = vmatpush1.msra.mxu0 0.0
    %7984 = vmatprep.subr.mxu0 0.0
    %7985 = vmatpush1.msra.mxu0 0.0
    %7986 = vmatprep.subr.mxu0 0.0
    %7987 = vmatpush1.msra.mxu0 0.0
    %7988 = vmatprep.subr.mxu0 0.0
    %7989 = vmatpush1.msra.mxu0 0.0
    %7990 = vmatprep.subr.mxu0 0.0
    %7991 = vmatpush1.msra.mxu0 0.0
    %7992 = vmatprep.subr.mxu0 0.0
    %7993 = vmatpush1.msra.mxu0 0.0
    %7994 = vmatprep.subr.mxu0 0.0
    %7995 = vmatpush1.msra.mxu0 0.0
    %7996 = vmatprep.mubr.f32.mxu0 0.0
    %7997 = vmatmul.mubr.f32.gmra.mrb[0].mxu0 %v7930
    %v7998 = vpop.f32.mrb[0].mxu0
    %v7999 = vadd.f32 0.0, %v7998
    %v8000 = vpop.f32.mrb[0].mxu0
    %8001 = vdwg.mxu0
    %v8003 = vsel %vm6833, %v6624, 0
    %8005 = vmatprep.subr.mxu0 0.0
    %8006 = vmatpush1.msra.mxu0 %v6761
    %8007 = vmatprep.subr.mxu0 0.0
    %8008 = vmatpush1.msra.mxu0 %v6762
    %8009 = vmatprep.subr.mxu0 0.0
    %8010 = vmatpush1.msra.mxu0 %v6763
    %8011 = vmatprep.subr.mxu0 0.0
    %8012 = vmatpush1.msra.mxu0 %v6764
    %8013 = vmatprep.subr.mxu0 0.0
    %8014 = vmatpush1.msra.mxu0 %v6765
    %8015 = vmatprep.subr.mxu0 0.0
    %8016 = vmatpush1.msra.mxu0 %v6766
    %8017 = vmatprep.subr.mxu0 0.0
    %8018 = vmatpush1.msra.mxu0 %v6767
    %8019 = vmatprep.subr.mxu0 0.0
    %8020 = vmatpush1.msra.mxu0 %v6768
    %8021 = vmatprep.subr.mxu0 0.0
    %8022 = vmatpush1.msra.mxu0 0.0
    %8023 = vmatprep.subr.mxu0 0.0
    %8024 = vmatpush1.msra.mxu0 0.0
    %8025 = vmatprep.subr.mxu0 0.0
    %8026 = vmatpush1.msra.mxu0 0.0
    %8027 = vmatprep.subr.mxu0 0.0
    %8028 = vmatpush1.msra.mxu0 0.0
    %8029 = vmatprep.subr.mxu0 0.0
    %8030 = vmatpush1.msra.mxu0 0.0
    %8031 = vmatprep.subr.mxu0 0.0
    %8032 = vmatpush1.msra.mxu0 0.0
    %8033 = vmatprep.subr.mxu0 0.0
    %8034 = vmatpush1.msra.mxu0 0.0
    %8035 = vmatprep.subr.mxu0 0.0
    %8036 = vmatpush1.msra.mxu0 0.0
    %8037 = vmatprep.subr.mxu0 0.0
    %8038 = vmatpush1.msra.mxu0 0.0
    %8039 = vmatprep.subr.mxu0 0.0
    %8040 = vmatpush1.msra.mxu0 0.0
    %8041 = vmatprep.subr.mxu0 0.0
    %8042 = vmatpush1.msra.mxu0 0.0
    %8043 = vmatprep.subr.mxu0 0.0
    %8044 = vmatpush1.msra.mxu0 0.0
    %8045 = vmatprep.subr.mxu0 0.0
    %8046 = vmatpush1.msra.mxu0 0.0
    %8047 = vmatprep.subr.mxu0 0.0
    %8048 = vmatpush1.msra.mxu0 0.0
    %8049 = vmatprep.subr.mxu0 0.0
    %8050 = vmatpush1.msra.mxu0 0.0
    %8051 = vmatprep.subr.mxu0 0.0
    %8052 = vmatpush1.msra.mxu0 0.0
    %8053 = vmatprep.subr.mxu0 0.0
    %8054 = vmatpush1.msra.mxu0 0.0
    %8055 = vmatprep.subr.mxu0 0.0
    %8056 = vmatpush1.msra.mxu0 0.0
    %8057 = vmatprep.subr.mxu0 0.0
    %8058 = vmatpush1.msra.mxu0 0.0
    %8059 = vmatprep.subr.mxu0 0.0
    %8060 = vmatpush1.msra.mxu0 0.0
    %8061 = vmatprep.subr.mxu0 0.0
    %8062 = vmatpush1.msra.mxu0 0.0
    %8063 = vmatprep.subr.mxu0 0.0
    %8064 = vmatpush1.msra.mxu0 0.0
    %8065 = vmatprep.subr.mxu0 0.0
    %8066 = vmatpush1.msra.mxu0 0.0
    %8067 = vmatprep.subr.mxu0 0.0
    %8068 = vmatpush1.msra.mxu0 0.0
    %8069 = vmatprep.mubr.f32.mxu0 0.0
    %8070 = vmatmul.mubr.f32.gmra.mrb[0].mxu0 %v8003
    %v8071 = vpop.f32.mrb[0].mxu0
    %v8072 = vadd.f32 0.0, %v8071
    %v8073 = vpop.f32.mrb[0].mxu0
    %8074 = vdwg.mxu0
    %v8076 = vsel %vm6833, %v6625, 0
    %8078 = vmatprep.subr.mxu0 0.0
    %8079 = vmatpush1.msra.mxu0 %v6769
    %8080 = vmatprep.subr.mxu0 0.0
    %8081 = vmatpush1.msra.mxu0 %v6770
    %8082 = vmatprep.subr.mxu0 0.0
    %8083 = vmatpush1.msra.mxu0 %v6771
    %8084 = vmatprep.subr.mxu0 0.0
    %8085 = vmatpush1.msra.mxu0 %v6772
    %8086 = vmatprep.subr.mxu0 0.0
    %8087 = vmatpush1.msra.mxu0 %v6773
    %8088 = vmatprep.subr.mxu0 0.0
    %8089 = vmatpush1.msra.mxu0 %v6774
    %8090 = vmatprep.subr.mxu0 0.0
    %8091 = vmatpush1.msra.mxu0 %v6775
    %8092 = vmatprep.subr.mxu0 0.0
    %8093 = vmatpush1.msra.mxu0 %v6776
    %8094 = vmatprep.subr.mxu0 0.0
    %8095 = vmatpush1.msra.mxu0 0.0
    %8096 = vmatprep.subr.mxu0 0.0
    %8097 = vmatpush1.msra.mxu0 0.0
    %8098 = vmatprep.subr.mxu0 0.0
    %8099 = vmatpush1.msra.mxu0 0.0
    %8100 = vmatprep.subr.mxu0 0.0
    %8101 = vmatpush1.msra.mxu0 0.0
    %8102 = vmatprep.subr.mxu0 0.0
    %8103 = vmatpush1.msra.mxu0 0.0
    %8104 = vmatprep.subr.mxu0 0.0
    %8105 = vmatpush1.msra.mxu0 0.0
    %8106 = vmatprep.subr.mxu0 0.0
    %8107 = vmatpush1.msra.mxu0 0.0
    %8108 = vmatprep.subr.mxu0 0.0
    %8109 = vmatpush1.msra.mxu0 0.0
    %8110 = vmatprep.subr.mxu0 0.0
    %8111 = vmatpush1.msra.mxu0 0.0
    %8112 = vmatprep.subr.mxu0 0.0
    %8113 = vmatpush1.msra.mxu0 0.0
    %8114 = vmatprep.subr.mxu0 0.0
    %8115 = vmatpush1.msra.mxu0 0.0
    %8116 = vmatprep.subr.mxu0 0.0
    %8117 = vmatpush1.msra.mxu0 0.0
    %8118 = vmatprep.subr.mxu0 0.0
    %8119 = vmatpush1.msra.mxu0 0.0
    %8120 = vmatprep.subr.mxu0 0.0
    %8121 = vmatpush1.msra.mxu0 0.0
    %8122 = vmatprep.subr.mxu0 0.0
    %8123 = vmatpush1.msra.mxu0 0.0
    %8124 = vmatprep.subr.mxu0 0.0
    %8125 = vmatpush1.msra.mxu0 0.0
    %8126 = vmatprep.subr.mxu0 0.0
    %8127 = vmatpush1.msra.mxu0 0.0
    %8128 = vmatprep.subr.mxu0 0.0
    %8129 = vmatpush1.msra.mxu0 0.0
    %8130 = vmatprep.subr.mxu0 0.0
    %8131 = vmatpush1.msra.mxu0 0.0
    %8132 = vmatprep.subr.mxu0 0.0
    %8133 = vmatpush1.msra.mxu0 0.0
    %8134 = vmatprep.subr.mxu0 0.0
    %8135 = vmatpush1.msra.mxu0 0.0
    %8136 = vmatprep.subr.mxu0 0.0
    %8137 = vmatpush1.msra.mxu0 0.0
    %8138 = vmatprep.subr.mxu0 0.0
    %8139 = vmatpush1.msra.mxu0 0.0
    %8140 = vmatprep.subr.mxu0 0.0
    %8141 = vmatpush1.msra.mxu0 0.0
    %8142 = vmatprep.mubr.f32.mxu0 0.0
    %8143 = vmatmul.mubr.f32.gmra.mrb[0].mxu0 %v8076
    %v8144 = vpop.f32.mrb[0].mxu0
    %v8145 = vadd.f32 0.0, %v8144
    %v8146 = vpop.f32.mrb[0].mxu0
    %8147 = vdwg.mxu0
    %v8149 = vsel %vm6833, %v6626, 0
    %8151 = vmatprep.subr.mxu0 0.0
    %8152 = vmatpush1.msra.mxu0 %v6777
    %8153 = vmatprep.subr.mxu0 0.0
    %8154 = vmatpush1.msra.mxu0 %v6778
    %8155 = vmatprep.subr.mxu0 0.0
    %8156 = vmatpush1.msra.mxu0 %v6779
    %8157 = vmatprep.subr.mxu0 0.0
    %8158 = vmatpush1.msra.mxu0 %v6780
    %8159 = vmatprep.subr.mxu0 0.0
    %8160 = vmatpush1.msra.mxu0 %v6781
    %8161 = vmatprep.subr.mxu0 0.0
    %8162 = vmatpush1.msra.mxu0 %v6782
    %8163 = vmatprep.subr.mxu0 0.0
    %8164 = vmatpush1.msra.mxu0 %v6783
    %8165 = vmatprep.subr.mxu0 0.0
    %8166 = vmatpush1.msra.mxu0 %v6784
    %8167 = vmatprep.subr.mxu0 0.0
    %8168 = vmatpush1.msra.mxu0 0.0
    %8169 = vmatprep.subr.mxu0 0.0
    %8170 = vmatpush1.msra.mxu0 0.0
    %8171 = vmatprep.subr.mxu0 0.0
    %8172 = vmatpush1.msra.mxu0 0.0
    %8173 = vmatprep.subr.mxu0 0.0
    %8174 = vmatpush1.msra.mxu0 0.0
    %8175 = vmatprep.subr.mxu0 0.0
    %8176 = vmatpush1.msra.mxu0 0.0
    %8177 = vmatprep.subr.mxu0 0.0
    %8178 = vmatpush1.msra.mxu0 0.0
    %8179 = vmatprep.subr.mxu0 0.0
    %8180 = vmatpush1.msra.mxu0 0.0
    %8181 = vmatprep.subr.mxu0 0.0
    %8182 = vmatpush1.msra.mxu0 0.0
    %8183 = vmatprep.subr.mxu0 0.0
    %8184 = vmatpush1.msra.mxu0 0.0
    %8185 = vmatprep.subr.mxu0 0.0
    %8186 = vmatpush1.msra.mxu0 0.0
    %8187 = vmatprep.subr.mxu0 0.0
    %8188 = vmatpush1.msra.mxu0 0.0
    %8189 = vmatprep.subr.mxu0 0.0
    %8190 = vmatpush1.msra.mxu0 0.0
    %8191 = vmatprep.subr.mxu0 0.0
    %8192 = vmatpush1.msra.mxu0 0.0
    %8193 = vmatprep.subr.mxu0 0.0
    %8194 = vmatpush1.msra.mxu0 0.0
    %8195 = vmatprep.subr.mxu0 0.0
    %8196 = vmatpush1.msra.mxu0 0.0
    %8197 = vmatprep.subr.mxu0 0.0
    %8198 = vmatpush1.msra.mxu0 0.0
    %8199 = vmatprep.subr.mxu0 0.0
    %8200 = vmatpush1.msra.mxu0 0.0
    %8201 = vmatprep.subr.mxu0 0.0
    %8202 = vmatpush1.msra.mxu0 0.0
    %8203 = vmatprep.subr.mxu0 0.0
    %8204 = vmatpush1.msra.mxu0 0.0
    %8205 = vmatprep.subr.mxu0 0.0
    %8206 = vmatpush1.msra.mxu0 0.0
    %8207 = vmatprep.subr.mxu0 0.0
    %8208 = vmatpush1.msra.mxu0 0.0
    %8209 = vmatprep.subr.mxu0 0.0
    %8210 = vmatpush1.msra.mxu0 0.0
    %8211 = vmatprep.subr.mxu0 0.0
    %8212 = vmatpush1.msra.mxu0 0.0
    %8213 = vmatprep.subr.mxu0 0.0
    %8214 = vmatpush1.msra.mxu0 0.0
    %8215 = vmatprep.mubr.f32.mxu0 0.0
    %8216 = vmatmul.mubr.f32.gmra.mrb[0].mxu0 %v8149
    %v8217 = vpop.f32.mrb[0].mxu0
    %v8218 = vadd.f32 0.0, %v8217
    %v8219 = vpop.f32.mrb[0].mxu0
    %8220 = vdwg.mxu0
    %v8222 = vsel %vm6833, %v6627, 0
    %8224 = vmatprep.subr.mxu0 0.0
    %8225 = vmatpush1.msra.mxu0 %v6785
    %8226 = vmatprep.subr.mxu0 0.0
    %8227 = vmatpush1.msra.mxu0 %v6786
    %8228 = vmatprep.subr.mxu0 0.0
    %8229 = vmatpush1.msra.mxu0 %v6787
    %8230 = vmatprep.subr.mxu0 0.0
    %8231 = vmatpush1.msra.mxu0 %v6788
    %8232 = vmatprep.subr.mxu0 0.0
    %8233 = vmatpush1.msra.mxu0 %v6789
    %8234 = vmatprep.subr.mxu0 0.0
    %8235 = vmatpush1.msra.mxu0 %v6790
    %8236 = vmatprep.subr.mxu0 0.0
    %8237 = vmatpush1.msra.mxu0 %v6791
    %8238 = vmatprep.subr.mxu0 0.0
    %8239 = vmatpush1.msra.mxu0 %v6792
    %8240 = vmatprep.subr.mxu0 0.0
    %8241 = vmatpush1.msra.mxu0 0.0
    %8242 = vmatprep.subr.mxu0 0.0
    %8243 = vmatpush1.msra.mxu0 0.0
    %8244 = vmatprep.subr.mxu0 0.0
    %8245 = vmatpush1.msra.mxu0 0.0
    %8246 = vmatprep.subr.mxu0 0.0
    %8247 = vmatpush1.msra.mxu0 0.0
    %8248 = vmatprep.subr.mxu0 0.0
    %8249 = vmatpush1.msra.mxu0 0.0
    %8250 = vmatprep.subr.mxu0 0.0
    %8251 = vmatpush1.msra.mxu0 0.0
    %8252 = vmatprep.subr.mxu0 0.0
    %8253 = vmatpush1.msra.mxu0 0.0
    %8254 = vmatprep.subr.mxu0 0.0
    %8255 = vmatpush1.msra.mxu0 0.0
    %8256 = vmatprep.subr.mxu0 0.0
    %8257 = vmatpush1.msra.mxu0 0.0
    %8258 = vmatprep.subr.mxu0 0.0
    %8259 = vmatpush1.msra.mxu0 0.0
    %8260 = vmatprep.subr.mxu0 0.0
    %8261 = vmatpush1.msra.mxu0 0.0
    %8262 = vmatprep.subr.mxu0 0.0
    %8263 = vmatpush1.msra.mxu0 0.0
    %8264 = vmatprep.subr.mxu0 0.0
    %8265 = vmatpush1.msra.mxu0 0.0
    %8266 = vmatprep.subr.mxu0 0.0
    %8267 = vmatpush1.msra.mxu0 0.0
    %8268 = vmatprep.subr.mxu0 0.0
    %8269 = vmatpush1.msra.mxu0 0.0
    %8270 = vmatprep.subr.mxu0 0.0
    %8271 = vmatpush1.msra.mxu0 0.0
    %8272 = vmatprep.subr.mxu0 0.0
    %8273 = vmatpush1.msra.mxu0 0.0
    %8274 = vmatprep.subr.mxu0 0.0
    %8275 = vmatpush1.msra.mxu0 0.0
    %8276 = vmatprep.subr.mxu0 0.0
    %8277 = vmatpush1.msra.mxu0 0.0
    %8278 = vmatprep.subr.mxu0 0.0
    %8279 = vmatpush1.msra.mxu0 0.0
    %8280 = vmatprep.subr.mxu0 0.0
    %8281 = vmatpush1.msra.mxu0 0.0
    %8282 = vmatprep.subr.mxu0 0.0
    %8283 = vmatpush1.msra.mxu0 0.0
    %8284 = vmatprep.subr.mxu0 0.0
    %8285 = vmatpush1.msra.mxu0 0.0
    %8286 = vmatprep.subr.mxu0 0.0
    %8287 = vmatpush1.msra.mxu0 0.0
    %8288 = vmatprep.mubr.f32.mxu0 0.0
    %8289 = vmatmul.mubr.f32.gmra.mrb[0].mxu0 %v8222
    %v8290 = vpop.f32.mrb[0].mxu0
    %v8291 = vadd.f32 0.0, %v8290
    %v8292 = vpop.f32.mrb[0].mxu0
    %8293 = vdwg.mxu0
    %v8295 = vsel %vm6833, %v6628, 0
    %8297 = vmatprep.subr.mxu0 0.0
    %8298 = vmatpush1.msra.mxu0 %v6793
    %8299 = vmatprep.subr.mxu0 0.0
    %8300 = vmatpush1.msra.mxu0 %v6794
    %8301 = vmatprep.subr.mxu0 0.0
    %8302 = vmatpush1.msra.mxu0 %v6795
    %8303 = vmatprep.subr.mxu0 0.0
    %8304 = vmatpush1.msra.mxu0 %v6796
    %8305 = vmatprep.subr.mxu0 0.0
    %8306 = vmatpush1.msra.mxu0 %v6797
    %8307 = vmatprep.subr.mxu0 0.0
    %8308 = vmatpush1.msra.mxu0 %v6798
    %8309 = vmatprep.subr.mxu0 0.0
    %8310 = vmatpush1.msra.mxu0 %v6799
    %8311 = vmatprep.subr.mxu0 0.0
    %8312 = vmatpush1.msra.mxu0 %v6800
    %8313 = vmatprep.subr.mxu0 0.0
    %8314 = vmatpush1.msra.mxu0 0.0
    %8315 = vmatprep.subr.mxu0 0.0
    %8316 = vmatpush1.msra.mxu0 0.0
    %8317 = vmatprep.subr.mxu0 0.0
    %8318 = vmatpush1.msra.mxu0 0.0
    %8319 = vmatprep.subr.mxu0 0.0
    %8320 = vmatpush1.msra.mxu0 0.0
    %8321 = vmatprep.subr.mxu0 0.0
    %8322 = vmatpush1.msra.mxu0 0.0
    %8323 = vmatprep.subr.mxu0 0.0
    %8324 = vmatpush1.msra.mxu0 0.0
    %8325 = vmatprep.subr.mxu0 0.0
    %8326 = vmatpush1.msra.mxu0 0.0
    %8327 = vmatprep.subr.mxu0 0.0
    %8328 = vmatpush1.msra.mxu0 0.0
    %8329 = vmatprep.subr.mxu0 0.0
    %8330 = vmatpush1.msra.mxu0 0.0
    %8331 = vmatprep.subr.mxu0 0.0
    %8332 = vmatpush1.msra.mxu0 0.0
    %8333 = vmatprep.subr.mxu0 0.0
    %8334 = vmatpush1.msra.mxu0 0.0
    %8335 = vmatprep.subr.mxu0 0.0
    %8336 = vmatpush1.msra.mxu0 0.0
    %8337 = vmatprep.subr.mxu0 0.0
    %8338 = vmatpush1.msra.mxu0 0.0
    %8339 = vmatprep.subr.mxu0 0.0
    %8340 = vmatpush1.msra.mxu0 0.0
    %8341 = vmatprep.subr.mxu0 0.0
    %8342 = vmatpush1.msra.mxu0 0.0
    %8343 = vmatprep.subr.mxu0 0.0
    %8344 = vmatpush1.msra.mxu0 0.0
    %8345 = vmatprep.subr.mxu0 0.0
    %8346 = vmatpush1.msra.mxu0 0.0
    %8347 = vmatprep.subr.mxu0 0.0
    %8348 = vmatpush1.msra.mxu0 0.0
    %8349 = vmatprep.subr.mxu0 0.0
    %8350 = vmatpush1.msra.mxu0 0.0
    %8351 = vmatprep.subr.mxu0 0.0
    %8352 = vmatpush1.msra.mxu0 0.0
    %8353 = vmatprep.subr.mxu0 0.0
    %8354 = vmatpush1.msra.mxu0 0.0
    %8355 = vmatprep.subr.mxu0 0.0
    %8356 = vmatpush1.msra.mxu0 0.0
    %8357 = vmatprep.subr.mxu0 0.0
    %8358 = vmatpush1.msra.mxu0 0.0
    %8359 = vmatprep.subr.mxu0 0.0
    %8360 = vmatpush1.msra.mxu0 0.0
    %8361 = vmatprep.mubr.f32.mxu0 0.0
    %8362 = vmatmul.mubr.f32.gmra.mrb[0].mxu0 %v8295
    %v8363 = vpop.f32.mrb[0].mxu0
    %v8364 = vadd.f32 0.0, %v8363
    %v8365 = vpop.f32.mrb[0].mxu0
    %8366 = vdwg.mxu0
    %v8368 = vsel %vm6833, %v6629, 0
    %8370 = vmatprep.subr.mxu0 0.0
    %8371 = vmatpush1.msra.mxu0 %v6801
    %8372 = vmatprep.subr.mxu0 0.0
    %8373 = vmatpush1.msra.mxu0 %v6802
    %8374 = vmatprep.subr.mxu0 0.0
    %8375 = vmatpush1.msra.mxu0 %v6803
    %8376 = vmatprep.subr.mxu0 0.0
    %8377 = vmatpush1.msra.mxu0 %v6804
    %8378 = vmatprep.subr.mxu0 0.0
    %8379 = vmatpush1.msra.mxu0 %v6805
    %8380 = vmatprep.subr.mxu0 0.0
    %8381 = vmatpush1.msra.mxu0 %v6806
    %8382 = vmatprep.subr.mxu0 0.0
    %8383 = vmatpush1.msra.mxu0 %v6807
    %8384 = vmatprep.subr.mxu0 0.0
    %8385 = vmatpush1.msra.mxu0 %v6808
    %8386 = vmatprep.subr.mxu0 0.0
    %8387 = vmatpush1.msra.mxu0 0.0
    %8388 = vmatprep.subr.mxu0 0.0
    %8389 = vmatpush1.msra.mxu0 0.0
    %8390 = vmatprep.subr.mxu0 0.0
    %8391 = vmatpush1.msra.mxu0 0.0
    %8392 = vmatprep.subr.mxu0 0.0
    %8393 = vmatpush1.msra.mxu0 0.0
    %8394 = vmatprep.subr.mxu0 0.0
    %8395 = vmatpush1.msra.mxu0 0.0
    %8396 = vmatprep.subr.mxu0 0.0
    %8397 = vmatpush1.msra.mxu0 0.0
    %8398 = vmatprep.subr.mxu0 0.0
    %8399 = vmatpush1.msra.mxu0 0.0
    %8400 = vmatprep.subr.mxu0 0.0
    %8401 = vmatpush1.msra.mxu0 0.0
    %8402 = vmatprep.subr.mxu0 0.0
    %8403 = vmatpush1.msra.mxu0 0.0
    %8404 = vmatprep.subr.mxu0 0.0
    %8405 = vmatpush1.msra.mxu0 0.0
    %8406 = vmatprep.subr.mxu0 0.0
    %8407 = vmatpush1.msra.mxu0 0.0
    %8408 = vmatprep.subr.mxu0 0.0
    %8409 = vmatpush1.msra.mxu0 0.0
    %8410 = vmatprep.subr.mxu0 0.0
    %8411 = vmatpush1.msra.mxu0 0.0
    %8412 = vmatprep.subr.mxu0 0.0
    %8413 = vmatpush1.msra.mxu0 0.0
    %8414 = vmatprep.subr.mxu0 0.0
    %8415 = vmatpush1.msra.mxu0 0.0
    %8416 = vmatprep.subr.mxu0 0.0
    %8417 = vmatpush1.msra.mxu0 0.0
    %8418 = vmatprep.subr.mxu0 0.0
    %8419 = vmatpush1.msra.mxu0 0.0
    %8420 = vmatprep.subr.mxu0 0.0
    %8421 = vmatpush1.msra.mxu0 0.0
    %8422 = vmatprep.subr.mxu0 0.0
    %8423 = vmatpush1.msra.mxu0 0.0
    %8424 = vmatprep.subr.mxu0 0.0
    %8425 = vmatpush1.msra.mxu0 0.0
    %8426 = vmatprep.subr.mxu0 0.0
    %8427 = vmatpush1.msra.mxu0 0.0
    %8428 = vmatprep.subr.mxu0 0.0
    %8429 = vmatpush1.msra.mxu0 0.0
    %8430 = vmatprep.subr.mxu0 0.0
    %8431 = vmatpush1.msra.mxu0 0.0
    %8432 = vmatprep.subr.mxu0 0.0
    %8433 = vmatpush1.msra.mxu0 0.0
    %8434 = vmatprep.mubr.f32.mxu0 0.0
    %8435 = vmatmul.mubr.f32.gmra.mrb[0].mxu0 %v8368
    %v8436 = vpop.f32.mrb[0].mxu0
    %v8437 = vadd.f32 0.0, %v8436
    %v8438 = vpop.f32.mrb[0].mxu0
    %8439 = vdwg.mxu0
    %v8441 = vsel %vm6833, %v6630, 0
    %8443 = vmatprep.subr.mxu0 0.0
    %8444 = vmatpush1.msra.mxu0 %v6809
    %8445 = vmatprep.subr.mxu0 0.0
    %8446 = vmatpush1.msra.mxu0 %v6810
    %8447 = vmatprep.subr.mxu0 0.0
    %8448 = vmatpush1.msra.mxu0 %v6811
    %8449 = vmatprep.subr.mxu0 0.0
    %8450 = vmatpush1.msra.mxu0 %v6812
    %8451 = vmatprep.subr.mxu0 0.0
    %8452 = vmatpush1.msra.mxu0 %v6813
    %8453 = vmatprep.subr.mxu0 0.0
    %8454 = vmatpush1.msra.mxu0 %v6814
    %8455 = vmatprep.subr.mxu0 0.0
    %8456 = vmatpush1.msra.mxu0 %v6815
    %8457 = vmatprep.subr.mxu0 0.0
    %8458 = vmatpush1.msra.mxu0 %v6816
    %8459 = vmatprep.subr.mxu0 0.0
    %8460 = vmatpush1.msra.mxu0 0.0
    %8461 = vmatprep.subr.mxu0 0.0
    %8462 = vmatpush1.msra.mxu0 0.0
    %8463 = vmatprep.subr.mxu0 0.0
    %8464 = vmatpush1.msra.mxu0 0.0
    %8465 = vmatprep.subr.mxu0 0.0
    %8466 = vmatpush1.msra.mxu0 0.0
    %8467 = vmatprep.subr.mxu0 0.0
    %8468 = vmatpush1.msra.mxu0 0.0
    %8469 = vmatprep.subr.mxu0 0.0
    %8470 = vmatpush1.msra.mxu0 0.0
    %8471 = vmatprep.subr.mxu0 0.0
    %8472 = vmatpush1.msra.mxu0 0.0
    %8473 = vmatprep.subr.mxu0 0.0
    %8474 = vmatpush1.msra.mxu0 0.0
    %8475 = vmatprep.subr.mxu0 0.0
    %8476 = vmatpush1.msra.mxu0 0.0
    %8477 = vmatprep.subr.mxu0 0.0
    %8478 = vmatpush1.msra.mxu0 0.0
    %8479 = vmatprep.subr.mxu0 0.0
    %8480 = vmatpush1.msra.mxu0 0.0
    %8481 = vmatprep.subr.mxu0 0.0
    %8482 = vmatpush1.msra.mxu0 0.0
    %8483 = vmatprep.subr.mxu0 0.0
    %8484 = vmatpush1.msra.mxu0 0.0
    %8485 = vmatprep.subr.mxu0 0.0
    %8486 = vmatpush1.msra.mxu0 0.0
    %8487 = vmatprep.subr.mxu0 0.0
    %8488 = vmatpush1.msra.mxu0 0.0
    %8489 = vmatprep.subr.mxu0 0.0
    %8490 = vmatpush1.msra.mxu0 0.0
    %8491 = vmatprep.subr.mxu0 0.0
    %8492 = vmatpush1.msra.mxu0 0.0
    %8493 = vmatprep.subr.mxu0 0.0
    %8494 = vmatpush1.msra.mxu0 0.0
    %8495 = vmatprep.subr.mxu0 0.0
    %8496 = vmatpush1.msra.mxu0 0.0
    %8497 = vmatprep.subr.mxu0 0.0
    %8498 = vmatpush1.msra.mxu0 0.0
    %8499 = vmatprep.subr.mxu0 0.0
    %8500 = vmatpush1.msra.mxu0 0.0
    %8501 = vmatprep.subr.mxu0 0.0
    %8502 = vmatpush1.msra.mxu0 0.0
    %8503 = vmatprep.subr.mxu0 0.0
    %8504 = vmatpush1.msra.mxu0 0.0
    %8505 = vmatprep.subr.mxu0 0.0
    %8506 = vmatpush1.msra.mxu0 0.0
    %8507 = vmatprep.mubr.f32.mxu0 0.0
    %8508 = vmatmul.mubr.f32.gmra.mrb[0].mxu0 %v8441
    %v8509 = vpop.f32.mrb[0].mxu0
    %v8510 = vadd.f32 0.0, %v8509
    %v8511 = vpop.f32.mrb[0].mxu0
    %8512 = vdwg.mxu0
    %v8514 = vsel %vm6833, %v6631, 0
    %8516 = vmatprep.subr.mxu0 0.0
    %8517 = vmatpush1.msra.mxu0 %v6817
    %8518 = vmatprep.subr.mxu0 0.0
    %8519 = vmatpush1.msra.mxu0 %v6818
    %8520 = vmatprep.subr.mxu0 0.0
    %8521 = vmatpush1.msra.mxu0 %v6819
    %8522 = vmatprep.subr.mxu0 0.0
    %8523 = vmatpush1.msra.mxu0 %v6820
    %8524 = vmatprep.subr.mxu0 0.0
    %8525 = vmatpush1.msra.mxu0 %v6821
    %8526 = vmatprep.subr.mxu0 0.0
    %8527 = vmatpush1.msra.mxu0 %v6822
    %8528 = vmatprep.subr.mxu0 0.0
    %8529 = vmatpush1.msra.mxu0 %v6823
    %8530 = vmatprep.subr.mxu0 0.0
    %8531 = vmatpush1.msra.mxu0 %v6824
    %8532 = vmatprep.subr.mxu0 0.0
    %8533 = vmatpush1.msra.mxu0 0.0
    %8534 = vmatprep.subr.mxu0 0.0
    %8535 = vmatpush1.msra.mxu0 0.0
    %8536 = vmatprep.subr.mxu0 0.0
    %8537 = vmatpush1.msra.mxu0 0.0
    %8538 = vmatprep.subr.mxu0 0.0
    %8539 = vmatpush1.msra.mxu0 0.0
    %8540 = vmatprep.subr.mxu0 0.0
    %8541 = vmatpush1.msra.mxu0 0.0
    %8542 = vmatprep.subr.mxu0 0.0
    %8543 = vmatpush1.msra.mxu0 0.0
    %8544 = vmatprep.subr.mxu0 0.0
    %8545 = vmatpush1.msra.mxu0 0.0
    %8546 = vmatprep.subr.mxu0 0.0
    %8547 = vmatpush1.msra.mxu0 0.0
    %8548 = vmatprep.subr.mxu0 0.0
    %8549 = vmatpush1.msra.mxu0 0.0
    %8550 = vmatprep.subr.mxu0 0.0
    %8551 = vmatpush1.msra.mxu0 0.0
    %8552 = vmatprep.subr.mxu0 0.0
    %8553 = vmatpush1.msra.mxu0 0.0
    %8554 = vmatprep.subr.mxu0 0.0
    %8555 = vmatpush1.msra.mxu0 0.0
    %8556 = vmatprep.subr.mxu0 0.0
    %8557 = vmatpush1.msra.mxu0 0.0
    %8558 = vmatprep.subr.mxu0 0.0
    %8559 = vmatpush1.msra.mxu0 0.0
    %8560 = vmatprep.subr.mxu0 0.0
    %8561 = vmatpush1.msra.mxu0 0.0
    %8562 = vmatprep.subr.mxu0 0.0
    %8563 = vmatpush1.msra.mxu0 0.0
    %8564 = vmatprep.subr.mxu0 0.0
    %8565 = vmatpush1.msra.mxu0 0.0
    %8566 = vmatprep.subr.mxu0 0.0
    %8567 = vmatpush1.msra.mxu0 0.0
    %8568 = vmatprep.subr.mxu0 0.0
    %8569 = vmatpush1.msra.mxu0 0.0
    %8570 = vmatprep.subr.mxu0 0.0
    %8571 = vmatpush1.msra.mxu0 0.0
    %8572 = vmatprep.subr.mxu0 0.0
    %8573 = vmatpush1.msra.mxu0 0.0
    %8574 = vmatprep.subr.mxu0 0.0
    %8575 = vmatpush1.msra.mxu0 0.0
    %8576 = vmatprep.subr.mxu0 0.0
    %8577 = vmatpush1.msra.mxu0 0.0
    %8578 = vmatprep.subr.mxu0 0.0
    %8579 = vmatpush1.msra.mxu0 0.0
    %8580 = vmatprep.mubr.f32.mxu0 0.0
    %8581 = vmatmul.mubr.f32.gmra.mrb[0].mxu0 %v8514
    %v8582 = vpop.f32.mrb[0].mxu0
    %v8583 = vadd.f32 0.0, %v8582
    %v8584 = vpop.f32.mrb[0].mxu0
    %8585 = vdwg.mxu0
    %v8587 = vsel %vm6833, %v6632, 0
    %8589 = vmatprep.subr.mxu0 0.0
    %8590 = vmatpush1.msra.mxu0 %v6825
    %8591 = vmatprep.subr.mxu0 0.0
    %8592 = vmatpush1.msra.mxu0 %v6826
    %8593 = vmatprep.subr.mxu0 0.0
    %8594 = vmatpush1.msra.mxu0 %v6827
    %8595 = vmatprep.subr.mxu0 0.0
    %8596 = vmatpush1.msra.mxu0 %v6828
    %8597 = vmatprep.subr.mxu0 0.0
    %8598 = vmatpush1.msra.mxu0 %v6829
    %8599 = vmatprep.subr.mxu0 0.0
    %8600 = vmatpush1.msra.mxu0 %v6830
    %8601 = vmatprep.subr.mxu0 0.0
    %8602 = vmatpush1.msra.mxu0 %v6831
    %8603 = vmatprep.subr.mxu0 0.0
    %8604 = vmatpush1.msra.mxu0 %v6832
    %8605 = vmatprep.subr.mxu0 0.0
    %8606 = vmatpush1.msra.mxu0 0.0
    %8607 = vmatprep.subr.mxu0 0.0
    %8608 = vmatpush1.msra.mxu0 0.0
    %8609 = vmatprep.subr.mxu0 0.0
    %8610 = vmatpush1.msra.mxu0 0.0
    %8611 = vmatprep.subr.mxu0 0.0
    %8612 = vmatpush1.msra.mxu0 0.0
    %8613 = vmatprep.subr.mxu0 0.0
    %8614 = vmatpush1.msra.mxu0 0.0
    %8615 = vmatprep.subr.mxu0 0.0
    %8616 = vmatpush1.msra.mxu0 0.0
    %8617 = vmatprep.subr.mxu0 0.0
    %8618 = vmatpush1.msra.mxu0 0.0
    %8619 = vmatprep.subr.mxu0 0.0
    %8620 = vmatpush1.msra.mxu0 0.0
    %8621 = vmatprep.subr.mxu0 0.0
    %8622 = vmatpush1.msra.mxu0 0.0
    %8623 = vmatprep.subr.mxu0 0.0
    %8624 = vmatpush1.msra.mxu0 0.0
    %8625 = vmatprep.subr.mxu0 0.0
    %8626 = vmatpush1.msra.mxu0 0.0
    %8627 = vmatprep.subr.mxu0 0.0
    %8628 = vmatpush1.msra.mxu0 0.0
    %8629 = vmatprep.subr.mxu0 0.0
    %8630 = vmatpush1.msra.mxu0 0.0
    %8631 = vmatprep.subr.mxu0 0.0
    %8632 = vmatpush1.msra.mxu0 0.0
    %8633 = vmatprep.subr.mxu0 0.0
    %8634 = vmatpush1.msra.mxu0 0.0
    %8635 = vmatprep.subr.mxu0 0.0
    %8636 = vmatpush1.msra.mxu0 0.0
    %8637 = vmatprep.subr.mxu0 0.0
    %8638 = vmatpush1.msra.mxu0 0.0
    %8639 = vmatprep.subr.mxu0 0.0
    %8640 = vmatpush1.msra.mxu0 0.0
    %8641 = vmatprep.subr.mxu0 0.0
    %8642 = vmatpush1.msra.mxu0 0.0
    %8643 = vmatprep.subr.mxu0 0.0
    %8644 = vmatpush1.msra.mxu0 0.0
    %8645 = vmatprep.subr.mxu0 0.0
    %8646 = vmatpush1.msra.mxu0 0.0
    %8647 = vmatprep.subr.mxu0 0.0
    %8648 = vmatpush1.msra.mxu0 0.0
    %8649 = vmatprep.subr.mxu0 0.0
    %8650 = vmatpush1.msra.mxu0 0.0
    %8651 = vmatprep.subr.mxu0 0.0
    %8652 = vmatpush1.msra.mxu0 0.0
    %8653 = vmatprep.mubr.f32.mxu0 0.0
    %8654 = vmatmul.mubr.f32.gmra.mrb[0].mxu0 %v8587
    %v8655 = vpop.f32.mrb[0].mxu0
    %v8656 = vadd.f32 0.0, %v8655
    %v8657 = vpop.f32.mrb[0].mxu0
    %8658 = vdwg.mxu0
    %v8659 = vadd.f32 %v6904, %v6977
    %v8660 = vadd.f32 %v8659, %v7050
    %v8661 = vadd.f32 %v8660, %v7123
    %v8662 = vadd.f32 %v8661, %v7196
    %v8663 = vadd.f32 %v8662, %v7269
    %v8664 = vadd.f32 %v8663, %v7342
    %v8665 = vadd.f32 %v8664, %v7415
    %v8666 = vadd.f32 %v8665, %v7488
    %v8667 = vadd.f32 %v8666, %v7561
    %v8668 = vadd.f32 %v8667, %v7634
    %v8669 = vadd.f32 %v8668, %v7707
    %v8670 = vadd.f32 %v8669, %v7780
    %v8671 = vadd.f32 %v8670, %v7853
    %v8672 = vadd.f32 %v8671, %v7926
    %v8673 = vadd.f32 %v8672, %v7999
    %v8674 = vadd.f32 %v8673, %v8072
    %v8675 = vadd.f32 %v8674, %v8145
    %v8676 = vadd.f32 %v8675, %v8218
    %v8677 = vadd.f32 %v8676, %v8291
    %v8678 = vadd.f32 %v8677, %v8364
    %v8679 = vadd.f32 %v8678, %v8437
    %v8680 = vadd.f32 %v8679, %v8510
    %v8681 = vadd.f32 %v8680, %v8583
    %v8682 = vadd.f32 %v8681, %v8656
    %v8683 = vlaneseq
    %v8684 = vshrl.u32 %v8683, 7
    %v8685 = vsub.s32 2, %v8684
    %v8686 = vrot.slane %v88, %v8685
    %v8687 = vadd.f32 %v8682, %v8686
    %v8688 = vmul.f32 %v8687, %v8687
    %v8689 = vsel %vm6833, %v8688, 0.0
    %8690 = vadd.xlane.f32.xlu0 %v8689
    %v8691 = vpop.xlane.xlu0 %8690
    %v8692 = vrsqrt.pop %v8691
    %v8693 = vmul.f32 %v8691, %v8692
    %vm8694 = vcmp.eq.f32.partialorder %v8691, inf
    %v8695 = vsel %vm8694, %v8691, %v8693
    %vm8696 = vcmp.eq.f32.partialorder %v8691, 0.0
    %v8697 = vand.u32 %v8691, 2147483648
    %v8698 = vsel %vm8696, %v8697, %v8695
    %v8699 = vadd.f32 %v8698, 0.0001
    %v8700 = vrcp.pop %v8699
    %v8701 = vmul.f32 %v8687, %v8700
    %8703 = vrot.lane.b32.xlu0 %v8688, 64
    %v8704 = vpop.permute.xlu0 %8703
    %v8706 = vsel %vm6833, %v8704, 0.0
    %8707 = vadd.xlane.f32.xlu0 %v8706
    %v8708 = vpop.xlane.xlu0 %8707
    %v8709 = vrsqrt.pop %v8708
    %v8710 = vmul.f32 %v8708, %v8709
    %vm8711 = vcmp.eq.f32.partialorder %v8708, inf
    %v8712 = vsel %vm8711, %v8708, %v8710
    %vm8713 = vcmp.eq.f32.partialorder %v8708, 0.0
    %v8714 = vand.u32 %v8708, 2147483648
    %v8715 = vsel %vm8713, %v8714, %v8712
    %v8716 = vadd.f32 %v8715, 0.0001
    %v8717 = vrcp.pop %v8716
    %v8718 = vmul.f32 %v8687, %v8717
    %8720 = vrot.lane.b32.xlu0 %v8718, 64
    %v8721 = vpop.permute.xlu0 %8720
    %v8723 = vrot.slane %v88, 3
    %v8724 = vsel %vm6833, %v8721, 0
    %v8726 = vsel %vm6833, %v8723, 0
    %8728 = vmatprep.subr.mxu0 0.0
    %8729 = vmatpush1.xpose.msra.mxu0 %v8726
    %8730 = vmatprep.subr.mxu0 0.0
    %8731 = vmatpush1.xpose.msra.mxu0 0.0
    %8732 = vmatprep.subr.mxu0 0.0
    %8733 = vmatpush1.xpose.msra.mxu0 0.0
    %8734 = vmatprep.subr.mxu0 0.0
    %8735 = vmatpush1.xpose.msra.mxu0 0.0
    %8736 = vmatprep.subr.mxu0 0.0
    %8737 = vmatpush1.xpose.msra.mxu0 0.0
    %8738 = vmatprep.subr.mxu0 0.0
    %8739 = vmatpush1.xpose.msra.mxu0 0.0
    %8740 = vmatprep.subr.mxu0 0.0
    %8741 = vmatpush1.xpose.msra.mxu0 0.0
    %8742 = vmatprep.subr.mxu0 0.0
    %8743 = vmatpush1.xpose.msra.mxu0 0.0
    %8744 = vmatprep.subr.mxu0 0.0
    %8745 = vmatpush1.xpose.msra.mxu0 0.0
    %8746 = vmatprep.subr.mxu0 0.0
    %8747 = vmatpush1.xpose.msra.mxu0 0.0
    %8748 = vmatprep.subr.mxu0 0.0
    %8749 = vmatpush1.xpose.msra.mxu0 0.0
    %8750 = vmatprep.subr.mxu0 0.0
    %8751 = vmatpush1.xpose.msra.mxu0 0.0
    %8752 = vmatprep.subr.mxu0 0.0
    %8753 = vmatpush1.xpose.msra.mxu0 0.0
    %8754 = vmatprep.subr.mxu0 0.0
    %8755 = vmatpush1.xpose.msra.mxu0 0.0
    %8756 = vmatprep.subr.mxu0 0.0
    %8757 = vmatpush1.xpose.msra.mxu0 0.0
    %8758 = vmatprep.subr.mxu0 0.0
    %8759 = vmatpush1.xpose.msra.mxu0 0.0
    %8760 = vmatprep.subr.mxu0 0.0
    %8761 = vmatpush1.xpose.msra.mxu0 0.0
    %8762 = vmatprep.subr.mxu0 0.0
    %8763 = vmatpush1.xpose.msra.mxu0 0.0
    %8764 = vmatprep.subr.mxu0 0.0
    %8765 = vmatpush1.xpose.msra.mxu0 0.0
    %8766 = vmatprep.subr.mxu0 0.0
    %8767 = vmatpush1.xpose.msra.mxu0 0.0
    %8768 = vmatprep.subr.mxu0 0.0
    %8769 = vmatpush1.xpose.msra.mxu0 0.0
    %8770 = vmatprep.subr.mxu0 0.0
    %8771 = vmatpush1.xpose.msra.mxu0 0.0
    %8772 = vmatprep.subr.mxu0 0.0
    %8773 = vmatpush1.xpose.msra.mxu0 0.0
    %8774 = vmatprep.subr.mxu0 0.0
    %8775 = vmatpush1.xpose.msra.mxu0 0.0
    %8776 = vmatprep.subr.mxu0 0.0
    %8777 = vmatpush1.xpose.msra.mxu0 0.0
    %8778 = vmatprep.subr.mxu0 0.0
    %8779 = vmatpush1.xpose.msra.mxu0 0.0
    %8780 = vmatprep.subr.mxu0 0.0
    %8781 = vmatpush1.xpose.msra.mxu0 0.0
    %8782 = vmatprep.subr.mxu0 0.0
    %8783 = vmatpush1.xpose.msra.mxu0 0.0
    %8784 = vmatprep.subr.mxu0 0.0
    %8785 = vmatpush1.xpose.msra.mxu0 0.0
    %8786 = vmatprep.subr.mxu0 0.0
    %8787 = vmatpush1.xpose.msra.mxu0 0.0
    %8788 = vmatprep.subr.mxu0 0.0
    %8789 = vmatpush1.xpose.msra.mxu0 0.0
    %8790 = vmatprep.subr.mxu0 0.0
    %8791 = vmatpush1.xpose.msra.mxu0 0.0
    %8792 = vmatprep.mubr.f32.mxu0 0.0
    %8793 = vmatmul.mubr.f32.gmra.mrb[0].mxu0 %v8724
    %v8794 = vpop.f32.mrb[0].mxu0
    %v8795 = vadd.f32 0.0, %v8794
    %v8796 = vpop.f32.mrb[0].mxu0
    %8797 = vdwg.mxu0
    %vm8798 = vcmask 39936
    %v8799 = vsel %vm8798, %v8795, -inf
    %8800 = vmax.xlane.f32.xlu0 %v8799
    %v8801 = vpop.xlane.xlu0 %8800
    %v8802 = vlaneseq
    %v8803 = vand.u32 %v8802, 127
    %vm8804 = vcmp.eq.f32.partialorder %v8795, %v8801
    %v8805 = vsel %vm8804, %v8803, 5
    %v8806 = vsel %vm8798, %v8805, 2147483647
    %v8807 = vand.u32 %v8806, 65535
    %v8808 = vshra.s32 %v8806, 16
    %v8809 = vcvt.s32.f32 %v8807
    %v8810 = vcvt.s32.f32 %v8808
    %8811 = vmin.xlane.f32.xlu0 %v8810
    %v8812 = vpop.xlane.xlu0 %8811
    %vm8813 = vcmp.eq.f32.partialorder %v8810, %v8812
    %v8814 = vsel %vm8813, %v8809, inf
    %8815 = vmin.xlane.f32.xlu0 %v8814
    %v8816 = vpop.xlane.xlu0 %8815
    %v8817 = vcvt.f32.s32 %v8816
    %v8818 = vcvt.f32.s32 %v8812
    %v8819 = vshll.u32 %v8818, 16
    %v8820 = vadd.s32 %v8819, %v8817
    %vm8821 = vcmp.eq.s32.totalorder %v8803, %v8820
    %v8822 = vsel %vm8821, 1, 0
    %v8823 = vcvt.s32.f32 %v8822
    %v8825 = vsel %vm8798, %v8823, 0
    %vm8827 = vcmask 1044480
    %v8828 = vsel %vm8827, %v8723, 0
    %8830 = vmatprep.subr.mxu0 0.0
    %8831 = vmatpush1.msra.mxu0 %v8828
    %8832 = vmatprep.subr.mxu0 0.0
    %8833 = vmatpush1.msra.mxu0 0.0
    %8834 = vmatprep.subr.mxu0 0.0
    %8835 = vmatpush1.msra.mxu0 0.0
    %8836 = vmatprep.subr.mxu0 0.0
    %8837 = vmatpush1.msra.mxu0 0.0
    %8838 = vmatprep.subr.mxu0 0.0
    %8839 = vmatpush1.msra.mxu0 0.0
    %8840 = vmatprep.subr.mxu0 0.0
    %8841 = vmatpush1.msra.mxu0 0.0
    %8842 = vmatprep.subr.mxu0 0.0
    %8843 = vmatpush1.msra.mxu0 0.0
    %8844 = vmatprep.subr.mxu0 0.0
    %8845 = vmatpush1.msra.mxu0 0.0
    %8846 = vmatprep.subr.mxu0 0.0
    %8847 = vmatpush1.msra.mxu0 0.0
    %8848 = vmatprep.subr.mxu0 0.0
    %8849 = vmatpush1.msra.mxu0 0.0
    %8850 = vmatprep.subr.mxu0 0.0
    %8851 = vmatpush1.msra.mxu0 0.0
    %8852 = vmatprep.subr.mxu0 0.0
    %8853 = vmatpush1.msra.mxu0 0.0
    %8854 = vmatprep.subr.mxu0 0.0
    %8855 = vmatpush1.msra.mxu0 0.0
    %8856 = vmatprep.subr.mxu0 0.0
    %8857 = vmatpush1.msra.mxu0 0.0
    %8858 = vmatprep.subr.mxu0 0.0
    %8859 = vmatpush1.msra.mxu0 0.0
    %8860 = vmatprep.subr.mxu0 0.0
    %8861 = vmatpush1.msra.mxu0 0.0
    %8862 = vmatprep.subr.mxu0 0.0
    %8863 = vmatpush1.msra.mxu0 0.0
    %8864 = vmatprep.subr.mxu0 0.0
    %8865 = vmatpush1.msra.mxu0 0.0
    %8866 = vmatprep.subr.mxu0 0.0
    %8867 = vmatpush1.msra.mxu0 0.0
    %8868 = vmatprep.subr.mxu0 0.0
    %8869 = vmatpush1.msra.mxu0 0.0
    %8870 = vmatprep.subr.mxu0 0.0
    %8871 = vmatpush1.msra.mxu0 0.0
    %8872 = vmatprep.subr.mxu0 0.0
    %8873 = vmatpush1.msra.mxu0 0.0
    %8874 = vmatprep.subr.mxu0 0.0
    %8875 = vmatpush1.msra.mxu0 0.0
    %8876 = vmatprep.subr.mxu0 0.0
    %8877 = vmatpush1.msra.mxu0 0.0
    %8878 = vmatprep.subr.mxu0 0.0
    %8879 = vmatpush1.msra.mxu0 0.0
    %8880 = vmatprep.subr.mxu0 0.0
    %8881 = vmatpush1.msra.mxu0 0.0
    %8882 = vmatprep.subr.mxu0 0.0
    %8883 = vmatpush1.msra.mxu0 0.0
    %8884 = vmatprep.subr.mxu0 0.0
    %8885 = vmatpush1.msra.mxu0 0.0
    %8886 = vmatprep.subr.mxu0 0.0
    %8887 = vmatpush1.msra.mxu0 0.0
    %8888 = vmatprep.subr.mxu0 0.0
    %8889 = vmatpush1.msra.mxu0 0.0
    %8890 = vmatprep.subr.mxu0 0.0
    %8891 = vmatpush1.msra.mxu0 0.0
    %8892 = vmatprep.subr.mxu0 0.0
    %8893 = vmatpush1.msra.mxu0 0.0
    %8894 = vmatprep.mubr.f32.mxu0 0.0
    %8895 = vmatmul.mubr.f32.gmra.mrb[0].mxu0 %v8825
    %v8896 = vpop.f32.mrb[0].mxu0
    %v8897 = vadd.f32 0.0, %v8896
    %v8898 = vpop.f32.mrb[0].mxu0
    %8899 = vdwg.mxu0
    %v8901 = vsel %vm6833, %v8701, 0
    %v8904 = vsel %vm6833, %v8897, 0
    %8906 = vmatprep.subr.mxu0 0.0
    %8907 = vmatpush1.xpose.msra.mxu0 %v8904
    %8908 = vmatprep.subr.mxu0 0.0
    %8909 = vmatpush1.xpose.msra.mxu0 0.0
    %8910 = vmatprep.subr.mxu0 0.0
    %8911 = vmatpush1.xpose.msra.mxu0 0.0
    %8912 = vmatprep.subr.mxu0 0.0
    %8913 = vmatpush1.xpose.msra.mxu0 0.0
    %8914 = vmatprep.subr.mxu0 0.0
    %8915 = vmatpush1.xpose.msra.mxu0 0.0
    %8916 = vmatprep.subr.mxu0 0.0
    %8917 = vmatpush1.xpose.msra.mxu0 0.0
    %8918 = vmatprep.subr.mxu0 0.0
    %8919 = vmatpush1.xpose.msra.mxu0 0.0
    %8920 = vmatprep.subr.mxu0 0.0
    %8921 = vmatpush1.xpose.msra.mxu0 0.0
    %8922 = vmatprep.subr.mxu0 0.0
    %8923 = vmatpush1.xpose.msra.mxu0 0.0
    %8924 = vmatprep.subr.mxu0 0.0
    %8925 = vmatpush1.xpose.msra.mxu0 0.0
    %8926 = vmatprep.subr.mxu0 0.0
    %8927 = vmatpush1.xpose.msra.mxu0 0.0
    %8928 = vmatprep.subr.mxu0 0.0
    %8929 = vmatpush1.xpose.msra.mxu0 0.0
    %8930 = vmatprep.subr.mxu0 0.0
    %8931 = vmatpush1.xpose.msra.mxu0 0.0
    %8932 = vmatprep.subr.mxu0 0.0
    %8933 = vmatpush1.xpose.msra.mxu0 0.0
    %8934 = vmatprep.subr.mxu0 0.0
    %8935 = vmatpush1.xpose.msra.mxu0 0.0
    %8936 = vmatprep.subr.mxu0 0.0
    %8937 = vmatpush1.xpose.msra.mxu0 0.0
    %8938 = vmatprep.subr.mxu0 0.0
    %8939 = vmatpush1.xpose.msra.mxu0 0.0
    %8940 = vmatprep.subr.mxu0 0.0
    %8941 = vmatpush1.xpose.msra.mxu0 0.0
    %8942 = vmatprep.subr.mxu0 0.0
    %8943 = vmatpush1.xpose.msra.mxu0 0.0
    %8944 = vmatprep.subr.mxu0 0.0
    %8945 = vmatpush1.xpose.msra.mxu0 0.0
    %8946 = vmatprep.subr.mxu0 0.0
    %8947 = vmatpush1.xpose.msra.mxu0 0.0
    %8948 = vmatprep.subr.mxu0 0.0
    %8949 = vmatpush1.xpose.msra.mxu0 0.0
    %8950 = vmatprep.subr.mxu0 0.0
    %8951 = vmatpush1.xpose.msra.mxu0 0.0
    %8952 = vmatprep.subr.mxu0 0.0
    %8953 = vmatpush1.xpose.msra.mxu0 0.0
    %8954 = vmatprep.subr.mxu0 0.0
    %8955 = vmatpush1.xpose.msra.mxu0 0.0
    %8956 = vmatprep.subr.mxu0 0.0
    %8957 = vmatpush1.xpose.msra.mxu0 0.0
    %8958 = vmatprep.subr.mxu0 0.0
    %8959 = vmatpush1.xpose.msra.mxu0 0.0
    %8960 = vmatprep.subr.mxu0 0.0
    %8961 = vmatpush1.xpose.msra.mxu0 0.0
    %8962 = vmatprep.subr.mxu0 0.0
    %8963 = vmatpush1.xpose.msra.mxu0 0.0
    %8964 = vmatprep.subr.mxu0 0.0
    %8965 = vmatpush1.xpose.msra.mxu0 0.0
    %8966 = vmatprep.subr.mxu0 0.0
    %8967 = vmatpush1.xpose.msra.mxu0 0.0
    %8968 = vmatprep.subr.mxu0 0.0
    %8969 = vmatpush1.xpose.msra.mxu0 0.0
    %8970 = vmatprep.mubr.f32.mxu0 0.0
    %8971 = vmatmul.mubr.f32.gmra.mrb[0].mxu0 %v8901
    %v8972 = vpop.f32.mrb[0].mxu0
    %v8973 = vadd.f32 0.0, %v8972
    %v8974 = vpop.f32.mrb[0].mxu0
    %8975 = vdwg.mxu0
    %v8976 = vmul.f32 %v88, 1.442695
    %v8977 = vpow.pop %v8976
    %8979 = vrot.lane.b32.xlu0 %v8977, 1
    %v8980 = vpop.permute.xlu0 %8979
    %s8981 = vtos %v8980
    %v8982 = vstv %s8981
    %v8984 = vmul.f32 %v8982, %v8973
    %vm8985 = vcmask 64512
    %8986 = vst.msk [vmem:[#allocation5] sm:$0xff] %vm8985, %v8984
    // Predicated region
    $region30: #{tpu_custom_call.1} parent=1 // pred_check
      _
    $region31: #{tpu_custom_call.1} parent=1 // pred_check_branch
      %8988 = sbr.rel (0) target = $region33
    $region32: #{tpu_custom_call.1} parent=1 // pred_region
      %s8990 = ssub.s32 128, 128
      %8991 = vsyncadd [#allocation4], %s8990
      %s8993 = sshll.u32 [#allocation5], 4
      %s8994 = int_to_ptr.vmem [resolvable:$true] %s8993
      %8996 = dma.vmem_to_hbm [thread:$0]  %s8994, 128, %s6, [#allocation4]
    $region33: #{tpu_custom_call.1} parent=1 // pred_fallthru
      _
    // Predicated region
    $region34: #{tpu_custom_call.1} parent=1 // pred_check
      _
    $region35: #{tpu_custom_call.1} parent=1 // pred_check_branch
      %8998 = sbr.rel (0) target = $region37
    $region36: #{tpu_custom_call.1} parent=1 // pred_region
      %8999 = dma.done [#allocation4], 128
    $region37: #{tpu_custom_call.1} parent=1 // pred_fallthru
      _
    %9000 = vsyncpa [#allocation3], 1
    %9001 = vsyncpa [#allocation4], 1

</llo_original>
